<compile_context>
chip_gen: v5e
topology: v5e:2x2
jax: 0.10.0
libtpu: 0.0.40
codegen_flags: <defaults>
</compile_context>

<pallas_src>
import math

import jax
import jax.numpy as jnp
from jax.experimental import pallas as pl
from jax.experimental.pallas import tpu as pltpu

TWO_PI = 2.0 * math.pi

# Lanes (spatial pixels) per grid step.  4096 keeps the double-buffered output
# block (2 * 2M * 4096 * 4B = 8 MiB at M=128) inside v5e's 16 MiB scoped-VMEM
# default while being >> 512 lanes, i.e. at the measured HBM-roofline plateau.
DEFAULT_SPATIAL_TILE = 4096


# ----------------------------------------------------------------------------
# Pallas kernel: fused  [sin((2*pi*B)^T x) ; cos((2*pi*B)^T x)]  (channel-major)
# ----------------------------------------------------------------------------
def _gfft_kernel(bt_ref, x_ref, o_ref):
    # bt: (M, C) = (2*pi*B)^T,  x: (C, T),  o: (2M, T)
    m = bt_ref.shape[0]
    y = jnp.dot(bt_ref[...], x_ref[...], preferred_element_type=jnp.float32)
    # Static sublane slices at multiples of 8 -> dense stores; full lane width.
    # TODO(synk): on v6e/v7x a shared range reduction + minimax sin/cos pair
    # sharing z^2 would roughly halve the transcendental VALU cost; kept libm
    # sin/cos here for numerical parity with the PyTorch reference.
    o_ref[:m, :] = jnp.sin(y).astype(o_ref.dtype)
    o_ref[m:, :] = jnp.cos(y).astype(o_ref.dtype)


def _gfft_ncs(x_ncs, bt_scaled, tile):
    """x_ncs: (N, C, S) with S % tile == 0; bt_scaled: (M, C) -> (N, 2M, S)."""
    n, c, s = x_ncs.shape
    m = bt_scaled.shape[0]
    p = n * s
    cost = pl.CostEstimate(
        flops=2 * p * c * m,
        transcendentals=2 * p * m,
        bytes_accessed=4 * (p * c + c * m + 2 * p * m),
    )
    return pl.pallas_call(
        _gfft_kernel,
        out_shape=jax.ShapeDtypeStruct((n, 2 * m, s), jnp.float32),
        grid=(n, s // tile),
        in_specs=[
            # Tiny (M, C) scaled Fourier matrix: same block every step, stays
            # resident in VMEM.
            pl.BlockSpec((m, c), lambda b, t: (0, 0)),
            # (C, tile) pixel slab; batch dim squeezed out of the kernel view.
            pl.BlockSpec((None, c, tile), lambda b, t: (b, 0, t)),
        ],
        out_specs=pl.BlockSpec((None, 2 * m, tile), lambda b, t: (b, 0, t)),
        compiler_params=pltpu.CompilerParams(
            dimension_semantics=("parallel", "parallel")),
        cost_estimate=cost,
    )(bt_scaled, x_ncs)


# ----------------------------------------------------------------------------
# Module wrapper
# ----------------------------------------------------------------------------
def gaussian_fourier_feature_transform(x_nchw, b_mat,
                                       spatial_tile=DEFAULT_SPATIAL_TILE):
    """x_nchw: (N, C, W, H) f32, b_mat: (C, M) f32 -> (N, 2M, W, H) f32."""
    n, c, w, h = x_nchw.shape
    c_in, m = b_mat.shape
    assert c == c_in, f"expected {c_in} input channels, got {c}"

    s = w * h
    # Channel-major layout: (N, C, W, H) -> (N, C, W*H) is a free reshape, and
    # the (N, 2M, W*H) output reshapes for free to (N, 2M, W, H) — no permutes.
    x = x_nchw.reshape(n, c, s)

    # Fold 2*pi into the tiny constant Fourier matrix once and pre-transpose
    # so the kernel computes (2*pi*B)^T @ x directly.
    bt_scaled = (TWO_PI * b_mat).T  # (M, C)

    # Spatial (lane) tile: full extent if it fits, else a multiple of 128.
    tile = min(spatial_tile, s)
    if tile != s:
        tile = max(128, (tile // 128) * 128)
    s_pad = pl.cdiv(s, tile) * tile
    if s_pad != s:
        x = jnp.pad(x, ((0, 0), (0, 0), (0, s_pad - s)))

    y = _gfft_ncs(x, bt_scaled, tile)  # (N, 2M, s_pad)

    if s_pad != s:
        y = y[:, :, :s]
    # Channels [0:M] = sin, [M:2M] = cos == torch.cat([sin, cos], dim=1).
    return y.reshape(n, 2 * m, w, h)


# ----------------------------------------------------------------------------
if __name__ == "__main__":
    root = jax.random.PRNGKey(0)
    k_b, k_x = jax.random.split(root)

    # Module hyper-parameters (PyTorch defaults; small spatial input).
    num_input_channels = 4
    mapping_size = 128
    scale = 6.0

    # torch.randn((C, M)) * scale  equivalent.
    b_mat = jax.random.normal(
        k_b, (num_input_channels, mapping_size), jnp.float32) * scale

    # Small deterministic input consistent with the module's 4D contract.
    N, C, W, H = 2, num_input_channels, 16, 16
    x = jax.random.normal(k_x, (N, C, W, H), jnp.float32)

    y = gaussian_fourier_feature_transform(x, b_mat)
    y = jax.block_until_ready(y)

    # Shape + numerical check against a pure-jnp reference of the same math.
    assert y.shape == (N, 2 * mapping_size, W, H), y.shape
    x_flat = jnp.transpose(x, (0, 2, 3, 1)).reshape(N * W * H, C)
    proj = TWO_PI * (x_flat @ b_mat)
    ref = jnp.concatenate([jnp.sin(proj), jnp.cos(proj)], axis=-1)
    ref = jnp.transpose(ref.reshape(N, W, H, 2 * mapping_size), (0, 3, 1, 2))
    assert bool(jnp.all(jnp.isfinite(y)))
    assert bool(jnp.allclose(y, ref, atol=1e-2, rtol=1e-4))
    print("KERNEL_OK")
</pallas_src>

<mosaic_0001>
module attributes {stable_mosaic.version = 11 : i64} {
  func.func @_gfft_kernel(%arg0: i32, %arg1: i32, %arg2: memref<128x4xf32, #tpu.memory_space<vmem>>, %arg3: memref<1x4x256xf32, #tpu.memory_space<vmem>>, %arg4: memref<1x256x256xf32, #tpu.memory_space<vmem>>) attributes {dimension_semantics = [#tpu.dimension_semantics<parallel>, #tpu.dimension_semantics<parallel>], iteration_bounds = array<i64: 2, 1>, scalar_prefetch = 0 : i64, scratch_operands = 0 : i64, tpu.core_type = #tpu.core_type<tc>, window_params = [{pipeline_mode = #tpu.pipeline_mode<synchronous>, transform_indices = @transform_0, window_bounds = array<i64: 128, 4>}, {transform_indices = @transform_1, window_bounds = array<i64: 1, 4, 256>}, {transform_indices = @transform_2, window_bounds = array<i64: 1, 256, 256>}]} {
    %c0 = arith.constant 0 : index
    %c0_0 = arith.constant 0 : index
    %0 = vector.load %arg2[%c0, %c0_0] : memref<128x4xf32, #tpu.memory_space<vmem>>, vector<128x4xf32>
    %c0_1 = arith.constant 0 : index
    %c0_2 = arith.constant 0 : index
    %c0_3 = arith.constant 0 : index
    %1 = vector.load %arg3[%c0_1, %c0_2, %c0_3] : memref<1x4x256xf32, #tpu.memory_space<vmem>>, vector<1x4x256xf32>
    %2 = vector.shape_cast %1 : vector<1x4x256xf32> to vector<4x256xf32>
    %cst = arith.constant dense<0.000000e+00> : vector<128x256xf32>
    %3 = tpu.matmul %0, %2, %cst {dimension_numbers = #tpu.dot_dimension_numbers<[1], [0], [0], [1], [0, 0, 1, 1], [], []>} : vector<128x4xf32>, vector<4x256xf32>, vector<128x256xf32> -> vector<128x256xf32>
    %4 = math.sin %3 : vector<128x256xf32>
    %c0_4 = arith.constant 0 : index
    %c0_5 = arith.constant 0 : index
    %c0_6 = arith.constant 0 : index
    %5 = vector.load %arg4[%c0_4, %c0_5, %c0_6] : memref<1x256x256xf32, #tpu.memory_space<vmem>>, vector<1x128x256xf32>
    %6 = vector.shape_cast %5 : vector<1x128x256xf32> to vector<128x256xf32>
    %7 = vector.shape_cast %4 : vector<128x256xf32> to vector<1x128x256xf32>
    tpu.vector_store %arg4[%c0_4, %c0_5, %c0_6], %7 {strides = array<i32>} : memref<1x256x256xf32, #tpu.memory_space<vmem>>, vector<1x128x256xf32>,
    %8 = math.cos %3 : vector<128x256xf32>
    %c0_7 = arith.constant 0 : index
    %c128 = arith.constant 128 : index
    %c0_8 = arith.constant 0 : index
    %9 = vector.load %arg4[%c0_7, %c128, %c0_8] : memref<1x256x256xf32, #tpu.memory_space<vmem>>, vector<1x128x256xf32>
    %10 = vector.shape_cast %9 : vector<1x128x256xf32> to vector<128x256xf32>
    %11 = vector.shape_cast %8 : vector<128x256xf32> to vector<1x128x256xf32>
    tpu.vector_store %arg4[%c0_7, %c128, %c0_8], %11 {strides = array<i32>} : memref<1x256x256xf32, #tpu.memory_space<vmem>>, vector<1x128x256xf32>,
    return
  }
  func.func @transform_0(%arg0: i32, %arg1: i32) -> (i32, i32) {
    %c0_i32 = arith.constant 0 : i32
    %c0_i32_0 = arith.constant 0 : i32
    %c0_i32_1 = arith.constant 0 : i32
    return %c0_i32, %c0_i32_0 : i32, i32
  }
  func.func @transform_1(%arg0: i32, %arg1: i32) -> (i32, i32, i32) {
    %c0_i32 = arith.constant 0 : i32
    %c0_i32_0 = arith.constant 0 : i32
    return %arg0, %c0_i32, %arg1 : i32, i32, i32
  }
  func.func @transform_2(%arg0: i32, %arg1: i32) -> (i32, i32, i32) {
    %c0_i32 = arith.constant 0 : i32
    %c0_i32_0 = arith.constant 0 : i32
    return %arg0, %c0_i32, %arg1 : i32, i32, i32
  }
}

</mosaic_0001>

<llo_original>
// kernel: tpu_custom_call.1
$region0: #{tpu_custom_call.1}
  #allocation0 [shape = 'u32[]', space=smem, size = 0x4, offset = 0x4, fixed_abs, tag = 'smem constant byte address 0x4 - core index']
  #allocation1 [shape = 'u32[72,128]{1,0:T(1,128)}', space=vmem, size = 0x9000, scoped, tag = 'internal scratch']
  %s0 = inlined_call_operand.vmem [shape: f32[128,4], index: 0, kind: input, shape index: {}]
  %s1 = inlined_call_operand.vmem [shape: f32[2,4,256], index: 1, kind: input, shape index: {}]
  %s2 = inlined_call_operand.hbm [shape: f32[2,256,256], index: 2, kind: output, shape index: {}]
  %s3 = sld [smem:[#allocation0]]
  $region41: #{tpu_custom_call.1} parent=0
    _
  %s5 = ssub.s32 1, %s3
  %s6 = scalar_select 0, %s5, %s3
  $region1: #{tpu_custom_call.1} parent=0
    #allocation2 [shape = 'u8[524288]{0}', space=vmem, size = 0x80000, scoped, tag = 'output window, operand 0']
    #allocation3 [shape = 's32[2]{0}', space=sflag, size = 0x8, scoped, tag = 'scoped memory for tpu_custom_call.1']
    %7 = vsyncpa [#allocation3], 0
    %s8 = scalar_lea.sflag [#allocation3], 1
    %9 = vsyncpa %s8, 0
    loop: start=0, step=1, limit=4
    $region2: #{tpu_custom_call.1} parent=1 // loop_pre_header
      _
    $region3: #{tpu_custom_call.1} parent=1 // loop_header
      %s11 = sphi 0, %s15
      %p12 = scmp.ge.s32.totalorder %s11, 4
      %s18 = sphi 0, %s30
      %s19 = sphi 0, %s26
      %s20 = sphi 0, %s18
      %s21 = sphi 0, %s19
      %s22 = sphi 0, %s20
      %s23 = sphi 0, %s21
      %s31 = sphi 0, %s31
      %s33 = sphi 0, %s31
      %s34 = sphi 0, %s33
      %s48 = sphi 0, %s34
      %s56 = sphi 0, %s58
      %s59 = sphi 0, %s56
      %s60 = sphi 0, %s59
      %s76 = sphi 0, %s60
      %s84 = sphi 0, %s86
      %s87 = sphi 0, %s84
      %s88 = sphi 0, %s87
      %s104 = sphi 0, %s88
    $region4: #{tpu_custom_call.1} parent=1 // loop_header_branch
      %14 = sbr.rel (%p12) target = $region8
    $region5: #{tpu_custom_call.1} parent=1 // loop_body
      %s16 = ssub.s32 %s11, 1
      %s17 = ssub.s32 %s11, 2
      %s24 = sadd.s32 1, %s19
      %p25 = scmp.ge.s32.totalorder %s24, 1
      %s26 = scalar_select %p25, 0, %s24
      %s27 = sadd.s32 1, %s18
      %s28 = scalar_select %p25, %s27, %s18
      %p29 = scmp.ge.s32.totalorder %s28, 2
      %s30 = scalar_select %p29, 0, %s28
      %s32 = sadd.s32 %s31, 1
      %p35 = scmp.eq.s32.totalorder %s11, 1
      %p36 = scmp.ne.s32.totalorder %s31, %s33
      %p37 = scmp.eq.s32.totalorder %s11, 0
      %p38 = por %p36, %p37
      %p39 = scmp.ne.s32.totalorder %s31, %s33
      %p40 = scmp.eq.s32.totalorder %s16, 1
      %p41 = por %p39, %p40
      %p42 = scmp.ne.s32.totalorder %s33, %s34
      %p43 = scmp.eq.s32.totalorder %s16, 0
      %p44 = por %p42, %p43
      %p45 = scmp.ne.s32.totalorder %s33, %s34
      %p46 = scmp.eq.s32.totalorder %s17, 1
      %p47 = por %p45, %p46
      %p49 = scmp.ne.s32.totalorder %s34, %s48
      %p50 = scmp.eq.s32.totalorder %s17, 0
      %p51 = por %p49, %p50
      %s52 = ssub.s32 %s18, %s30
      %s53 = ssub.s32 %s19, %s26
      %s54 = sor.u32 %s52, %s53
      %p55 = scmp.eq.s32.totalorder %s54, 0
      %s57 = sadd.s32 %s56, 1
      %s58 = scalar_select %p55, %s56, %s57
      %p61 = pneg %p55
      %p62 = scmp.eq.s32.totalorder %s11, 1
      %p63 = por %p61, %p62
      %p64 = scmp.ne.s32.totalorder %s56, %s59
      %p65 = scmp.eq.s32.totalorder %s11, 0
      %p66 = por %p64, %p65
      %p67 = scmp.ne.s32.totalorder %s56, %s59
      %p68 = scmp.eq.s32.totalorder %s16, 1
      %p69 = por %p67, %p68
      %p70 = scmp.ne.s32.totalorder %s59, %s60
      %p71 = scmp.eq.s32.totalorder %s16, 0
      %p72 = por %p70, %p71
      %p73 = scmp.ne.s32.totalorder %s59, %s60
      %p74 = scmp.eq.s32.totalorder %s17, 1
      %p75 = por %p73, %p74
      %p77 = scmp.ne.s32.totalorder %s60, %s76
      %p78 = scmp.eq.s32.totalorder %s17, 0
      %p79 = por %p77, %p78
      %s80 = ssub.s32 %s18, %s30
      %s81 = ssub.s32 %s19, %s26
      %s82 = sor.u32 %s80, %s81
      %p83 = scmp.eq.s32.totalorder %s82, 0
      %s85 = sadd.s32 %s84, 1
      %s86 = scalar_select %p83, %s84, %s85
      %p89 = pneg %p83
      %p90 = scmp.eq.s32.totalorder %s11, 1
      %p91 = por %p89, %p90
      %p92 = scmp.ne.s32.totalorder %s84, %s87
      %p93 = scmp.eq.s32.totalorder %s11, 0
      %p94 = por %p92, %p93
      %p95 = scmp.ne.s32.totalorder %s84, %s87
      %p96 = scmp.eq.s32.totalorder %s16, 1
      %p97 = por %p95, %p96
      %p98 = scmp.ne.s32.totalorder %s87, %s88
      %p99 = scmp.eq.s32.totalorder %s16, 0
      %p100 = por %p98, %p99
      %p101 = scmp.ne.s32.totalorder %s87, %s88
      %p102 = scmp.eq.s32.totalorder %s17, 1
      %p103 = por %p101, %p102
      %p105 = scmp.ne.s32.totalorder %s88, %s104
      %p106 = scmp.eq.s32.totalorder %s17, 0
      %p107 = por %p105, %p106
      %p108 = scmp.le.s32.totalorder 1, %s11
      %p109 = scmp.lt.s32.totalorder %s11, 3
      %p110 = pnand %p108, %p109
      %p111 = pneg %p110
      // Predicated region
      $region9: #{tpu_custom_call.1} parent=5 // pred_check
        _
      $region10: #{tpu_custom_call.1} parent=5 // pred_check_branch
        %113 = sbr.rel (%p110) target = $region12
      $region11: #{tpu_custom_call.1} parent=5 // pred_region
        %s114 = ssub.s32 %s11, 1
        // Predicated region
        $region13: #{tpu_custom_call.1} parent=11 // pred_check
          %p115 = pneg %p44
        $region14: #{tpu_custom_call.1} parent=11 // pred_check_branch
          %117 = sbr.rel (%p115) target = $region16
        $region15: #{tpu_custom_call.1} parent=11 // pred_region
          _
        $region16: #{tpu_custom_call.1} parent=11 // pred_fallthru
          _
      $region12: #{tpu_custom_call.1} parent=5 // pred_fallthru
        _
      %p118 = scmp.lt.s32.totalorder %s11, 2
      // Predicated region
      $region17: #{tpu_custom_call.1} parent=5 // pred_check
        %p119 = pneg %p118
      $region18: #{tpu_custom_call.1} parent=5 // pred_check_branch
        %121 = sbr.rel (%p119) target = $region20
      $region19: #{tpu_custom_call.1} parent=5 // pred_region
        // Predicated region
        $region21: #{tpu_custom_call.1} parent=19 // pred_check
          %p122 = pneg %p66
        $region22: #{tpu_custom_call.1} parent=19 // pred_check_branch
          %124 = sbr.rel (%p122) target = $region24
        $region23: #{tpu_custom_call.1} parent=19 // pred_region
          %s125 = smul.u32 2, %s19
          %p126 = scmp.lt.s32.totalorder %s18, 1
          %s127 = scalar_select %p126, %s18, 1
          %p128 = scmp.lt.s32.totalorder %s125, 1
          %s129 = scalar_select %p128, %s125, 1
          %s130 = smul.addr %s127, 2
          %s131 = sadd.s32 %s129, %s130
          %s132 = smul.addr %s131, 4
          %s133 = scalar_lea.vmem %s1, %s132
          %s134 = smul.u32 2, %s19
        $region24: #{tpu_custom_call.1} parent=19 // pred_fallthru
          _
      $region20: #{tpu_custom_call.1} parent=5 // pred_fallthru
        _
      %p135 = scmp.le.s32.totalorder 1, %s11
      %p136 = scmp.lt.s32.totalorder %s11, 3
      %p137 = pnand %p135, %p136
      %p138 = pneg %p137
      // Predicated region
      $region25: #{tpu_custom_call.1} parent=5 // pred_check
        _
      $region26: #{tpu_custom_call.1} parent=5 // pred_check_branch
        %140 = sbr.rel (%p137) target = $region28
      $region27: #{tpu_custom_call.1} parent=5 // pred_region
        %s141 = ssub.s32 %s11, 1
        %p142 = pneg %p44
        %p143 = pneg %p41
        %s144 = smul.u32 2, %s21
        %p145 = scmp.lt.s32.totalorder %s20, 1
        %s146 = scalar_select %p145, %s20, 1
        %p147 = scmp.lt.s32.totalorder %s144, 1
        %s148 = scalar_select %p147, %s144, 1
        %s149 = smul.addr %s146, 2
        %s150 = sadd.s32 %s148, %s149
        %s151 = smul.addr %s150, 4
        %s152 = scalar_lea.vmem %s1, %s151
        %p153 = pneg %p72
        %p154 = pneg %p69
        %p155 = pneg %p100
        %p156 = pneg %p97
        %s157 = sand.u32 %s87, 1
        %s158 = scalar_lea.sflag [#allocation3], %s157
        %s159 = sand.u32 %s87, 1
        %s160 = smul.addr %s159, 512
        %s161 = scalar_lea.vmem [#allocation2], %s160
        %s162 = smul.u32 2, %s21
        %p163 = scmp.lt.s32.totalorder %s20, 1
        %s164 = scalar_select %p163, %s20, 1
        %p165 = scmp.lt.s32.totalorder %s162, 1
        %s166 = scalar_select %p165, %s162, 1
        %s167 = smul.addr %s164, 2
        %s168 = sadd.s32 %s166, %s167
        %s169 = smul.addr %s168, 4
        %s170 = scalar_lea.vmem %s1, %s169
        %s171 = smul.u32 2, %s21
        %s172 = smul.u32 2, %s21
        %v173 = vld [vmem:[%s0] sm:$0xff]
        %v174 = vld [vmem:[%s0 + $0x8] sm:$0xff]
        %v175 = vld [vmem:[%s0 + $0x10] sm:$0xff]
        %v176 = vld [vmem:[%s0 + $0x18] sm:$0xff]
        %v177 = vld [vmem:[%s0 + $0x20] sm:$0xff]
        %v178 = vld [vmem:[%s0 + $0x28] sm:$0xff]
        %v179 = vld [vmem:[%s0 + $0x30] sm:$0xff]
        %v180 = vld [vmem:[%s0 + $0x38] sm:$0xff]
        %v181 = vld [vmem:[%s0 + $0x40] sm:$0xff]
        %v182 = vld [vmem:[%s0 + $0x48] sm:$0xff]
        %v183 = vld [vmem:[%s0 + $0x50] sm:$0xff]
        %v184 = vld [vmem:[%s0 + $0x58] sm:$0xff]
        %v185 = vld [vmem:[%s0 + $0x60] sm:$0xff]
        %v186 = vld [vmem:[%s0 + $0x68] sm:$0xff]
        %v187 = vld [vmem:[%s0 + $0x70] sm:$0xff]
        %v188 = vld [vmem:[%s0 + $0x78] sm:$0xff]
        %v189 = vld [vmem:[%s170] sm:$0xff]
        %191 = vst [vmem:[#allocation1] ss:$2 sm:$0xff] %v189
        %v192 = vld.sshfl [vmem:[#allocation1] sm:$0xff pattern:$0x75316420]
        %v193 = vld.sshfl [vmem:[#allocation1 + $0x8] sm:$0xff pattern:$0x75316420]
        %vm194 = vcmask 31744
        %v196 = vsel %vm194, %v173, 0
        %v199 = vsel %vm194, %v174, 0
        %v202 = vsel %vm194, %v175, 0
        %v205 = vsel %vm194, %v176, 0
        %v208 = vsel %vm194, %v177, 0
        %v211 = vsel %vm194, %v178, 0
        %v214 = vsel %vm194, %v179, 0
        %v217 = vsel %vm194, %v180, 0
        %v220 = vsel %vm194, %v181, 0
        %v223 = vsel %vm194, %v182, 0
        %v226 = vsel %vm194, %v183, 0
        %v229 = vsel %vm194, %v184, 0
        %v232 = vsel %vm194, %v185, 0
        %v235 = vsel %vm194, %v186, 0
        %v238 = vsel %vm194, %v187, 0
        %v241 = vsel %vm194, %v188, 0
        %vm243 = vcmask 1043456
        %v244 = vsel %vm243, %v192, 0
        %v246 = vsel %vm243, %v193, 0
        %248 = vmatpush.msra.mxu0 0.0
        %249 = vmatpush.msra.mxu0 0.0
        %250 = vmatpush.msra.mxu0 0.0
        %251 = vmatpush.msra.mxu0 0.0
        %252 = vmatpush.msra.mxu0 0.0
        %253 = vmatpush.msra.mxu0 0.0
        %254 = vmatpush.msra.mxu0 0.0
        %255 = vmatpush.msra.mxu0 0.0
        %256 = vmatpush.msra.mxu0 0.0
        %257 = vmatpush.msra.mxu0 0.0
        %258 = vmatpush.msra.mxu0 0.0
        %259 = vmatpush.msra.mxu0 0.0
        %260 = vmatpush.msra.mxu0 0.0
        %261 = vmatpush.msra.mxu0 0.0
        %262 = vmatpush.msra.mxu0 0.0
        %263 = vmatpush.msra.mxu0 %v244
        %264 = vmatmul.f32.gmra.mxu0 %v196
        %v265 = vpop.f32.mrf.mxu0
        %v266 = vadd.f32 0.0, %v265
        %267 = vmatmul.f32.gmra.mxu0 %v199
        %v268 = vpop.f32.mrf.mxu0
        %v269 = vadd.f32 0.0, %v268
        %270 = vmatmul.f32.gmra.mxu0 %v202
        %v271 = vpop.f32.mrf.mxu0
        %v272 = vadd.f32 0.0, %v271
        %273 = vmatmul.f32.gmra.mxu0 %v205
        %v274 = vpop.f32.mrf.mxu0
        %v275 = vadd.f32 0.0, %v274
        %276 = vmatmul.f32.gmra.mxu0 %v208
        %v277 = vpop.f32.mrf.mxu0
        %v278 = vadd.f32 0.0, %v277
        %279 = vmatmul.f32.gmra.mxu0 %v211
        %v280 = vpop.f32.mrf.mxu0
        %v281 = vadd.f32 0.0, %v280
        %282 = vmatmul.f32.gmra.mxu0 %v214
        %v283 = vpop.f32.mrf.mxu0
        %v284 = vadd.f32 0.0, %v283
        %285 = vmatmul.f32.gmra.mxu0 %v217
        %v286 = vpop.f32.mrf.mxu0
        %v287 = vadd.f32 0.0, %v286
        %288 = vmatmul.f32.gmra.mxu0 %v220
        %v289 = vpop.f32.mrf.mxu0
        %v290 = vadd.f32 0.0, %v289
        %291 = vmatmul.f32.gmra.mxu0 %v223
        %v292 = vpop.f32.mrf.mxu0
        %v293 = vadd.f32 0.0, %v292
        %294 = vmatmul.f32.gmra.mxu0 %v226
        %v295 = vpop.f32.mrf.mxu0
        %v296 = vadd.f32 0.0, %v295
        %297 = vmatmul.f32.gmra.mxu0 %v229
        %v298 = vpop.f32.mrf.mxu0
        %v299 = vadd.f32 0.0, %v298
        %300 = vmatmul.f32.gmra.mxu0 %v232
        %v301 = vpop.f32.mrf.mxu0
        %v302 = vadd.f32 0.0, %v301
        %303 = vmatmul.f32.gmra.mxu0 %v235
        %v304 = vpop.f32.mrf.mxu0
        %v305 = vadd.f32 0.0, %v304
        %306 = vmatmul.f32.gmra.mxu0 %v238
        %v307 = vpop.f32.mrf.mxu0
        %v308 = vadd.f32 0.0, %v307
        %309 = vmatmul.f32.gmra.mxu0 %v241
        %v310 = vpop.f32.mrf.mxu0
        %v311 = vadd.f32 0.0, %v310
        %312 = vdwg.mxu0
        %313 = vmatpush.msra.mxu0 0.0
        %314 = vmatpush.msra.mxu0 0.0
        %315 = vmatpush.msra.mxu0 0.0
        %316 = vmatpush.msra.mxu0 0.0
        %317 = vmatpush.msra.mxu0 0.0
        %318 = vmatpush.msra.mxu0 0.0
        %319 = vmatpush.msra.mxu0 0.0
        %320 = vmatpush.msra.mxu0 0.0
        %321 = vmatpush.msra.mxu0 0.0
        %322 = vmatpush.msra.mxu0 0.0
        %323 = vmatpush.msra.mxu0 0.0
        %324 = vmatpush.msra.mxu0 0.0
        %325 = vmatpush.msra.mxu0 0.0
        %326 = vmatpush.msra.mxu0 0.0
        %327 = vmatpush.msra.mxu0 0.0
        %328 = vmatpush.msra.mxu0 %v246
        %329 = vmatmul.f32.gmra.mxu0 %v196
        %v330 = vpop.f32.mrf.mxu0
        %v331 = vadd.f32 0.0, %v330
        %332 = vmatmul.f32.gmra.mxu0 %v199
        %v333 = vpop.f32.mrf.mxu0
        %v334 = vadd.f32 0.0, %v333
        %335 = vmatmul.f32.gmra.mxu0 %v202
        %v336 = vpop.f32.mrf.mxu0
        %v337 = vadd.f32 0.0, %v336
        %338 = vmatmul.f32.gmra.mxu0 %v205
        %v339 = vpop.f32.mrf.mxu0
        %v340 = vadd.f32 0.0, %v339
        %341 = vmatmul.f32.gmra.mxu0 %v208
        %v342 = vpop.f32.mrf.mxu0
        %v343 = vadd.f32 0.0, %v342
        %344 = vmatmul.f32.gmra.mxu0 %v211
        %v345 = vpop.f32.mrf.mxu0
        %v346 = vadd.f32 0.0, %v345
        %347 = vmatmul.f32.gmra.mxu0 %v214
        %v348 = vpop.f32.mrf.mxu0
        %v349 = vadd.f32 0.0, %v348
        %350 = vmatmul.f32.gmra.mxu0 %v217
        %v351 = vpop.f32.mrf.mxu0
        %v352 = vadd.f32 0.0, %v351
        %353 = vmatmul.f32.gmra.mxu0 %v220
        %v354 = vpop.f32.mrf.mxu0
        %v355 = vadd.f32 0.0, %v354
        %356 = vmatmul.f32.gmra.mxu0 %v223
        %v357 = vpop.f32.mrf.mxu0
        %v358 = vadd.f32 0.0, %v357
        %359 = vmatmul.f32.gmra.mxu0 %v226
        %v360 = vpop.f32.mrf.mxu0
        %v361 = vadd.f32 0.0, %v360
        %362 = vmatmul.f32.gmra.mxu0 %v229
        %v363 = vpop.f32.mrf.mxu0
        %v364 = vadd.f32 0.0, %v363
        %365 = vmatmul.f32.gmra.mxu0 %v232
        %v366 = vpop.f32.mrf.mxu0
        %v367 = vadd.f32 0.0, %v366
        %368 = vmatmul.f32.gmra.mxu0 %v235
        %v369 = vpop.f32.mrf.mxu0
        %v370 = vadd.f32 0.0, %v369
        %371 = vmatmul.f32.gmra.mxu0 %v238
        %v372 = vpop.f32.mrf.mxu0
        %v373 = vadd.f32 0.0, %v372
        %374 = vmatmul.f32.gmra.mxu0 %v241
        %v375 = vpop.f32.mrf.mxu0
        %v376 = vadd.f32 0.0, %v375
        %377 = vdwg.mxu0
        %v378 = vand.u32 2147483647, %v266
        %vm379 = vcmp.le.f32.partialorder %v378, 0.7853982
        %vm380 = vcmp.lt.s32.totalorder %v266, 0
        %v381 = vand.u32 %v266, 2139095040
        %v382 = vshrl.u32 %v381, 23
        %v383 = vsub.s32 %v382, 127
        %v384 = vand.u32 2147483647, %v266
        %v385 = vand.u32 %v384, 8388607
        %v386 = vor.u32 %v385, 8388608
        %v387 = vsub.s32 0, %v386
        %v388 = vadd.s32 %v383, 1
        %vm389 = vcmp.gt.s32.totalorder %v388, 0
        %v390 = vsel %vm389, %v388, 0
        %v391 = vshrl.u32 %v390, 5
        %v392 = vand.u32 %v390, 31
        %v393 = vsub.s32 32, %v392
        %v394 = vshrl.u32 683565275, %v393
        %v395 = vshll.u32 683565275, %v392
        %v396 = vshrl.u32 2475754826, %v393
        %v397 = vor.u32 %v395, %v396
        %v398 = vshll.u32 2475754826, %v392
        %v399 = vshrl.u32 2131351028, %v393
        %v400 = vor.u32 %v398, %v399
        %v401 = vshll.u32 2131351028, %v392
        %v402 = vshrl.u32 2102212464, %v393
        %v403 = vor.u32 %v401, %v402
        %v404 = vshll.u32 2102212464, %v392
        %v405 = vshrl.u32 920167782, %v393
        %v406 = vor.u32 %v404, %v405
        %v407 = vshll.u32 920167782, %v392
        %v408 = vshrl.u32 1326507024, %v393
        %v409 = vor.u32 %v407, %v408
        %vm410 = vcmp.lt.s32.totalorder %v391, 1
        %vm411 = vcmp.lt.s32.totalorder %v391, 2
        %vm412 = vcmp.lt.s32.totalorder %v391, 3
        %vm413 = vcmp.lt.s32.totalorder %v391, 4
        %v414 = vsel %vm410, %v394, %v397
        %v415 = vsel %vm413, %v403, 2102212464
        %v416 = vsel %vm412, %v400, %v415
        %v417 = vsel %vm411, %v414, %v416
        %v418 = vsel %vm410, %v397, %v400
        %v419 = vsel %vm413, %v406, 920167782
        %v420 = vsel %vm412, %v403, %v419
        %v421 = vsel %vm411, %v418, %v420
        %v422 = vsel %vm410, %v400, %v403
        %v423 = vsel %vm413, %v409, 1326507024
        %v424 = vsel %vm412, %v406, %v423
        %v425 = vsel %vm411, %v422, %v424
        %v426 = vshll.u32 %v386, 8
        %v427 = vand.u32 %v426, 65535
        %v428 = vshrl.u32 %v426, 16
        %v429 = vand.u32 %v425, 65535
        %v430 = vshrl.u32 %v425, 16
        %v431 = vmul.u32 %v427, %v429
        %v432 = vmul.u32 %v427, %v430
        %v433 = vmul.u32 %v428, %v429
        %v434 = vmul.u32 %v428, %v430
        %v435 = vshll.u32 %v432, 16
        %v436 = vshrl.u32 %v432, 16
        %v437 = vshll.u32 %v433, 16
        %v438 = vshrl.u32 %v433, 16
        %vm439 = vc.u32 %v431, %v435
        %v440 = vsel %vm439, 1, 0
        %v441 = vadd.s32 %v431, %v435
        %v442 = vadd.s32 %v434, %v440
        %vm443 = vc.u32 %v441, %v437
        %v444 = vsel %vm443, 1, 0
        %v445 = vadd.s32 %v441, %v437
        %v446 = vadd.s32 %v442, %v444
        %v447 = vadd.s32 %v446, %v436
        %v448 = vadd.s32 %v447, %v438
        %v449 = vand.u32 %v426, 65535
        %v450 = vshrl.u32 %v426, 16
        %v451 = vand.u32 %v421, 65535
        %v452 = vshrl.u32 %v421, 16
        %v453 = vmul.u32 %v449, %v451
        %v454 = vmul.u32 %v449, %v452
        %v455 = vmul.u32 %v450, %v451
        %v456 = vmul.u32 %v450, %v452
        %v457 = vshll.u32 %v454, 16
        %v458 = vshrl.u32 %v454, 16
        %v459 = vshll.u32 %v455, 16
        %v460 = vshrl.u32 %v455, 16
        %vm461 = vc.u32 %v453, %v457
        %v462 = vsel %vm461, 1, 0
        %v463 = vadd.s32 %v453, %v457
        %v464 = vadd.s32 %v456, %v462
        %vm465 = vc.u32 %v463, %v459
        %v466 = vsel %vm465, 1, 0
        %v467 = vadd.s32 %v463, %v459
        %v468 = vadd.s32 %v464, %v466
        %v469 = vadd.s32 %v468, %v458
        %v470 = vadd.s32 %v469, %v460
        %v471 = vmul.u32 %v426, %v417
        %v472 = vadd.s32 %v448, %v467
        %vm473 = vc.u32 %v448, %v467
        %v474 = vadd.s32 %v470, 1
        %v475 = vsel %vm473, %v474, %v470
        %v476 = vadd.s32 %v471, %v475
        %v477 = vadd.s32 %v476, 536870912
        %v478 = vshrl.u32 %v477, 30
        %v479 = vshll.u32 %v478, 30
        %v480 = vsub.s32 %v476, %v479
        %vm481 = vcmp.lt.s32.totalorder %v480, 0
        %v482 = vsub.s32 0, %v480
        %v483 = vsel %vm481, %v482, %v480
        %v484 = vclz %v483
        %v485 = vsub.s32 %v484, 2
        %vm486 = vcmp.gt.s32.totalorder 0, %v485
        %v487 = vsel %vm486, 0, %v485
        %v488 = vsub.s32 32, %v487
        %v489 = vshll.u32 %v480, %v487
        %v490 = vshrl.u32 %v472, %v488
        %v491 = vor.u32 %v489, %v490
        %v492 = vsub.s32 4294967266, %v487
        %v493 = vadd.s32 %v492, 127
        %v494 = vshll.u32 %v493, 23
        %v495 = vor.u32 4788187, %v494
        %v496 = vand.u32 2147483647, %v495
        %v498 = vcvt.s32.f32 %v491
        %v499 = vmul.f32 %v498, %v496
        %v500 = vxor.u32 %v499, 2147483648
        %v501 = vsel %vm380, %v500, %v499
        %v502 = vsub.s32 4, %v478
        %v503 = vsel %vm380, %v502, %v478
        %v504 = vsel %vm379, %v266, %v501
        %v505 = vsel %vm379, 0, %v503
        %v506 = vmul.f32 %v504, %v504
        %v507 = vmul.f32 %v506, -0.001358992
        %v508 = vadd.f32 %v507, 0.041655596
        %v509 = vmul.f32 %v506, %v508
        %v510 = vadd.f32 %v509, -0.4999988
        %v511 = vmul.f32 %v506, %v510
        %v512 = vadd.f32 1.0, %v511
        %v513 = vmul.f32 %v504, %v504
        %v514 = vmul.f32 %v513, -0.00019511016
        %v515 = vadd.f32 %v514, 0.008332121
        %v516 = vmul.f32 %v513, %v515
        %v517 = vadd.f32 %v516, -0.16666654
        %v518 = vmul.f32 %v513, %v517
        %v519 = vadd.f32 %v518, 1.0
        %v520 = vmul.f32 %v519, %v504
        %vm521 = vweird.f32 %v266
        %v522 = vadd.s32 %v505, 3
        %v523 = vand.u32 %v522, 3
        %vm524 = vcmp.lt.s32.totalorder %v523, 2
        %vm525 = vcmp.eq.s32.totalorder %v523, 0
        %v526 = vxor.u32 %v520, 2147483648
        %v527 = vsel %vm525, %v512, %v526
        %vm528 = vcmp.eq.s32.totalorder %v523, 2
        %v529 = vxor.u32 %v512, 2147483648
        %v530 = vsel %vm528, %v529, %v520
        %v531 = vsel %vm524, %v527, %v530
        %v532 = vsel %vm521, nan, %v531
        %v533 = vand.u32 2147483647, %v331
        %vm534 = vcmp.le.f32.partialorder %v533, 0.7853982
        %vm535 = vcmp.lt.s32.totalorder %v331, 0
        %v536 = vand.u32 %v331, 2139095040
        %v537 = vshrl.u32 %v536, 23
        %v538 = vsub.s32 %v537, 127
        %v539 = vand.u32 2147483647, %v331
        %v540 = vand.u32 %v539, 8388607
        %v541 = vor.u32 %v540, 8388608
        %v542 = vsub.s32 0, %v541
        %v543 = vadd.s32 %v538, 1
        %vm544 = vcmp.gt.s32.totalorder %v543, 0
        %v545 = vsel %vm544, %v543, 0
        %v546 = vshrl.u32 %v545, 5
        %v547 = vand.u32 %v545, 31
        %v548 = vsub.s32 32, %v547
        %v549 = vshrl.u32 683565275, %v548
        %v550 = vshll.u32 683565275, %v547
        %v551 = vshrl.u32 2475754826, %v548
        %v552 = vor.u32 %v550, %v551
        %v553 = vshll.u32 2475754826, %v547
        %v554 = vshrl.u32 2131351028, %v548
        %v555 = vor.u32 %v553, %v554
        %v556 = vshll.u32 2131351028, %v547
        %v557 = vshrl.u32 2102212464, %v548
        %v558 = vor.u32 %v556, %v557
        %v559 = vshll.u32 2102212464, %v547
        %v560 = vshrl.u32 920167782, %v548
        %v561 = vor.u32 %v559, %v560
        %v562 = vshll.u32 920167782, %v547
        %v563 = vshrl.u32 1326507024, %v548
        %v564 = vor.u32 %v562, %v563
        %vm565 = vcmp.lt.s32.totalorder %v546, 1
        %vm566 = vcmp.lt.s32.totalorder %v546, 2
        %vm567 = vcmp.lt.s32.totalorder %v546, 3
        %vm568 = vcmp.lt.s32.totalorder %v546, 4
        %v569 = vsel %vm565, %v549, %v552
        %v570 = vsel %vm568, %v558, 2102212464
        %v571 = vsel %vm567, %v555, %v570
        %v572 = vsel %vm566, %v569, %v571
        %v573 = vsel %vm565, %v552, %v555
        %v574 = vsel %vm568, %v561, 920167782
        %v575 = vsel %vm567, %v558, %v574
        %v576 = vsel %vm566, %v573, %v575
        %v577 = vsel %vm565, %v555, %v558
        %v578 = vsel %vm568, %v564, 1326507024
        %v579 = vsel %vm567, %v561, %v578
        %v580 = vsel %vm566, %v577, %v579
        %v581 = vshll.u32 %v541, 8
        %v582 = vand.u32 %v581, 65535
        %v583 = vshrl.u32 %v581, 16
        %v584 = vand.u32 %v580, 65535
        %v585 = vshrl.u32 %v580, 16
        %v586 = vmul.u32 %v582, %v584
        %v587 = vmul.u32 %v582, %v585
        %v588 = vmul.u32 %v583, %v584
        %v589 = vmul.u32 %v583, %v585
        %v590 = vshll.u32 %v587, 16
        %v591 = vshrl.u32 %v587, 16
        %v592 = vshll.u32 %v588, 16
        %v593 = vshrl.u32 %v588, 16
        %vm594 = vc.u32 %v586, %v590
        %v595 = vsel %vm594, 1, 0
        %v596 = vadd.s32 %v586, %v590
        %v597 = vadd.s32 %v589, %v595
        %vm598 = vc.u32 %v596, %v592
        %v599 = vsel %vm598, 1, 0
        %v600 = vadd.s32 %v596, %v592
        %v601 = vadd.s32 %v597, %v599
        %v602 = vadd.s32 %v601, %v591
        %v603 = vadd.s32 %v602, %v593
        %v604 = vand.u32 %v581, 65535
        %v605 = vshrl.u32 %v581, 16
        %v606 = vand.u32 %v576, 65535
        %v607 = vshrl.u32 %v576, 16
        %v608 = vmul.u32 %v604, %v606
        %v609 = vmul.u32 %v604, %v607
        %v610 = vmul.u32 %v605, %v606
        %v611 = vmul.u32 %v605, %v607
        %v612 = vshll.u32 %v609, 16
        %v613 = vshrl.u32 %v609, 16
        %v614 = vshll.u32 %v610, 16
        %v615 = vshrl.u32 %v610, 16
        %vm616 = vc.u32 %v608, %v612
        %v617 = vsel %vm616, 1, 0
        %v618 = vadd.s32 %v608, %v612
        %v619 = vadd.s32 %v611, %v617
        %vm620 = vc.u32 %v618, %v614
        %v621 = vsel %vm620, 1, 0
        %v622 = vadd.s32 %v618, %v614
        %v623 = vadd.s32 %v619, %v621
        %v624 = vadd.s32 %v623, %v613
        %v625 = vadd.s32 %v624, %v615
        %v626 = vmul.u32 %v581, %v572
        %v627 = vadd.s32 %v603, %v622
        %vm628 = vc.u32 %v603, %v622
        %v629 = vadd.s32 %v625, 1
        %v630 = vsel %vm628, %v629, %v625
        %v631 = vadd.s32 %v626, %v630
        %v632 = vadd.s32 %v631, 536870912
        %v633 = vshrl.u32 %v632, 30
        %v634 = vshll.u32 %v633, 30
        %v635 = vsub.s32 %v631, %v634
        %vm636 = vcmp.lt.s32.totalorder %v635, 0
        %v637 = vsub.s32 0, %v635
        %v638 = vsel %vm636, %v637, %v635
        %v639 = vclz %v638
        %v640 = vsub.s32 %v639, 2
        %vm641 = vcmp.gt.s32.totalorder 0, %v640
        %v642 = vsel %vm641, 0, %v640
        %v643 = vsub.s32 32, %v642
        %v644 = vshll.u32 %v635, %v642
        %v645 = vshrl.u32 %v627, %v643
        %v646 = vor.u32 %v644, %v645
        %v647 = vsub.s32 4294967266, %v642
        %v648 = vadd.s32 %v647, 127
        %v649 = vshll.u32 %v648, 23
        %v650 = vor.u32 4788187, %v649
        %v651 = vand.u32 2147483647, %v650
        %v653 = vcvt.s32.f32 %v646
        %v654 = vmul.f32 %v653, %v651
        %v655 = vxor.u32 %v654, 2147483648
        %v656 = vsel %vm535, %v655, %v654
        %v657 = vsub.s32 4, %v633
        %v658 = vsel %vm535, %v657, %v633
        %v659 = vsel %vm534, %v331, %v656
        %v660 = vsel %vm534, 0, %v658
        %v661 = vmul.f32 %v659, %v659
        %v662 = vmul.f32 %v661, -0.001358992
        %v663 = vadd.f32 %v662, 0.041655596
        %v664 = vmul.f32 %v661, %v663
        %v665 = vadd.f32 %v664, -0.4999988
        %v666 = vmul.f32 %v661, %v665
        %v667 = vadd.f32 1.0, %v666
        %v668 = vmul.f32 %v659, %v659
        %v669 = vmul.f32 %v668, -0.00019511016
        %v670 = vadd.f32 %v669, 0.008332121
        %v671 = vmul.f32 %v668, %v670
        %v672 = vadd.f32 %v671, -0.16666654
        %v673 = vmul.f32 %v668, %v672
        %v674 = vadd.f32 %v673, 1.0
        %v675 = vmul.f32 %v674, %v659
        %vm676 = vweird.f32 %v331
        %v677 = vadd.s32 %v660, 3
        %v678 = vand.u32 %v677, 3
        %vm679 = vcmp.lt.s32.totalorder %v678, 2
        %vm680 = vcmp.eq.s32.totalorder %v678, 0
        %v681 = vxor.u32 %v675, 2147483648
        %v682 = vsel %vm680, %v667, %v681
        %vm683 = vcmp.eq.s32.totalorder %v678, 2
        %v684 = vxor.u32 %v667, 2147483648
        %v685 = vsel %vm683, %v684, %v675
        %v686 = vsel %vm679, %v682, %v685
        %v687 = vsel %vm676, nan, %v686
        %v688 = vand.u32 2147483647, %v269
        %vm689 = vcmp.le.f32.partialorder %v688, 0.7853982
        %vm690 = vcmp.lt.s32.totalorder %v269, 0
        %v691 = vand.u32 %v269, 2139095040
        %v692 = vshrl.u32 %v691, 23
        %v693 = vsub.s32 %v692, 127
        %v694 = vand.u32 2147483647, %v269
        %v695 = vand.u32 %v694, 8388607
        %v696 = vor.u32 %v695, 8388608
        %v697 = vsub.s32 0, %v696
        %v698 = vadd.s32 %v693, 1
        %vm699 = vcmp.gt.s32.totalorder %v698, 0
        %v700 = vsel %vm699, %v698, 0
        %v701 = vshrl.u32 %v700, 5
        %v702 = vand.u32 %v700, 31
        %v703 = vsub.s32 32, %v702
        %v704 = vshrl.u32 683565275, %v703
        %v705 = vshll.u32 683565275, %v702
        %v706 = vshrl.u32 2475754826, %v703
        %v707 = vor.u32 %v705, %v706
        %v708 = vshll.u32 2475754826, %v702
        %v709 = vshrl.u32 2131351028, %v703
        %v710 = vor.u32 %v708, %v709
        %v711 = vshll.u32 2131351028, %v702
        %v712 = vshrl.u32 2102212464, %v703
        %v713 = vor.u32 %v711, %v712
        %v714 = vshll.u32 2102212464, %v702
        %v715 = vshrl.u32 920167782, %v703
        %v716 = vor.u32 %v714, %v715
        %v717 = vshll.u32 920167782, %v702
        %v718 = vshrl.u32 1326507024, %v703
        %v719 = vor.u32 %v717, %v718
        %vm720 = vcmp.lt.s32.totalorder %v701, 1
        %vm721 = vcmp.lt.s32.totalorder %v701, 2
        %vm722 = vcmp.lt.s32.totalorder %v701, 3
        %vm723 = vcmp.lt.s32.totalorder %v701, 4
        %v724 = vsel %vm720, %v704, %v707
        %v725 = vsel %vm723, %v713, 2102212464
        %v726 = vsel %vm722, %v710, %v725
        %v727 = vsel %vm721, %v724, %v726
        %v728 = vsel %vm720, %v707, %v710
        %v729 = vsel %vm723, %v716, 920167782
        %v730 = vsel %vm722, %v713, %v729
        %v731 = vsel %vm721, %v728, %v730
        %v732 = vsel %vm720, %v710, %v713
        %v733 = vsel %vm723, %v719, 1326507024
        %v734 = vsel %vm722, %v716, %v733
        %v735 = vsel %vm721, %v732, %v734
        %v736 = vshll.u32 %v696, 8
        %v737 = vand.u32 %v736, 65535
        %v738 = vshrl.u32 %v736, 16
        %v739 = vand.u32 %v735, 65535
        %v740 = vshrl.u32 %v735, 16
        %v741 = vmul.u32 %v737, %v739
        %v742 = vmul.u32 %v737, %v740
        %v743 = vmul.u32 %v738, %v739
        %v744 = vmul.u32 %v738, %v740
        %v745 = vshll.u32 %v742, 16
        %v746 = vshrl.u32 %v742, 16
        %v747 = vshll.u32 %v743, 16
        %v748 = vshrl.u32 %v743, 16
        %vm749 = vc.u32 %v741, %v745
        %v750 = vsel %vm749, 1, 0
        %v751 = vadd.s32 %v741, %v745
        %v752 = vadd.s32 %v744, %v750
        %vm753 = vc.u32 %v751, %v747
        %v754 = vsel %vm753, 1, 0
        %v755 = vadd.s32 %v751, %v747
        %v756 = vadd.s32 %v752, %v754
        %v757 = vadd.s32 %v756, %v746
        %v758 = vadd.s32 %v757, %v748
        %v759 = vand.u32 %v736, 65535
        %v760 = vshrl.u32 %v736, 16
        %v761 = vand.u32 %v731, 65535
        %v762 = vshrl.u32 %v731, 16
        %v763 = vmul.u32 %v759, %v761
        %v764 = vmul.u32 %v759, %v762
        %v765 = vmul.u32 %v760, %v761
        %v766 = vmul.u32 %v760, %v762
        %v767 = vshll.u32 %v764, 16
        %v768 = vshrl.u32 %v764, 16
        %v769 = vshll.u32 %v765, 16
        %v770 = vshrl.u32 %v765, 16
        %vm771 = vc.u32 %v763, %v767
        %v772 = vsel %vm771, 1, 0
        %v773 = vadd.s32 %v763, %v767
        %v774 = vadd.s32 %v766, %v772
        %vm775 = vc.u32 %v773, %v769
        %v776 = vsel %vm775, 1, 0
        %v777 = vadd.s32 %v773, %v769
        %v778 = vadd.s32 %v774, %v776
        %v779 = vadd.s32 %v778, %v768
        %v780 = vadd.s32 %v779, %v770
        %v781 = vmul.u32 %v736, %v727
        %v782 = vadd.s32 %v758, %v777
        %vm783 = vc.u32 %v758, %v777
        %v784 = vadd.s32 %v780, 1
        %v785 = vsel %vm783, %v784, %v780
        %v786 = vadd.s32 %v781, %v785
        %v787 = vadd.s32 %v786, 536870912
        %v788 = vshrl.u32 %v787, 30
        %v789 = vshll.u32 %v788, 30
        %v790 = vsub.s32 %v786, %v789
        %vm791 = vcmp.lt.s32.totalorder %v790, 0
        %v792 = vsub.s32 0, %v790
        %v793 = vsel %vm791, %v792, %v790
        %v794 = vclz %v793
        %v795 = vsub.s32 %v794, 2
        %vm796 = vcmp.gt.s32.totalorder 0, %v795
        %v797 = vsel %vm796, 0, %v795
        %v798 = vsub.s32 32, %v797
        %v799 = vshll.u32 %v790, %v797
        %v800 = vshrl.u32 %v782, %v798
        %v801 = vor.u32 %v799, %v800
        %v802 = vsub.s32 4294967266, %v797
        %v803 = vadd.s32 %v802, 127
        %v804 = vshll.u32 %v803, 23
        %v805 = vor.u32 4788187, %v804
        %v806 = vand.u32 2147483647, %v805
        %v808 = vcvt.s32.f32 %v801
        %v809 = vmul.f32 %v808, %v806
        %v810 = vxor.u32 %v809, 2147483648
        %v811 = vsel %vm690, %v810, %v809
        %v812 = vsub.s32 4, %v788
        %v813 = vsel %vm690, %v812, %v788
        %v814 = vsel %vm689, %v269, %v811
        %v815 = vsel %vm689, 0, %v813
        %v816 = vmul.f32 %v814, %v814
        %v817 = vmul.f32 %v816, -0.001358992
        %v818 = vadd.f32 %v817, 0.041655596
        %v819 = vmul.f32 %v816, %v818
        %v820 = vadd.f32 %v819, -0.4999988
        %v821 = vmul.f32 %v816, %v820
        %v822 = vadd.f32 1.0, %v821
        %v823 = vmul.f32 %v814, %v814
        %v824 = vmul.f32 %v823, -0.00019511016
        %v825 = vadd.f32 %v824, 0.008332121
        %v826 = vmul.f32 %v823, %v825
        %v827 = vadd.f32 %v826, -0.16666654
        %v828 = vmul.f32 %v823, %v827
        %v829 = vadd.f32 %v828, 1.0
        %v830 = vmul.f32 %v829, %v814
        %vm831 = vweird.f32 %v269
        %v832 = vadd.s32 %v815, 3
        %v833 = vand.u32 %v832, 3
        %vm834 = vcmp.lt.s32.totalorder %v833, 2
        %vm835 = vcmp.eq.s32.totalorder %v833, 0
        %v836 = vxor.u32 %v830, 2147483648
        %v837 = vsel %vm835, %v822, %v836
        %vm838 = vcmp.eq.s32.totalorder %v833, 2
        %v839 = vxor.u32 %v822, 2147483648
        %v840 = vsel %vm838, %v839, %v830
        %v841 = vsel %vm834, %v837, %v840
        %v842 = vsel %vm831, nan, %v841
        %v843 = vand.u32 2147483647, %v334
        %vm844 = vcmp.le.f32.partialorder %v843, 0.7853982
        %vm845 = vcmp.lt.s32.totalorder %v334, 0
        %v846 = vand.u32 %v334, 2139095040
        %v847 = vshrl.u32 %v846, 23
        %v848 = vsub.s32 %v847, 127
        %v849 = vand.u32 2147483647, %v334
        %v850 = vand.u32 %v849, 8388607
        %v851 = vor.u32 %v850, 8388608
        %v852 = vsub.s32 0, %v851
        %v853 = vadd.s32 %v848, 1
        %vm854 = vcmp.gt.s32.totalorder %v853, 0
        %v855 = vsel %vm854, %v853, 0
        %v856 = vshrl.u32 %v855, 5
        %v857 = vand.u32 %v855, 31
        %v858 = vsub.s32 32, %v857
        %v859 = vshrl.u32 683565275, %v858
        %v860 = vshll.u32 683565275, %v857
        %v861 = vshrl.u32 2475754826, %v858
        %v862 = vor.u32 %v860, %v861
        %v863 = vshll.u32 2475754826, %v857
        %v864 = vshrl.u32 2131351028, %v858
        %v865 = vor.u32 %v863, %v864
        %v866 = vshll.u32 2131351028, %v857
        %v867 = vshrl.u32 2102212464, %v858
        %v868 = vor.u32 %v866, %v867
        %v869 = vshll.u32 2102212464, %v857
        %v870 = vshrl.u32 920167782, %v858
        %v871 = vor.u32 %v869, %v870
        %v872 = vshll.u32 920167782, %v857
        %v873 = vshrl.u32 1326507024, %v858
        %v874 = vor.u32 %v872, %v873
        %vm875 = vcmp.lt.s32.totalorder %v856, 1
        %vm876 = vcmp.lt.s32.totalorder %v856, 2
        %vm877 = vcmp.lt.s32.totalorder %v856, 3
        %vm878 = vcmp.lt.s32.totalorder %v856, 4
        %v879 = vsel %vm875, %v859, %v862
        %v880 = vsel %vm878, %v868, 2102212464
        %v881 = vsel %vm877, %v865, %v880
        %v882 = vsel %vm876, %v879, %v881
        %v883 = vsel %vm875, %v862, %v865
        %v884 = vsel %vm878, %v871, 920167782
        %v885 = vsel %vm877, %v868, %v884
        %v886 = vsel %vm876, %v883, %v885
        %v887 = vsel %vm875, %v865, %v868
        %v888 = vsel %vm878, %v874, 1326507024
        %v889 = vsel %vm877, %v871, %v888
        %v890 = vsel %vm876, %v887, %v889
        %v891 = vshll.u32 %v851, 8
        %v892 = vand.u32 %v891, 65535
        %v893 = vshrl.u32 %v891, 16
        %v894 = vand.u32 %v890, 65535
        %v895 = vshrl.u32 %v890, 16
        %v896 = vmul.u32 %v892, %v894
        %v897 = vmul.u32 %v892, %v895
        %v898 = vmul.u32 %v893, %v894
        %v899 = vmul.u32 %v893, %v895
        %v900 = vshll.u32 %v897, 16
        %v901 = vshrl.u32 %v897, 16
        %v902 = vshll.u32 %v898, 16
        %v903 = vshrl.u32 %v898, 16
        %vm904 = vc.u32 %v896, %v900
        %v905 = vsel %vm904, 1, 0
        %v906 = vadd.s32 %v896, %v900
        %v907 = vadd.s32 %v899, %v905
        %vm908 = vc.u32 %v906, %v902
        %v909 = vsel %vm908, 1, 0
        %v910 = vadd.s32 %v906, %v902
        %v911 = vadd.s32 %v907, %v909
        %v912 = vadd.s32 %v911, %v901
        %v913 = vadd.s32 %v912, %v903
        %v914 = vand.u32 %v891, 65535
        %v915 = vshrl.u32 %v891, 16
        %v916 = vand.u32 %v886, 65535
        %v917 = vshrl.u32 %v886, 16
        %v918 = vmul.u32 %v914, %v916
        %v919 = vmul.u32 %v914, %v917
        %v920 = vmul.u32 %v915, %v916
        %v921 = vmul.u32 %v915, %v917
        %v922 = vshll.u32 %v919, 16
        %v923 = vshrl.u32 %v919, 16
        %v924 = vshll.u32 %v920, 16
        %v925 = vshrl.u32 %v920, 16
        %vm926 = vc.u32 %v918, %v922
        %v927 = vsel %vm926, 1, 0
        %v928 = vadd.s32 %v918, %v922
        %v929 = vadd.s32 %v921, %v927
        %vm930 = vc.u32 %v928, %v924
        %v931 = vsel %vm930, 1, 0
        %v932 = vadd.s32 %v928, %v924
        %v933 = vadd.s32 %v929, %v931
        %v934 = vadd.s32 %v933, %v923
        %v935 = vadd.s32 %v934, %v925
        %v936 = vmul.u32 %v891, %v882
        %v937 = vadd.s32 %v913, %v932
        %vm938 = vc.u32 %v913, %v932
        %v939 = vadd.s32 %v935, 1
        %v940 = vsel %vm938, %v939, %v935
        %v941 = vadd.s32 %v936, %v940
        %v942 = vadd.s32 %v941, 536870912
        %v943 = vshrl.u32 %v942, 30
        %v944 = vshll.u32 %v943, 30
        %v945 = vsub.s32 %v941, %v944
        %vm946 = vcmp.lt.s32.totalorder %v945, 0
        %v947 = vsub.s32 0, %v945
        %v948 = vsel %vm946, %v947, %v945
        %v949 = vclz %v948
        %v950 = vsub.s32 %v949, 2
        %vm951 = vcmp.gt.s32.totalorder 0, %v950
        %v952 = vsel %vm951, 0, %v950
        %v953 = vsub.s32 32, %v952
        %v954 = vshll.u32 %v945, %v952
        %v955 = vshrl.u32 %v937, %v953
        %v956 = vor.u32 %v954, %v955
        %v957 = vsub.s32 4294967266, %v952
        %v958 = vadd.s32 %v957, 127
        %v959 = vshll.u32 %v958, 23
        %v960 = vor.u32 4788187, %v959
        %v961 = vand.u32 2147483647, %v960
        %v963 = vcvt.s32.f32 %v956
        %v964 = vmul.f32 %v963, %v961
        %v965 = vxor.u32 %v964, 2147483648
        %v966 = vsel %vm845, %v965, %v964
        %v967 = vsub.s32 4, %v943
        %v968 = vsel %vm845, %v967, %v943
        %v969 = vsel %vm844, %v334, %v966
        %v970 = vsel %vm844, 0, %v968
        %v971 = vmul.f32 %v969, %v969
        %v972 = vmul.f32 %v971, -0.001358992
        %v973 = vadd.f32 %v972, 0.041655596
        %v974 = vmul.f32 %v971, %v973
        %v975 = vadd.f32 %v974, -0.4999988
        %v976 = vmul.f32 %v971, %v975
        %v977 = vadd.f32 1.0, %v976
        %v978 = vmul.f32 %v969, %v969
        %v979 = vmul.f32 %v978, -0.00019511016
        %v980 = vadd.f32 %v979, 0.008332121
        %v981 = vmul.f32 %v978, %v980
        %v982 = vadd.f32 %v981, -0.16666654
        %v983 = vmul.f32 %v978, %v982
        %v984 = vadd.f32 %v983, 1.0
        %v985 = vmul.f32 %v984, %v969
        %vm986 = vweird.f32 %v334
        %v987 = vadd.s32 %v970, 3
        %v988 = vand.u32 %v987, 3
        %vm989 = vcmp.lt.s32.totalorder %v988, 2
        %vm990 = vcmp.eq.s32.totalorder %v988, 0
        %v991 = vxor.u32 %v985, 2147483648
        %v992 = vsel %vm990, %v977, %v991
        %vm993 = vcmp.eq.s32.totalorder %v988, 2
        %v994 = vxor.u32 %v977, 2147483648
        %v995 = vsel %vm993, %v994, %v985
        %v996 = vsel %vm989, %v992, %v995
        %v997 = vsel %vm986, nan, %v996
        %v998 = vand.u32 2147483647, %v272
        %vm999 = vcmp.le.f32.partialorder %v998, 0.7853982
        %vm1000 = vcmp.lt.s32.totalorder %v272, 0
        %v1001 = vand.u32 %v272, 2139095040
        %v1002 = vshrl.u32 %v1001, 23
        %v1003 = vsub.s32 %v1002, 127
        %v1004 = vand.u32 2147483647, %v272
        %v1005 = vand.u32 %v1004, 8388607
        %v1006 = vor.u32 %v1005, 8388608
        %v1007 = vsub.s32 0, %v1006
        %v1008 = vadd.s32 %v1003, 1
        %vm1009 = vcmp.gt.s32.totalorder %v1008, 0
        %v1010 = vsel %vm1009, %v1008, 0
        %v1011 = vshrl.u32 %v1010, 5
        %v1012 = vand.u32 %v1010, 31
        %v1013 = vsub.s32 32, %v1012
        %v1014 = vshrl.u32 683565275, %v1013
        %v1015 = vshll.u32 683565275, %v1012
        %v1016 = vshrl.u32 2475754826, %v1013
        %v1017 = vor.u32 %v1015, %v1016
        %v1018 = vshll.u32 2475754826, %v1012
        %v1019 = vshrl.u32 2131351028, %v1013
        %v1020 = vor.u32 %v1018, %v1019
        %v1021 = vshll.u32 2131351028, %v1012
        %v1022 = vshrl.u32 2102212464, %v1013
        %v1023 = vor.u32 %v1021, %v1022
        %v1024 = vshll.u32 2102212464, %v1012
        %v1025 = vshrl.u32 920167782, %v1013
        %v1026 = vor.u32 %v1024, %v1025
        %v1027 = vshll.u32 920167782, %v1012
        %v1028 = vshrl.u32 1326507024, %v1013
        %v1029 = vor.u32 %v1027, %v1028
        %vm1030 = vcmp.lt.s32.totalorder %v1011, 1
        %vm1031 = vcmp.lt.s32.totalorder %v1011, 2
        %vm1032 = vcmp.lt.s32.totalorder %v1011, 3
        %vm1033 = vcmp.lt.s32.totalorder %v1011, 4
        %v1034 = vsel %vm1030, %v1014, %v1017
        %v1035 = vsel %vm1033, %v1023, 2102212464
        %v1036 = vsel %vm1032, %v1020, %v1035
        %v1037 = vsel %vm1031, %v1034, %v1036
        %v1038 = vsel %vm1030, %v1017, %v1020
        %v1039 = vsel %vm1033, %v1026, 920167782
        %v1040 = vsel %vm1032, %v1023, %v1039
        %v1041 = vsel %vm1031, %v1038, %v1040
        %v1042 = vsel %vm1030, %v1020, %v1023
        %v1043 = vsel %vm1033, %v1029, 1326507024
        %v1044 = vsel %vm1032, %v1026, %v1043
        %v1045 = vsel %vm1031, %v1042, %v1044
        %v1046 = vshll.u32 %v1006, 8
        %v1047 = vand.u32 %v1046, 65535
        %v1048 = vshrl.u32 %v1046, 16
        %v1049 = vand.u32 %v1045, 65535
        %v1050 = vshrl.u32 %v1045, 16
        %v1051 = vmul.u32 %v1047, %v1049
        %v1052 = vmul.u32 %v1047, %v1050
        %v1053 = vmul.u32 %v1048, %v1049
        %v1054 = vmul.u32 %v1048, %v1050
        %v1055 = vshll.u32 %v1052, 16
        %v1056 = vshrl.u32 %v1052, 16
        %v1057 = vshll.u32 %v1053, 16
        %v1058 = vshrl.u32 %v1053, 16
        %vm1059 = vc.u32 %v1051, %v1055
        %v1060 = vsel %vm1059, 1, 0
        %v1061 = vadd.s32 %v1051, %v1055
        %v1062 = vadd.s32 %v1054, %v1060
        %vm1063 = vc.u32 %v1061, %v1057
        %v1064 = vsel %vm1063, 1, 0
        %v1065 = vadd.s32 %v1061, %v1057
        %v1066 = vadd.s32 %v1062, %v1064
        %v1067 = vadd.s32 %v1066, %v1056
        %v1068 = vadd.s32 %v1067, %v1058
        %v1069 = vand.u32 %v1046, 65535
        %v1070 = vshrl.u32 %v1046, 16
        %v1071 = vand.u32 %v1041, 65535
        %v1072 = vshrl.u32 %v1041, 16
        %v1073 = vmul.u32 %v1069, %v1071
        %v1074 = vmul.u32 %v1069, %v1072
        %v1075 = vmul.u32 %v1070, %v1071
        %v1076 = vmul.u32 %v1070, %v1072
        %v1077 = vshll.u32 %v1074, 16
        %v1078 = vshrl.u32 %v1074, 16
        %v1079 = vshll.u32 %v1075, 16
        %v1080 = vshrl.u32 %v1075, 16
        %vm1081 = vc.u32 %v1073, %v1077
        %v1082 = vsel %vm1081, 1, 0
        %v1083 = vadd.s32 %v1073, %v1077
        %v1084 = vadd.s32 %v1076, %v1082
        %vm1085 = vc.u32 %v1083, %v1079
        %v1086 = vsel %vm1085, 1, 0
        %v1087 = vadd.s32 %v1083, %v1079
        %v1088 = vadd.s32 %v1084, %v1086
        %v1089 = vadd.s32 %v1088, %v1078
        %v1090 = vadd.s32 %v1089, %v1080
        %v1091 = vmul.u32 %v1046, %v1037
        %v1092 = vadd.s32 %v1068, %v1087
        %vm1093 = vc.u32 %v1068, %v1087
        %v1094 = vadd.s32 %v1090, 1
        %v1095 = vsel %vm1093, %v1094, %v1090
        %v1096 = vadd.s32 %v1091, %v1095
        %v1097 = vadd.s32 %v1096, 536870912
        %v1098 = vshrl.u32 %v1097, 30
        %v1099 = vshll.u32 %v1098, 30
        %v1100 = vsub.s32 %v1096, %v1099
        %vm1101 = vcmp.lt.s32.totalorder %v1100, 0
        %v1102 = vsub.s32 0, %v1100
        %v1103 = vsel %vm1101, %v1102, %v1100
        %v1104 = vclz %v1103
        %v1105 = vsub.s32 %v1104, 2
        %vm1106 = vcmp.gt.s32.totalorder 0, %v1105
        %v1107 = vsel %vm1106, 0, %v1105
        %v1108 = vsub.s32 32, %v1107
        %v1109 = vshll.u32 %v1100, %v1107
        %v1110 = vshrl.u32 %v1092, %v1108
        %v1111 = vor.u32 %v1109, %v1110
        %v1112 = vsub.s32 4294967266, %v1107
        %v1113 = vadd.s32 %v1112, 127
        %v1114 = vshll.u32 %v1113, 23
        %v1115 = vor.u32 4788187, %v1114
        %v1116 = vand.u32 2147483647, %v1115
        %v1118 = vcvt.s32.f32 %v1111
        %v1119 = vmul.f32 %v1118, %v1116
        %v1120 = vxor.u32 %v1119, 2147483648
        %v1121 = vsel %vm1000, %v1120, %v1119
        %v1122 = vsub.s32 4, %v1098
        %v1123 = vsel %vm1000, %v1122, %v1098
        %v1124 = vsel %vm999, %v272, %v1121
        %v1125 = vsel %vm999, 0, %v1123
        %v1126 = vmul.f32 %v1124, %v1124
        %v1127 = vmul.f32 %v1126, -0.001358992
        %v1128 = vadd.f32 %v1127, 0.041655596
        %v1129 = vmul.f32 %v1126, %v1128
        %v1130 = vadd.f32 %v1129, -0.4999988
        %v1131 = vmul.f32 %v1126, %v1130
        %v1132 = vadd.f32 1.0, %v1131
        %v1133 = vmul.f32 %v1124, %v1124
        %v1134 = vmul.f32 %v1133, -0.00019511016
        %v1135 = vadd.f32 %v1134, 0.008332121
        %v1136 = vmul.f32 %v1133, %v1135
        %v1137 = vadd.f32 %v1136, -0.16666654
        %v1138 = vmul.f32 %v1133, %v1137
        %v1139 = vadd.f32 %v1138, 1.0
        %v1140 = vmul.f32 %v1139, %v1124
        %vm1141 = vweird.f32 %v272
        %v1142 = vadd.s32 %v1125, 3
        %v1143 = vand.u32 %v1142, 3
        %vm1144 = vcmp.lt.s32.totalorder %v1143, 2
        %vm1145 = vcmp.eq.s32.totalorder %v1143, 0
        %v1146 = vxor.u32 %v1140, 2147483648
        %v1147 = vsel %vm1145, %v1132, %v1146
        %vm1148 = vcmp.eq.s32.totalorder %v1143, 2
        %v1149 = vxor.u32 %v1132, 2147483648
        %v1150 = vsel %vm1148, %v1149, %v1140
        %v1151 = vsel %vm1144, %v1147, %v1150
        %v1152 = vsel %vm1141, nan, %v1151
        %v1153 = vand.u32 2147483647, %v337
        %vm1154 = vcmp.le.f32.partialorder %v1153, 0.7853982
        %vm1155 = vcmp.lt.s32.totalorder %v337, 0
        %v1156 = vand.u32 %v337, 2139095040
        %v1157 = vshrl.u32 %v1156, 23
        %v1158 = vsub.s32 %v1157, 127
        %v1159 = vand.u32 2147483647, %v337
        %v1160 = vand.u32 %v1159, 8388607
        %v1161 = vor.u32 %v1160, 8388608
        %v1162 = vsub.s32 0, %v1161
        %v1163 = vadd.s32 %v1158, 1
        %vm1164 = vcmp.gt.s32.totalorder %v1163, 0
        %v1165 = vsel %vm1164, %v1163, 0
        %v1166 = vshrl.u32 %v1165, 5
        %v1167 = vand.u32 %v1165, 31
        %v1168 = vsub.s32 32, %v1167
        %v1169 = vshrl.u32 683565275, %v1168
        %v1170 = vshll.u32 683565275, %v1167
        %v1171 = vshrl.u32 2475754826, %v1168
        %v1172 = vor.u32 %v1170, %v1171
        %v1173 = vshll.u32 2475754826, %v1167
        %v1174 = vshrl.u32 2131351028, %v1168
        %v1175 = vor.u32 %v1173, %v1174
        %v1176 = vshll.u32 2131351028, %v1167
        %v1177 = vshrl.u32 2102212464, %v1168
        %v1178 = vor.u32 %v1176, %v1177
        %v1179 = vshll.u32 2102212464, %v1167
        %v1180 = vshrl.u32 920167782, %v1168
        %v1181 = vor.u32 %v1179, %v1180
        %v1182 = vshll.u32 920167782, %v1167
        %v1183 = vshrl.u32 1326507024, %v1168
        %v1184 = vor.u32 %v1182, %v1183
        %vm1185 = vcmp.lt.s32.totalorder %v1166, 1
        %vm1186 = vcmp.lt.s32.totalorder %v1166, 2
        %vm1187 = vcmp.lt.s32.totalorder %v1166, 3
        %vm1188 = vcmp.lt.s32.totalorder %v1166, 4
        %v1189 = vsel %vm1185, %v1169, %v1172
        %v1190 = vsel %vm1188, %v1178, 2102212464
        %v1191 = vsel %vm1187, %v1175, %v1190
        %v1192 = vsel %vm1186, %v1189, %v1191
        %v1193 = vsel %vm1185, %v1172, %v1175
        %v1194 = vsel %vm1188, %v1181, 920167782
        %v1195 = vsel %vm1187, %v1178, %v1194
        %v1196 = vsel %vm1186, %v1193, %v1195
        %v1197 = vsel %vm1185, %v1175, %v1178
        %v1198 = vsel %vm1188, %v1184, 1326507024
        %v1199 = vsel %vm1187, %v1181, %v1198
        %v1200 = vsel %vm1186, %v1197, %v1199
        %v1201 = vshll.u32 %v1161, 8
        %v1202 = vand.u32 %v1201, 65535
        %v1203 = vshrl.u32 %v1201, 16
        %v1204 = vand.u32 %v1200, 65535
        %v1205 = vshrl.u32 %v1200, 16
        %v1206 = vmul.u32 %v1202, %v1204
        %v1207 = vmul.u32 %v1202, %v1205
        %v1208 = vmul.u32 %v1203, %v1204
        %v1209 = vmul.u32 %v1203, %v1205
        %v1210 = vshll.u32 %v1207, 16
        %v1211 = vshrl.u32 %v1207, 16
        %v1212 = vshll.u32 %v1208, 16
        %v1213 = vshrl.u32 %v1208, 16
        %vm1214 = vc.u32 %v1206, %v1210
        %v1215 = vsel %vm1214, 1, 0
        %v1216 = vadd.s32 %v1206, %v1210
        %v1217 = vadd.s32 %v1209, %v1215
        %vm1218 = vc.u32 %v1216, %v1212
        %v1219 = vsel %vm1218, 1, 0
        %v1220 = vadd.s32 %v1216, %v1212
        %v1221 = vadd.s32 %v1217, %v1219
        %v1222 = vadd.s32 %v1221, %v1211
        %v1223 = vadd.s32 %v1222, %v1213
        %v1224 = vand.u32 %v1201, 65535
        %v1225 = vshrl.u32 %v1201, 16
        %v1226 = vand.u32 %v1196, 65535
        %v1227 = vshrl.u32 %v1196, 16
        %v1228 = vmul.u32 %v1224, %v1226
        %v1229 = vmul.u32 %v1224, %v1227
        %v1230 = vmul.u32 %v1225, %v1226
        %v1231 = vmul.u32 %v1225, %v1227
        %v1232 = vshll.u32 %v1229, 16
        %v1233 = vshrl.u32 %v1229, 16
        %v1234 = vshll.u32 %v1230, 16
        %v1235 = vshrl.u32 %v1230, 16
        %vm1236 = vc.u32 %v1228, %v1232
        %v1237 = vsel %vm1236, 1, 0
        %v1238 = vadd.s32 %v1228, %v1232
        %v1239 = vadd.s32 %v1231, %v1237
        %vm1240 = vc.u32 %v1238, %v1234
        %v1241 = vsel %vm1240, 1, 0
        %v1242 = vadd.s32 %v1238, %v1234
        %v1243 = vadd.s32 %v1239, %v1241
        %v1244 = vadd.s32 %v1243, %v1233
        %v1245 = vadd.s32 %v1244, %v1235
        %v1246 = vmul.u32 %v1201, %v1192
        %v1247 = vadd.s32 %v1223, %v1242
        %vm1248 = vc.u32 %v1223, %v1242
        %v1249 = vadd.s32 %v1245, 1
        %v1250 = vsel %vm1248, %v1249, %v1245
        %v1251 = vadd.s32 %v1246, %v1250
        %v1252 = vadd.s32 %v1251, 536870912
        %v1253 = vshrl.u32 %v1252, 30
        %v1254 = vshll.u32 %v1253, 30
        %v1255 = vsub.s32 %v1251, %v1254
        %vm1256 = vcmp.lt.s32.totalorder %v1255, 0
        %v1257 = vsub.s32 0, %v1255
        %v1258 = vsel %vm1256, %v1257, %v1255
        %v1259 = vclz %v1258
        %v1260 = vsub.s32 %v1259, 2
        %vm1261 = vcmp.gt.s32.totalorder 0, %v1260
        %v1262 = vsel %vm1261, 0, %v1260
        %v1263 = vsub.s32 32, %v1262
        %v1264 = vshll.u32 %v1255, %v1262
        %v1265 = vshrl.u32 %v1247, %v1263
        %v1266 = vor.u32 %v1264, %v1265
        %v1267 = vsub.s32 4294967266, %v1262
        %v1268 = vadd.s32 %v1267, 127
        %v1269 = vshll.u32 %v1268, 23
        %v1270 = vor.u32 4788187, %v1269
        %v1271 = vand.u32 2147483647, %v1270
        %v1273 = vcvt.s32.f32 %v1266
        %v1274 = vmul.f32 %v1273, %v1271
        %v1275 = vxor.u32 %v1274, 2147483648
        %v1276 = vsel %vm1155, %v1275, %v1274
        %v1277 = vsub.s32 4, %v1253
        %v1278 = vsel %vm1155, %v1277, %v1253
        %v1279 = vsel %vm1154, %v337, %v1276
        %v1280 = vsel %vm1154, 0, %v1278
        %v1281 = vmul.f32 %v1279, %v1279
        %v1282 = vmul.f32 %v1281, -0.001358992
        %v1283 = vadd.f32 %v1282, 0.041655596
        %v1284 = vmul.f32 %v1281, %v1283
        %v1285 = vadd.f32 %v1284, -0.4999988
        %v1286 = vmul.f32 %v1281, %v1285
        %v1287 = vadd.f32 1.0, %v1286
        %v1288 = vmul.f32 %v1279, %v1279
        %v1289 = vmul.f32 %v1288, -0.00019511016
        %v1290 = vadd.f32 %v1289, 0.008332121
        %v1291 = vmul.f32 %v1288, %v1290
        %v1292 = vadd.f32 %v1291, -0.16666654
        %v1293 = vmul.f32 %v1288, %v1292
        %v1294 = vadd.f32 %v1293, 1.0
        %v1295 = vmul.f32 %v1294, %v1279
        %vm1296 = vweird.f32 %v337
        %v1297 = vadd.s32 %v1280, 3
        %v1298 = vand.u32 %v1297, 3
        %vm1299 = vcmp.lt.s32.totalorder %v1298, 2
        %vm1300 = vcmp.eq.s32.totalorder %v1298, 0
        %v1301 = vxor.u32 %v1295, 2147483648
        %v1302 = vsel %vm1300, %v1287, %v1301
        %vm1303 = vcmp.eq.s32.totalorder %v1298, 2
        %v1304 = vxor.u32 %v1287, 2147483648
        %v1305 = vsel %vm1303, %v1304, %v1295
        %v1306 = vsel %vm1299, %v1302, %v1305
        %v1307 = vsel %vm1296, nan, %v1306
        %v1308 = vand.u32 2147483647, %v275
        %vm1309 = vcmp.le.f32.partialorder %v1308, 0.7853982
        %vm1310 = vcmp.lt.s32.totalorder %v275, 0
        %v1311 = vand.u32 %v275, 2139095040
        %v1312 = vshrl.u32 %v1311, 23
        %v1313 = vsub.s32 %v1312, 127
        %v1314 = vand.u32 2147483647, %v275
        %v1315 = vand.u32 %v1314, 8388607
        %v1316 = vor.u32 %v1315, 8388608
        %v1317 = vsub.s32 0, %v1316
        %v1318 = vadd.s32 %v1313, 1
        %vm1319 = vcmp.gt.s32.totalorder %v1318, 0
        %v1320 = vsel %vm1319, %v1318, 0
        %v1321 = vshrl.u32 %v1320, 5
        %v1322 = vand.u32 %v1320, 31
        %v1323 = vsub.s32 32, %v1322
        %v1324 = vshrl.u32 683565275, %v1323
        %v1325 = vshll.u32 683565275, %v1322
        %v1326 = vshrl.u32 2475754826, %v1323
        %v1327 = vor.u32 %v1325, %v1326
        %v1328 = vshll.u32 2475754826, %v1322
        %v1329 = vshrl.u32 2131351028, %v1323
        %v1330 = vor.u32 %v1328, %v1329
        %v1331 = vshll.u32 2131351028, %v1322
        %v1332 = vshrl.u32 2102212464, %v1323
        %v1333 = vor.u32 %v1331, %v1332
        %v1334 = vshll.u32 2102212464, %v1322
        %v1335 = vshrl.u32 920167782, %v1323
        %v1336 = vor.u32 %v1334, %v1335
        %v1337 = vshll.u32 920167782, %v1322
        %v1338 = vshrl.u32 1326507024, %v1323
        %v1339 = vor.u32 %v1337, %v1338
        %vm1340 = vcmp.lt.s32.totalorder %v1321, 1
        %vm1341 = vcmp.lt.s32.totalorder %v1321, 2
        %vm1342 = vcmp.lt.s32.totalorder %v1321, 3
        %vm1343 = vcmp.lt.s32.totalorder %v1321, 4
        %v1344 = vsel %vm1340, %v1324, %v1327
        %v1345 = vsel %vm1343, %v1333, 2102212464
        %v1346 = vsel %vm1342, %v1330, %v1345
        %v1347 = vsel %vm1341, %v1344, %v1346
        %v1348 = vsel %vm1340, %v1327, %v1330
        %v1349 = vsel %vm1343, %v1336, 920167782
        %v1350 = vsel %vm1342, %v1333, %v1349
        %v1351 = vsel %vm1341, %v1348, %v1350
        %v1352 = vsel %vm1340, %v1330, %v1333
        %v1353 = vsel %vm1343, %v1339, 1326507024
        %v1354 = vsel %vm1342, %v1336, %v1353
        %v1355 = vsel %vm1341, %v1352, %v1354
        %v1356 = vshll.u32 %v1316, 8
        %v1357 = vand.u32 %v1356, 65535
        %v1358 = vshrl.u32 %v1356, 16
        %v1359 = vand.u32 %v1355, 65535
        %v1360 = vshrl.u32 %v1355, 16
        %v1361 = vmul.u32 %v1357, %v1359
        %v1362 = vmul.u32 %v1357, %v1360
        %v1363 = vmul.u32 %v1358, %v1359
        %v1364 = vmul.u32 %v1358, %v1360
        %v1365 = vshll.u32 %v1362, 16
        %v1366 = vshrl.u32 %v1362, 16
        %v1367 = vshll.u32 %v1363, 16
        %v1368 = vshrl.u32 %v1363, 16
        %vm1369 = vc.u32 %v1361, %v1365
        %v1370 = vsel %vm1369, 1, 0
        %v1371 = vadd.s32 %v1361, %v1365
        %v1372 = vadd.s32 %v1364, %v1370
        %vm1373 = vc.u32 %v1371, %v1367
        %v1374 = vsel %vm1373, 1, 0
        %v1375 = vadd.s32 %v1371, %v1367
        %v1376 = vadd.s32 %v1372, %v1374
        %v1377 = vadd.s32 %v1376, %v1366
        %v1378 = vadd.s32 %v1377, %v1368
        %v1379 = vand.u32 %v1356, 65535
        %v1380 = vshrl.u32 %v1356, 16
        %v1381 = vand.u32 %v1351, 65535
        %v1382 = vshrl.u32 %v1351, 16
        %v1383 = vmul.u32 %v1379, %v1381
        %v1384 = vmul.u32 %v1379, %v1382
        %v1385 = vmul.u32 %v1380, %v1381
        %v1386 = vmul.u32 %v1380, %v1382
        %v1387 = vshll.u32 %v1384, 16
        %v1388 = vshrl.u32 %v1384, 16
        %v1389 = vshll.u32 %v1385, 16
        %v1390 = vshrl.u32 %v1385, 16
        %vm1391 = vc.u32 %v1383, %v1387
        %v1392 = vsel %vm1391, 1, 0
        %v1393 = vadd.s32 %v1383, %v1387
        %v1394 = vadd.s32 %v1386, %v1392
        %vm1395 = vc.u32 %v1393, %v1389
        %v1396 = vsel %vm1395, 1, 0
        %v1397 = vadd.s32 %v1393, %v1389
        %v1398 = vadd.s32 %v1394, %v1396
        %v1399 = vadd.s32 %v1398, %v1388
        %v1400 = vadd.s32 %v1399, %v1390
        %v1401 = vmul.u32 %v1356, %v1347
        %v1402 = vadd.s32 %v1378, %v1397
        %vm1403 = vc.u32 %v1378, %v1397
        %v1404 = vadd.s32 %v1400, 1
        %v1405 = vsel %vm1403, %v1404, %v1400
        %v1406 = vadd.s32 %v1401, %v1405
        %v1407 = vadd.s32 %v1406, 536870912
        %v1408 = vshrl.u32 %v1407, 30
        %v1409 = vshll.u32 %v1408, 30
        %v1410 = vsub.s32 %v1406, %v1409
        %vm1411 = vcmp.lt.s32.totalorder %v1410, 0
        %v1412 = vsub.s32 0, %v1410
        %v1413 = vsel %vm1411, %v1412, %v1410
        %v1414 = vclz %v1413
        %v1415 = vsub.s32 %v1414, 2
        %vm1416 = vcmp.gt.s32.totalorder 0, %v1415
        %v1417 = vsel %vm1416, 0, %v1415
        %v1418 = vsub.s32 32, %v1417
        %v1419 = vshll.u32 %v1410, %v1417
        %v1420 = vshrl.u32 %v1402, %v1418
        %v1421 = vor.u32 %v1419, %v1420
        %v1422 = vsub.s32 4294967266, %v1417
        %v1423 = vadd.s32 %v1422, 127
        %v1424 = vshll.u32 %v1423, 23
        %v1425 = vor.u32 4788187, %v1424
        %v1426 = vand.u32 2147483647, %v1425
        %v1428 = vcvt.s32.f32 %v1421
        %v1429 = vmul.f32 %v1428, %v1426
        %v1430 = vxor.u32 %v1429, 2147483648
        %v1431 = vsel %vm1310, %v1430, %v1429
        %v1432 = vsub.s32 4, %v1408
        %v1433 = vsel %vm1310, %v1432, %v1408
        %v1434 = vsel %vm1309, %v275, %v1431
        %v1435 = vsel %vm1309, 0, %v1433
        %v1436 = vmul.f32 %v1434, %v1434
        %v1437 = vmul.f32 %v1436, -0.001358992
        %v1438 = vadd.f32 %v1437, 0.041655596
        %v1439 = vmul.f32 %v1436, %v1438
        %v1440 = vadd.f32 %v1439, -0.4999988
        %v1441 = vmul.f32 %v1436, %v1440
        %v1442 = vadd.f32 1.0, %v1441
        %v1443 = vmul.f32 %v1434, %v1434
        %v1444 = vmul.f32 %v1443, -0.00019511016
        %v1445 = vadd.f32 %v1444, 0.008332121
        %v1446 = vmul.f32 %v1443, %v1445
        %v1447 = vadd.f32 %v1446, -0.16666654
        %v1448 = vmul.f32 %v1443, %v1447
        %v1449 = vadd.f32 %v1448, 1.0
        %v1450 = vmul.f32 %v1449, %v1434
        %vm1451 = vweird.f32 %v275
        %v1452 = vadd.s32 %v1435, 3
        %v1453 = vand.u32 %v1452, 3
        %vm1454 = vcmp.lt.s32.totalorder %v1453, 2
        %vm1455 = vcmp.eq.s32.totalorder %v1453, 0
        %v1456 = vxor.u32 %v1450, 2147483648
        %v1457 = vsel %vm1455, %v1442, %v1456
        %vm1458 = vcmp.eq.s32.totalorder %v1453, 2
        %v1459 = vxor.u32 %v1442, 2147483648
        %v1460 = vsel %vm1458, %v1459, %v1450
        %v1461 = vsel %vm1454, %v1457, %v1460
        %v1462 = vsel %vm1451, nan, %v1461
        %v1463 = vand.u32 2147483647, %v340
        %vm1464 = vcmp.le.f32.partialorder %v1463, 0.7853982
        %vm1465 = vcmp.lt.s32.totalorder %v340, 0
        %v1466 = vand.u32 %v340, 2139095040
        %v1467 = vshrl.u32 %v1466, 23
        %v1468 = vsub.s32 %v1467, 127
        %v1469 = vand.u32 2147483647, %v340
        %v1470 = vand.u32 %v1469, 8388607
        %v1471 = vor.u32 %v1470, 8388608
        %v1472 = vsub.s32 0, %v1471
        %v1473 = vadd.s32 %v1468, 1
        %vm1474 = vcmp.gt.s32.totalorder %v1473, 0
        %v1475 = vsel %vm1474, %v1473, 0
        %v1476 = vshrl.u32 %v1475, 5
        %v1477 = vand.u32 %v1475, 31
        %v1478 = vsub.s32 32, %v1477
        %v1479 = vshrl.u32 683565275, %v1478
        %v1480 = vshll.u32 683565275, %v1477
        %v1481 = vshrl.u32 2475754826, %v1478
        %v1482 = vor.u32 %v1480, %v1481
        %v1483 = vshll.u32 2475754826, %v1477
        %v1484 = vshrl.u32 2131351028, %v1478
        %v1485 = vor.u32 %v1483, %v1484
        %v1486 = vshll.u32 2131351028, %v1477
        %v1487 = vshrl.u32 2102212464, %v1478
        %v1488 = vor.u32 %v1486, %v1487
        %v1489 = vshll.u32 2102212464, %v1477
        %v1490 = vshrl.u32 920167782, %v1478
        %v1491 = vor.u32 %v1489, %v1490
        %v1492 = vshll.u32 920167782, %v1477
        %v1493 = vshrl.u32 1326507024, %v1478
        %v1494 = vor.u32 %v1492, %v1493
        %vm1495 = vcmp.lt.s32.totalorder %v1476, 1
        %vm1496 = vcmp.lt.s32.totalorder %v1476, 2
        %vm1497 = vcmp.lt.s32.totalorder %v1476, 3
        %vm1498 = vcmp.lt.s32.totalorder %v1476, 4
        %v1499 = vsel %vm1495, %v1479, %v1482
        %v1500 = vsel %vm1498, %v1488, 2102212464
        %v1501 = vsel %vm1497, %v1485, %v1500
        %v1502 = vsel %vm1496, %v1499, %v1501
        %v1503 = vsel %vm1495, %v1482, %v1485
        %v1504 = vsel %vm1498, %v1491, 920167782
        %v1505 = vsel %vm1497, %v1488, %v1504
        %v1506 = vsel %vm1496, %v1503, %v1505
        %v1507 = vsel %vm1495, %v1485, %v1488
        %v1508 = vsel %vm1498, %v1494, 1326507024
        %v1509 = vsel %vm1497, %v1491, %v1508
        %v1510 = vsel %vm1496, %v1507, %v1509
        %v1511 = vshll.u32 %v1471, 8
        %v1512 = vand.u32 %v1511, 65535
        %v1513 = vshrl.u32 %v1511, 16
        %v1514 = vand.u32 %v1510, 65535
        %v1515 = vshrl.u32 %v1510, 16
        %v1516 = vmul.u32 %v1512, %v1514
        %v1517 = vmul.u32 %v1512, %v1515
        %v1518 = vmul.u32 %v1513, %v1514
        %v1519 = vmul.u32 %v1513, %v1515
        %v1520 = vshll.u32 %v1517, 16
        %v1521 = vshrl.u32 %v1517, 16
        %v1522 = vshll.u32 %v1518, 16
        %v1523 = vshrl.u32 %v1518, 16
        %vm1524 = vc.u32 %v1516, %v1520
        %v1525 = vsel %vm1524, 1, 0
        %v1526 = vadd.s32 %v1516, %v1520
        %v1527 = vadd.s32 %v1519, %v1525
        %vm1528 = vc.u32 %v1526, %v1522
        %v1529 = vsel %vm1528, 1, 0
        %v1530 = vadd.s32 %v1526, %v1522
        %v1531 = vadd.s32 %v1527, %v1529
        %v1532 = vadd.s32 %v1531, %v1521
        %v1533 = vadd.s32 %v1532, %v1523
        %v1534 = vand.u32 %v1511, 65535
        %v1535 = vshrl.u32 %v1511, 16
        %v1536 = vand.u32 %v1506, 65535
        %v1537 = vshrl.u32 %v1506, 16
        %v1538 = vmul.u32 %v1534, %v1536
        %v1539 = vmul.u32 %v1534, %v1537
        %v1540 = vmul.u32 %v1535, %v1536
        %v1541 = vmul.u32 %v1535, %v1537
        %v1542 = vshll.u32 %v1539, 16
        %v1543 = vshrl.u32 %v1539, 16
        %v1544 = vshll.u32 %v1540, 16
        %v1545 = vshrl.u32 %v1540, 16
        %vm1546 = vc.u32 %v1538, %v1542
        %v1547 = vsel %vm1546, 1, 0
        %v1548 = vadd.s32 %v1538, %v1542
        %v1549 = vadd.s32 %v1541, %v1547
        %vm1550 = vc.u32 %v1548, %v1544
        %v1551 = vsel %vm1550, 1, 0
        %v1552 = vadd.s32 %v1548, %v1544
        %v1553 = vadd.s32 %v1549, %v1551
        %v1554 = vadd.s32 %v1553, %v1543
        %v1555 = vadd.s32 %v1554, %v1545
        %v1556 = vmul.u32 %v1511, %v1502
        %v1557 = vadd.s32 %v1533, %v1552
        %vm1558 = vc.u32 %v1533, %v1552
        %v1559 = vadd.s32 %v1555, 1
        %v1560 = vsel %vm1558, %v1559, %v1555
        %v1561 = vadd.s32 %v1556, %v1560
        %v1562 = vadd.s32 %v1561, 536870912
        %v1563 = vshrl.u32 %v1562, 30
        %v1564 = vshll.u32 %v1563, 30
        %v1565 = vsub.s32 %v1561, %v1564
        %vm1566 = vcmp.lt.s32.totalorder %v1565, 0
        %v1567 = vsub.s32 0, %v1565
        %v1568 = vsel %vm1566, %v1567, %v1565
        %v1569 = vclz %v1568
        %v1570 = vsub.s32 %v1569, 2
        %vm1571 = vcmp.gt.s32.totalorder 0, %v1570
        %v1572 = vsel %vm1571, 0, %v1570
        %v1573 = vsub.s32 32, %v1572
        %v1574 = vshll.u32 %v1565, %v1572
        %v1575 = vshrl.u32 %v1557, %v1573
        %v1576 = vor.u32 %v1574, %v1575
        %v1577 = vsub.s32 4294967266, %v1572
        %v1578 = vadd.s32 %v1577, 127
        %v1579 = vshll.u32 %v1578, 23
        %v1580 = vor.u32 4788187, %v1579
        %v1581 = vand.u32 2147483647, %v1580
        %v1583 = vcvt.s32.f32 %v1576
        %v1584 = vmul.f32 %v1583, %v1581
        %v1585 = vxor.u32 %v1584, 2147483648
        %v1586 = vsel %vm1465, %v1585, %v1584
        %v1587 = vsub.s32 4, %v1563
        %v1588 = vsel %vm1465, %v1587, %v1563
        %v1589 = vsel %vm1464, %v340, %v1586
        %v1590 = vsel %vm1464, 0, %v1588
        %v1591 = vmul.f32 %v1589, %v1589
        %v1592 = vmul.f32 %v1591, -0.001358992
        %v1593 = vadd.f32 %v1592, 0.041655596
        %v1594 = vmul.f32 %v1591, %v1593
        %v1595 = vadd.f32 %v1594, -0.4999988
        %v1596 = vmul.f32 %v1591, %v1595
        %v1597 = vadd.f32 1.0, %v1596
        %v1598 = vmul.f32 %v1589, %v1589
        %v1599 = vmul.f32 %v1598, -0.00019511016
        %v1600 = vadd.f32 %v1599, 0.008332121
        %v1601 = vmul.f32 %v1598, %v1600
        %v1602 = vadd.f32 %v1601, -0.16666654
        %v1603 = vmul.f32 %v1598, %v1602
        %v1604 = vadd.f32 %v1603, 1.0
        %v1605 = vmul.f32 %v1604, %v1589
        %vm1606 = vweird.f32 %v340
        %v1607 = vadd.s32 %v1590, 3
        %v1608 = vand.u32 %v1607, 3
        %vm1609 = vcmp.lt.s32.totalorder %v1608, 2
        %vm1610 = vcmp.eq.s32.totalorder %v1608, 0
        %v1611 = vxor.u32 %v1605, 2147483648
        %v1612 = vsel %vm1610, %v1597, %v1611
        %vm1613 = vcmp.eq.s32.totalorder %v1608, 2
        %v1614 = vxor.u32 %v1597, 2147483648
        %v1615 = vsel %vm1613, %v1614, %v1605
        %v1616 = vsel %vm1609, %v1612, %v1615
        %v1617 = vsel %vm1606, nan, %v1616
        %v1618 = vand.u32 2147483647, %v278
        %vm1619 = vcmp.le.f32.partialorder %v1618, 0.7853982
        %vm1620 = vcmp.lt.s32.totalorder %v278, 0
        %v1621 = vand.u32 %v278, 2139095040
        %v1622 = vshrl.u32 %v1621, 23
        %v1623 = vsub.s32 %v1622, 127
        %v1624 = vand.u32 2147483647, %v278
        %v1625 = vand.u32 %v1624, 8388607
        %v1626 = vor.u32 %v1625, 8388608
        %v1627 = vsub.s32 0, %v1626
        %v1628 = vadd.s32 %v1623, 1
        %vm1629 = vcmp.gt.s32.totalorder %v1628, 0
        %v1630 = vsel %vm1629, %v1628, 0
        %v1631 = vshrl.u32 %v1630, 5
        %v1632 = vand.u32 %v1630, 31
        %v1633 = vsub.s32 32, %v1632
        %v1634 = vshrl.u32 683565275, %v1633
        %v1635 = vshll.u32 683565275, %v1632
        %v1636 = vshrl.u32 2475754826, %v1633
        %v1637 = vor.u32 %v1635, %v1636
        %v1638 = vshll.u32 2475754826, %v1632
        %v1639 = vshrl.u32 2131351028, %v1633
        %v1640 = vor.u32 %v1638, %v1639
        %v1641 = vshll.u32 2131351028, %v1632
        %v1642 = vshrl.u32 2102212464, %v1633
        %v1643 = vor.u32 %v1641, %v1642
        %v1644 = vshll.u32 2102212464, %v1632
        %v1645 = vshrl.u32 920167782, %v1633
        %v1646 = vor.u32 %v1644, %v1645
        %v1647 = vshll.u32 920167782, %v1632
        %v1648 = vshrl.u32 1326507024, %v1633
        %v1649 = vor.u32 %v1647, %v1648
        %vm1650 = vcmp.lt.s32.totalorder %v1631, 1
        %vm1651 = vcmp.lt.s32.totalorder %v1631, 2
        %vm1652 = vcmp.lt.s32.totalorder %v1631, 3
        %vm1653 = vcmp.lt.s32.totalorder %v1631, 4
        %v1654 = vsel %vm1650, %v1634, %v1637
        %v1655 = vsel %vm1653, %v1643, 2102212464
        %v1656 = vsel %vm1652, %v1640, %v1655
        %v1657 = vsel %vm1651, %v1654, %v1656
        %v1658 = vsel %vm1650, %v1637, %v1640
        %v1659 = vsel %vm1653, %v1646, 920167782
        %v1660 = vsel %vm1652, %v1643, %v1659
        %v1661 = vsel %vm1651, %v1658, %v1660
        %v1662 = vsel %vm1650, %v1640, %v1643
        %v1663 = vsel %vm1653, %v1649, 1326507024
        %v1664 = vsel %vm1652, %v1646, %v1663
        %v1665 = vsel %vm1651, %v1662, %v1664
        %v1666 = vshll.u32 %v1626, 8
        %v1667 = vand.u32 %v1666, 65535
        %v1668 = vshrl.u32 %v1666, 16
        %v1669 = vand.u32 %v1665, 65535
        %v1670 = vshrl.u32 %v1665, 16
        %v1671 = vmul.u32 %v1667, %v1669
        %v1672 = vmul.u32 %v1667, %v1670
        %v1673 = vmul.u32 %v1668, %v1669
        %v1674 = vmul.u32 %v1668, %v1670
        %v1675 = vshll.u32 %v1672, 16
        %v1676 = vshrl.u32 %v1672, 16
        %v1677 = vshll.u32 %v1673, 16
        %v1678 = vshrl.u32 %v1673, 16
        %vm1679 = vc.u32 %v1671, %v1675
        %v1680 = vsel %vm1679, 1, 0
        %v1681 = vadd.s32 %v1671, %v1675
        %v1682 = vadd.s32 %v1674, %v1680
        %vm1683 = vc.u32 %v1681, %v1677
        %v1684 = vsel %vm1683, 1, 0
        %v1685 = vadd.s32 %v1681, %v1677
        %v1686 = vadd.s32 %v1682, %v1684
        %v1687 = vadd.s32 %v1686, %v1676
        %v1688 = vadd.s32 %v1687, %v1678
        %v1689 = vand.u32 %v1666, 65535
        %v1690 = vshrl.u32 %v1666, 16
        %v1691 = vand.u32 %v1661, 65535
        %v1692 = vshrl.u32 %v1661, 16
        %v1693 = vmul.u32 %v1689, %v1691
        %v1694 = vmul.u32 %v1689, %v1692
        %v1695 = vmul.u32 %v1690, %v1691
        %v1696 = vmul.u32 %v1690, %v1692
        %v1697 = vshll.u32 %v1694, 16
        %v1698 = vshrl.u32 %v1694, 16
        %v1699 = vshll.u32 %v1695, 16
        %v1700 = vshrl.u32 %v1695, 16
        %vm1701 = vc.u32 %v1693, %v1697
        %v1702 = vsel %vm1701, 1, 0
        %v1703 = vadd.s32 %v1693, %v1697
        %v1704 = vadd.s32 %v1696, %v1702
        %vm1705 = vc.u32 %v1703, %v1699
        %v1706 = vsel %vm1705, 1, 0
        %v1707 = vadd.s32 %v1703, %v1699
        %v1708 = vadd.s32 %v1704, %v1706
        %v1709 = vadd.s32 %v1708, %v1698
        %v1710 = vadd.s32 %v1709, %v1700
        %v1711 = vmul.u32 %v1666, %v1657
        %v1712 = vadd.s32 %v1688, %v1707
        %vm1713 = vc.u32 %v1688, %v1707
        %v1714 = vadd.s32 %v1710, 1
        %v1715 = vsel %vm1713, %v1714, %v1710
        %v1716 = vadd.s32 %v1711, %v1715
        %v1717 = vadd.s32 %v1716, 536870912
        %v1718 = vshrl.u32 %v1717, 30
        %v1719 = vshll.u32 %v1718, 30
        %v1720 = vsub.s32 %v1716, %v1719
        %vm1721 = vcmp.lt.s32.totalorder %v1720, 0
        %v1722 = vsub.s32 0, %v1720
        %v1723 = vsel %vm1721, %v1722, %v1720
        %v1724 = vclz %v1723
        %v1725 = vsub.s32 %v1724, 2
        %vm1726 = vcmp.gt.s32.totalorder 0, %v1725
        %v1727 = vsel %vm1726, 0, %v1725
        %v1728 = vsub.s32 32, %v1727
        %v1729 = vshll.u32 %v1720, %v1727
        %v1730 = vshrl.u32 %v1712, %v1728
        %v1731 = vor.u32 %v1729, %v1730
        %v1732 = vsub.s32 4294967266, %v1727
        %v1733 = vadd.s32 %v1732, 127
        %v1734 = vshll.u32 %v1733, 23
        %v1735 = vor.u32 4788187, %v1734
        %v1736 = vand.u32 2147483647, %v1735
        %v1738 = vcvt.s32.f32 %v1731
        %v1739 = vmul.f32 %v1738, %v1736
        %v1740 = vxor.u32 %v1739, 2147483648
        %v1741 = vsel %vm1620, %v1740, %v1739
        %v1742 = vsub.s32 4, %v1718
        %v1743 = vsel %vm1620, %v1742, %v1718
        %v1744 = vsel %vm1619, %v278, %v1741
        %v1745 = vsel %vm1619, 0, %v1743
        %v1746 = vmul.f32 %v1744, %v1744
        %v1747 = vmul.f32 %v1746, -0.001358992
        %v1748 = vadd.f32 %v1747, 0.041655596
        %v1749 = vmul.f32 %v1746, %v1748
        %v1750 = vadd.f32 %v1749, -0.4999988
        %v1751 = vmul.f32 %v1746, %v1750
        %v1752 = vadd.f32 1.0, %v1751
        %v1753 = vmul.f32 %v1744, %v1744
        %v1754 = vmul.f32 %v1753, -0.00019511016
        %v1755 = vadd.f32 %v1754, 0.008332121
        %v1756 = vmul.f32 %v1753, %v1755
        %v1757 = vadd.f32 %v1756, -0.16666654
        %v1758 = vmul.f32 %v1753, %v1757
        %v1759 = vadd.f32 %v1758, 1.0
        %v1760 = vmul.f32 %v1759, %v1744
        %vm1761 = vweird.f32 %v278
        %v1762 = vadd.s32 %v1745, 3
        %v1763 = vand.u32 %v1762, 3
        %vm1764 = vcmp.lt.s32.totalorder %v1763, 2
        %vm1765 = vcmp.eq.s32.totalorder %v1763, 0
        %v1766 = vxor.u32 %v1760, 2147483648
        %v1767 = vsel %vm1765, %v1752, %v1766
        %vm1768 = vcmp.eq.s32.totalorder %v1763, 2
        %v1769 = vxor.u32 %v1752, 2147483648
        %v1770 = vsel %vm1768, %v1769, %v1760
        %v1771 = vsel %vm1764, %v1767, %v1770
        %v1772 = vsel %vm1761, nan, %v1771
        %v1773 = vand.u32 2147483647, %v343
        %vm1774 = vcmp.le.f32.partialorder %v1773, 0.7853982
        %vm1775 = vcmp.lt.s32.totalorder %v343, 0
        %v1776 = vand.u32 %v343, 2139095040
        %v1777 = vshrl.u32 %v1776, 23
        %v1778 = vsub.s32 %v1777, 127
        %v1779 = vand.u32 2147483647, %v343
        %v1780 = vand.u32 %v1779, 8388607
        %v1781 = vor.u32 %v1780, 8388608
        %v1782 = vsub.s32 0, %v1781
        %v1783 = vadd.s32 %v1778, 1
        %vm1784 = vcmp.gt.s32.totalorder %v1783, 0
        %v1785 = vsel %vm1784, %v1783, 0
        %v1786 = vshrl.u32 %v1785, 5
        %v1787 = vand.u32 %v1785, 31
        %v1788 = vsub.s32 32, %v1787
        %v1789 = vshrl.u32 683565275, %v1788
        %v1790 = vshll.u32 683565275, %v1787
        %v1791 = vshrl.u32 2475754826, %v1788
        %v1792 = vor.u32 %v1790, %v1791
        %v1793 = vshll.u32 2475754826, %v1787
        %v1794 = vshrl.u32 2131351028, %v1788
        %v1795 = vor.u32 %v1793, %v1794
        %v1796 = vshll.u32 2131351028, %v1787
        %v1797 = vshrl.u32 2102212464, %v1788
        %v1798 = vor.u32 %v1796, %v1797
        %v1799 = vshll.u32 2102212464, %v1787
        %v1800 = vshrl.u32 920167782, %v1788
        %v1801 = vor.u32 %v1799, %v1800
        %v1802 = vshll.u32 920167782, %v1787
        %v1803 = vshrl.u32 1326507024, %v1788
        %v1804 = vor.u32 %v1802, %v1803
        %vm1805 = vcmp.lt.s32.totalorder %v1786, 1
        %vm1806 = vcmp.lt.s32.totalorder %v1786, 2
        %vm1807 = vcmp.lt.s32.totalorder %v1786, 3
        %vm1808 = vcmp.lt.s32.totalorder %v1786, 4
        %v1809 = vsel %vm1805, %v1789, %v1792
        %v1810 = vsel %vm1808, %v1798, 2102212464
        %v1811 = vsel %vm1807, %v1795, %v1810
        %v1812 = vsel %vm1806, %v1809, %v1811
        %v1813 = vsel %vm1805, %v1792, %v1795
        %v1814 = vsel %vm1808, %v1801, 920167782
        %v1815 = vsel %vm1807, %v1798, %v1814
        %v1816 = vsel %vm1806, %v1813, %v1815
        %v1817 = vsel %vm1805, %v1795, %v1798
        %v1818 = vsel %vm1808, %v1804, 1326507024
        %v1819 = vsel %vm1807, %v1801, %v1818
        %v1820 = vsel %vm1806, %v1817, %v1819
        %v1821 = vshll.u32 %v1781, 8
        %v1822 = vand.u32 %v1821, 65535
        %v1823 = vshrl.u32 %v1821, 16
        %v1824 = vand.u32 %v1820, 65535
        %v1825 = vshrl.u32 %v1820, 16
        %v1826 = vmul.u32 %v1822, %v1824
        %v1827 = vmul.u32 %v1822, %v1825
        %v1828 = vmul.u32 %v1823, %v1824
        %v1829 = vmul.u32 %v1823, %v1825
        %v1830 = vshll.u32 %v1827, 16
        %v1831 = vshrl.u32 %v1827, 16
        %v1832 = vshll.u32 %v1828, 16
        %v1833 = vshrl.u32 %v1828, 16
        %vm1834 = vc.u32 %v1826, %v1830
        %v1835 = vsel %vm1834, 1, 0
        %v1836 = vadd.s32 %v1826, %v1830
        %v1837 = vadd.s32 %v1829, %v1835
        %vm1838 = vc.u32 %v1836, %v1832
        %v1839 = vsel %vm1838, 1, 0
        %v1840 = vadd.s32 %v1836, %v1832
        %v1841 = vadd.s32 %v1837, %v1839
        %v1842 = vadd.s32 %v1841, %v1831
        %v1843 = vadd.s32 %v1842, %v1833
        %v1844 = vand.u32 %v1821, 65535
        %v1845 = vshrl.u32 %v1821, 16
        %v1846 = vand.u32 %v1816, 65535
        %v1847 = vshrl.u32 %v1816, 16
        %v1848 = vmul.u32 %v1844, %v1846
        %v1849 = vmul.u32 %v1844, %v1847
        %v1850 = vmul.u32 %v1845, %v1846
        %v1851 = vmul.u32 %v1845, %v1847
        %v1852 = vshll.u32 %v1849, 16
        %v1853 = vshrl.u32 %v1849, 16
        %v1854 = vshll.u32 %v1850, 16
        %v1855 = vshrl.u32 %v1850, 16
        %vm1856 = vc.u32 %v1848, %v1852
        %v1857 = vsel %vm1856, 1, 0
        %v1858 = vadd.s32 %v1848, %v1852
        %v1859 = vadd.s32 %v1851, %v1857
        %vm1860 = vc.u32 %v1858, %v1854
        %v1861 = vsel %vm1860, 1, 0
        %v1862 = vadd.s32 %v1858, %v1854
        %v1863 = vadd.s32 %v1859, %v1861
        %v1864 = vadd.s32 %v1863, %v1853
        %v1865 = vadd.s32 %v1864, %v1855
        %v1866 = vmul.u32 %v1821, %v1812
        %v1867 = vadd.s32 %v1843, %v1862
        %vm1868 = vc.u32 %v1843, %v1862
        %v1869 = vadd.s32 %v1865, 1
        %v1870 = vsel %vm1868, %v1869, %v1865
        %v1871 = vadd.s32 %v1866, %v1870
        %v1872 = vadd.s32 %v1871, 536870912
        %v1873 = vshrl.u32 %v1872, 30
        %v1874 = vshll.u32 %v1873, 30
        %v1875 = vsub.s32 %v1871, %v1874
        %vm1876 = vcmp.lt.s32.totalorder %v1875, 0
        %v1877 = vsub.s32 0, %v1875
        %v1878 = vsel %vm1876, %v1877, %v1875
        %v1879 = vclz %v1878
        %v1880 = vsub.s32 %v1879, 2
        %vm1881 = vcmp.gt.s32.totalorder 0, %v1880
        %v1882 = vsel %vm1881, 0, %v1880
        %v1883 = vsub.s32 32, %v1882
        %v1884 = vshll.u32 %v1875, %v1882
        %v1885 = vshrl.u32 %v1867, %v1883
        %v1886 = vor.u32 %v1884, %v1885
        %v1887 = vsub.s32 4294967266, %v1882
        %v1888 = vadd.s32 %v1887, 127
        %v1889 = vshll.u32 %v1888, 23
        %v1890 = vor.u32 4788187, %v1889
        %v1891 = vand.u32 2147483647, %v1890
        %v1893 = vcvt.s32.f32 %v1886
        %v1894 = vmul.f32 %v1893, %v1891
        %v1895 = vxor.u32 %v1894, 2147483648
        %v1896 = vsel %vm1775, %v1895, %v1894
        %v1897 = vsub.s32 4, %v1873
        %v1898 = vsel %vm1775, %v1897, %v1873
        %v1899 = vsel %vm1774, %v343, %v1896
        %v1900 = vsel %vm1774, 0, %v1898
        %v1901 = vmul.f32 %v1899, %v1899
        %v1902 = vmul.f32 %v1901, -0.001358992
        %v1903 = vadd.f32 %v1902, 0.041655596
        %v1904 = vmul.f32 %v1901, %v1903
        %v1905 = vadd.f32 %v1904, -0.4999988
        %v1906 = vmul.f32 %v1901, %v1905
        %v1907 = vadd.f32 1.0, %v1906
        %v1908 = vmul.f32 %v1899, %v1899
        %v1909 = vmul.f32 %v1908, -0.00019511016
        %v1910 = vadd.f32 %v1909, 0.008332121
        %v1911 = vmul.f32 %v1908, %v1910
        %v1912 = vadd.f32 %v1911, -0.16666654
        %v1913 = vmul.f32 %v1908, %v1912
        %v1914 = vadd.f32 %v1913, 1.0
        %v1915 = vmul.f32 %v1914, %v1899
        %vm1916 = vweird.f32 %v343
        %v1917 = vadd.s32 %v1900, 3
        %v1918 = vand.u32 %v1917, 3
        %vm1919 = vcmp.lt.s32.totalorder %v1918, 2
        %vm1920 = vcmp.eq.s32.totalorder %v1918, 0
        %v1921 = vxor.u32 %v1915, 2147483648
        %v1922 = vsel %vm1920, %v1907, %v1921
        %vm1923 = vcmp.eq.s32.totalorder %v1918, 2
        %v1924 = vxor.u32 %v1907, 2147483648
        %v1925 = vsel %vm1923, %v1924, %v1915
        %v1926 = vsel %vm1919, %v1922, %v1925
        %v1927 = vsel %vm1916, nan, %v1926
        %v1928 = vand.u32 2147483647, %v281
        %vm1929 = vcmp.le.f32.partialorder %v1928, 0.7853982
        %vm1930 = vcmp.lt.s32.totalorder %v281, 0
        %v1931 = vand.u32 %v281, 2139095040
        %v1932 = vshrl.u32 %v1931, 23
        %v1933 = vsub.s32 %v1932, 127
        %v1934 = vand.u32 2147483647, %v281
        %v1935 = vand.u32 %v1934, 8388607
        %v1936 = vor.u32 %v1935, 8388608
        %v1937 = vsub.s32 0, %v1936
        %v1938 = vadd.s32 %v1933, 1
        %vm1939 = vcmp.gt.s32.totalorder %v1938, 0
        %v1940 = vsel %vm1939, %v1938, 0
        %v1941 = vshrl.u32 %v1940, 5
        %v1942 = vand.u32 %v1940, 31
        %v1943 = vsub.s32 32, %v1942
        %v1944 = vshrl.u32 683565275, %v1943
        %v1945 = vshll.u32 683565275, %v1942
        %v1946 = vshrl.u32 2475754826, %v1943
        %v1947 = vor.u32 %v1945, %v1946
        %v1948 = vshll.u32 2475754826, %v1942
        %v1949 = vshrl.u32 2131351028, %v1943
        %v1950 = vor.u32 %v1948, %v1949
        %v1951 = vshll.u32 2131351028, %v1942
        %v1952 = vshrl.u32 2102212464, %v1943
        %v1953 = vor.u32 %v1951, %v1952
        %v1954 = vshll.u32 2102212464, %v1942
        %v1955 = vshrl.u32 920167782, %v1943
        %v1956 = vor.u32 %v1954, %v1955
        %v1957 = vshll.u32 920167782, %v1942
        %v1958 = vshrl.u32 1326507024, %v1943
        %v1959 = vor.u32 %v1957, %v1958
        %vm1960 = vcmp.lt.s32.totalorder %v1941, 1
        %vm1961 = vcmp.lt.s32.totalorder %v1941, 2
        %vm1962 = vcmp.lt.s32.totalorder %v1941, 3
        %vm1963 = vcmp.lt.s32.totalorder %v1941, 4
        %v1964 = vsel %vm1960, %v1944, %v1947
        %v1965 = vsel %vm1963, %v1953, 2102212464
        %v1966 = vsel %vm1962, %v1950, %v1965
        %v1967 = vsel %vm1961, %v1964, %v1966
        %v1968 = vsel %vm1960, %v1947, %v1950
        %v1969 = vsel %vm1963, %v1956, 920167782
        %v1970 = vsel %vm1962, %v1953, %v1969
        %v1971 = vsel %vm1961, %v1968, %v1970
        %v1972 = vsel %vm1960, %v1950, %v1953
        %v1973 = vsel %vm1963, %v1959, 1326507024
        %v1974 = vsel %vm1962, %v1956, %v1973
        %v1975 = vsel %vm1961, %v1972, %v1974
        %v1976 = vshll.u32 %v1936, 8
        %v1977 = vand.u32 %v1976, 65535
        %v1978 = vshrl.u32 %v1976, 16
        %v1979 = vand.u32 %v1975, 65535
        %v1980 = vshrl.u32 %v1975, 16
        %v1981 = vmul.u32 %v1977, %v1979
        %v1982 = vmul.u32 %v1977, %v1980
        %v1983 = vmul.u32 %v1978, %v1979
        %v1984 = vmul.u32 %v1978, %v1980
        %v1985 = vshll.u32 %v1982, 16
        %v1986 = vshrl.u32 %v1982, 16
        %v1987 = vshll.u32 %v1983, 16
        %v1988 = vshrl.u32 %v1983, 16
        %vm1989 = vc.u32 %v1981, %v1985
        %v1990 = vsel %vm1989, 1, 0
        %v1991 = vadd.s32 %v1981, %v1985
        %v1992 = vadd.s32 %v1984, %v1990
        %vm1993 = vc.u32 %v1991, %v1987
        %v1994 = vsel %vm1993, 1, 0
        %v1995 = vadd.s32 %v1991, %v1987
        %v1996 = vadd.s32 %v1992, %v1994
        %v1997 = vadd.s32 %v1996, %v1986
        %v1998 = vadd.s32 %v1997, %v1988
        %v1999 = vand.u32 %v1976, 65535
        %v2000 = vshrl.u32 %v1976, 16
        %v2001 = vand.u32 %v1971, 65535
        %v2002 = vshrl.u32 %v1971, 16
        %v2003 = vmul.u32 %v1999, %v2001
        %v2004 = vmul.u32 %v1999, %v2002
        %v2005 = vmul.u32 %v2000, %v2001
        %v2006 = vmul.u32 %v2000, %v2002
        %v2007 = vshll.u32 %v2004, 16
        %v2008 = vshrl.u32 %v2004, 16
        %v2009 = vshll.u32 %v2005, 16
        %v2010 = vshrl.u32 %v2005, 16
        %vm2011 = vc.u32 %v2003, %v2007
        %v2012 = vsel %vm2011, 1, 0
        %v2013 = vadd.s32 %v2003, %v2007
        %v2014 = vadd.s32 %v2006, %v2012
        %vm2015 = vc.u32 %v2013, %v2009
        %v2016 = vsel %vm2015, 1, 0
        %v2017 = vadd.s32 %v2013, %v2009
        %v2018 = vadd.s32 %v2014, %v2016
        %v2019 = vadd.s32 %v2018, %v2008
        %v2020 = vadd.s32 %v2019, %v2010
        %v2021 = vmul.u32 %v1976, %v1967
        %v2022 = vadd.s32 %v1998, %v2017
        %vm2023 = vc.u32 %v1998, %v2017
        %v2024 = vadd.s32 %v2020, 1
        %v2025 = vsel %vm2023, %v2024, %v2020
        %v2026 = vadd.s32 %v2021, %v2025
        %v2027 = vadd.s32 %v2026, 536870912
        %v2028 = vshrl.u32 %v2027, 30
        %v2029 = vshll.u32 %v2028, 30
        %v2030 = vsub.s32 %v2026, %v2029
        %vm2031 = vcmp.lt.s32.totalorder %v2030, 0
        %v2032 = vsub.s32 0, %v2030
        %v2033 = vsel %vm2031, %v2032, %v2030
        %v2034 = vclz %v2033
        %v2035 = vsub.s32 %v2034, 2
        %vm2036 = vcmp.gt.s32.totalorder 0, %v2035
        %v2037 = vsel %vm2036, 0, %v2035
        %v2038 = vsub.s32 32, %v2037
        %v2039 = vshll.u32 %v2030, %v2037
        %v2040 = vshrl.u32 %v2022, %v2038
        %v2041 = vor.u32 %v2039, %v2040
        %v2042 = vsub.s32 4294967266, %v2037
        %v2043 = vadd.s32 %v2042, 127
        %v2044 = vshll.u32 %v2043, 23
        %v2045 = vor.u32 4788187, %v2044
        %v2046 = vand.u32 2147483647, %v2045
        %v2048 = vcvt.s32.f32 %v2041
        %v2049 = vmul.f32 %v2048, %v2046
        %v2050 = vxor.u32 %v2049, 2147483648
        %v2051 = vsel %vm1930, %v2050, %v2049
        %v2052 = vsub.s32 4, %v2028
        %v2053 = vsel %vm1930, %v2052, %v2028
        %v2054 = vsel %vm1929, %v281, %v2051
        %v2055 = vsel %vm1929, 0, %v2053
        %v2056 = vmul.f32 %v2054, %v2054
        %v2057 = vmul.f32 %v2056, -0.001358992
        %v2058 = vadd.f32 %v2057, 0.041655596
        %v2059 = vmul.f32 %v2056, %v2058
        %v2060 = vadd.f32 %v2059, -0.4999988
        %v2061 = vmul.f32 %v2056, %v2060
        %v2062 = vadd.f32 1.0, %v2061
        %v2063 = vmul.f32 %v2054, %v2054
        %v2064 = vmul.f32 %v2063, -0.00019511016
        %v2065 = vadd.f32 %v2064, 0.008332121
        %v2066 = vmul.f32 %v2063, %v2065
        %v2067 = vadd.f32 %v2066, -0.16666654
        %v2068 = vmul.f32 %v2063, %v2067
        %v2069 = vadd.f32 %v2068, 1.0
        %v2070 = vmul.f32 %v2069, %v2054
        %vm2071 = vweird.f32 %v281
        %v2072 = vadd.s32 %v2055, 3
        %v2073 = vand.u32 %v2072, 3
        %vm2074 = vcmp.lt.s32.totalorder %v2073, 2
        %vm2075 = vcmp.eq.s32.totalorder %v2073, 0
        %v2076 = vxor.u32 %v2070, 2147483648
        %v2077 = vsel %vm2075, %v2062, %v2076
        %vm2078 = vcmp.eq.s32.totalorder %v2073, 2
        %v2079 = vxor.u32 %v2062, 2147483648
        %v2080 = vsel %vm2078, %v2079, %v2070
        %v2081 = vsel %vm2074, %v2077, %v2080
        %v2082 = vsel %vm2071, nan, %v2081
        %v2083 = vand.u32 2147483647, %v346
        %vm2084 = vcmp.le.f32.partialorder %v2083, 0.7853982
        %vm2085 = vcmp.lt.s32.totalorder %v346, 0
        %v2086 = vand.u32 %v346, 2139095040
        %v2087 = vshrl.u32 %v2086, 23
        %v2088 = vsub.s32 %v2087, 127
        %v2089 = vand.u32 2147483647, %v346
        %v2090 = vand.u32 %v2089, 8388607
        %v2091 = vor.u32 %v2090, 8388608
        %v2092 = vsub.s32 0, %v2091
        %v2093 = vadd.s32 %v2088, 1
        %vm2094 = vcmp.gt.s32.totalorder %v2093, 0
        %v2095 = vsel %vm2094, %v2093, 0
        %v2096 = vshrl.u32 %v2095, 5
        %v2097 = vand.u32 %v2095, 31
        %v2098 = vsub.s32 32, %v2097
        %v2099 = vshrl.u32 683565275, %v2098
        %v2100 = vshll.u32 683565275, %v2097
        %v2101 = vshrl.u32 2475754826, %v2098
        %v2102 = vor.u32 %v2100, %v2101
        %v2103 = vshll.u32 2475754826, %v2097
        %v2104 = vshrl.u32 2131351028, %v2098
        %v2105 = vor.u32 %v2103, %v2104
        %v2106 = vshll.u32 2131351028, %v2097
        %v2107 = vshrl.u32 2102212464, %v2098
        %v2108 = vor.u32 %v2106, %v2107
        %v2109 = vshll.u32 2102212464, %v2097
        %v2110 = vshrl.u32 920167782, %v2098
        %v2111 = vor.u32 %v2109, %v2110
        %v2112 = vshll.u32 920167782, %v2097
        %v2113 = vshrl.u32 1326507024, %v2098
        %v2114 = vor.u32 %v2112, %v2113
        %vm2115 = vcmp.lt.s32.totalorder %v2096, 1
        %vm2116 = vcmp.lt.s32.totalorder %v2096, 2
        %vm2117 = vcmp.lt.s32.totalorder %v2096, 3
        %vm2118 = vcmp.lt.s32.totalorder %v2096, 4
        %v2119 = vsel %vm2115, %v2099, %v2102
        %v2120 = vsel %vm2118, %v2108, 2102212464
        %v2121 = vsel %vm2117, %v2105, %v2120
        %v2122 = vsel %vm2116, %v2119, %v2121
        %v2123 = vsel %vm2115, %v2102, %v2105
        %v2124 = vsel %vm2118, %v2111, 920167782
        %v2125 = vsel %vm2117, %v2108, %v2124
        %v2126 = vsel %vm2116, %v2123, %v2125
        %v2127 = vsel %vm2115, %v2105, %v2108
        %v2128 = vsel %vm2118, %v2114, 1326507024
        %v2129 = vsel %vm2117, %v2111, %v2128
        %v2130 = vsel %vm2116, %v2127, %v2129
        %v2131 = vshll.u32 %v2091, 8
        %v2132 = vand.u32 %v2131, 65535
        %v2133 = vshrl.u32 %v2131, 16
        %v2134 = vand.u32 %v2130, 65535
        %v2135 = vshrl.u32 %v2130, 16
        %v2136 = vmul.u32 %v2132, %v2134
        %v2137 = vmul.u32 %v2132, %v2135
        %v2138 = vmul.u32 %v2133, %v2134
        %v2139 = vmul.u32 %v2133, %v2135
        %v2140 = vshll.u32 %v2137, 16
        %v2141 = vshrl.u32 %v2137, 16
        %v2142 = vshll.u32 %v2138, 16
        %v2143 = vshrl.u32 %v2138, 16
        %vm2144 = vc.u32 %v2136, %v2140
        %v2145 = vsel %vm2144, 1, 0
        %v2146 = vadd.s32 %v2136, %v2140
        %v2147 = vadd.s32 %v2139, %v2145
        %vm2148 = vc.u32 %v2146, %v2142
        %v2149 = vsel %vm2148, 1, 0
        %v2150 = vadd.s32 %v2146, %v2142
        %v2151 = vadd.s32 %v2147, %v2149
        %v2152 = vadd.s32 %v2151, %v2141
        %v2153 = vadd.s32 %v2152, %v2143
        %v2154 = vand.u32 %v2131, 65535
        %v2155 = vshrl.u32 %v2131, 16
        %v2156 = vand.u32 %v2126, 65535
        %v2157 = vshrl.u32 %v2126, 16
        %v2158 = vmul.u32 %v2154, %v2156
        %v2159 = vmul.u32 %v2154, %v2157
        %v2160 = vmul.u32 %v2155, %v2156
        %v2161 = vmul.u32 %v2155, %v2157
        %v2162 = vshll.u32 %v2159, 16
        %v2163 = vshrl.u32 %v2159, 16
        %v2164 = vshll.u32 %v2160, 16
        %v2165 = vshrl.u32 %v2160, 16
        %vm2166 = vc.u32 %v2158, %v2162
        %v2167 = vsel %vm2166, 1, 0
        %v2168 = vadd.s32 %v2158, %v2162
        %v2169 = vadd.s32 %v2161, %v2167
        %vm2170 = vc.u32 %v2168, %v2164
        %v2171 = vsel %vm2170, 1, 0
        %v2172 = vadd.s32 %v2168, %v2164
        %v2173 = vadd.s32 %v2169, %v2171
        %v2174 = vadd.s32 %v2173, %v2163
        %v2175 = vadd.s32 %v2174, %v2165
        %v2176 = vmul.u32 %v2131, %v2122
        %v2177 = vadd.s32 %v2153, %v2172
        %vm2178 = vc.u32 %v2153, %v2172
        %v2179 = vadd.s32 %v2175, 1
        %v2180 = vsel %vm2178, %v2179, %v2175
        %v2181 = vadd.s32 %v2176, %v2180
        %v2182 = vadd.s32 %v2181, 536870912
        %v2183 = vshrl.u32 %v2182, 30
        %v2184 = vshll.u32 %v2183, 30
        %v2185 = vsub.s32 %v2181, %v2184
        %vm2186 = vcmp.lt.s32.totalorder %v2185, 0
        %v2187 = vsub.s32 0, %v2185
        %v2188 = vsel %vm2186, %v2187, %v2185
        %v2189 = vclz %v2188
        %v2190 = vsub.s32 %v2189, 2
        %vm2191 = vcmp.gt.s32.totalorder 0, %v2190
        %v2192 = vsel %vm2191, 0, %v2190
        %v2193 = vsub.s32 32, %v2192
        %v2194 = vshll.u32 %v2185, %v2192
        %v2195 = vshrl.u32 %v2177, %v2193
        %v2196 = vor.u32 %v2194, %v2195
        %v2197 = vsub.s32 4294967266, %v2192
        %v2198 = vadd.s32 %v2197, 127
        %v2199 = vshll.u32 %v2198, 23
        %v2200 = vor.u32 4788187, %v2199
        %v2201 = vand.u32 2147483647, %v2200
        %v2203 = vcvt.s32.f32 %v2196
        %v2204 = vmul.f32 %v2203, %v2201
        %v2205 = vxor.u32 %v2204, 2147483648
        %v2206 = vsel %vm2085, %v2205, %v2204
        %v2207 = vsub.s32 4, %v2183
        %v2208 = vsel %vm2085, %v2207, %v2183
        %v2209 = vsel %vm2084, %v346, %v2206
        %v2210 = vsel %vm2084, 0, %v2208
        %v2211 = vmul.f32 %v2209, %v2209
        %v2212 = vmul.f32 %v2211, -0.001358992
        %v2213 = vadd.f32 %v2212, 0.041655596
        %v2214 = vmul.f32 %v2211, %v2213
        %v2215 = vadd.f32 %v2214, -0.4999988
        %v2216 = vmul.f32 %v2211, %v2215
        %v2217 = vadd.f32 1.0, %v2216
        %v2218 = vmul.f32 %v2209, %v2209
        %v2219 = vmul.f32 %v2218, -0.00019511016
        %v2220 = vadd.f32 %v2219, 0.008332121
        %v2221 = vmul.f32 %v2218, %v2220
        %v2222 = vadd.f32 %v2221, -0.16666654
        %v2223 = vmul.f32 %v2218, %v2222
        %v2224 = vadd.f32 %v2223, 1.0
        %v2225 = vmul.f32 %v2224, %v2209
        %vm2226 = vweird.f32 %v346
        %v2227 = vadd.s32 %v2210, 3
        %v2228 = vand.u32 %v2227, 3
        %vm2229 = vcmp.lt.s32.totalorder %v2228, 2
        %vm2230 = vcmp.eq.s32.totalorder %v2228, 0
        %v2231 = vxor.u32 %v2225, 2147483648
        %v2232 = vsel %vm2230, %v2217, %v2231
        %vm2233 = vcmp.eq.s32.totalorder %v2228, 2
        %v2234 = vxor.u32 %v2217, 2147483648
        %v2235 = vsel %vm2233, %v2234, %v2225
        %v2236 = vsel %vm2229, %v2232, %v2235
        %v2237 = vsel %vm2226, nan, %v2236
        %v2238 = vand.u32 2147483647, %v284
        %vm2239 = vcmp.le.f32.partialorder %v2238, 0.7853982
        %vm2240 = vcmp.lt.s32.totalorder %v284, 0
        %v2241 = vand.u32 %v284, 2139095040
        %v2242 = vshrl.u32 %v2241, 23
        %v2243 = vsub.s32 %v2242, 127
        %v2244 = vand.u32 2147483647, %v284
        %v2245 = vand.u32 %v2244, 8388607
        %v2246 = vor.u32 %v2245, 8388608
        %v2247 = vsub.s32 0, %v2246
        %v2248 = vadd.s32 %v2243, 1
        %vm2249 = vcmp.gt.s32.totalorder %v2248, 0
        %v2250 = vsel %vm2249, %v2248, 0
        %v2251 = vshrl.u32 %v2250, 5
        %v2252 = vand.u32 %v2250, 31
        %v2253 = vsub.s32 32, %v2252
        %v2254 = vshrl.u32 683565275, %v2253
        %v2255 = vshll.u32 683565275, %v2252
        %v2256 = vshrl.u32 2475754826, %v2253
        %v2257 = vor.u32 %v2255, %v2256
        %v2258 = vshll.u32 2475754826, %v2252
        %v2259 = vshrl.u32 2131351028, %v2253
        %v2260 = vor.u32 %v2258, %v2259
        %v2261 = vshll.u32 2131351028, %v2252
        %v2262 = vshrl.u32 2102212464, %v2253
        %v2263 = vor.u32 %v2261, %v2262
        %v2264 = vshll.u32 2102212464, %v2252
        %v2265 = vshrl.u32 920167782, %v2253
        %v2266 = vor.u32 %v2264, %v2265
        %v2267 = vshll.u32 920167782, %v2252
        %v2268 = vshrl.u32 1326507024, %v2253
        %v2269 = vor.u32 %v2267, %v2268
        %vm2270 = vcmp.lt.s32.totalorder %v2251, 1
        %vm2271 = vcmp.lt.s32.totalorder %v2251, 2
        %vm2272 = vcmp.lt.s32.totalorder %v2251, 3
        %vm2273 = vcmp.lt.s32.totalorder %v2251, 4
        %v2274 = vsel %vm2270, %v2254, %v2257
        %v2275 = vsel %vm2273, %v2263, 2102212464
        %v2276 = vsel %vm2272, %v2260, %v2275
        %v2277 = vsel %vm2271, %v2274, %v2276
        %v2278 = vsel %vm2270, %v2257, %v2260
        %v2279 = vsel %vm2273, %v2266, 920167782
        %v2280 = vsel %vm2272, %v2263, %v2279
        %v2281 = vsel %vm2271, %v2278, %v2280
        %v2282 = vsel %vm2270, %v2260, %v2263
        %v2283 = vsel %vm2273, %v2269, 1326507024
        %v2284 = vsel %vm2272, %v2266, %v2283
        %v2285 = vsel %vm2271, %v2282, %v2284
        %v2286 = vshll.u32 %v2246, 8
        %v2287 = vand.u32 %v2286, 65535
        %v2288 = vshrl.u32 %v2286, 16
        %v2289 = vand.u32 %v2285, 65535
        %v2290 = vshrl.u32 %v2285, 16
        %v2291 = vmul.u32 %v2287, %v2289
        %v2292 = vmul.u32 %v2287, %v2290
        %v2293 = vmul.u32 %v2288, %v2289
        %v2294 = vmul.u32 %v2288, %v2290
        %v2295 = vshll.u32 %v2292, 16
        %v2296 = vshrl.u32 %v2292, 16
        %v2297 = vshll.u32 %v2293, 16
        %v2298 = vshrl.u32 %v2293, 16
        %vm2299 = vc.u32 %v2291, %v2295
        %v2300 = vsel %vm2299, 1, 0
        %v2301 = vadd.s32 %v2291, %v2295
        %v2302 = vadd.s32 %v2294, %v2300
        %vm2303 = vc.u32 %v2301, %v2297
        %v2304 = vsel %vm2303, 1, 0
        %v2305 = vadd.s32 %v2301, %v2297
        %v2306 = vadd.s32 %v2302, %v2304
        %v2307 = vadd.s32 %v2306, %v2296
        %v2308 = vadd.s32 %v2307, %v2298
        %v2309 = vand.u32 %v2286, 65535
        %v2310 = vshrl.u32 %v2286, 16
        %v2311 = vand.u32 %v2281, 65535
        %v2312 = vshrl.u32 %v2281, 16
        %v2313 = vmul.u32 %v2309, %v2311
        %v2314 = vmul.u32 %v2309, %v2312
        %v2315 = vmul.u32 %v2310, %v2311
        %v2316 = vmul.u32 %v2310, %v2312
        %v2317 = vshll.u32 %v2314, 16
        %v2318 = vshrl.u32 %v2314, 16
        %v2319 = vshll.u32 %v2315, 16
        %v2320 = vshrl.u32 %v2315, 16
        %vm2321 = vc.u32 %v2313, %v2317
        %v2322 = vsel %vm2321, 1, 0
        %v2323 = vadd.s32 %v2313, %v2317
        %v2324 = vadd.s32 %v2316, %v2322
        %vm2325 = vc.u32 %v2323, %v2319
        %v2326 = vsel %vm2325, 1, 0
        %v2327 = vadd.s32 %v2323, %v2319
        %v2328 = vadd.s32 %v2324, %v2326
        %v2329 = vadd.s32 %v2328, %v2318
        %v2330 = vadd.s32 %v2329, %v2320
        %v2331 = vmul.u32 %v2286, %v2277
        %v2332 = vadd.s32 %v2308, %v2327
        %vm2333 = vc.u32 %v2308, %v2327
        %v2334 = vadd.s32 %v2330, 1
        %v2335 = vsel %vm2333, %v2334, %v2330
        %v2336 = vadd.s32 %v2331, %v2335
        %v2337 = vadd.s32 %v2336, 536870912
        %v2338 = vshrl.u32 %v2337, 30
        %v2339 = vshll.u32 %v2338, 30
        %v2340 = vsub.s32 %v2336, %v2339
        %vm2341 = vcmp.lt.s32.totalorder %v2340, 0
        %v2342 = vsub.s32 0, %v2340
        %v2343 = vsel %vm2341, %v2342, %v2340
        %v2344 = vclz %v2343
        %v2345 = vsub.s32 %v2344, 2
        %vm2346 = vcmp.gt.s32.totalorder 0, %v2345
        %v2347 = vsel %vm2346, 0, %v2345
        %v2348 = vsub.s32 32, %v2347
        %v2349 = vshll.u32 %v2340, %v2347
        %v2350 = vshrl.u32 %v2332, %v2348
        %v2351 = vor.u32 %v2349, %v2350
        %v2352 = vsub.s32 4294967266, %v2347
        %v2353 = vadd.s32 %v2352, 127
        %v2354 = vshll.u32 %v2353, 23
        %v2355 = vor.u32 4788187, %v2354
        %v2356 = vand.u32 2147483647, %v2355
        %v2358 = vcvt.s32.f32 %v2351
        %v2359 = vmul.f32 %v2358, %v2356
        %v2360 = vxor.u32 %v2359, 2147483648
        %v2361 = vsel %vm2240, %v2360, %v2359
        %v2362 = vsub.s32 4, %v2338
        %v2363 = vsel %vm2240, %v2362, %v2338
        %v2364 = vsel %vm2239, %v284, %v2361
        %v2365 = vsel %vm2239, 0, %v2363
        %v2366 = vmul.f32 %v2364, %v2364
        %v2367 = vmul.f32 %v2366, -0.001358992
        %v2368 = vadd.f32 %v2367, 0.041655596
        %v2369 = vmul.f32 %v2366, %v2368
        %v2370 = vadd.f32 %v2369, -0.4999988
        %v2371 = vmul.f32 %v2366, %v2370
        %v2372 = vadd.f32 1.0, %v2371
        %v2373 = vmul.f32 %v2364, %v2364
        %v2374 = vmul.f32 %v2373, -0.00019511016
        %v2375 = vadd.f32 %v2374, 0.008332121
        %v2376 = vmul.f32 %v2373, %v2375
        %v2377 = vadd.f32 %v2376, -0.16666654
        %v2378 = vmul.f32 %v2373, %v2377
        %v2379 = vadd.f32 %v2378, 1.0
        %v2380 = vmul.f32 %v2379, %v2364
        %vm2381 = vweird.f32 %v284
        %v2382 = vadd.s32 %v2365, 3
        %v2383 = vand.u32 %v2382, 3
        %vm2384 = vcmp.lt.s32.totalorder %v2383, 2
        %vm2385 = vcmp.eq.s32.totalorder %v2383, 0
        %v2386 = vxor.u32 %v2380, 2147483648
        %v2387 = vsel %vm2385, %v2372, %v2386
        %vm2388 = vcmp.eq.s32.totalorder %v2383, 2
        %v2389 = vxor.u32 %v2372, 2147483648
        %v2390 = vsel %vm2388, %v2389, %v2380
        %v2391 = vsel %vm2384, %v2387, %v2390
        %v2392 = vsel %vm2381, nan, %v2391
        %v2393 = vand.u32 2147483647, %v349
        %vm2394 = vcmp.le.f32.partialorder %v2393, 0.7853982
        %vm2395 = vcmp.lt.s32.totalorder %v349, 0
        %v2396 = vand.u32 %v349, 2139095040
        %v2397 = vshrl.u32 %v2396, 23
        %v2398 = vsub.s32 %v2397, 127
        %v2399 = vand.u32 2147483647, %v349
        %v2400 = vand.u32 %v2399, 8388607
        %v2401 = vor.u32 %v2400, 8388608
        %v2402 = vsub.s32 0, %v2401
        %v2403 = vadd.s32 %v2398, 1
        %vm2404 = vcmp.gt.s32.totalorder %v2403, 0
        %v2405 = vsel %vm2404, %v2403, 0
        %v2406 = vshrl.u32 %v2405, 5
        %v2407 = vand.u32 %v2405, 31
        %v2408 = vsub.s32 32, %v2407
        %v2409 = vshrl.u32 683565275, %v2408
        %v2410 = vshll.u32 683565275, %v2407
        %v2411 = vshrl.u32 2475754826, %v2408
        %v2412 = vor.u32 %v2410, %v2411
        %v2413 = vshll.u32 2475754826, %v2407
        %v2414 = vshrl.u32 2131351028, %v2408
        %v2415 = vor.u32 %v2413, %v2414
        %v2416 = vshll.u32 2131351028, %v2407
        %v2417 = vshrl.u32 2102212464, %v2408
        %v2418 = vor.u32 %v2416, %v2417
        %v2419 = vshll.u32 2102212464, %v2407
        %v2420 = vshrl.u32 920167782, %v2408
        %v2421 = vor.u32 %v2419, %v2420
        %v2422 = vshll.u32 920167782, %v2407
        %v2423 = vshrl.u32 1326507024, %v2408
        %v2424 = vor.u32 %v2422, %v2423
        %vm2425 = vcmp.lt.s32.totalorder %v2406, 1
        %vm2426 = vcmp.lt.s32.totalorder %v2406, 2
        %vm2427 = vcmp.lt.s32.totalorder %v2406, 3
        %vm2428 = vcmp.lt.s32.totalorder %v2406, 4
        %v2429 = vsel %vm2425, %v2409, %v2412
        %v2430 = vsel %vm2428, %v2418, 2102212464
        %v2431 = vsel %vm2427, %v2415, %v2430
        %v2432 = vsel %vm2426, %v2429, %v2431
        %v2433 = vsel %vm2425, %v2412, %v2415
        %v2434 = vsel %vm2428, %v2421, 920167782
        %v2435 = vsel %vm2427, %v2418, %v2434
        %v2436 = vsel %vm2426, %v2433, %v2435
        %v2437 = vsel %vm2425, %v2415, %v2418
        %v2438 = vsel %vm2428, %v2424, 1326507024
        %v2439 = vsel %vm2427, %v2421, %v2438
        %v2440 = vsel %vm2426, %v2437, %v2439
        %v2441 = vshll.u32 %v2401, 8
        %v2442 = vand.u32 %v2441, 65535
        %v2443 = vshrl.u32 %v2441, 16
        %v2444 = vand.u32 %v2440, 65535
        %v2445 = vshrl.u32 %v2440, 16
        %v2446 = vmul.u32 %v2442, %v2444
        %v2447 = vmul.u32 %v2442, %v2445
        %v2448 = vmul.u32 %v2443, %v2444
        %v2449 = vmul.u32 %v2443, %v2445
        %v2450 = vshll.u32 %v2447, 16
        %v2451 = vshrl.u32 %v2447, 16
        %v2452 = vshll.u32 %v2448, 16
        %v2453 = vshrl.u32 %v2448, 16
        %vm2454 = vc.u32 %v2446, %v2450
        %v2455 = vsel %vm2454, 1, 0
        %v2456 = vadd.s32 %v2446, %v2450
        %v2457 = vadd.s32 %v2449, %v2455
        %vm2458 = vc.u32 %v2456, %v2452
        %v2459 = vsel %vm2458, 1, 0
        %v2460 = vadd.s32 %v2456, %v2452
        %v2461 = vadd.s32 %v2457, %v2459
        %v2462 = vadd.s32 %v2461, %v2451
        %v2463 = vadd.s32 %v2462, %v2453
        %v2464 = vand.u32 %v2441, 65535
        %v2465 = vshrl.u32 %v2441, 16
        %v2466 = vand.u32 %v2436, 65535
        %v2467 = vshrl.u32 %v2436, 16
        %v2468 = vmul.u32 %v2464, %v2466
        %v2469 = vmul.u32 %v2464, %v2467
        %v2470 = vmul.u32 %v2465, %v2466
        %v2471 = vmul.u32 %v2465, %v2467
        %v2472 = vshll.u32 %v2469, 16
        %v2473 = vshrl.u32 %v2469, 16
        %v2474 = vshll.u32 %v2470, 16
        %v2475 = vshrl.u32 %v2470, 16
        %vm2476 = vc.u32 %v2468, %v2472
        %v2477 = vsel %vm2476, 1, 0
        %v2478 = vadd.s32 %v2468, %v2472
        %v2479 = vadd.s32 %v2471, %v2477
        %vm2480 = vc.u32 %v2478, %v2474
        %v2481 = vsel %vm2480, 1, 0
        %v2482 = vadd.s32 %v2478, %v2474
        %v2483 = vadd.s32 %v2479, %v2481
        %v2484 = vadd.s32 %v2483, %v2473
        %v2485 = vadd.s32 %v2484, %v2475
        %v2486 = vmul.u32 %v2441, %v2432
        %v2487 = vadd.s32 %v2463, %v2482
        %vm2488 = vc.u32 %v2463, %v2482
        %v2489 = vadd.s32 %v2485, 1
        %v2490 = vsel %vm2488, %v2489, %v2485
        %v2491 = vadd.s32 %v2486, %v2490
        %v2492 = vadd.s32 %v2491, 536870912
        %v2493 = vshrl.u32 %v2492, 30
        %v2494 = vshll.u32 %v2493, 30
        %v2495 = vsub.s32 %v2491, %v2494
        %vm2496 = vcmp.lt.s32.totalorder %v2495, 0
        %v2497 = vsub.s32 0, %v2495
        %v2498 = vsel %vm2496, %v2497, %v2495
        %v2499 = vclz %v2498
        %v2500 = vsub.s32 %v2499, 2
        %vm2501 = vcmp.gt.s32.totalorder 0, %v2500
        %v2502 = vsel %vm2501, 0, %v2500
        %v2503 = vsub.s32 32, %v2502
        %v2504 = vshll.u32 %v2495, %v2502
        %v2505 = vshrl.u32 %v2487, %v2503
        %v2506 = vor.u32 %v2504, %v2505
        %v2507 = vsub.s32 4294967266, %v2502
        %v2508 = vadd.s32 %v2507, 127
        %v2509 = vshll.u32 %v2508, 23
        %v2510 = vor.u32 4788187, %v2509
        %v2511 = vand.u32 2147483647, %v2510
        %v2513 = vcvt.s32.f32 %v2506
        %v2514 = vmul.f32 %v2513, %v2511
        %v2515 = vxor.u32 %v2514, 2147483648
        %v2516 = vsel %vm2395, %v2515, %v2514
        %v2517 = vsub.s32 4, %v2493
        %v2518 = vsel %vm2395, %v2517, %v2493
        %v2519 = vsel %vm2394, %v349, %v2516
        %v2520 = vsel %vm2394, 0, %v2518
        %v2521 = vmul.f32 %v2519, %v2519
        %v2522 = vmul.f32 %v2521, -0.001358992
        %v2523 = vadd.f32 %v2522, 0.041655596
        %v2524 = vmul.f32 %v2521, %v2523
        %v2525 = vadd.f32 %v2524, -0.4999988
        %v2526 = vmul.f32 %v2521, %v2525
        %v2527 = vadd.f32 1.0, %v2526
        %v2528 = vmul.f32 %v2519, %v2519
        %v2529 = vmul.f32 %v2528, -0.00019511016
        %v2530 = vadd.f32 %v2529, 0.008332121
        %v2531 = vmul.f32 %v2528, %v2530
        %v2532 = vadd.f32 %v2531, -0.16666654
        %v2533 = vmul.f32 %v2528, %v2532
        %v2534 = vadd.f32 %v2533, 1.0
        %v2535 = vmul.f32 %v2534, %v2519
        %vm2536 = vweird.f32 %v349
        %v2537 = vadd.s32 %v2520, 3
        %v2538 = vand.u32 %v2537, 3
        %vm2539 = vcmp.lt.s32.totalorder %v2538, 2
        %vm2540 = vcmp.eq.s32.totalorder %v2538, 0
        %v2541 = vxor.u32 %v2535, 2147483648
        %v2542 = vsel %vm2540, %v2527, %v2541
        %vm2543 = vcmp.eq.s32.totalorder %v2538, 2
        %v2544 = vxor.u32 %v2527, 2147483648
        %v2545 = vsel %vm2543, %v2544, %v2535
        %v2546 = vsel %vm2539, %v2542, %v2545
        %v2547 = vsel %vm2536, nan, %v2546
        %v2548 = vand.u32 2147483647, %v287
        %vm2549 = vcmp.le.f32.partialorder %v2548, 0.7853982
        %vm2550 = vcmp.lt.s32.totalorder %v287, 0
        %v2551 = vand.u32 %v287, 2139095040
        %v2552 = vshrl.u32 %v2551, 23
        %v2553 = vsub.s32 %v2552, 127
        %v2554 = vand.u32 2147483647, %v287
        %v2555 = vand.u32 %v2554, 8388607
        %v2556 = vor.u32 %v2555, 8388608
        %v2557 = vsub.s32 0, %v2556
        %v2558 = vadd.s32 %v2553, 1
        %vm2559 = vcmp.gt.s32.totalorder %v2558, 0
        %v2560 = vsel %vm2559, %v2558, 0
        %v2561 = vshrl.u32 %v2560, 5
        %v2562 = vand.u32 %v2560, 31
        %v2563 = vsub.s32 32, %v2562
        %v2564 = vshrl.u32 683565275, %v2563
        %v2565 = vshll.u32 683565275, %v2562
        %v2566 = vshrl.u32 2475754826, %v2563
        %v2567 = vor.u32 %v2565, %v2566
        %v2568 = vshll.u32 2475754826, %v2562
        %v2569 = vshrl.u32 2131351028, %v2563
        %v2570 = vor.u32 %v2568, %v2569
        %v2571 = vshll.u32 2131351028, %v2562
        %v2572 = vshrl.u32 2102212464, %v2563
        %v2573 = vor.u32 %v2571, %v2572
        %v2574 = vshll.u32 2102212464, %v2562
        %v2575 = vshrl.u32 920167782, %v2563
        %v2576 = vor.u32 %v2574, %v2575
        %v2577 = vshll.u32 920167782, %v2562
        %v2578 = vshrl.u32 1326507024, %v2563
        %v2579 = vor.u32 %v2577, %v2578
        %vm2580 = vcmp.lt.s32.totalorder %v2561, 1
        %vm2581 = vcmp.lt.s32.totalorder %v2561, 2
        %vm2582 = vcmp.lt.s32.totalorder %v2561, 3
        %vm2583 = vcmp.lt.s32.totalorder %v2561, 4
        %v2584 = vsel %vm2580, %v2564, %v2567
        %v2585 = vsel %vm2583, %v2573, 2102212464
        %v2586 = vsel %vm2582, %v2570, %v2585
        %v2587 = vsel %vm2581, %v2584, %v2586
        %v2588 = vsel %vm2580, %v2567, %v2570
        %v2589 = vsel %vm2583, %v2576, 920167782
        %v2590 = vsel %vm2582, %v2573, %v2589
        %v2591 = vsel %vm2581, %v2588, %v2590
        %v2592 = vsel %vm2580, %v2570, %v2573
        %v2593 = vsel %vm2583, %v2579, 1326507024
        %v2594 = vsel %vm2582, %v2576, %v2593
        %v2595 = vsel %vm2581, %v2592, %v2594
        %v2596 = vshll.u32 %v2556, 8
        %v2597 = vand.u32 %v2596, 65535
        %v2598 = vshrl.u32 %v2596, 16
        %v2599 = vand.u32 %v2595, 65535
        %v2600 = vshrl.u32 %v2595, 16
        %v2601 = vmul.u32 %v2597, %v2599
        %v2602 = vmul.u32 %v2597, %v2600
        %v2603 = vmul.u32 %v2598, %v2599
        %v2604 = vmul.u32 %v2598, %v2600
        %v2605 = vshll.u32 %v2602, 16
        %v2606 = vshrl.u32 %v2602, 16
        %v2607 = vshll.u32 %v2603, 16
        %v2608 = vshrl.u32 %v2603, 16
        %vm2609 = vc.u32 %v2601, %v2605
        %v2610 = vsel %vm2609, 1, 0
        %v2611 = vadd.s32 %v2601, %v2605
        %v2612 = vadd.s32 %v2604, %v2610
        %vm2613 = vc.u32 %v2611, %v2607
        %v2614 = vsel %vm2613, 1, 0
        %v2615 = vadd.s32 %v2611, %v2607
        %v2616 = vadd.s32 %v2612, %v2614
        %v2617 = vadd.s32 %v2616, %v2606
        %v2618 = vadd.s32 %v2617, %v2608
        %v2619 = vand.u32 %v2596, 65535
        %v2620 = vshrl.u32 %v2596, 16
        %v2621 = vand.u32 %v2591, 65535
        %v2622 = vshrl.u32 %v2591, 16
        %v2623 = vmul.u32 %v2619, %v2621
        %v2624 = vmul.u32 %v2619, %v2622
        %v2625 = vmul.u32 %v2620, %v2621
        %v2626 = vmul.u32 %v2620, %v2622
        %v2627 = vshll.u32 %v2624, 16
        %v2628 = vshrl.u32 %v2624, 16
        %v2629 = vshll.u32 %v2625, 16
        %v2630 = vshrl.u32 %v2625, 16
        %vm2631 = vc.u32 %v2623, %v2627
        %v2632 = vsel %vm2631, 1, 0
        %v2633 = vadd.s32 %v2623, %v2627
        %v2634 = vadd.s32 %v2626, %v2632
        %vm2635 = vc.u32 %v2633, %v2629
        %v2636 = vsel %vm2635, 1, 0
        %v2637 = vadd.s32 %v2633, %v2629
        %v2638 = vadd.s32 %v2634, %v2636
        %v2639 = vadd.s32 %v2638, %v2628
        %v2640 = vadd.s32 %v2639, %v2630
        %v2641 = vmul.u32 %v2596, %v2587
        %v2642 = vadd.s32 %v2618, %v2637
        %vm2643 = vc.u32 %v2618, %v2637
        %v2644 = vadd.s32 %v2640, 1
        %v2645 = vsel %vm2643, %v2644, %v2640
        %v2646 = vadd.s32 %v2641, %v2645
        %v2647 = vadd.s32 %v2646, 536870912
        %v2648 = vshrl.u32 %v2647, 30
        %v2649 = vshll.u32 %v2648, 30
        %v2650 = vsub.s32 %v2646, %v2649
        %vm2651 = vcmp.lt.s32.totalorder %v2650, 0
        %v2652 = vsub.s32 0, %v2650
        %v2653 = vsel %vm2651, %v2652, %v2650
        %v2654 = vclz %v2653
        %v2655 = vsub.s32 %v2654, 2
        %vm2656 = vcmp.gt.s32.totalorder 0, %v2655
        %v2657 = vsel %vm2656, 0, %v2655
        %v2658 = vsub.s32 32, %v2657
        %v2659 = vshll.u32 %v2650, %v2657
        %v2660 = vshrl.u32 %v2642, %v2658
        %v2661 = vor.u32 %v2659, %v2660
        %v2662 = vsub.s32 4294967266, %v2657
        %v2663 = vadd.s32 %v2662, 127
        %v2664 = vshll.u32 %v2663, 23
        %v2665 = vor.u32 4788187, %v2664
        %v2666 = vand.u32 2147483647, %v2665
        %v2668 = vcvt.s32.f32 %v2661
        %v2669 = vmul.f32 %v2668, %v2666
        %v2670 = vxor.u32 %v2669, 2147483648
        %v2671 = vsel %vm2550, %v2670, %v2669
        %v2672 = vsub.s32 4, %v2648
        %v2673 = vsel %vm2550, %v2672, %v2648
        %v2674 = vsel %vm2549, %v287, %v2671
        %v2675 = vsel %vm2549, 0, %v2673
        %v2676 = vmul.f32 %v2674, %v2674
        %v2677 = vmul.f32 %v2676, -0.001358992
        %v2678 = vadd.f32 %v2677, 0.041655596
        %v2679 = vmul.f32 %v2676, %v2678
        %v2680 = vadd.f32 %v2679, -0.4999988
        %v2681 = vmul.f32 %v2676, %v2680
        %v2682 = vadd.f32 1.0, %v2681
        %v2683 = vmul.f32 %v2674, %v2674
        %v2684 = vmul.f32 %v2683, -0.00019511016
        %v2685 = vadd.f32 %v2684, 0.008332121
        %v2686 = vmul.f32 %v2683, %v2685
        %v2687 = vadd.f32 %v2686, -0.16666654
        %v2688 = vmul.f32 %v2683, %v2687
        %v2689 = vadd.f32 %v2688, 1.0
        %v2690 = vmul.f32 %v2689, %v2674
        %vm2691 = vweird.f32 %v287
        %v2692 = vadd.s32 %v2675, 3
        %v2693 = vand.u32 %v2692, 3
        %vm2694 = vcmp.lt.s32.totalorder %v2693, 2
        %vm2695 = vcmp.eq.s32.totalorder %v2693, 0
        %v2696 = vxor.u32 %v2690, 2147483648
        %v2697 = vsel %vm2695, %v2682, %v2696
        %vm2698 = vcmp.eq.s32.totalorder %v2693, 2
        %v2699 = vxor.u32 %v2682, 2147483648
        %v2700 = vsel %vm2698, %v2699, %v2690
        %v2701 = vsel %vm2694, %v2697, %v2700
        %v2702 = vsel %vm2691, nan, %v2701
        %v2703 = vand.u32 2147483647, %v352
        %vm2704 = vcmp.le.f32.partialorder %v2703, 0.7853982
        %vm2705 = vcmp.lt.s32.totalorder %v352, 0
        %v2706 = vand.u32 %v352, 2139095040
        %v2707 = vshrl.u32 %v2706, 23
        %v2708 = vsub.s32 %v2707, 127
        %v2709 = vand.u32 2147483647, %v352
        %v2710 = vand.u32 %v2709, 8388607
        %v2711 = vor.u32 %v2710, 8388608
        %v2712 = vsub.s32 0, %v2711
        %v2713 = vadd.s32 %v2708, 1
        %vm2714 = vcmp.gt.s32.totalorder %v2713, 0
        %v2715 = vsel %vm2714, %v2713, 0
        %v2716 = vshrl.u32 %v2715, 5
        %v2717 = vand.u32 %v2715, 31
        %v2718 = vsub.s32 32, %v2717
        %v2719 = vshrl.u32 683565275, %v2718
        %v2720 = vshll.u32 683565275, %v2717
        %v2721 = vshrl.u32 2475754826, %v2718
        %v2722 = vor.u32 %v2720, %v2721
        %v2723 = vshll.u32 2475754826, %v2717
        %v2724 = vshrl.u32 2131351028, %v2718
        %v2725 = vor.u32 %v2723, %v2724
        %v2726 = vshll.u32 2131351028, %v2717
        %v2727 = vshrl.u32 2102212464, %v2718
        %v2728 = vor.u32 %v2726, %v2727
        %v2729 = vshll.u32 2102212464, %v2717
        %v2730 = vshrl.u32 920167782, %v2718
        %v2731 = vor.u32 %v2729, %v2730
        %v2732 = vshll.u32 920167782, %v2717
        %v2733 = vshrl.u32 1326507024, %v2718
        %v2734 = vor.u32 %v2732, %v2733
        %vm2735 = vcmp.lt.s32.totalorder %v2716, 1
        %vm2736 = vcmp.lt.s32.totalorder %v2716, 2
        %vm2737 = vcmp.lt.s32.totalorder %v2716, 3
        %vm2738 = vcmp.lt.s32.totalorder %v2716, 4
        %v2739 = vsel %vm2735, %v2719, %v2722
        %v2740 = vsel %vm2738, %v2728, 2102212464
        %v2741 = vsel %vm2737, %v2725, %v2740
        %v2742 = vsel %vm2736, %v2739, %v2741
        %v2743 = vsel %vm2735, %v2722, %v2725
        %v2744 = vsel %vm2738, %v2731, 920167782
        %v2745 = vsel %vm2737, %v2728, %v2744
        %v2746 = vsel %vm2736, %v2743, %v2745
        %v2747 = vsel %vm2735, %v2725, %v2728
        %v2748 = vsel %vm2738, %v2734, 1326507024
        %v2749 = vsel %vm2737, %v2731, %v2748
        %v2750 = vsel %vm2736, %v2747, %v2749
        %v2751 = vshll.u32 %v2711, 8
        %v2752 = vand.u32 %v2751, 65535
        %v2753 = vshrl.u32 %v2751, 16
        %v2754 = vand.u32 %v2750, 65535
        %v2755 = vshrl.u32 %v2750, 16
        %v2756 = vmul.u32 %v2752, %v2754
        %v2757 = vmul.u32 %v2752, %v2755
        %v2758 = vmul.u32 %v2753, %v2754
        %v2759 = vmul.u32 %v2753, %v2755
        %v2760 = vshll.u32 %v2757, 16
        %v2761 = vshrl.u32 %v2757, 16
        %v2762 = vshll.u32 %v2758, 16
        %v2763 = vshrl.u32 %v2758, 16
        %vm2764 = vc.u32 %v2756, %v2760
        %v2765 = vsel %vm2764, 1, 0
        %v2766 = vadd.s32 %v2756, %v2760
        %v2767 = vadd.s32 %v2759, %v2765
        %vm2768 = vc.u32 %v2766, %v2762
        %v2769 = vsel %vm2768, 1, 0
        %v2770 = vadd.s32 %v2766, %v2762
        %v2771 = vadd.s32 %v2767, %v2769
        %v2772 = vadd.s32 %v2771, %v2761
        %v2773 = vadd.s32 %v2772, %v2763
        %v2774 = vand.u32 %v2751, 65535
        %v2775 = vshrl.u32 %v2751, 16
        %v2776 = vand.u32 %v2746, 65535
        %v2777 = vshrl.u32 %v2746, 16
        %v2778 = vmul.u32 %v2774, %v2776
        %v2779 = vmul.u32 %v2774, %v2777
        %v2780 = vmul.u32 %v2775, %v2776
        %v2781 = vmul.u32 %v2775, %v2777
        %v2782 = vshll.u32 %v2779, 16
        %v2783 = vshrl.u32 %v2779, 16
        %v2784 = vshll.u32 %v2780, 16
        %v2785 = vshrl.u32 %v2780, 16
        %vm2786 = vc.u32 %v2778, %v2782
        %v2787 = vsel %vm2786, 1, 0
        %v2788 = vadd.s32 %v2778, %v2782
        %v2789 = vadd.s32 %v2781, %v2787
        %vm2790 = vc.u32 %v2788, %v2784
        %v2791 = vsel %vm2790, 1, 0
        %v2792 = vadd.s32 %v2788, %v2784
        %v2793 = vadd.s32 %v2789, %v2791
        %v2794 = vadd.s32 %v2793, %v2783
        %v2795 = vadd.s32 %v2794, %v2785
        %v2796 = vmul.u32 %v2751, %v2742
        %v2797 = vadd.s32 %v2773, %v2792
        %vm2798 = vc.u32 %v2773, %v2792
        %v2799 = vadd.s32 %v2795, 1
        %v2800 = vsel %vm2798, %v2799, %v2795
        %v2801 = vadd.s32 %v2796, %v2800
        %v2802 = vadd.s32 %v2801, 536870912
        %v2803 = vshrl.u32 %v2802, 30
        %v2804 = vshll.u32 %v2803, 30
        %v2805 = vsub.s32 %v2801, %v2804
        %vm2806 = vcmp.lt.s32.totalorder %v2805, 0
        %v2807 = vsub.s32 0, %v2805
        %v2808 = vsel %vm2806, %v2807, %v2805
        %v2809 = vclz %v2808
        %v2810 = vsub.s32 %v2809, 2
        %vm2811 = vcmp.gt.s32.totalorder 0, %v2810
        %v2812 = vsel %vm2811, 0, %v2810
        %v2813 = vsub.s32 32, %v2812
        %v2814 = vshll.u32 %v2805, %v2812
        %v2815 = vshrl.u32 %v2797, %v2813
        %v2816 = vor.u32 %v2814, %v2815
        %v2817 = vsub.s32 4294967266, %v2812
        %v2818 = vadd.s32 %v2817, 127
        %v2819 = vshll.u32 %v2818, 23
        %v2820 = vor.u32 4788187, %v2819
        %v2821 = vand.u32 2147483647, %v2820
        %v2823 = vcvt.s32.f32 %v2816
        %v2824 = vmul.f32 %v2823, %v2821
        %v2825 = vxor.u32 %v2824, 2147483648
        %v2826 = vsel %vm2705, %v2825, %v2824
        %v2827 = vsub.s32 4, %v2803
        %v2828 = vsel %vm2705, %v2827, %v2803
        %v2829 = vsel %vm2704, %v352, %v2826
        %v2830 = vsel %vm2704, 0, %v2828
        %v2831 = vmul.f32 %v2829, %v2829
        %v2832 = vmul.f32 %v2831, -0.001358992
        %v2833 = vadd.f32 %v2832, 0.041655596
        %v2834 = vmul.f32 %v2831, %v2833
        %v2835 = vadd.f32 %v2834, -0.4999988
        %v2836 = vmul.f32 %v2831, %v2835
        %v2837 = vadd.f32 1.0, %v2836
        %v2838 = vmul.f32 %v2829, %v2829
        %v2839 = vmul.f32 %v2838, -0.00019511016
        %v2840 = vadd.f32 %v2839, 0.008332121
        %v2841 = vmul.f32 %v2838, %v2840
        %v2842 = vadd.f32 %v2841, -0.16666654
        %v2843 = vmul.f32 %v2838, %v2842
        %v2844 = vadd.f32 %v2843, 1.0
        %v2845 = vmul.f32 %v2844, %v2829
        %vm2846 = vweird.f32 %v352
        %v2847 = vadd.s32 %v2830, 3
        %v2848 = vand.u32 %v2847, 3
        %vm2849 = vcmp.lt.s32.totalorder %v2848, 2
        %vm2850 = vcmp.eq.s32.totalorder %v2848, 0
        %v2851 = vxor.u32 %v2845, 2147483648
        %v2852 = vsel %vm2850, %v2837, %v2851
        %vm2853 = vcmp.eq.s32.totalorder %v2848, 2
        %v2854 = vxor.u32 %v2837, 2147483648
        %v2855 = vsel %vm2853, %v2854, %v2845
        %v2856 = vsel %vm2849, %v2852, %v2855
        %v2857 = vsel %vm2846, nan, %v2856
        %v2858 = vand.u32 2147483647, %v290
        %vm2859 = vcmp.le.f32.partialorder %v2858, 0.7853982
        %vm2860 = vcmp.lt.s32.totalorder %v290, 0
        %v2861 = vand.u32 %v290, 2139095040
        %v2862 = vshrl.u32 %v2861, 23
        %v2863 = vsub.s32 %v2862, 127
        %v2864 = vand.u32 2147483647, %v290
        %v2865 = vand.u32 %v2864, 8388607
        %v2866 = vor.u32 %v2865, 8388608
        %v2867 = vsub.s32 0, %v2866
        %v2868 = vadd.s32 %v2863, 1
        %vm2869 = vcmp.gt.s32.totalorder %v2868, 0
        %v2870 = vsel %vm2869, %v2868, 0
        %v2871 = vshrl.u32 %v2870, 5
        %v2872 = vand.u32 %v2870, 31
        %v2873 = vsub.s32 32, %v2872
        %v2874 = vshrl.u32 683565275, %v2873
        %v2875 = vshll.u32 683565275, %v2872
        %v2876 = vshrl.u32 2475754826, %v2873
        %v2877 = vor.u32 %v2875, %v2876
        %v2878 = vshll.u32 2475754826, %v2872
        %v2879 = vshrl.u32 2131351028, %v2873
        %v2880 = vor.u32 %v2878, %v2879
        %v2881 = vshll.u32 2131351028, %v2872
        %v2882 = vshrl.u32 2102212464, %v2873
        %v2883 = vor.u32 %v2881, %v2882
        %v2884 = vshll.u32 2102212464, %v2872
        %v2885 = vshrl.u32 920167782, %v2873
        %v2886 = vor.u32 %v2884, %v2885
        %v2887 = vshll.u32 920167782, %v2872
        %v2888 = vshrl.u32 1326507024, %v2873
        %v2889 = vor.u32 %v2887, %v2888
        %vm2890 = vcmp.lt.s32.totalorder %v2871, 1
        %vm2891 = vcmp.lt.s32.totalorder %v2871, 2
        %vm2892 = vcmp.lt.s32.totalorder %v2871, 3
        %vm2893 = vcmp.lt.s32.totalorder %v2871, 4
        %v2894 = vsel %vm2890, %v2874, %v2877
        %v2895 = vsel %vm2893, %v2883, 2102212464
        %v2896 = vsel %vm2892, %v2880, %v2895
        %v2897 = vsel %vm2891, %v2894, %v2896
        %v2898 = vsel %vm2890, %v2877, %v2880
        %v2899 = vsel %vm2893, %v2886, 920167782
        %v2900 = vsel %vm2892, %v2883, %v2899
        %v2901 = vsel %vm2891, %v2898, %v2900
        %v2902 = vsel %vm2890, %v2880, %v2883
        %v2903 = vsel %vm2893, %v2889, 1326507024
        %v2904 = vsel %vm2892, %v2886, %v2903
        %v2905 = vsel %vm2891, %v2902, %v2904
        %v2906 = vshll.u32 %v2866, 8
        %v2907 = vand.u32 %v2906, 65535
        %v2908 = vshrl.u32 %v2906, 16
        %v2909 = vand.u32 %v2905, 65535
        %v2910 = vshrl.u32 %v2905, 16
        %v2911 = vmul.u32 %v2907, %v2909
        %v2912 = vmul.u32 %v2907, %v2910
        %v2913 = vmul.u32 %v2908, %v2909
        %v2914 = vmul.u32 %v2908, %v2910
        %v2915 = vshll.u32 %v2912, 16
        %v2916 = vshrl.u32 %v2912, 16
        %v2917 = vshll.u32 %v2913, 16
        %v2918 = vshrl.u32 %v2913, 16
        %vm2919 = vc.u32 %v2911, %v2915
        %v2920 = vsel %vm2919, 1, 0
        %v2921 = vadd.s32 %v2911, %v2915
        %v2922 = vadd.s32 %v2914, %v2920
        %vm2923 = vc.u32 %v2921, %v2917
        %v2924 = vsel %vm2923, 1, 0
        %v2925 = vadd.s32 %v2921, %v2917
        %v2926 = vadd.s32 %v2922, %v2924
        %v2927 = vadd.s32 %v2926, %v2916
        %v2928 = vadd.s32 %v2927, %v2918
        %v2929 = vand.u32 %v2906, 65535
        %v2930 = vshrl.u32 %v2906, 16
        %v2931 = vand.u32 %v2901, 65535
        %v2932 = vshrl.u32 %v2901, 16
        %v2933 = vmul.u32 %v2929, %v2931
        %v2934 = vmul.u32 %v2929, %v2932
        %v2935 = vmul.u32 %v2930, %v2931
        %v2936 = vmul.u32 %v2930, %v2932
        %v2937 = vshll.u32 %v2934, 16
        %v2938 = vshrl.u32 %v2934, 16
        %v2939 = vshll.u32 %v2935, 16
        %v2940 = vshrl.u32 %v2935, 16
        %vm2941 = vc.u32 %v2933, %v2937
        %v2942 = vsel %vm2941, 1, 0
        %v2943 = vadd.s32 %v2933, %v2937
        %v2944 = vadd.s32 %v2936, %v2942
        %vm2945 = vc.u32 %v2943, %v2939
        %v2946 = vsel %vm2945, 1, 0
        %v2947 = vadd.s32 %v2943, %v2939
        %v2948 = vadd.s32 %v2944, %v2946
        %v2949 = vadd.s32 %v2948, %v2938
        %v2950 = vadd.s32 %v2949, %v2940
        %v2951 = vmul.u32 %v2906, %v2897
        %v2952 = vadd.s32 %v2928, %v2947
        %vm2953 = vc.u32 %v2928, %v2947
        %v2954 = vadd.s32 %v2950, 1
        %v2955 = vsel %vm2953, %v2954, %v2950
        %v2956 = vadd.s32 %v2951, %v2955
        %v2957 = vadd.s32 %v2956, 536870912
        %v2958 = vshrl.u32 %v2957, 30
        %v2959 = vshll.u32 %v2958, 30
        %v2960 = vsub.s32 %v2956, %v2959
        %vm2961 = vcmp.lt.s32.totalorder %v2960, 0
        %v2962 = vsub.s32 0, %v2960
        %v2963 = vsel %vm2961, %v2962, %v2960
        %v2964 = vclz %v2963
        %v2965 = vsub.s32 %v2964, 2
        %vm2966 = vcmp.gt.s32.totalorder 0, %v2965
        %v2967 = vsel %vm2966, 0, %v2965
        %v2968 = vsub.s32 32, %v2967
        %v2969 = vshll.u32 %v2960, %v2967
        %v2970 = vshrl.u32 %v2952, %v2968
        %v2971 = vor.u32 %v2969, %v2970
        %v2972 = vsub.s32 4294967266, %v2967
        %v2973 = vadd.s32 %v2972, 127
        %v2974 = vshll.u32 %v2973, 23
        %v2975 = vor.u32 4788187, %v2974
        %v2976 = vand.u32 2147483647, %v2975
        %v2978 = vcvt.s32.f32 %v2971
        %v2979 = vmul.f32 %v2978, %v2976
        %v2980 = vxor.u32 %v2979, 2147483648
        %v2981 = vsel %vm2860, %v2980, %v2979
        %v2982 = vsub.s32 4, %v2958
        %v2983 = vsel %vm2860, %v2982, %v2958
        %v2984 = vsel %vm2859, %v290, %v2981
        %v2985 = vsel %vm2859, 0, %v2983
        %v2986 = vmul.f32 %v2984, %v2984
        %v2987 = vmul.f32 %v2986, -0.001358992
        %v2988 = vadd.f32 %v2987, 0.041655596
        %v2989 = vmul.f32 %v2986, %v2988
        %v2990 = vadd.f32 %v2989, -0.4999988
        %v2991 = vmul.f32 %v2986, %v2990
        %v2992 = vadd.f32 1.0, %v2991
        %v2993 = vmul.f32 %v2984, %v2984
        %v2994 = vmul.f32 %v2993, -0.00019511016
        %v2995 = vadd.f32 %v2994, 0.008332121
        %v2996 = vmul.f32 %v2993, %v2995
        %v2997 = vadd.f32 %v2996, -0.16666654
        %v2998 = vmul.f32 %v2993, %v2997
        %v2999 = vadd.f32 %v2998, 1.0
        %v3000 = vmul.f32 %v2999, %v2984
        %vm3001 = vweird.f32 %v290
        %v3002 = vadd.s32 %v2985, 3
        %v3003 = vand.u32 %v3002, 3
        %vm3004 = vcmp.lt.s32.totalorder %v3003, 2
        %vm3005 = vcmp.eq.s32.totalorder %v3003, 0
        %v3006 = vxor.u32 %v3000, 2147483648
        %v3007 = vsel %vm3005, %v2992, %v3006
        %vm3008 = vcmp.eq.s32.totalorder %v3003, 2
        %v3009 = vxor.u32 %v2992, 2147483648
        %v3010 = vsel %vm3008, %v3009, %v3000
        %v3011 = vsel %vm3004, %v3007, %v3010
        %v3012 = vsel %vm3001, nan, %v3011
        %v3013 = vand.u32 2147483647, %v355
        %vm3014 = vcmp.le.f32.partialorder %v3013, 0.7853982
        %vm3015 = vcmp.lt.s32.totalorder %v355, 0
        %v3016 = vand.u32 %v355, 2139095040
        %v3017 = vshrl.u32 %v3016, 23
        %v3018 = vsub.s32 %v3017, 127
        %v3019 = vand.u32 2147483647, %v355
        %v3020 = vand.u32 %v3019, 8388607
        %v3021 = vor.u32 %v3020, 8388608
        %v3022 = vsub.s32 0, %v3021
        %v3023 = vadd.s32 %v3018, 1
        %vm3024 = vcmp.gt.s32.totalorder %v3023, 0
        %v3025 = vsel %vm3024, %v3023, 0
        %v3026 = vshrl.u32 %v3025, 5
        %v3027 = vand.u32 %v3025, 31
        %v3028 = vsub.s32 32, %v3027
        %v3029 = vshrl.u32 683565275, %v3028
        %v3030 = vshll.u32 683565275, %v3027
        %v3031 = vshrl.u32 2475754826, %v3028
        %v3032 = vor.u32 %v3030, %v3031
        %v3033 = vshll.u32 2475754826, %v3027
        %v3034 = vshrl.u32 2131351028, %v3028
        %v3035 = vor.u32 %v3033, %v3034
        %v3036 = vshll.u32 2131351028, %v3027
        %v3037 = vshrl.u32 2102212464, %v3028
        %v3038 = vor.u32 %v3036, %v3037
        %v3039 = vshll.u32 2102212464, %v3027
        %v3040 = vshrl.u32 920167782, %v3028
        %v3041 = vor.u32 %v3039, %v3040
        %v3042 = vshll.u32 920167782, %v3027
        %v3043 = vshrl.u32 1326507024, %v3028
        %v3044 = vor.u32 %v3042, %v3043
        %vm3045 = vcmp.lt.s32.totalorder %v3026, 1
        %vm3046 = vcmp.lt.s32.totalorder %v3026, 2
        %vm3047 = vcmp.lt.s32.totalorder %v3026, 3
        %vm3048 = vcmp.lt.s32.totalorder %v3026, 4
        %v3049 = vsel %vm3045, %v3029, %v3032
        %v3050 = vsel %vm3048, %v3038, 2102212464
        %v3051 = vsel %vm3047, %v3035, %v3050
        %v3052 = vsel %vm3046, %v3049, %v3051
        %v3053 = vsel %vm3045, %v3032, %v3035
        %v3054 = vsel %vm3048, %v3041, 920167782
        %v3055 = vsel %vm3047, %v3038, %v3054
        %v3056 = vsel %vm3046, %v3053, %v3055
        %v3057 = vsel %vm3045, %v3035, %v3038
        %v3058 = vsel %vm3048, %v3044, 1326507024
        %v3059 = vsel %vm3047, %v3041, %v3058
        %v3060 = vsel %vm3046, %v3057, %v3059
        %v3061 = vshll.u32 %v3021, 8
        %v3062 = vand.u32 %v3061, 65535
        %v3063 = vshrl.u32 %v3061, 16
        %v3064 = vand.u32 %v3060, 65535
        %v3065 = vshrl.u32 %v3060, 16
        %v3066 = vmul.u32 %v3062, %v3064
        %v3067 = vmul.u32 %v3062, %v3065
        %v3068 = vmul.u32 %v3063, %v3064
        %v3069 = vmul.u32 %v3063, %v3065
        %v3070 = vshll.u32 %v3067, 16
        %v3071 = vshrl.u32 %v3067, 16
        %v3072 = vshll.u32 %v3068, 16
        %v3073 = vshrl.u32 %v3068, 16
        %vm3074 = vc.u32 %v3066, %v3070
        %v3075 = vsel %vm3074, 1, 0
        %v3076 = vadd.s32 %v3066, %v3070
        %v3077 = vadd.s32 %v3069, %v3075
        %vm3078 = vc.u32 %v3076, %v3072
        %v3079 = vsel %vm3078, 1, 0
        %v3080 = vadd.s32 %v3076, %v3072
        %v3081 = vadd.s32 %v3077, %v3079
        %v3082 = vadd.s32 %v3081, %v3071
        %v3083 = vadd.s32 %v3082, %v3073
        %v3084 = vand.u32 %v3061, 65535
        %v3085 = vshrl.u32 %v3061, 16
        %v3086 = vand.u32 %v3056, 65535
        %v3087 = vshrl.u32 %v3056, 16
        %v3088 = vmul.u32 %v3084, %v3086
        %v3089 = vmul.u32 %v3084, %v3087
        %v3090 = vmul.u32 %v3085, %v3086
        %v3091 = vmul.u32 %v3085, %v3087
        %v3092 = vshll.u32 %v3089, 16
        %v3093 = vshrl.u32 %v3089, 16
        %v3094 = vshll.u32 %v3090, 16
        %v3095 = vshrl.u32 %v3090, 16
        %vm3096 = vc.u32 %v3088, %v3092
        %v3097 = vsel %vm3096, 1, 0
        %v3098 = vadd.s32 %v3088, %v3092
        %v3099 = vadd.s32 %v3091, %v3097
        %vm3100 = vc.u32 %v3098, %v3094
        %v3101 = vsel %vm3100, 1, 0
        %v3102 = vadd.s32 %v3098, %v3094
        %v3103 = vadd.s32 %v3099, %v3101
        %v3104 = vadd.s32 %v3103, %v3093
        %v3105 = vadd.s32 %v3104, %v3095
        %v3106 = vmul.u32 %v3061, %v3052
        %v3107 = vadd.s32 %v3083, %v3102
        %vm3108 = vc.u32 %v3083, %v3102
        %v3109 = vadd.s32 %v3105, 1
        %v3110 = vsel %vm3108, %v3109, %v3105
        %v3111 = vadd.s32 %v3106, %v3110
        %v3112 = vadd.s32 %v3111, 536870912
        %v3113 = vshrl.u32 %v3112, 30
        %v3114 = vshll.u32 %v3113, 30
        %v3115 = vsub.s32 %v3111, %v3114
        %vm3116 = vcmp.lt.s32.totalorder %v3115, 0
        %v3117 = vsub.s32 0, %v3115
        %v3118 = vsel %vm3116, %v3117, %v3115
        %v3119 = vclz %v3118
        %v3120 = vsub.s32 %v3119, 2
        %vm3121 = vcmp.gt.s32.totalorder 0, %v3120
        %v3122 = vsel %vm3121, 0, %v3120
        %v3123 = vsub.s32 32, %v3122
        %v3124 = vshll.u32 %v3115, %v3122
        %v3125 = vshrl.u32 %v3107, %v3123
        %v3126 = vor.u32 %v3124, %v3125
        %v3127 = vsub.s32 4294967266, %v3122
        %v3128 = vadd.s32 %v3127, 127
        %v3129 = vshll.u32 %v3128, 23
        %v3130 = vor.u32 4788187, %v3129
        %v3131 = vand.u32 2147483647, %v3130
        %v3133 = vcvt.s32.f32 %v3126
        %v3134 = vmul.f32 %v3133, %v3131
        %v3135 = vxor.u32 %v3134, 2147483648
        %v3136 = vsel %vm3015, %v3135, %v3134
        %v3137 = vsub.s32 4, %v3113
        %v3138 = vsel %vm3015, %v3137, %v3113
        %v3139 = vsel %vm3014, %v355, %v3136
        %v3140 = vsel %vm3014, 0, %v3138
        %v3141 = vmul.f32 %v3139, %v3139
        %v3142 = vmul.f32 %v3141, -0.001358992
        %v3143 = vadd.f32 %v3142, 0.041655596
        %v3144 = vmul.f32 %v3141, %v3143
        %v3145 = vadd.f32 %v3144, -0.4999988
        %v3146 = vmul.f32 %v3141, %v3145
        %v3147 = vadd.f32 1.0, %v3146
        %v3148 = vmul.f32 %v3139, %v3139
        %v3149 = vmul.f32 %v3148, -0.00019511016
        %v3150 = vadd.f32 %v3149, 0.008332121
        %v3151 = vmul.f32 %v3148, %v3150
        %v3152 = vadd.f32 %v3151, -0.16666654
        %v3153 = vmul.f32 %v3148, %v3152
        %v3154 = vadd.f32 %v3153, 1.0
        %v3155 = vmul.f32 %v3154, %v3139
        %vm3156 = vweird.f32 %v355
        %v3157 = vadd.s32 %v3140, 3
        %v3158 = vand.u32 %v3157, 3
        %vm3159 = vcmp.lt.s32.totalorder %v3158, 2
        %vm3160 = vcmp.eq.s32.totalorder %v3158, 0
        %v3161 = vxor.u32 %v3155, 2147483648
        %v3162 = vsel %vm3160, %v3147, %v3161
        %vm3163 = vcmp.eq.s32.totalorder %v3158, 2
        %v3164 = vxor.u32 %v3147, 2147483648
        %v3165 = vsel %vm3163, %v3164, %v3155
        %v3166 = vsel %vm3159, %v3162, %v3165
        %v3167 = vsel %vm3156, nan, %v3166
        %v3168 = vand.u32 2147483647, %v293
        %vm3169 = vcmp.le.f32.partialorder %v3168, 0.7853982
        %vm3170 = vcmp.lt.s32.totalorder %v293, 0
        %v3171 = vand.u32 %v293, 2139095040
        %v3172 = vshrl.u32 %v3171, 23
        %v3173 = vsub.s32 %v3172, 127
        %v3174 = vand.u32 2147483647, %v293
        %v3175 = vand.u32 %v3174, 8388607
        %v3176 = vor.u32 %v3175, 8388608
        %v3177 = vsub.s32 0, %v3176
        %v3178 = vadd.s32 %v3173, 1
        %vm3179 = vcmp.gt.s32.totalorder %v3178, 0
        %v3180 = vsel %vm3179, %v3178, 0
        %v3181 = vshrl.u32 %v3180, 5
        %v3182 = vand.u32 %v3180, 31
        %v3183 = vsub.s32 32, %v3182
        %v3184 = vshrl.u32 683565275, %v3183
        %v3185 = vshll.u32 683565275, %v3182
        %v3186 = vshrl.u32 2475754826, %v3183
        %v3187 = vor.u32 %v3185, %v3186
        %v3188 = vshll.u32 2475754826, %v3182
        %v3189 = vshrl.u32 2131351028, %v3183
        %v3190 = vor.u32 %v3188, %v3189
        %v3191 = vshll.u32 2131351028, %v3182
        %v3192 = vshrl.u32 2102212464, %v3183
        %v3193 = vor.u32 %v3191, %v3192
        %v3194 = vshll.u32 2102212464, %v3182
        %v3195 = vshrl.u32 920167782, %v3183
        %v3196 = vor.u32 %v3194, %v3195
        %v3197 = vshll.u32 920167782, %v3182
        %v3198 = vshrl.u32 1326507024, %v3183
        %v3199 = vor.u32 %v3197, %v3198
        %vm3200 = vcmp.lt.s32.totalorder %v3181, 1
        %vm3201 = vcmp.lt.s32.totalorder %v3181, 2
        %vm3202 = vcmp.lt.s32.totalorder %v3181, 3
        %vm3203 = vcmp.lt.s32.totalorder %v3181, 4
        %v3204 = vsel %vm3200, %v3184, %v3187
        %v3205 = vsel %vm3203, %v3193, 2102212464
        %v3206 = vsel %vm3202, %v3190, %v3205
        %v3207 = vsel %vm3201, %v3204, %v3206
        %v3208 = vsel %vm3200, %v3187, %v3190
        %v3209 = vsel %vm3203, %v3196, 920167782
        %v3210 = vsel %vm3202, %v3193, %v3209
        %v3211 = vsel %vm3201, %v3208, %v3210
        %v3212 = vsel %vm3200, %v3190, %v3193
        %v3213 = vsel %vm3203, %v3199, 1326507024
        %v3214 = vsel %vm3202, %v3196, %v3213
        %v3215 = vsel %vm3201, %v3212, %v3214
        %v3216 = vshll.u32 %v3176, 8
        %v3217 = vand.u32 %v3216, 65535
        %v3218 = vshrl.u32 %v3216, 16
        %v3219 = vand.u32 %v3215, 65535
        %v3220 = vshrl.u32 %v3215, 16
        %v3221 = vmul.u32 %v3217, %v3219
        %v3222 = vmul.u32 %v3217, %v3220
        %v3223 = vmul.u32 %v3218, %v3219
        %v3224 = vmul.u32 %v3218, %v3220
        %v3225 = vshll.u32 %v3222, 16
        %v3226 = vshrl.u32 %v3222, 16
        %v3227 = vshll.u32 %v3223, 16
        %v3228 = vshrl.u32 %v3223, 16
        %vm3229 = vc.u32 %v3221, %v3225
        %v3230 = vsel %vm3229, 1, 0
        %v3231 = vadd.s32 %v3221, %v3225
        %v3232 = vadd.s32 %v3224, %v3230
        %vm3233 = vc.u32 %v3231, %v3227
        %v3234 = vsel %vm3233, 1, 0
        %v3235 = vadd.s32 %v3231, %v3227
        %v3236 = vadd.s32 %v3232, %v3234
        %v3237 = vadd.s32 %v3236, %v3226
        %v3238 = vadd.s32 %v3237, %v3228
        %v3239 = vand.u32 %v3216, 65535
        %v3240 = vshrl.u32 %v3216, 16
        %v3241 = vand.u32 %v3211, 65535
        %v3242 = vshrl.u32 %v3211, 16
        %v3243 = vmul.u32 %v3239, %v3241
        %v3244 = vmul.u32 %v3239, %v3242
        %v3245 = vmul.u32 %v3240, %v3241
        %v3246 = vmul.u32 %v3240, %v3242
        %v3247 = vshll.u32 %v3244, 16
        %v3248 = vshrl.u32 %v3244, 16
        %v3249 = vshll.u32 %v3245, 16
        %v3250 = vshrl.u32 %v3245, 16
        %vm3251 = vc.u32 %v3243, %v3247
        %v3252 = vsel %vm3251, 1, 0
        %v3253 = vadd.s32 %v3243, %v3247
        %v3254 = vadd.s32 %v3246, %v3252
        %vm3255 = vc.u32 %v3253, %v3249
        %v3256 = vsel %vm3255, 1, 0
        %v3257 = vadd.s32 %v3253, %v3249
        %v3258 = vadd.s32 %v3254, %v3256
        %v3259 = vadd.s32 %v3258, %v3248
        %v3260 = vadd.s32 %v3259, %v3250
        %v3261 = vmul.u32 %v3216, %v3207
        %v3262 = vadd.s32 %v3238, %v3257
        %vm3263 = vc.u32 %v3238, %v3257
        %v3264 = vadd.s32 %v3260, 1
        %v3265 = vsel %vm3263, %v3264, %v3260
        %v3266 = vadd.s32 %v3261, %v3265
        %v3267 = vadd.s32 %v3266, 536870912
        %v3268 = vshrl.u32 %v3267, 30
        %v3269 = vshll.u32 %v3268, 30
        %v3270 = vsub.s32 %v3266, %v3269
        %vm3271 = vcmp.lt.s32.totalorder %v3270, 0
        %v3272 = vsub.s32 0, %v3270
        %v3273 = vsel %vm3271, %v3272, %v3270
        %v3274 = vclz %v3273
        %v3275 = vsub.s32 %v3274, 2
        %vm3276 = vcmp.gt.s32.totalorder 0, %v3275
        %v3277 = vsel %vm3276, 0, %v3275
        %v3278 = vsub.s32 32, %v3277
        %v3279 = vshll.u32 %v3270, %v3277
        %v3280 = vshrl.u32 %v3262, %v3278
        %v3281 = vor.u32 %v3279, %v3280
        %v3282 = vsub.s32 4294967266, %v3277
        %v3283 = vadd.s32 %v3282, 127
        %v3284 = vshll.u32 %v3283, 23
        %v3285 = vor.u32 4788187, %v3284
        %v3286 = vand.u32 2147483647, %v3285
        %v3288 = vcvt.s32.f32 %v3281
        %v3289 = vmul.f32 %v3288, %v3286
        %v3290 = vxor.u32 %v3289, 2147483648
        %v3291 = vsel %vm3170, %v3290, %v3289
        %v3292 = vsub.s32 4, %v3268
        %v3293 = vsel %vm3170, %v3292, %v3268
        %v3294 = vsel %vm3169, %v293, %v3291
        %v3295 = vsel %vm3169, 0, %v3293
        %v3296 = vmul.f32 %v3294, %v3294
        %v3297 = vmul.f32 %v3296, -0.001358992
        %v3298 = vadd.f32 %v3297, 0.041655596
        %v3299 = vmul.f32 %v3296, %v3298
        %v3300 = vadd.f32 %v3299, -0.4999988
        %v3301 = vmul.f32 %v3296, %v3300
        %v3302 = vadd.f32 1.0, %v3301
        %v3303 = vmul.f32 %v3294, %v3294
        %v3304 = vmul.f32 %v3303, -0.00019511016
        %v3305 = vadd.f32 %v3304, 0.008332121
        %v3306 = vmul.f32 %v3303, %v3305
        %v3307 = vadd.f32 %v3306, -0.16666654
        %v3308 = vmul.f32 %v3303, %v3307
        %v3309 = vadd.f32 %v3308, 1.0
        %v3310 = vmul.f32 %v3309, %v3294
        %vm3311 = vweird.f32 %v293
        %v3312 = vadd.s32 %v3295, 3
        %v3313 = vand.u32 %v3312, 3
        %vm3314 = vcmp.lt.s32.totalorder %v3313, 2
        %vm3315 = vcmp.eq.s32.totalorder %v3313, 0
        %v3316 = vxor.u32 %v3310, 2147483648
        %v3317 = vsel %vm3315, %v3302, %v3316
        %vm3318 = vcmp.eq.s32.totalorder %v3313, 2
        %v3319 = vxor.u32 %v3302, 2147483648
        %v3320 = vsel %vm3318, %v3319, %v3310
        %v3321 = vsel %vm3314, %v3317, %v3320
        %v3322 = vsel %vm3311, nan, %v3321
        %v3323 = vand.u32 2147483647, %v358
        %vm3324 = vcmp.le.f32.partialorder %v3323, 0.7853982
        %vm3325 = vcmp.lt.s32.totalorder %v358, 0
        %v3326 = vand.u32 %v358, 2139095040
        %v3327 = vshrl.u32 %v3326, 23
        %v3328 = vsub.s32 %v3327, 127
        %v3329 = vand.u32 2147483647, %v358
        %v3330 = vand.u32 %v3329, 8388607
        %v3331 = vor.u32 %v3330, 8388608
        %v3332 = vsub.s32 0, %v3331
        %v3333 = vadd.s32 %v3328, 1
        %vm3334 = vcmp.gt.s32.totalorder %v3333, 0
        %v3335 = vsel %vm3334, %v3333, 0
        %v3336 = vshrl.u32 %v3335, 5
        %v3337 = vand.u32 %v3335, 31
        %v3338 = vsub.s32 32, %v3337
        %v3339 = vshrl.u32 683565275, %v3338
        %v3340 = vshll.u32 683565275, %v3337
        %v3341 = vshrl.u32 2475754826, %v3338
        %v3342 = vor.u32 %v3340, %v3341
        %v3343 = vshll.u32 2475754826, %v3337
        %v3344 = vshrl.u32 2131351028, %v3338
        %v3345 = vor.u32 %v3343, %v3344
        %v3346 = vshll.u32 2131351028, %v3337
        %v3347 = vshrl.u32 2102212464, %v3338
        %v3348 = vor.u32 %v3346, %v3347
        %v3349 = vshll.u32 2102212464, %v3337
        %v3350 = vshrl.u32 920167782, %v3338
        %v3351 = vor.u32 %v3349, %v3350
        %v3352 = vshll.u32 920167782, %v3337
        %v3353 = vshrl.u32 1326507024, %v3338
        %v3354 = vor.u32 %v3352, %v3353
        %vm3355 = vcmp.lt.s32.totalorder %v3336, 1
        %vm3356 = vcmp.lt.s32.totalorder %v3336, 2
        %vm3357 = vcmp.lt.s32.totalorder %v3336, 3
        %vm3358 = vcmp.lt.s32.totalorder %v3336, 4
        %v3359 = vsel %vm3355, %v3339, %v3342
        %v3360 = vsel %vm3358, %v3348, 2102212464
        %v3361 = vsel %vm3357, %v3345, %v3360
        %v3362 = vsel %vm3356, %v3359, %v3361
        %v3363 = vsel %vm3355, %v3342, %v3345
        %v3364 = vsel %vm3358, %v3351, 920167782
        %v3365 = vsel %vm3357, %v3348, %v3364
        %v3366 = vsel %vm3356, %v3363, %v3365
        %v3367 = vsel %vm3355, %v3345, %v3348
        %v3368 = vsel %vm3358, %v3354, 1326507024
        %v3369 = vsel %vm3357, %v3351, %v3368
        %v3370 = vsel %vm3356, %v3367, %v3369
        %v3371 = vshll.u32 %v3331, 8
        %v3372 = vand.u32 %v3371, 65535
        %v3373 = vshrl.u32 %v3371, 16
        %v3374 = vand.u32 %v3370, 65535
        %v3375 = vshrl.u32 %v3370, 16
        %v3376 = vmul.u32 %v3372, %v3374
        %v3377 = vmul.u32 %v3372, %v3375
        %v3378 = vmul.u32 %v3373, %v3374
        %v3379 = vmul.u32 %v3373, %v3375
        %v3380 = vshll.u32 %v3377, 16
        %v3381 = vshrl.u32 %v3377, 16
        %v3382 = vshll.u32 %v3378, 16
        %v3383 = vshrl.u32 %v3378, 16
        %vm3384 = vc.u32 %v3376, %v3380
        %v3385 = vsel %vm3384, 1, 0
        %v3386 = vadd.s32 %v3376, %v3380
        %v3387 = vadd.s32 %v3379, %v3385
        %vm3388 = vc.u32 %v3386, %v3382
        %v3389 = vsel %vm3388, 1, 0
        %v3390 = vadd.s32 %v3386, %v3382
        %v3391 = vadd.s32 %v3387, %v3389
        %v3392 = vadd.s32 %v3391, %v3381
        %v3393 = vadd.s32 %v3392, %v3383
        %v3394 = vand.u32 %v3371, 65535
        %v3395 = vshrl.u32 %v3371, 16
        %v3396 = vand.u32 %v3366, 65535
        %v3397 = vshrl.u32 %v3366, 16
        %v3398 = vmul.u32 %v3394, %v3396
        %v3399 = vmul.u32 %v3394, %v3397
        %v3400 = vmul.u32 %v3395, %v3396
        %v3401 = vmul.u32 %v3395, %v3397
        %v3402 = vshll.u32 %v3399, 16
        %v3403 = vshrl.u32 %v3399, 16
        %v3404 = vshll.u32 %v3400, 16
        %v3405 = vshrl.u32 %v3400, 16
        %vm3406 = vc.u32 %v3398, %v3402
        %v3407 = vsel %vm3406, 1, 0
        %v3408 = vadd.s32 %v3398, %v3402
        %v3409 = vadd.s32 %v3401, %v3407
        %vm3410 = vc.u32 %v3408, %v3404
        %v3411 = vsel %vm3410, 1, 0
        %v3412 = vadd.s32 %v3408, %v3404
        %v3413 = vadd.s32 %v3409, %v3411
        %v3414 = vadd.s32 %v3413, %v3403
        %v3415 = vadd.s32 %v3414, %v3405
        %v3416 = vmul.u32 %v3371, %v3362
        %v3417 = vadd.s32 %v3393, %v3412
        %vm3418 = vc.u32 %v3393, %v3412
        %v3419 = vadd.s32 %v3415, 1
        %v3420 = vsel %vm3418, %v3419, %v3415
        %v3421 = vadd.s32 %v3416, %v3420
        %v3422 = vadd.s32 %v3421, 536870912
        %v3423 = vshrl.u32 %v3422, 30
        %v3424 = vshll.u32 %v3423, 30
        %v3425 = vsub.s32 %v3421, %v3424
        %vm3426 = vcmp.lt.s32.totalorder %v3425, 0
        %v3427 = vsub.s32 0, %v3425
        %v3428 = vsel %vm3426, %v3427, %v3425
        %v3429 = vclz %v3428
        %v3430 = vsub.s32 %v3429, 2
        %vm3431 = vcmp.gt.s32.totalorder 0, %v3430
        %v3432 = vsel %vm3431, 0, %v3430
        %v3433 = vsub.s32 32, %v3432
        %v3434 = vshll.u32 %v3425, %v3432
        %v3435 = vshrl.u32 %v3417, %v3433
        %v3436 = vor.u32 %v3434, %v3435
        %v3437 = vsub.s32 4294967266, %v3432
        %v3438 = vadd.s32 %v3437, 127
        %v3439 = vshll.u32 %v3438, 23
        %v3440 = vor.u32 4788187, %v3439
        %v3441 = vand.u32 2147483647, %v3440
        %v3443 = vcvt.s32.f32 %v3436
        %v3444 = vmul.f32 %v3443, %v3441
        %v3445 = vxor.u32 %v3444, 2147483648
        %v3446 = vsel %vm3325, %v3445, %v3444
        %v3447 = vsub.s32 4, %v3423
        %v3448 = vsel %vm3325, %v3447, %v3423
        %v3449 = vsel %vm3324, %v358, %v3446
        %v3450 = vsel %vm3324, 0, %v3448
        %v3451 = vmul.f32 %v3449, %v3449
        %v3452 = vmul.f32 %v3451, -0.001358992
        %v3453 = vadd.f32 %v3452, 0.041655596
        %v3454 = vmul.f32 %v3451, %v3453
        %v3455 = vadd.f32 %v3454, -0.4999988
        %v3456 = vmul.f32 %v3451, %v3455
        %v3457 = vadd.f32 1.0, %v3456
        %v3458 = vmul.f32 %v3449, %v3449
        %v3459 = vmul.f32 %v3458, -0.00019511016
        %v3460 = vadd.f32 %v3459, 0.008332121
        %v3461 = vmul.f32 %v3458, %v3460
        %v3462 = vadd.f32 %v3461, -0.16666654
        %v3463 = vmul.f32 %v3458, %v3462
        %v3464 = vadd.f32 %v3463, 1.0
        %v3465 = vmul.f32 %v3464, %v3449
        %vm3466 = vweird.f32 %v358
        %v3467 = vadd.s32 %v3450, 3
        %v3468 = vand.u32 %v3467, 3
        %vm3469 = vcmp.lt.s32.totalorder %v3468, 2
        %vm3470 = vcmp.eq.s32.totalorder %v3468, 0
        %v3471 = vxor.u32 %v3465, 2147483648
        %v3472 = vsel %vm3470, %v3457, %v3471
        %vm3473 = vcmp.eq.s32.totalorder %v3468, 2
        %v3474 = vxor.u32 %v3457, 2147483648
        %v3475 = vsel %vm3473, %v3474, %v3465
        %v3476 = vsel %vm3469, %v3472, %v3475
        %v3477 = vsel %vm3466, nan, %v3476
        %v3478 = vand.u32 2147483647, %v296
        %vm3479 = vcmp.le.f32.partialorder %v3478, 0.7853982
        %vm3480 = vcmp.lt.s32.totalorder %v296, 0
        %v3481 = vand.u32 %v296, 2139095040
        %v3482 = vshrl.u32 %v3481, 23
        %v3483 = vsub.s32 %v3482, 127
        %v3484 = vand.u32 2147483647, %v296
        %v3485 = vand.u32 %v3484, 8388607
        %v3486 = vor.u32 %v3485, 8388608
        %v3487 = vsub.s32 0, %v3486
        %v3488 = vadd.s32 %v3483, 1
        %vm3489 = vcmp.gt.s32.totalorder %v3488, 0
        %v3490 = vsel %vm3489, %v3488, 0
        %v3491 = vshrl.u32 %v3490, 5
        %v3492 = vand.u32 %v3490, 31
        %v3493 = vsub.s32 32, %v3492
        %v3494 = vshrl.u32 683565275, %v3493
        %v3495 = vshll.u32 683565275, %v3492
        %v3496 = vshrl.u32 2475754826, %v3493
        %v3497 = vor.u32 %v3495, %v3496
        %v3498 = vshll.u32 2475754826, %v3492
        %v3499 = vshrl.u32 2131351028, %v3493
        %v3500 = vor.u32 %v3498, %v3499
        %v3501 = vshll.u32 2131351028, %v3492
        %v3502 = vshrl.u32 2102212464, %v3493
        %v3503 = vor.u32 %v3501, %v3502
        %v3504 = vshll.u32 2102212464, %v3492
        %v3505 = vshrl.u32 920167782, %v3493
        %v3506 = vor.u32 %v3504, %v3505
        %v3507 = vshll.u32 920167782, %v3492
        %v3508 = vshrl.u32 1326507024, %v3493
        %v3509 = vor.u32 %v3507, %v3508
        %vm3510 = vcmp.lt.s32.totalorder %v3491, 1
        %vm3511 = vcmp.lt.s32.totalorder %v3491, 2
        %vm3512 = vcmp.lt.s32.totalorder %v3491, 3
        %vm3513 = vcmp.lt.s32.totalorder %v3491, 4
        %v3514 = vsel %vm3510, %v3494, %v3497
        %v3515 = vsel %vm3513, %v3503, 2102212464
        %v3516 = vsel %vm3512, %v3500, %v3515
        %v3517 = vsel %vm3511, %v3514, %v3516
        %v3518 = vsel %vm3510, %v3497, %v3500
        %v3519 = vsel %vm3513, %v3506, 920167782
        %v3520 = vsel %vm3512, %v3503, %v3519
        %v3521 = vsel %vm3511, %v3518, %v3520
        %v3522 = vsel %vm3510, %v3500, %v3503
        %v3523 = vsel %vm3513, %v3509, 1326507024
        %v3524 = vsel %vm3512, %v3506, %v3523
        %v3525 = vsel %vm3511, %v3522, %v3524
        %v3526 = vshll.u32 %v3486, 8
        %v3527 = vand.u32 %v3526, 65535
        %v3528 = vshrl.u32 %v3526, 16
        %v3529 = vand.u32 %v3525, 65535
        %v3530 = vshrl.u32 %v3525, 16
        %v3531 = vmul.u32 %v3527, %v3529
        %v3532 = vmul.u32 %v3527, %v3530
        %v3533 = vmul.u32 %v3528, %v3529
        %v3534 = vmul.u32 %v3528, %v3530
        %v3535 = vshll.u32 %v3532, 16
        %v3536 = vshrl.u32 %v3532, 16
        %v3537 = vshll.u32 %v3533, 16
        %v3538 = vshrl.u32 %v3533, 16
        %vm3539 = vc.u32 %v3531, %v3535
        %v3540 = vsel %vm3539, 1, 0
        %v3541 = vadd.s32 %v3531, %v3535
        %v3542 = vadd.s32 %v3534, %v3540
        %vm3543 = vc.u32 %v3541, %v3537
        %v3544 = vsel %vm3543, 1, 0
        %v3545 = vadd.s32 %v3541, %v3537
        %v3546 = vadd.s32 %v3542, %v3544
        %v3547 = vadd.s32 %v3546, %v3536
        %v3548 = vadd.s32 %v3547, %v3538
        %v3549 = vand.u32 %v3526, 65535
        %v3550 = vshrl.u32 %v3526, 16
        %v3551 = vand.u32 %v3521, 65535
        %v3552 = vshrl.u32 %v3521, 16
        %v3553 = vmul.u32 %v3549, %v3551
        %v3554 = vmul.u32 %v3549, %v3552
        %v3555 = vmul.u32 %v3550, %v3551
        %v3556 = vmul.u32 %v3550, %v3552
        %v3557 = vshll.u32 %v3554, 16
        %v3558 = vshrl.u32 %v3554, 16
        %v3559 = vshll.u32 %v3555, 16
        %v3560 = vshrl.u32 %v3555, 16
        %vm3561 = vc.u32 %v3553, %v3557
        %v3562 = vsel %vm3561, 1, 0
        %v3563 = vadd.s32 %v3553, %v3557
        %v3564 = vadd.s32 %v3556, %v3562
        %vm3565 = vc.u32 %v3563, %v3559
        %v3566 = vsel %vm3565, 1, 0
        %v3567 = vadd.s32 %v3563, %v3559
        %v3568 = vadd.s32 %v3564, %v3566
        %v3569 = vadd.s32 %v3568, %v3558
        %v3570 = vadd.s32 %v3569, %v3560
        %v3571 = vmul.u32 %v3526, %v3517
        %v3572 = vadd.s32 %v3548, %v3567
        %vm3573 = vc.u32 %v3548, %v3567
        %v3574 = vadd.s32 %v3570, 1
        %v3575 = vsel %vm3573, %v3574, %v3570
        %v3576 = vadd.s32 %v3571, %v3575
        %v3577 = vadd.s32 %v3576, 536870912
        %v3578 = vshrl.u32 %v3577, 30
        %v3579 = vshll.u32 %v3578, 30
        %v3580 = vsub.s32 %v3576, %v3579
        %vm3581 = vcmp.lt.s32.totalorder %v3580, 0
        %v3582 = vsub.s32 0, %v3580
        %v3583 = vsel %vm3581, %v3582, %v3580
        %v3584 = vclz %v3583
        %v3585 = vsub.s32 %v3584, 2
        %vm3586 = vcmp.gt.s32.totalorder 0, %v3585
        %v3587 = vsel %vm3586, 0, %v3585
        %v3588 = vsub.s32 32, %v3587
        %v3589 = vshll.u32 %v3580, %v3587
        %v3590 = vshrl.u32 %v3572, %v3588
        %v3591 = vor.u32 %v3589, %v3590
        %v3592 = vsub.s32 4294967266, %v3587
        %v3593 = vadd.s32 %v3592, 127
        %v3594 = vshll.u32 %v3593, 23
        %v3595 = vor.u32 4788187, %v3594
        %v3596 = vand.u32 2147483647, %v3595
        %v3598 = vcvt.s32.f32 %v3591
        %v3599 = vmul.f32 %v3598, %v3596
        %v3600 = vxor.u32 %v3599, 2147483648
        %v3601 = vsel %vm3480, %v3600, %v3599
        %v3602 = vsub.s32 4, %v3578
        %v3603 = vsel %vm3480, %v3602, %v3578
        %v3604 = vsel %vm3479, %v296, %v3601
        %v3605 = vsel %vm3479, 0, %v3603
        %v3606 = vmul.f32 %v3604, %v3604
        %v3607 = vmul.f32 %v3606, -0.001358992
        %v3608 = vadd.f32 %v3607, 0.041655596
        %v3609 = vmul.f32 %v3606, %v3608
        %v3610 = vadd.f32 %v3609, -0.4999988
        %v3611 = vmul.f32 %v3606, %v3610
        %v3612 = vadd.f32 1.0, %v3611
        %v3613 = vmul.f32 %v3604, %v3604
        %v3614 = vmul.f32 %v3613, -0.00019511016
        %v3615 = vadd.f32 %v3614, 0.008332121
        %v3616 = vmul.f32 %v3613, %v3615
        %v3617 = vadd.f32 %v3616, -0.16666654
        %v3618 = vmul.f32 %v3613, %v3617
        %v3619 = vadd.f32 %v3618, 1.0
        %v3620 = vmul.f32 %v3619, %v3604
        %vm3621 = vweird.f32 %v296
        %v3622 = vadd.s32 %v3605, 3
        %v3623 = vand.u32 %v3622, 3
        %vm3624 = vcmp.lt.s32.totalorder %v3623, 2
        %vm3625 = vcmp.eq.s32.totalorder %v3623, 0
        %v3626 = vxor.u32 %v3620, 2147483648
        %v3627 = vsel %vm3625, %v3612, %v3626
        %vm3628 = vcmp.eq.s32.totalorder %v3623, 2
        %v3629 = vxor.u32 %v3612, 2147483648
        %v3630 = vsel %vm3628, %v3629, %v3620
        %v3631 = vsel %vm3624, %v3627, %v3630
        %v3632 = vsel %vm3621, nan, %v3631
        %v3633 = vand.u32 2147483647, %v361
        %vm3634 = vcmp.le.f32.partialorder %v3633, 0.7853982
        %vm3635 = vcmp.lt.s32.totalorder %v361, 0
        %v3636 = vand.u32 %v361, 2139095040
        %v3637 = vshrl.u32 %v3636, 23
        %v3638 = vsub.s32 %v3637, 127
        %v3639 = vand.u32 2147483647, %v361
        %v3640 = vand.u32 %v3639, 8388607
        %v3641 = vor.u32 %v3640, 8388608
        %v3642 = vsub.s32 0, %v3641
        %v3643 = vadd.s32 %v3638, 1
        %vm3644 = vcmp.gt.s32.totalorder %v3643, 0
        %v3645 = vsel %vm3644, %v3643, 0
        %v3646 = vshrl.u32 %v3645, 5
        %v3647 = vand.u32 %v3645, 31
        %v3648 = vsub.s32 32, %v3647
        %v3649 = vshrl.u32 683565275, %v3648
        %v3650 = vshll.u32 683565275, %v3647
        %v3651 = vshrl.u32 2475754826, %v3648
        %v3652 = vor.u32 %v3650, %v3651
        %v3653 = vshll.u32 2475754826, %v3647
        %v3654 = vshrl.u32 2131351028, %v3648
        %v3655 = vor.u32 %v3653, %v3654
        %v3656 = vshll.u32 2131351028, %v3647
        %v3657 = vshrl.u32 2102212464, %v3648
        %v3658 = vor.u32 %v3656, %v3657
        %v3659 = vshll.u32 2102212464, %v3647
        %v3660 = vshrl.u32 920167782, %v3648
        %v3661 = vor.u32 %v3659, %v3660
        %v3662 = vshll.u32 920167782, %v3647
        %v3663 = vshrl.u32 1326507024, %v3648
        %v3664 = vor.u32 %v3662, %v3663
        %vm3665 = vcmp.lt.s32.totalorder %v3646, 1
        %vm3666 = vcmp.lt.s32.totalorder %v3646, 2
        %vm3667 = vcmp.lt.s32.totalorder %v3646, 3
        %vm3668 = vcmp.lt.s32.totalorder %v3646, 4
        %v3669 = vsel %vm3665, %v3649, %v3652
        %v3670 = vsel %vm3668, %v3658, 2102212464
        %v3671 = vsel %vm3667, %v3655, %v3670
        %v3672 = vsel %vm3666, %v3669, %v3671
        %v3673 = vsel %vm3665, %v3652, %v3655
        %v3674 = vsel %vm3668, %v3661, 920167782
        %v3675 = vsel %vm3667, %v3658, %v3674
        %v3676 = vsel %vm3666, %v3673, %v3675
        %v3677 = vsel %vm3665, %v3655, %v3658
        %v3678 = vsel %vm3668, %v3664, 1326507024
        %v3679 = vsel %vm3667, %v3661, %v3678
        %v3680 = vsel %vm3666, %v3677, %v3679
        %v3681 = vshll.u32 %v3641, 8
        %v3682 = vand.u32 %v3681, 65535
        %v3683 = vshrl.u32 %v3681, 16
        %v3684 = vand.u32 %v3680, 65535
        %v3685 = vshrl.u32 %v3680, 16
        %v3686 = vmul.u32 %v3682, %v3684
        %v3687 = vmul.u32 %v3682, %v3685
        %v3688 = vmul.u32 %v3683, %v3684
        %v3689 = vmul.u32 %v3683, %v3685
        %v3690 = vshll.u32 %v3687, 16
        %v3691 = vshrl.u32 %v3687, 16
        %v3692 = vshll.u32 %v3688, 16
        %v3693 = vshrl.u32 %v3688, 16
        %vm3694 = vc.u32 %v3686, %v3690
        %v3695 = vsel %vm3694, 1, 0
        %v3696 = vadd.s32 %v3686, %v3690
        %v3697 = vadd.s32 %v3689, %v3695
        %vm3698 = vc.u32 %v3696, %v3692
        %v3699 = vsel %vm3698, 1, 0
        %v3700 = vadd.s32 %v3696, %v3692
        %v3701 = vadd.s32 %v3697, %v3699
        %v3702 = vadd.s32 %v3701, %v3691
        %v3703 = vadd.s32 %v3702, %v3693
        %v3704 = vand.u32 %v3681, 65535
        %v3705 = vshrl.u32 %v3681, 16
        %v3706 = vand.u32 %v3676, 65535
        %v3707 = vshrl.u32 %v3676, 16
        %v3708 = vmul.u32 %v3704, %v3706
        %v3709 = vmul.u32 %v3704, %v3707
        %v3710 = vmul.u32 %v3705, %v3706
        %v3711 = vmul.u32 %v3705, %v3707
        %v3712 = vshll.u32 %v3709, 16
        %v3713 = vshrl.u32 %v3709, 16
        %v3714 = vshll.u32 %v3710, 16
        %v3715 = vshrl.u32 %v3710, 16
        %vm3716 = vc.u32 %v3708, %v3712
        %v3717 = vsel %vm3716, 1, 0
        %v3718 = vadd.s32 %v3708, %v3712
        %v3719 = vadd.s32 %v3711, %v3717
        %vm3720 = vc.u32 %v3718, %v3714
        %v3721 = vsel %vm3720, 1, 0
        %v3722 = vadd.s32 %v3718, %v3714
        %v3723 = vadd.s32 %v3719, %v3721
        %v3724 = vadd.s32 %v3723, %v3713
        %v3725 = vadd.s32 %v3724, %v3715
        %v3726 = vmul.u32 %v3681, %v3672
        %v3727 = vadd.s32 %v3703, %v3722
        %vm3728 = vc.u32 %v3703, %v3722
        %v3729 = vadd.s32 %v3725, 1
        %v3730 = vsel %vm3728, %v3729, %v3725
        %v3731 = vadd.s32 %v3726, %v3730
        %v3732 = vadd.s32 %v3731, 536870912
        %v3733 = vshrl.u32 %v3732, 30
        %v3734 = vshll.u32 %v3733, 30
        %v3735 = vsub.s32 %v3731, %v3734
        %vm3736 = vcmp.lt.s32.totalorder %v3735, 0
        %v3737 = vsub.s32 0, %v3735
        %v3738 = vsel %vm3736, %v3737, %v3735
        %v3739 = vclz %v3738
        %v3740 = vsub.s32 %v3739, 2
        %vm3741 = vcmp.gt.s32.totalorder 0, %v3740
        %v3742 = vsel %vm3741, 0, %v3740
        %v3743 = vsub.s32 32, %v3742
        %v3744 = vshll.u32 %v3735, %v3742
        %v3745 = vshrl.u32 %v3727, %v3743
        %v3746 = vor.u32 %v3744, %v3745
        %v3747 = vsub.s32 4294967266, %v3742
        %v3748 = vadd.s32 %v3747, 127
        %v3749 = vshll.u32 %v3748, 23
        %v3750 = vor.u32 4788187, %v3749
        %v3751 = vand.u32 2147483647, %v3750
        %v3753 = vcvt.s32.f32 %v3746
        %v3754 = vmul.f32 %v3753, %v3751
        %v3755 = vxor.u32 %v3754, 2147483648
        %v3756 = vsel %vm3635, %v3755, %v3754
        %v3757 = vsub.s32 4, %v3733
        %v3758 = vsel %vm3635, %v3757, %v3733
        %v3759 = vsel %vm3634, %v361, %v3756
        %v3760 = vsel %vm3634, 0, %v3758
        %v3761 = vmul.f32 %v3759, %v3759
        %v3762 = vmul.f32 %v3761, -0.001358992
        %v3763 = vadd.f32 %v3762, 0.041655596
        %v3764 = vmul.f32 %v3761, %v3763
        %v3765 = vadd.f32 %v3764, -0.4999988
        %v3766 = vmul.f32 %v3761, %v3765
        %v3767 = vadd.f32 1.0, %v3766
        %v3768 = vmul.f32 %v3759, %v3759
        %v3769 = vmul.f32 %v3768, -0.00019511016
        %v3770 = vadd.f32 %v3769, 0.008332121
        %v3771 = vmul.f32 %v3768, %v3770
        %v3772 = vadd.f32 %v3771, -0.16666654
        %v3773 = vmul.f32 %v3768, %v3772
        %v3774 = vadd.f32 %v3773, 1.0
        %v3775 = vmul.f32 %v3774, %v3759
        %vm3776 = vweird.f32 %v361
        %v3777 = vadd.s32 %v3760, 3
        %v3778 = vand.u32 %v3777, 3
        %vm3779 = vcmp.lt.s32.totalorder %v3778, 2
        %vm3780 = vcmp.eq.s32.totalorder %v3778, 0
        %v3781 = vxor.u32 %v3775, 2147483648
        %v3782 = vsel %vm3780, %v3767, %v3781
        %vm3783 = vcmp.eq.s32.totalorder %v3778, 2
        %v3784 = vxor.u32 %v3767, 2147483648
        %v3785 = vsel %vm3783, %v3784, %v3775
        %v3786 = vsel %vm3779, %v3782, %v3785
        %v3787 = vsel %vm3776, nan, %v3786
        %v3788 = vand.u32 2147483647, %v299
        %vm3789 = vcmp.le.f32.partialorder %v3788, 0.7853982
        %vm3790 = vcmp.lt.s32.totalorder %v299, 0
        %v3791 = vand.u32 %v299, 2139095040
        %v3792 = vshrl.u32 %v3791, 23
        %v3793 = vsub.s32 %v3792, 127
        %v3794 = vand.u32 2147483647, %v299
        %v3795 = vand.u32 %v3794, 8388607
        %v3796 = vor.u32 %v3795, 8388608
        %v3797 = vsub.s32 0, %v3796
        %v3798 = vadd.s32 %v3793, 1
        %vm3799 = vcmp.gt.s32.totalorder %v3798, 0
        %v3800 = vsel %vm3799, %v3798, 0
        %v3801 = vshrl.u32 %v3800, 5
        %v3802 = vand.u32 %v3800, 31
        %v3803 = vsub.s32 32, %v3802
        %v3804 = vshrl.u32 683565275, %v3803
        %v3805 = vshll.u32 683565275, %v3802
        %v3806 = vshrl.u32 2475754826, %v3803
        %v3807 = vor.u32 %v3805, %v3806
        %v3808 = vshll.u32 2475754826, %v3802
        %v3809 = vshrl.u32 2131351028, %v3803
        %v3810 = vor.u32 %v3808, %v3809
        %v3811 = vshll.u32 2131351028, %v3802
        %v3812 = vshrl.u32 2102212464, %v3803
        %v3813 = vor.u32 %v3811, %v3812
        %v3814 = vshll.u32 2102212464, %v3802
        %v3815 = vshrl.u32 920167782, %v3803
        %v3816 = vor.u32 %v3814, %v3815
        %v3817 = vshll.u32 920167782, %v3802
        %v3818 = vshrl.u32 1326507024, %v3803
        %v3819 = vor.u32 %v3817, %v3818
        %vm3820 = vcmp.lt.s32.totalorder %v3801, 1
        %vm3821 = vcmp.lt.s32.totalorder %v3801, 2
        %vm3822 = vcmp.lt.s32.totalorder %v3801, 3
        %vm3823 = vcmp.lt.s32.totalorder %v3801, 4
        %v3824 = vsel %vm3820, %v3804, %v3807
        %v3825 = vsel %vm3823, %v3813, 2102212464
        %v3826 = vsel %vm3822, %v3810, %v3825
        %v3827 = vsel %vm3821, %v3824, %v3826
        %v3828 = vsel %vm3820, %v3807, %v3810
        %v3829 = vsel %vm3823, %v3816, 920167782
        %v3830 = vsel %vm3822, %v3813, %v3829
        %v3831 = vsel %vm3821, %v3828, %v3830
        %v3832 = vsel %vm3820, %v3810, %v3813
        %v3833 = vsel %vm3823, %v3819, 1326507024
        %v3834 = vsel %vm3822, %v3816, %v3833
        %v3835 = vsel %vm3821, %v3832, %v3834
        %v3836 = vshll.u32 %v3796, 8
        %v3837 = vand.u32 %v3836, 65535
        %v3838 = vshrl.u32 %v3836, 16
        %v3839 = vand.u32 %v3835, 65535
        %v3840 = vshrl.u32 %v3835, 16
        %v3841 = vmul.u32 %v3837, %v3839
        %v3842 = vmul.u32 %v3837, %v3840
        %v3843 = vmul.u32 %v3838, %v3839
        %v3844 = vmul.u32 %v3838, %v3840
        %v3845 = vshll.u32 %v3842, 16
        %v3846 = vshrl.u32 %v3842, 16
        %v3847 = vshll.u32 %v3843, 16
        %v3848 = vshrl.u32 %v3843, 16
        %vm3849 = vc.u32 %v3841, %v3845
        %v3850 = vsel %vm3849, 1, 0
        %v3851 = vadd.s32 %v3841, %v3845
        %v3852 = vadd.s32 %v3844, %v3850
        %vm3853 = vc.u32 %v3851, %v3847
        %v3854 = vsel %vm3853, 1, 0
        %v3855 = vadd.s32 %v3851, %v3847
        %v3856 = vadd.s32 %v3852, %v3854
        %v3857 = vadd.s32 %v3856, %v3846
        %v3858 = vadd.s32 %v3857, %v3848
        %v3859 = vand.u32 %v3836, 65535
        %v3860 = vshrl.u32 %v3836, 16
        %v3861 = vand.u32 %v3831, 65535
        %v3862 = vshrl.u32 %v3831, 16
        %v3863 = vmul.u32 %v3859, %v3861
        %v3864 = vmul.u32 %v3859, %v3862
        %v3865 = vmul.u32 %v3860, %v3861
        %v3866 = vmul.u32 %v3860, %v3862
        %v3867 = vshll.u32 %v3864, 16
        %v3868 = vshrl.u32 %v3864, 16
        %v3869 = vshll.u32 %v3865, 16
        %v3870 = vshrl.u32 %v3865, 16
        %vm3871 = vc.u32 %v3863, %v3867
        %v3872 = vsel %vm3871, 1, 0
        %v3873 = vadd.s32 %v3863, %v3867
        %v3874 = vadd.s32 %v3866, %v3872
        %vm3875 = vc.u32 %v3873, %v3869
        %v3876 = vsel %vm3875, 1, 0
        %v3877 = vadd.s32 %v3873, %v3869
        %v3878 = vadd.s32 %v3874, %v3876
        %v3879 = vadd.s32 %v3878, %v3868
        %v3880 = vadd.s32 %v3879, %v3870
        %v3881 = vmul.u32 %v3836, %v3827
        %v3882 = vadd.s32 %v3858, %v3877
        %vm3883 = vc.u32 %v3858, %v3877
        %v3884 = vadd.s32 %v3880, 1
        %v3885 = vsel %vm3883, %v3884, %v3880
        %v3886 = vadd.s32 %v3881, %v3885
        %v3887 = vadd.s32 %v3886, 536870912
        %v3888 = vshrl.u32 %v3887, 30
        %v3889 = vshll.u32 %v3888, 30
        %v3890 = vsub.s32 %v3886, %v3889
        %vm3891 = vcmp.lt.s32.totalorder %v3890, 0
        %v3892 = vsub.s32 0, %v3890
        %v3893 = vsel %vm3891, %v3892, %v3890
        %v3894 = vclz %v3893
        %v3895 = vsub.s32 %v3894, 2
        %vm3896 = vcmp.gt.s32.totalorder 0, %v3895
        %v3897 = vsel %vm3896, 0, %v3895
        %v3898 = vsub.s32 32, %v3897
        %v3899 = vshll.u32 %v3890, %v3897
        %v3900 = vshrl.u32 %v3882, %v3898
        %v3901 = vor.u32 %v3899, %v3900
        %v3902 = vsub.s32 4294967266, %v3897
        %v3903 = vadd.s32 %v3902, 127
        %v3904 = vshll.u32 %v3903, 23
        %v3905 = vor.u32 4788187, %v3904
        %v3906 = vand.u32 2147483647, %v3905
        %v3908 = vcvt.s32.f32 %v3901
        %v3909 = vmul.f32 %v3908, %v3906
        %v3910 = vxor.u32 %v3909, 2147483648
        %v3911 = vsel %vm3790, %v3910, %v3909
        %v3912 = vsub.s32 4, %v3888
        %v3913 = vsel %vm3790, %v3912, %v3888
        %v3914 = vsel %vm3789, %v299, %v3911
        %v3915 = vsel %vm3789, 0, %v3913
        %v3916 = vmul.f32 %v3914, %v3914
        %v3917 = vmul.f32 %v3916, -0.001358992
        %v3918 = vadd.f32 %v3917, 0.041655596
        %v3919 = vmul.f32 %v3916, %v3918
        %v3920 = vadd.f32 %v3919, -0.4999988
        %v3921 = vmul.f32 %v3916, %v3920
        %v3922 = vadd.f32 1.0, %v3921
        %v3923 = vmul.f32 %v3914, %v3914
        %v3924 = vmul.f32 %v3923, -0.00019511016
        %v3925 = vadd.f32 %v3924, 0.008332121
        %v3926 = vmul.f32 %v3923, %v3925
        %v3927 = vadd.f32 %v3926, -0.16666654
        %v3928 = vmul.f32 %v3923, %v3927
        %v3929 = vadd.f32 %v3928, 1.0
        %v3930 = vmul.f32 %v3929, %v3914
        %vm3931 = vweird.f32 %v299
        %v3932 = vadd.s32 %v3915, 3
        %v3933 = vand.u32 %v3932, 3
        %vm3934 = vcmp.lt.s32.totalorder %v3933, 2
        %vm3935 = vcmp.eq.s32.totalorder %v3933, 0
        %v3936 = vxor.u32 %v3930, 2147483648
        %v3937 = vsel %vm3935, %v3922, %v3936
        %vm3938 = vcmp.eq.s32.totalorder %v3933, 2
        %v3939 = vxor.u32 %v3922, 2147483648
        %v3940 = vsel %vm3938, %v3939, %v3930
        %v3941 = vsel %vm3934, %v3937, %v3940
        %v3942 = vsel %vm3931, nan, %v3941
        %v3943 = vand.u32 2147483647, %v364
        %vm3944 = vcmp.le.f32.partialorder %v3943, 0.7853982
        %vm3945 = vcmp.lt.s32.totalorder %v364, 0
        %v3946 = vand.u32 %v364, 2139095040
        %v3947 = vshrl.u32 %v3946, 23
        %v3948 = vsub.s32 %v3947, 127
        %v3949 = vand.u32 2147483647, %v364
        %v3950 = vand.u32 %v3949, 8388607
        %v3951 = vor.u32 %v3950, 8388608
        %v3952 = vsub.s32 0, %v3951
        %v3953 = vadd.s32 %v3948, 1
        %vm3954 = vcmp.gt.s32.totalorder %v3953, 0
        %v3955 = vsel %vm3954, %v3953, 0
        %v3956 = vshrl.u32 %v3955, 5
        %v3957 = vand.u32 %v3955, 31
        %v3958 = vsub.s32 32, %v3957
        %v3959 = vshrl.u32 683565275, %v3958
        %v3960 = vshll.u32 683565275, %v3957
        %v3961 = vshrl.u32 2475754826, %v3958
        %v3962 = vor.u32 %v3960, %v3961
        %v3963 = vshll.u32 2475754826, %v3957
        %v3964 = vshrl.u32 2131351028, %v3958
        %v3965 = vor.u32 %v3963, %v3964
        %v3966 = vshll.u32 2131351028, %v3957
        %v3967 = vshrl.u32 2102212464, %v3958
        %v3968 = vor.u32 %v3966, %v3967
        %v3969 = vshll.u32 2102212464, %v3957
        %v3970 = vshrl.u32 920167782, %v3958
        %v3971 = vor.u32 %v3969, %v3970
        %v3972 = vshll.u32 920167782, %v3957
        %v3973 = vshrl.u32 1326507024, %v3958
        %v3974 = vor.u32 %v3972, %v3973
        %vm3975 = vcmp.lt.s32.totalorder %v3956, 1
        %vm3976 = vcmp.lt.s32.totalorder %v3956, 2
        %vm3977 = vcmp.lt.s32.totalorder %v3956, 3
        %vm3978 = vcmp.lt.s32.totalorder %v3956, 4
        %v3979 = vsel %vm3975, %v3959, %v3962
        %v3980 = vsel %vm3978, %v3968, 2102212464
        %v3981 = vsel %vm3977, %v3965, %v3980
        %v3982 = vsel %vm3976, %v3979, %v3981
        %v3983 = vsel %vm3975, %v3962, %v3965
        %v3984 = vsel %vm3978, %v3971, 920167782
        %v3985 = vsel %vm3977, %v3968, %v3984
        %v3986 = vsel %vm3976, %v3983, %v3985
        %v3987 = vsel %vm3975, %v3965, %v3968
        %v3988 = vsel %vm3978, %v3974, 1326507024
        %v3989 = vsel %vm3977, %v3971, %v3988
        %v3990 = vsel %vm3976, %v3987, %v3989
        %v3991 = vshll.u32 %v3951, 8
        %v3992 = vand.u32 %v3991, 65535
        %v3993 = vshrl.u32 %v3991, 16
        %v3994 = vand.u32 %v3990, 65535
        %v3995 = vshrl.u32 %v3990, 16
        %v3996 = vmul.u32 %v3992, %v3994
        %v3997 = vmul.u32 %v3992, %v3995
        %v3998 = vmul.u32 %v3993, %v3994
        %v3999 = vmul.u32 %v3993, %v3995
        %v4000 = vshll.u32 %v3997, 16
        %v4001 = vshrl.u32 %v3997, 16
        %v4002 = vshll.u32 %v3998, 16
        %v4003 = vshrl.u32 %v3998, 16
        %vm4004 = vc.u32 %v3996, %v4000
        %v4005 = vsel %vm4004, 1, 0
        %v4006 = vadd.s32 %v3996, %v4000
        %v4007 = vadd.s32 %v3999, %v4005
        %vm4008 = vc.u32 %v4006, %v4002
        %v4009 = vsel %vm4008, 1, 0
        %v4010 = vadd.s32 %v4006, %v4002
        %v4011 = vadd.s32 %v4007, %v4009
        %v4012 = vadd.s32 %v4011, %v4001
        %v4013 = vadd.s32 %v4012, %v4003
        %v4014 = vand.u32 %v3991, 65535
        %v4015 = vshrl.u32 %v3991, 16
        %v4016 = vand.u32 %v3986, 65535
        %v4017 = vshrl.u32 %v3986, 16
        %v4018 = vmul.u32 %v4014, %v4016
        %v4019 = vmul.u32 %v4014, %v4017
        %v4020 = vmul.u32 %v4015, %v4016
        %v4021 = vmul.u32 %v4015, %v4017
        %v4022 = vshll.u32 %v4019, 16
        %v4023 = vshrl.u32 %v4019, 16
        %v4024 = vshll.u32 %v4020, 16
        %v4025 = vshrl.u32 %v4020, 16
        %vm4026 = vc.u32 %v4018, %v4022
        %v4027 = vsel %vm4026, 1, 0
        %v4028 = vadd.s32 %v4018, %v4022
        %v4029 = vadd.s32 %v4021, %v4027
        %vm4030 = vc.u32 %v4028, %v4024
        %v4031 = vsel %vm4030, 1, 0
        %v4032 = vadd.s32 %v4028, %v4024
        %v4033 = vadd.s32 %v4029, %v4031
        %v4034 = vadd.s32 %v4033, %v4023
        %v4035 = vadd.s32 %v4034, %v4025
        %v4036 = vmul.u32 %v3991, %v3982
        %v4037 = vadd.s32 %v4013, %v4032
        %vm4038 = vc.u32 %v4013, %v4032
        %v4039 = vadd.s32 %v4035, 1
        %v4040 = vsel %vm4038, %v4039, %v4035
        %v4041 = vadd.s32 %v4036, %v4040
        %v4042 = vadd.s32 %v4041, 536870912
        %v4043 = vshrl.u32 %v4042, 30
        %v4044 = vshll.u32 %v4043, 30
        %v4045 = vsub.s32 %v4041, %v4044
        %vm4046 = vcmp.lt.s32.totalorder %v4045, 0
        %v4047 = vsub.s32 0, %v4045
        %v4048 = vsel %vm4046, %v4047, %v4045
        %v4049 = vclz %v4048
        %v4050 = vsub.s32 %v4049, 2
        %vm4051 = vcmp.gt.s32.totalorder 0, %v4050
        %v4052 = vsel %vm4051, 0, %v4050
        %v4053 = vsub.s32 32, %v4052
        %v4054 = vshll.u32 %v4045, %v4052
        %v4055 = vshrl.u32 %v4037, %v4053
        %v4056 = vor.u32 %v4054, %v4055
        %v4057 = vsub.s32 4294967266, %v4052
        %v4058 = vadd.s32 %v4057, 127
        %v4059 = vshll.u32 %v4058, 23
        %v4060 = vor.u32 4788187, %v4059
        %v4061 = vand.u32 2147483647, %v4060
        %v4063 = vcvt.s32.f32 %v4056
        %v4064 = vmul.f32 %v4063, %v4061
        %v4065 = vxor.u32 %v4064, 2147483648
        %v4066 = vsel %vm3945, %v4065, %v4064
        %v4067 = vsub.s32 4, %v4043
        %v4068 = vsel %vm3945, %v4067, %v4043
        %v4069 = vsel %vm3944, %v364, %v4066
        %v4070 = vsel %vm3944, 0, %v4068
        %v4071 = vmul.f32 %v4069, %v4069
        %v4072 = vmul.f32 %v4071, -0.001358992
        %v4073 = vadd.f32 %v4072, 0.041655596
        %v4074 = vmul.f32 %v4071, %v4073
        %v4075 = vadd.f32 %v4074, -0.4999988
        %v4076 = vmul.f32 %v4071, %v4075
        %v4077 = vadd.f32 1.0, %v4076
        %v4078 = vmul.f32 %v4069, %v4069
        %v4079 = vmul.f32 %v4078, -0.00019511016
        %v4080 = vadd.f32 %v4079, 0.008332121
        %v4081 = vmul.f32 %v4078, %v4080
        %v4082 = vadd.f32 %v4081, -0.16666654
        %v4083 = vmul.f32 %v4078, %v4082
        %v4084 = vadd.f32 %v4083, 1.0
        %v4085 = vmul.f32 %v4084, %v4069
        %vm4086 = vweird.f32 %v364
        %v4087 = vadd.s32 %v4070, 3
        %v4088 = vand.u32 %v4087, 3
        %vm4089 = vcmp.lt.s32.totalorder %v4088, 2
        %vm4090 = vcmp.eq.s32.totalorder %v4088, 0
        %v4091 = vxor.u32 %v4085, 2147483648
        %v4092 = vsel %vm4090, %v4077, %v4091
        %vm4093 = vcmp.eq.s32.totalorder %v4088, 2
        %v4094 = vxor.u32 %v4077, 2147483648
        %v4095 = vsel %vm4093, %v4094, %v4085
        %v4096 = vsel %vm4089, %v4092, %v4095
        %v4097 = vsel %vm4086, nan, %v4096
        %v4098 = vand.u32 2147483647, %v302
        %vm4099 = vcmp.le.f32.partialorder %v4098, 0.7853982
        %vm4100 = vcmp.lt.s32.totalorder %v302, 0
        %v4101 = vand.u32 %v302, 2139095040
        %v4102 = vshrl.u32 %v4101, 23
        %v4103 = vsub.s32 %v4102, 127
        %v4104 = vand.u32 2147483647, %v302
        %v4105 = vand.u32 %v4104, 8388607
        %v4106 = vor.u32 %v4105, 8388608
        %v4107 = vsub.s32 0, %v4106
        %v4108 = vadd.s32 %v4103, 1
        %vm4109 = vcmp.gt.s32.totalorder %v4108, 0
        %v4110 = vsel %vm4109, %v4108, 0
        %v4111 = vshrl.u32 %v4110, 5
        %v4112 = vand.u32 %v4110, 31
        %v4113 = vsub.s32 32, %v4112
        %v4114 = vshrl.u32 683565275, %v4113
        %v4115 = vshll.u32 683565275, %v4112
        %v4116 = vshrl.u32 2475754826, %v4113
        %v4117 = vor.u32 %v4115, %v4116
        %v4118 = vshll.u32 2475754826, %v4112
        %v4119 = vshrl.u32 2131351028, %v4113
        %v4120 = vor.u32 %v4118, %v4119
        %v4121 = vshll.u32 2131351028, %v4112
        %v4122 = vshrl.u32 2102212464, %v4113
        %v4123 = vor.u32 %v4121, %v4122
        %v4124 = vshll.u32 2102212464, %v4112
        %v4125 = vshrl.u32 920167782, %v4113
        %v4126 = vor.u32 %v4124, %v4125
        %v4127 = vshll.u32 920167782, %v4112
        %v4128 = vshrl.u32 1326507024, %v4113
        %v4129 = vor.u32 %v4127, %v4128
        %vm4130 = vcmp.lt.s32.totalorder %v4111, 1
        %vm4131 = vcmp.lt.s32.totalorder %v4111, 2
        %vm4132 = vcmp.lt.s32.totalorder %v4111, 3
        %vm4133 = vcmp.lt.s32.totalorder %v4111, 4
        %v4134 = vsel %vm4130, %v4114, %v4117
        %v4135 = vsel %vm4133, %v4123, 2102212464
        %v4136 = vsel %vm4132, %v4120, %v4135
        %v4137 = vsel %vm4131, %v4134, %v4136
        %v4138 = vsel %vm4130, %v4117, %v4120
        %v4139 = vsel %vm4133, %v4126, 920167782
        %v4140 = vsel %vm4132, %v4123, %v4139
        %v4141 = vsel %vm4131, %v4138, %v4140
        %v4142 = vsel %vm4130, %v4120, %v4123
        %v4143 = vsel %vm4133, %v4129, 1326507024
        %v4144 = vsel %vm4132, %v4126, %v4143
        %v4145 = vsel %vm4131, %v4142, %v4144
        %v4146 = vshll.u32 %v4106, 8
        %v4147 = vand.u32 %v4146, 65535
        %v4148 = vshrl.u32 %v4146, 16
        %v4149 = vand.u32 %v4145, 65535
        %v4150 = vshrl.u32 %v4145, 16
        %v4151 = vmul.u32 %v4147, %v4149
        %v4152 = vmul.u32 %v4147, %v4150
        %v4153 = vmul.u32 %v4148, %v4149
        %v4154 = vmul.u32 %v4148, %v4150
        %v4155 = vshll.u32 %v4152, 16
        %v4156 = vshrl.u32 %v4152, 16
        %v4157 = vshll.u32 %v4153, 16
        %v4158 = vshrl.u32 %v4153, 16
        %vm4159 = vc.u32 %v4151, %v4155
        %v4160 = vsel %vm4159, 1, 0
        %v4161 = vadd.s32 %v4151, %v4155
        %v4162 = vadd.s32 %v4154, %v4160
        %vm4163 = vc.u32 %v4161, %v4157
        %v4164 = vsel %vm4163, 1, 0
        %v4165 = vadd.s32 %v4161, %v4157
        %v4166 = vadd.s32 %v4162, %v4164
        %v4167 = vadd.s32 %v4166, %v4156
        %v4168 = vadd.s32 %v4167, %v4158
        %v4169 = vand.u32 %v4146, 65535
        %v4170 = vshrl.u32 %v4146, 16
        %v4171 = vand.u32 %v4141, 65535
        %v4172 = vshrl.u32 %v4141, 16
        %v4173 = vmul.u32 %v4169, %v4171
        %v4174 = vmul.u32 %v4169, %v4172
        %v4175 = vmul.u32 %v4170, %v4171
        %v4176 = vmul.u32 %v4170, %v4172
        %v4177 = vshll.u32 %v4174, 16
        %v4178 = vshrl.u32 %v4174, 16
        %v4179 = vshll.u32 %v4175, 16
        %v4180 = vshrl.u32 %v4175, 16
        %vm4181 = vc.u32 %v4173, %v4177
        %v4182 = vsel %vm4181, 1, 0
        %v4183 = vadd.s32 %v4173, %v4177
        %v4184 = vadd.s32 %v4176, %v4182
        %vm4185 = vc.u32 %v4183, %v4179
        %v4186 = vsel %vm4185, 1, 0
        %v4187 = vadd.s32 %v4183, %v4179
        %v4188 = vadd.s32 %v4184, %v4186
        %v4189 = vadd.s32 %v4188, %v4178
        %v4190 = vadd.s32 %v4189, %v4180
        %v4191 = vmul.u32 %v4146, %v4137
        %v4192 = vadd.s32 %v4168, %v4187
        %vm4193 = vc.u32 %v4168, %v4187
        %v4194 = vadd.s32 %v4190, 1
        %v4195 = vsel %vm4193, %v4194, %v4190
        %v4196 = vadd.s32 %v4191, %v4195
        %v4197 = vadd.s32 %v4196, 536870912
        %v4198 = vshrl.u32 %v4197, 30
        %v4199 = vshll.u32 %v4198, 30
        %v4200 = vsub.s32 %v4196, %v4199
        %vm4201 = vcmp.lt.s32.totalorder %v4200, 0
        %v4202 = vsub.s32 0, %v4200
        %v4203 = vsel %vm4201, %v4202, %v4200
        %v4204 = vclz %v4203
        %v4205 = vsub.s32 %v4204, 2
        %vm4206 = vcmp.gt.s32.totalorder 0, %v4205
        %v4207 = vsel %vm4206, 0, %v4205
        %v4208 = vsub.s32 32, %v4207
        %v4209 = vshll.u32 %v4200, %v4207
        %v4210 = vshrl.u32 %v4192, %v4208
        %v4211 = vor.u32 %v4209, %v4210
        %v4212 = vsub.s32 4294967266, %v4207
        %v4213 = vadd.s32 %v4212, 127
        %v4214 = vshll.u32 %v4213, 23
        %v4215 = vor.u32 4788187, %v4214
        %v4216 = vand.u32 2147483647, %v4215
        %v4218 = vcvt.s32.f32 %v4211
        %v4219 = vmul.f32 %v4218, %v4216
        %v4220 = vxor.u32 %v4219, 2147483648
        %v4221 = vsel %vm4100, %v4220, %v4219
        %v4222 = vsub.s32 4, %v4198
        %v4223 = vsel %vm4100, %v4222, %v4198
        %v4224 = vsel %vm4099, %v302, %v4221
        %v4225 = vsel %vm4099, 0, %v4223
        %v4226 = vmul.f32 %v4224, %v4224
        %v4227 = vmul.f32 %v4226, -0.001358992
        %v4228 = vadd.f32 %v4227, 0.041655596
        %v4229 = vmul.f32 %v4226, %v4228
        %v4230 = vadd.f32 %v4229, -0.4999988
        %v4231 = vmul.f32 %v4226, %v4230
        %v4232 = vadd.f32 1.0, %v4231
        %v4233 = vmul.f32 %v4224, %v4224
        %v4234 = vmul.f32 %v4233, -0.00019511016
        %v4235 = vadd.f32 %v4234, 0.008332121
        %v4236 = vmul.f32 %v4233, %v4235
        %v4237 = vadd.f32 %v4236, -0.16666654
        %v4238 = vmul.f32 %v4233, %v4237
        %v4239 = vadd.f32 %v4238, 1.0
        %v4240 = vmul.f32 %v4239, %v4224
        %vm4241 = vweird.f32 %v302
        %v4242 = vadd.s32 %v4225, 3
        %v4243 = vand.u32 %v4242, 3
        %vm4244 = vcmp.lt.s32.totalorder %v4243, 2
        %vm4245 = vcmp.eq.s32.totalorder %v4243, 0
        %v4246 = vxor.u32 %v4240, 2147483648
        %v4247 = vsel %vm4245, %v4232, %v4246
        %vm4248 = vcmp.eq.s32.totalorder %v4243, 2
        %v4249 = vxor.u32 %v4232, 2147483648
        %v4250 = vsel %vm4248, %v4249, %v4240
        %v4251 = vsel %vm4244, %v4247, %v4250
        %v4252 = vsel %vm4241, nan, %v4251
        %v4253 = vand.u32 2147483647, %v367
        %vm4254 = vcmp.le.f32.partialorder %v4253, 0.7853982
        %vm4255 = vcmp.lt.s32.totalorder %v367, 0
        %v4256 = vand.u32 %v367, 2139095040
        %v4257 = vshrl.u32 %v4256, 23
        %v4258 = vsub.s32 %v4257, 127
        %v4259 = vand.u32 2147483647, %v367
        %v4260 = vand.u32 %v4259, 8388607
        %v4261 = vor.u32 %v4260, 8388608
        %v4262 = vsub.s32 0, %v4261
        %v4263 = vadd.s32 %v4258, 1
        %vm4264 = vcmp.gt.s32.totalorder %v4263, 0
        %v4265 = vsel %vm4264, %v4263, 0
        %v4266 = vshrl.u32 %v4265, 5
        %v4267 = vand.u32 %v4265, 31
        %v4268 = vsub.s32 32, %v4267
        %v4269 = vshrl.u32 683565275, %v4268
        %v4270 = vshll.u32 683565275, %v4267
        %v4271 = vshrl.u32 2475754826, %v4268
        %v4272 = vor.u32 %v4270, %v4271
        %v4273 = vshll.u32 2475754826, %v4267
        %v4274 = vshrl.u32 2131351028, %v4268
        %v4275 = vor.u32 %v4273, %v4274
        %v4276 = vshll.u32 2131351028, %v4267
        %v4277 = vshrl.u32 2102212464, %v4268
        %v4278 = vor.u32 %v4276, %v4277
        %v4279 = vshll.u32 2102212464, %v4267
        %v4280 = vshrl.u32 920167782, %v4268
        %v4281 = vor.u32 %v4279, %v4280
        %v4282 = vshll.u32 920167782, %v4267
        %v4283 = vshrl.u32 1326507024, %v4268
        %v4284 = vor.u32 %v4282, %v4283
        %vm4285 = vcmp.lt.s32.totalorder %v4266, 1
        %vm4286 = vcmp.lt.s32.totalorder %v4266, 2
        %vm4287 = vcmp.lt.s32.totalorder %v4266, 3
        %vm4288 = vcmp.lt.s32.totalorder %v4266, 4
        %v4289 = vsel %vm4285, %v4269, %v4272
        %v4290 = vsel %vm4288, %v4278, 2102212464
        %v4291 = vsel %vm4287, %v4275, %v4290
        %v4292 = vsel %vm4286, %v4289, %v4291
        %v4293 = vsel %vm4285, %v4272, %v4275
        %v4294 = vsel %vm4288, %v4281, 920167782
        %v4295 = vsel %vm4287, %v4278, %v4294
        %v4296 = vsel %vm4286, %v4293, %v4295
        %v4297 = vsel %vm4285, %v4275, %v4278
        %v4298 = vsel %vm4288, %v4284, 1326507024
        %v4299 = vsel %vm4287, %v4281, %v4298
        %v4300 = vsel %vm4286, %v4297, %v4299
        %v4301 = vshll.u32 %v4261, 8
        %v4302 = vand.u32 %v4301, 65535
        %v4303 = vshrl.u32 %v4301, 16
        %v4304 = vand.u32 %v4300, 65535
        %v4305 = vshrl.u32 %v4300, 16
        %v4306 = vmul.u32 %v4302, %v4304
        %v4307 = vmul.u32 %v4302, %v4305
        %v4308 = vmul.u32 %v4303, %v4304
        %v4309 = vmul.u32 %v4303, %v4305
        %v4310 = vshll.u32 %v4307, 16
        %v4311 = vshrl.u32 %v4307, 16
        %v4312 = vshll.u32 %v4308, 16
        %v4313 = vshrl.u32 %v4308, 16
        %vm4314 = vc.u32 %v4306, %v4310
        %v4315 = vsel %vm4314, 1, 0
        %v4316 = vadd.s32 %v4306, %v4310
        %v4317 = vadd.s32 %v4309, %v4315
        %vm4318 = vc.u32 %v4316, %v4312
        %v4319 = vsel %vm4318, 1, 0
        %v4320 = vadd.s32 %v4316, %v4312
        %v4321 = vadd.s32 %v4317, %v4319
        %v4322 = vadd.s32 %v4321, %v4311
        %v4323 = vadd.s32 %v4322, %v4313
        %v4324 = vand.u32 %v4301, 65535
        %v4325 = vshrl.u32 %v4301, 16
        %v4326 = vand.u32 %v4296, 65535
        %v4327 = vshrl.u32 %v4296, 16
        %v4328 = vmul.u32 %v4324, %v4326
        %v4329 = vmul.u32 %v4324, %v4327
        %v4330 = vmul.u32 %v4325, %v4326
        %v4331 = vmul.u32 %v4325, %v4327
        %v4332 = vshll.u32 %v4329, 16
        %v4333 = vshrl.u32 %v4329, 16
        %v4334 = vshll.u32 %v4330, 16
        %v4335 = vshrl.u32 %v4330, 16
        %vm4336 = vc.u32 %v4328, %v4332
        %v4337 = vsel %vm4336, 1, 0
        %v4338 = vadd.s32 %v4328, %v4332
        %v4339 = vadd.s32 %v4331, %v4337
        %vm4340 = vc.u32 %v4338, %v4334
        %v4341 = vsel %vm4340, 1, 0
        %v4342 = vadd.s32 %v4338, %v4334
        %v4343 = vadd.s32 %v4339, %v4341
        %v4344 = vadd.s32 %v4343, %v4333
        %v4345 = vadd.s32 %v4344, %v4335
        %v4346 = vmul.u32 %v4301, %v4292
        %v4347 = vadd.s32 %v4323, %v4342
        %vm4348 = vc.u32 %v4323, %v4342
        %v4349 = vadd.s32 %v4345, 1
        %v4350 = vsel %vm4348, %v4349, %v4345
        %v4351 = vadd.s32 %v4346, %v4350
        %v4352 = vadd.s32 %v4351, 536870912
        %v4353 = vshrl.u32 %v4352, 30
        %v4354 = vshll.u32 %v4353, 30
        %v4355 = vsub.s32 %v4351, %v4354
        %vm4356 = vcmp.lt.s32.totalorder %v4355, 0
        %v4357 = vsub.s32 0, %v4355
        %v4358 = vsel %vm4356, %v4357, %v4355
        %v4359 = vclz %v4358
        %v4360 = vsub.s32 %v4359, 2
        %vm4361 = vcmp.gt.s32.totalorder 0, %v4360
        %v4362 = vsel %vm4361, 0, %v4360
        %v4363 = vsub.s32 32, %v4362
        %v4364 = vshll.u32 %v4355, %v4362
        %v4365 = vshrl.u32 %v4347, %v4363
        %v4366 = vor.u32 %v4364, %v4365
        %v4367 = vsub.s32 4294967266, %v4362
        %v4368 = vadd.s32 %v4367, 127
        %v4369 = vshll.u32 %v4368, 23
        %v4370 = vor.u32 4788187, %v4369
        %v4371 = vand.u32 2147483647, %v4370
        %v4373 = vcvt.s32.f32 %v4366
        %v4374 = vmul.f32 %v4373, %v4371
        %v4375 = vxor.u32 %v4374, 2147483648
        %v4376 = vsel %vm4255, %v4375, %v4374
        %v4377 = vsub.s32 4, %v4353
        %v4378 = vsel %vm4255, %v4377, %v4353
        %v4379 = vsel %vm4254, %v367, %v4376
        %v4380 = vsel %vm4254, 0, %v4378
        %v4381 = vmul.f32 %v4379, %v4379
        %v4382 = vmul.f32 %v4381, -0.001358992
        %v4383 = vadd.f32 %v4382, 0.041655596
        %v4384 = vmul.f32 %v4381, %v4383
        %v4385 = vadd.f32 %v4384, -0.4999988
        %v4386 = vmul.f32 %v4381, %v4385
        %v4387 = vadd.f32 1.0, %v4386
        %v4388 = vmul.f32 %v4379, %v4379
        %v4389 = vmul.f32 %v4388, -0.00019511016
        %v4390 = vadd.f32 %v4389, 0.008332121
        %v4391 = vmul.f32 %v4388, %v4390
        %v4392 = vadd.f32 %v4391, -0.16666654
        %v4393 = vmul.f32 %v4388, %v4392
        %v4394 = vadd.f32 %v4393, 1.0
        %v4395 = vmul.f32 %v4394, %v4379
        %vm4396 = vweird.f32 %v367
        %v4397 = vadd.s32 %v4380, 3
        %v4398 = vand.u32 %v4397, 3
        %vm4399 = vcmp.lt.s32.totalorder %v4398, 2
        %vm4400 = vcmp.eq.s32.totalorder %v4398, 0
        %v4401 = vxor.u32 %v4395, 2147483648
        %v4402 = vsel %vm4400, %v4387, %v4401
        %vm4403 = vcmp.eq.s32.totalorder %v4398, 2
        %v4404 = vxor.u32 %v4387, 2147483648
        %v4405 = vsel %vm4403, %v4404, %v4395
        %v4406 = vsel %vm4399, %v4402, %v4405
        %v4407 = vsel %vm4396, nan, %v4406
        %v4408 = vand.u32 2147483647, %v305
        %vm4409 = vcmp.le.f32.partialorder %v4408, 0.7853982
        %vm4410 = vcmp.lt.s32.totalorder %v305, 0
        %v4411 = vand.u32 %v305, 2139095040
        %v4412 = vshrl.u32 %v4411, 23
        %v4413 = vsub.s32 %v4412, 127
        %v4414 = vand.u32 2147483647, %v305
        %v4415 = vand.u32 %v4414, 8388607
        %v4416 = vor.u32 %v4415, 8388608
        %v4417 = vsub.s32 0, %v4416
        %v4418 = vadd.s32 %v4413, 1
        %vm4419 = vcmp.gt.s32.totalorder %v4418, 0
        %v4420 = vsel %vm4419, %v4418, 0
        %v4421 = vshrl.u32 %v4420, 5
        %v4422 = vand.u32 %v4420, 31
        %v4423 = vsub.s32 32, %v4422
        %v4424 = vshrl.u32 683565275, %v4423
        %v4425 = vshll.u32 683565275, %v4422
        %v4426 = vshrl.u32 2475754826, %v4423
        %v4427 = vor.u32 %v4425, %v4426
        %v4428 = vshll.u32 2475754826, %v4422
        %v4429 = vshrl.u32 2131351028, %v4423
        %v4430 = vor.u32 %v4428, %v4429
        %v4431 = vshll.u32 2131351028, %v4422
        %v4432 = vshrl.u32 2102212464, %v4423
        %v4433 = vor.u32 %v4431, %v4432
        %v4434 = vshll.u32 2102212464, %v4422
        %v4435 = vshrl.u32 920167782, %v4423
        %v4436 = vor.u32 %v4434, %v4435
        %v4437 = vshll.u32 920167782, %v4422
        %v4438 = vshrl.u32 1326507024, %v4423
        %v4439 = vor.u32 %v4437, %v4438
        %vm4440 = vcmp.lt.s32.totalorder %v4421, 1
        %vm4441 = vcmp.lt.s32.totalorder %v4421, 2
        %vm4442 = vcmp.lt.s32.totalorder %v4421, 3
        %vm4443 = vcmp.lt.s32.totalorder %v4421, 4
        %v4444 = vsel %vm4440, %v4424, %v4427
        %v4445 = vsel %vm4443, %v4433, 2102212464
        %v4446 = vsel %vm4442, %v4430, %v4445
        %v4447 = vsel %vm4441, %v4444, %v4446
        %v4448 = vsel %vm4440, %v4427, %v4430
        %v4449 = vsel %vm4443, %v4436, 920167782
        %v4450 = vsel %vm4442, %v4433, %v4449
        %v4451 = vsel %vm4441, %v4448, %v4450
        %v4452 = vsel %vm4440, %v4430, %v4433
        %v4453 = vsel %vm4443, %v4439, 1326507024
        %v4454 = vsel %vm4442, %v4436, %v4453
        %v4455 = vsel %vm4441, %v4452, %v4454
        %v4456 = vshll.u32 %v4416, 8
        %v4457 = vand.u32 %v4456, 65535
        %v4458 = vshrl.u32 %v4456, 16
        %v4459 = vand.u32 %v4455, 65535
        %v4460 = vshrl.u32 %v4455, 16
        %v4461 = vmul.u32 %v4457, %v4459
        %v4462 = vmul.u32 %v4457, %v4460
        %v4463 = vmul.u32 %v4458, %v4459
        %v4464 = vmul.u32 %v4458, %v4460
        %v4465 = vshll.u32 %v4462, 16
        %v4466 = vshrl.u32 %v4462, 16
        %v4467 = vshll.u32 %v4463, 16
        %v4468 = vshrl.u32 %v4463, 16
        %vm4469 = vc.u32 %v4461, %v4465
        %v4470 = vsel %vm4469, 1, 0
        %v4471 = vadd.s32 %v4461, %v4465
        %v4472 = vadd.s32 %v4464, %v4470
        %vm4473 = vc.u32 %v4471, %v4467
        %v4474 = vsel %vm4473, 1, 0
        %v4475 = vadd.s32 %v4471, %v4467
        %v4476 = vadd.s32 %v4472, %v4474
        %v4477 = vadd.s32 %v4476, %v4466
        %v4478 = vadd.s32 %v4477, %v4468
        %v4479 = vand.u32 %v4456, 65535
        %v4480 = vshrl.u32 %v4456, 16
        %v4481 = vand.u32 %v4451, 65535
        %v4482 = vshrl.u32 %v4451, 16
        %v4483 = vmul.u32 %v4479, %v4481
        %v4484 = vmul.u32 %v4479, %v4482
        %v4485 = vmul.u32 %v4480, %v4481
        %v4486 = vmul.u32 %v4480, %v4482
        %v4487 = vshll.u32 %v4484, 16
        %v4488 = vshrl.u32 %v4484, 16
        %v4489 = vshll.u32 %v4485, 16
        %v4490 = vshrl.u32 %v4485, 16
        %vm4491 = vc.u32 %v4483, %v4487
        %v4492 = vsel %vm4491, 1, 0
        %v4493 = vadd.s32 %v4483, %v4487
        %v4494 = vadd.s32 %v4486, %v4492
        %vm4495 = vc.u32 %v4493, %v4489
        %v4496 = vsel %vm4495, 1, 0
        %v4497 = vadd.s32 %v4493, %v4489
        %v4498 = vadd.s32 %v4494, %v4496
        %v4499 = vadd.s32 %v4498, %v4488
        %v4500 = vadd.s32 %v4499, %v4490
        %v4501 = vmul.u32 %v4456, %v4447
        %v4502 = vadd.s32 %v4478, %v4497
        %vm4503 = vc.u32 %v4478, %v4497
        %v4504 = vadd.s32 %v4500, 1
        %v4505 = vsel %vm4503, %v4504, %v4500
        %v4506 = vadd.s32 %v4501, %v4505
        %v4507 = vadd.s32 %v4506, 536870912
        %v4508 = vshrl.u32 %v4507, 30
        %v4509 = vshll.u32 %v4508, 30
        %v4510 = vsub.s32 %v4506, %v4509
        %vm4511 = vcmp.lt.s32.totalorder %v4510, 0
        %v4512 = vsub.s32 0, %v4510
        %v4513 = vsel %vm4511, %v4512, %v4510
        %v4514 = vclz %v4513
        %v4515 = vsub.s32 %v4514, 2
        %vm4516 = vcmp.gt.s32.totalorder 0, %v4515
        %v4517 = vsel %vm4516, 0, %v4515
        %v4518 = vsub.s32 32, %v4517
        %v4519 = vshll.u32 %v4510, %v4517
        %v4520 = vshrl.u32 %v4502, %v4518
        %v4521 = vor.u32 %v4519, %v4520
        %v4522 = vsub.s32 4294967266, %v4517
        %v4523 = vadd.s32 %v4522, 127
        %v4524 = vshll.u32 %v4523, 23
        %v4525 = vor.u32 4788187, %v4524
        %v4526 = vand.u32 2147483647, %v4525
        %v4528 = vcvt.s32.f32 %v4521
        %v4529 = vmul.f32 %v4528, %v4526
        %v4530 = vxor.u32 %v4529, 2147483648
        %v4531 = vsel %vm4410, %v4530, %v4529
        %v4532 = vsub.s32 4, %v4508
        %v4533 = vsel %vm4410, %v4532, %v4508
        %v4534 = vsel %vm4409, %v305, %v4531
        %v4535 = vsel %vm4409, 0, %v4533
        %v4536 = vmul.f32 %v4534, %v4534
        %v4537 = vmul.f32 %v4536, -0.001358992
        %v4538 = vadd.f32 %v4537, 0.041655596
        %v4539 = vmul.f32 %v4536, %v4538
        %v4540 = vadd.f32 %v4539, -0.4999988
        %v4541 = vmul.f32 %v4536, %v4540
        %v4542 = vadd.f32 1.0, %v4541
        %v4543 = vmul.f32 %v4534, %v4534
        %v4544 = vmul.f32 %v4543, -0.00019511016
        %v4545 = vadd.f32 %v4544, 0.008332121
        %v4546 = vmul.f32 %v4543, %v4545
        %v4547 = vadd.f32 %v4546, -0.16666654
        %v4548 = vmul.f32 %v4543, %v4547
        %v4549 = vadd.f32 %v4548, 1.0
        %v4550 = vmul.f32 %v4549, %v4534
        %vm4551 = vweird.f32 %v305
        %v4552 = vadd.s32 %v4535, 3
        %v4553 = vand.u32 %v4552, 3
        %vm4554 = vcmp.lt.s32.totalorder %v4553, 2
        %vm4555 = vcmp.eq.s32.totalorder %v4553, 0
        %v4556 = vxor.u32 %v4550, 2147483648
        %v4557 = vsel %vm4555, %v4542, %v4556
        %vm4558 = vcmp.eq.s32.totalorder %v4553, 2
        %v4559 = vxor.u32 %v4542, 2147483648
        %v4560 = vsel %vm4558, %v4559, %v4550
        %v4561 = vsel %vm4554, %v4557, %v4560
        %v4562 = vsel %vm4551, nan, %v4561
        %v4563 = vand.u32 2147483647, %v370
        %vm4564 = vcmp.le.f32.partialorder %v4563, 0.7853982
        %vm4565 = vcmp.lt.s32.totalorder %v370, 0
        %v4566 = vand.u32 %v370, 2139095040
        %v4567 = vshrl.u32 %v4566, 23
        %v4568 = vsub.s32 %v4567, 127
        %v4569 = vand.u32 2147483647, %v370
        %v4570 = vand.u32 %v4569, 8388607
        %v4571 = vor.u32 %v4570, 8388608
        %v4572 = vsub.s32 0, %v4571
        %v4573 = vadd.s32 %v4568, 1
        %vm4574 = vcmp.gt.s32.totalorder %v4573, 0
        %v4575 = vsel %vm4574, %v4573, 0
        %v4576 = vshrl.u32 %v4575, 5
        %v4577 = vand.u32 %v4575, 31
        %v4578 = vsub.s32 32, %v4577
        %v4579 = vshrl.u32 683565275, %v4578
        %v4580 = vshll.u32 683565275, %v4577
        %v4581 = vshrl.u32 2475754826, %v4578
        %v4582 = vor.u32 %v4580, %v4581
        %v4583 = vshll.u32 2475754826, %v4577
        %v4584 = vshrl.u32 2131351028, %v4578
        %v4585 = vor.u32 %v4583, %v4584
        %v4586 = vshll.u32 2131351028, %v4577
        %v4587 = vshrl.u32 2102212464, %v4578
        %v4588 = vor.u32 %v4586, %v4587
        %v4589 = vshll.u32 2102212464, %v4577
        %v4590 = vshrl.u32 920167782, %v4578
        %v4591 = vor.u32 %v4589, %v4590
        %v4592 = vshll.u32 920167782, %v4577
        %v4593 = vshrl.u32 1326507024, %v4578
        %v4594 = vor.u32 %v4592, %v4593
        %vm4595 = vcmp.lt.s32.totalorder %v4576, 1
        %vm4596 = vcmp.lt.s32.totalorder %v4576, 2
        %vm4597 = vcmp.lt.s32.totalorder %v4576, 3
        %vm4598 = vcmp.lt.s32.totalorder %v4576, 4
        %v4599 = vsel %vm4595, %v4579, %v4582
        %v4600 = vsel %vm4598, %v4588, 2102212464
        %v4601 = vsel %vm4597, %v4585, %v4600
        %v4602 = vsel %vm4596, %v4599, %v4601
        %v4603 = vsel %vm4595, %v4582, %v4585
        %v4604 = vsel %vm4598, %v4591, 920167782
        %v4605 = vsel %vm4597, %v4588, %v4604
        %v4606 = vsel %vm4596, %v4603, %v4605
        %v4607 = vsel %vm4595, %v4585, %v4588
        %v4608 = vsel %vm4598, %v4594, 1326507024
        %v4609 = vsel %vm4597, %v4591, %v4608
        %v4610 = vsel %vm4596, %v4607, %v4609
        %v4611 = vshll.u32 %v4571, 8
        %v4612 = vand.u32 %v4611, 65535
        %v4613 = vshrl.u32 %v4611, 16
        %v4614 = vand.u32 %v4610, 65535
        %v4615 = vshrl.u32 %v4610, 16
        %v4616 = vmul.u32 %v4612, %v4614
        %v4617 = vmul.u32 %v4612, %v4615
        %v4618 = vmul.u32 %v4613, %v4614
        %v4619 = vmul.u32 %v4613, %v4615
        %v4620 = vshll.u32 %v4617, 16
        %v4621 = vshrl.u32 %v4617, 16
        %v4622 = vshll.u32 %v4618, 16
        %v4623 = vshrl.u32 %v4618, 16
        %vm4624 = vc.u32 %v4616, %v4620
        %v4625 = vsel %vm4624, 1, 0
        %v4626 = vadd.s32 %v4616, %v4620
        %v4627 = vadd.s32 %v4619, %v4625
        %vm4628 = vc.u32 %v4626, %v4622
        %v4629 = vsel %vm4628, 1, 0
        %v4630 = vadd.s32 %v4626, %v4622
        %v4631 = vadd.s32 %v4627, %v4629
        %v4632 = vadd.s32 %v4631, %v4621
        %v4633 = vadd.s32 %v4632, %v4623
        %v4634 = vand.u32 %v4611, 65535
        %v4635 = vshrl.u32 %v4611, 16
        %v4636 = vand.u32 %v4606, 65535
        %v4637 = vshrl.u32 %v4606, 16
        %v4638 = vmul.u32 %v4634, %v4636
        %v4639 = vmul.u32 %v4634, %v4637
        %v4640 = vmul.u32 %v4635, %v4636
        %v4641 = vmul.u32 %v4635, %v4637
        %v4642 = vshll.u32 %v4639, 16
        %v4643 = vshrl.u32 %v4639, 16
        %v4644 = vshll.u32 %v4640, 16
        %v4645 = vshrl.u32 %v4640, 16
        %vm4646 = vc.u32 %v4638, %v4642
        %v4647 = vsel %vm4646, 1, 0
        %v4648 = vadd.s32 %v4638, %v4642
        %v4649 = vadd.s32 %v4641, %v4647
        %vm4650 = vc.u32 %v4648, %v4644
        %v4651 = vsel %vm4650, 1, 0
        %v4652 = vadd.s32 %v4648, %v4644
        %v4653 = vadd.s32 %v4649, %v4651
        %v4654 = vadd.s32 %v4653, %v4643
        %v4655 = vadd.s32 %v4654, %v4645
        %v4656 = vmul.u32 %v4611, %v4602
        %v4657 = vadd.s32 %v4633, %v4652
        %vm4658 = vc.u32 %v4633, %v4652
        %v4659 = vadd.s32 %v4655, 1
        %v4660 = vsel %vm4658, %v4659, %v4655
        %v4661 = vadd.s32 %v4656, %v4660
        %v4662 = vadd.s32 %v4661, 536870912
        %v4663 = vshrl.u32 %v4662, 30
        %v4664 = vshll.u32 %v4663, 30
        %v4665 = vsub.s32 %v4661, %v4664
        %vm4666 = vcmp.lt.s32.totalorder %v4665, 0
        %v4667 = vsub.s32 0, %v4665
        %v4668 = vsel %vm4666, %v4667, %v4665
        %v4669 = vclz %v4668
        %v4670 = vsub.s32 %v4669, 2
        %vm4671 = vcmp.gt.s32.totalorder 0, %v4670
        %v4672 = vsel %vm4671, 0, %v4670
        %v4673 = vsub.s32 32, %v4672
        %v4674 = vshll.u32 %v4665, %v4672
        %v4675 = vshrl.u32 %v4657, %v4673
        %v4676 = vor.u32 %v4674, %v4675
        %v4677 = vsub.s32 4294967266, %v4672
        %v4678 = vadd.s32 %v4677, 127
        %v4679 = vshll.u32 %v4678, 23
        %v4680 = vor.u32 4788187, %v4679
        %v4681 = vand.u32 2147483647, %v4680
        %v4683 = vcvt.s32.f32 %v4676
        %v4684 = vmul.f32 %v4683, %v4681
        %v4685 = vxor.u32 %v4684, 2147483648
        %v4686 = vsel %vm4565, %v4685, %v4684
        %v4687 = vsub.s32 4, %v4663
        %v4688 = vsel %vm4565, %v4687, %v4663
        %v4689 = vsel %vm4564, %v370, %v4686
        %v4690 = vsel %vm4564, 0, %v4688
        %v4691 = vmul.f32 %v4689, %v4689
        %v4692 = vmul.f32 %v4691, -0.001358992
        %v4693 = vadd.f32 %v4692, 0.041655596
        %v4694 = vmul.f32 %v4691, %v4693
        %v4695 = vadd.f32 %v4694, -0.4999988
        %v4696 = vmul.f32 %v4691, %v4695
        %v4697 = vadd.f32 1.0, %v4696
        %v4698 = vmul.f32 %v4689, %v4689
        %v4699 = vmul.f32 %v4698, -0.00019511016
        %v4700 = vadd.f32 %v4699, 0.008332121
        %v4701 = vmul.f32 %v4698, %v4700
        %v4702 = vadd.f32 %v4701, -0.16666654
        %v4703 = vmul.f32 %v4698, %v4702
        %v4704 = vadd.f32 %v4703, 1.0
        %v4705 = vmul.f32 %v4704, %v4689
        %vm4706 = vweird.f32 %v370
        %v4707 = vadd.s32 %v4690, 3
        %v4708 = vand.u32 %v4707, 3
        %vm4709 = vcmp.lt.s32.totalorder %v4708, 2
        %vm4710 = vcmp.eq.s32.totalorder %v4708, 0
        %v4711 = vxor.u32 %v4705, 2147483648
        %v4712 = vsel %vm4710, %v4697, %v4711
        %vm4713 = vcmp.eq.s32.totalorder %v4708, 2
        %v4714 = vxor.u32 %v4697, 2147483648
        %v4715 = vsel %vm4713, %v4714, %v4705
        %v4716 = vsel %vm4709, %v4712, %v4715
        %v4717 = vsel %vm4706, nan, %v4716
        %v4718 = vand.u32 2147483647, %v308
        %vm4719 = vcmp.le.f32.partialorder %v4718, 0.7853982
        %vm4720 = vcmp.lt.s32.totalorder %v308, 0
        %v4721 = vand.u32 %v308, 2139095040
        %v4722 = vshrl.u32 %v4721, 23
        %v4723 = vsub.s32 %v4722, 127
        %v4724 = vand.u32 2147483647, %v308
        %v4725 = vand.u32 %v4724, 8388607
        %v4726 = vor.u32 %v4725, 8388608
        %v4727 = vsub.s32 0, %v4726
        %v4728 = vadd.s32 %v4723, 1
        %vm4729 = vcmp.gt.s32.totalorder %v4728, 0
        %v4730 = vsel %vm4729, %v4728, 0
        %v4731 = vshrl.u32 %v4730, 5
        %v4732 = vand.u32 %v4730, 31
        %v4733 = vsub.s32 32, %v4732
        %v4734 = vshrl.u32 683565275, %v4733
        %v4735 = vshll.u32 683565275, %v4732
        %v4736 = vshrl.u32 2475754826, %v4733
        %v4737 = vor.u32 %v4735, %v4736
        %v4738 = vshll.u32 2475754826, %v4732
        %v4739 = vshrl.u32 2131351028, %v4733
        %v4740 = vor.u32 %v4738, %v4739
        %v4741 = vshll.u32 2131351028, %v4732
        %v4742 = vshrl.u32 2102212464, %v4733
        %v4743 = vor.u32 %v4741, %v4742
        %v4744 = vshll.u32 2102212464, %v4732
        %v4745 = vshrl.u32 920167782, %v4733
        %v4746 = vor.u32 %v4744, %v4745
        %v4747 = vshll.u32 920167782, %v4732
        %v4748 = vshrl.u32 1326507024, %v4733
        %v4749 = vor.u32 %v4747, %v4748
        %vm4750 = vcmp.lt.s32.totalorder %v4731, 1
        %vm4751 = vcmp.lt.s32.totalorder %v4731, 2
        %vm4752 = vcmp.lt.s32.totalorder %v4731, 3
        %vm4753 = vcmp.lt.s32.totalorder %v4731, 4
        %v4754 = vsel %vm4750, %v4734, %v4737
        %v4755 = vsel %vm4753, %v4743, 2102212464
        %v4756 = vsel %vm4752, %v4740, %v4755
        %v4757 = vsel %vm4751, %v4754, %v4756
        %v4758 = vsel %vm4750, %v4737, %v4740
        %v4759 = vsel %vm4753, %v4746, 920167782
        %v4760 = vsel %vm4752, %v4743, %v4759
        %v4761 = vsel %vm4751, %v4758, %v4760
        %v4762 = vsel %vm4750, %v4740, %v4743
        %v4763 = vsel %vm4753, %v4749, 1326507024
        %v4764 = vsel %vm4752, %v4746, %v4763
        %v4765 = vsel %vm4751, %v4762, %v4764
        %v4766 = vshll.u32 %v4726, 8
        %v4767 = vand.u32 %v4766, 65535
        %v4768 = vshrl.u32 %v4766, 16
        %v4769 = vand.u32 %v4765, 65535
        %v4770 = vshrl.u32 %v4765, 16
        %v4771 = vmul.u32 %v4767, %v4769
        %v4772 = vmul.u32 %v4767, %v4770
        %v4773 = vmul.u32 %v4768, %v4769
        %v4774 = vmul.u32 %v4768, %v4770
        %v4775 = vshll.u32 %v4772, 16
        %v4776 = vshrl.u32 %v4772, 16
        %v4777 = vshll.u32 %v4773, 16
        %v4778 = vshrl.u32 %v4773, 16
        %vm4779 = vc.u32 %v4771, %v4775
        %v4780 = vsel %vm4779, 1, 0
        %v4781 = vadd.s32 %v4771, %v4775
        %v4782 = vadd.s32 %v4774, %v4780
        %vm4783 = vc.u32 %v4781, %v4777
        %v4784 = vsel %vm4783, 1, 0
        %v4785 = vadd.s32 %v4781, %v4777
        %v4786 = vadd.s32 %v4782, %v4784
        %v4787 = vadd.s32 %v4786, %v4776
        %v4788 = vadd.s32 %v4787, %v4778
        %v4789 = vand.u32 %v4766, 65535
        %v4790 = vshrl.u32 %v4766, 16
        %v4791 = vand.u32 %v4761, 65535
        %v4792 = vshrl.u32 %v4761, 16
        %v4793 = vmul.u32 %v4789, %v4791
        %v4794 = vmul.u32 %v4789, %v4792
        %v4795 = vmul.u32 %v4790, %v4791
        %v4796 = vmul.u32 %v4790, %v4792
        %v4797 = vshll.u32 %v4794, 16
        %v4798 = vshrl.u32 %v4794, 16
        %v4799 = vshll.u32 %v4795, 16
        %v4800 = vshrl.u32 %v4795, 16
        %vm4801 = vc.u32 %v4793, %v4797
        %v4802 = vsel %vm4801, 1, 0
        %v4803 = vadd.s32 %v4793, %v4797
        %v4804 = vadd.s32 %v4796, %v4802
        %vm4805 = vc.u32 %v4803, %v4799
        %v4806 = vsel %vm4805, 1, 0
        %v4807 = vadd.s32 %v4803, %v4799
        %v4808 = vadd.s32 %v4804, %v4806
        %v4809 = vadd.s32 %v4808, %v4798
        %v4810 = vadd.s32 %v4809, %v4800
        %v4811 = vmul.u32 %v4766, %v4757
        %v4812 = vadd.s32 %v4788, %v4807
        %vm4813 = vc.u32 %v4788, %v4807
        %v4814 = vadd.s32 %v4810, 1
        %v4815 = vsel %vm4813, %v4814, %v4810
        %v4816 = vadd.s32 %v4811, %v4815
        %v4817 = vadd.s32 %v4816, 536870912
        %v4818 = vshrl.u32 %v4817, 30
        %v4819 = vshll.u32 %v4818, 30
        %v4820 = vsub.s32 %v4816, %v4819
        %vm4821 = vcmp.lt.s32.totalorder %v4820, 0
        %v4822 = vsub.s32 0, %v4820
        %v4823 = vsel %vm4821, %v4822, %v4820
        %v4824 = vclz %v4823
        %v4825 = vsub.s32 %v4824, 2
        %vm4826 = vcmp.gt.s32.totalorder 0, %v4825
        %v4827 = vsel %vm4826, 0, %v4825
        %v4828 = vsub.s32 32, %v4827
        %v4829 = vshll.u32 %v4820, %v4827
        %v4830 = vshrl.u32 %v4812, %v4828
        %v4831 = vor.u32 %v4829, %v4830
        %v4832 = vsub.s32 4294967266, %v4827
        %v4833 = vadd.s32 %v4832, 127
        %v4834 = vshll.u32 %v4833, 23
        %v4835 = vor.u32 4788187, %v4834
        %v4836 = vand.u32 2147483647, %v4835
        %v4838 = vcvt.s32.f32 %v4831
        %v4839 = vmul.f32 %v4838, %v4836
        %v4840 = vxor.u32 %v4839, 2147483648
        %v4841 = vsel %vm4720, %v4840, %v4839
        %v4842 = vsub.s32 4, %v4818
        %v4843 = vsel %vm4720, %v4842, %v4818
        %v4844 = vsel %vm4719, %v308, %v4841
        %v4845 = vsel %vm4719, 0, %v4843
        %v4846 = vmul.f32 %v4844, %v4844
        %v4847 = vmul.f32 %v4846, -0.001358992
        %v4848 = vadd.f32 %v4847, 0.041655596
        %v4849 = vmul.f32 %v4846, %v4848
        %v4850 = vadd.f32 %v4849, -0.4999988
        %v4851 = vmul.f32 %v4846, %v4850
        %v4852 = vadd.f32 1.0, %v4851
        %v4853 = vmul.f32 %v4844, %v4844
        %v4854 = vmul.f32 %v4853, -0.00019511016
        %v4855 = vadd.f32 %v4854, 0.008332121
        %v4856 = vmul.f32 %v4853, %v4855
        %v4857 = vadd.f32 %v4856, -0.16666654
        %v4858 = vmul.f32 %v4853, %v4857
        %v4859 = vadd.f32 %v4858, 1.0
        %v4860 = vmul.f32 %v4859, %v4844
        %vm4861 = vweird.f32 %v308
        %v4862 = vadd.s32 %v4845, 3
        %v4863 = vand.u32 %v4862, 3
        %vm4864 = vcmp.lt.s32.totalorder %v4863, 2
        %vm4865 = vcmp.eq.s32.totalorder %v4863, 0
        %v4866 = vxor.u32 %v4860, 2147483648
        %v4867 = vsel %vm4865, %v4852, %v4866
        %vm4868 = vcmp.eq.s32.totalorder %v4863, 2
        %v4869 = vxor.u32 %v4852, 2147483648
        %v4870 = vsel %vm4868, %v4869, %v4860
        %v4871 = vsel %vm4864, %v4867, %v4870
        %v4872 = vsel %vm4861, nan, %v4871
        %v4873 = vand.u32 2147483647, %v373
        %vm4874 = vcmp.le.f32.partialorder %v4873, 0.7853982
        %vm4875 = vcmp.lt.s32.totalorder %v373, 0
        %v4876 = vand.u32 %v373, 2139095040
        %v4877 = vshrl.u32 %v4876, 23
        %v4878 = vsub.s32 %v4877, 127
        %v4879 = vand.u32 2147483647, %v373
        %v4880 = vand.u32 %v4879, 8388607
        %v4881 = vor.u32 %v4880, 8388608
        %v4882 = vsub.s32 0, %v4881
        %v4883 = vadd.s32 %v4878, 1
        %vm4884 = vcmp.gt.s32.totalorder %v4883, 0
        %v4885 = vsel %vm4884, %v4883, 0
        %v4886 = vshrl.u32 %v4885, 5
        %v4887 = vand.u32 %v4885, 31
        %v4888 = vsub.s32 32, %v4887
        %v4889 = vshrl.u32 683565275, %v4888
        %v4890 = vshll.u32 683565275, %v4887
        %v4891 = vshrl.u32 2475754826, %v4888
        %v4892 = vor.u32 %v4890, %v4891
        %v4893 = vshll.u32 2475754826, %v4887
        %v4894 = vshrl.u32 2131351028, %v4888
        %v4895 = vor.u32 %v4893, %v4894
        %v4896 = vshll.u32 2131351028, %v4887
        %v4897 = vshrl.u32 2102212464, %v4888
        %v4898 = vor.u32 %v4896, %v4897
        %v4899 = vshll.u32 2102212464, %v4887
        %v4900 = vshrl.u32 920167782, %v4888
        %v4901 = vor.u32 %v4899, %v4900
        %v4902 = vshll.u32 920167782, %v4887
        %v4903 = vshrl.u32 1326507024, %v4888
        %v4904 = vor.u32 %v4902, %v4903
        %vm4905 = vcmp.lt.s32.totalorder %v4886, 1
        %vm4906 = vcmp.lt.s32.totalorder %v4886, 2
        %vm4907 = vcmp.lt.s32.totalorder %v4886, 3
        %vm4908 = vcmp.lt.s32.totalorder %v4886, 4
        %v4909 = vsel %vm4905, %v4889, %v4892
        %v4910 = vsel %vm4908, %v4898, 2102212464
        %v4911 = vsel %vm4907, %v4895, %v4910
        %v4912 = vsel %vm4906, %v4909, %v4911
        %v4913 = vsel %vm4905, %v4892, %v4895
        %v4914 = vsel %vm4908, %v4901, 920167782
        %v4915 = vsel %vm4907, %v4898, %v4914
        %v4916 = vsel %vm4906, %v4913, %v4915
        %v4917 = vsel %vm4905, %v4895, %v4898
        %v4918 = vsel %vm4908, %v4904, 1326507024
        %v4919 = vsel %vm4907, %v4901, %v4918
        %v4920 = vsel %vm4906, %v4917, %v4919
        %v4921 = vshll.u32 %v4881, 8
        %v4922 = vand.u32 %v4921, 65535
        %v4923 = vshrl.u32 %v4921, 16
        %v4924 = vand.u32 %v4920, 65535
        %v4925 = vshrl.u32 %v4920, 16
        %v4926 = vmul.u32 %v4922, %v4924
        %v4927 = vmul.u32 %v4922, %v4925
        %v4928 = vmul.u32 %v4923, %v4924
        %v4929 = vmul.u32 %v4923, %v4925
        %v4930 = vshll.u32 %v4927, 16
        %v4931 = vshrl.u32 %v4927, 16
        %v4932 = vshll.u32 %v4928, 16
        %v4933 = vshrl.u32 %v4928, 16
        %vm4934 = vc.u32 %v4926, %v4930
        %v4935 = vsel %vm4934, 1, 0
        %v4936 = vadd.s32 %v4926, %v4930
        %v4937 = vadd.s32 %v4929, %v4935
        %vm4938 = vc.u32 %v4936, %v4932
        %v4939 = vsel %vm4938, 1, 0
        %v4940 = vadd.s32 %v4936, %v4932
        %v4941 = vadd.s32 %v4937, %v4939
        %v4942 = vadd.s32 %v4941, %v4931
        %v4943 = vadd.s32 %v4942, %v4933
        %v4944 = vand.u32 %v4921, 65535
        %v4945 = vshrl.u32 %v4921, 16
        %v4946 = vand.u32 %v4916, 65535
        %v4947 = vshrl.u32 %v4916, 16
        %v4948 = vmul.u32 %v4944, %v4946
        %v4949 = vmul.u32 %v4944, %v4947
        %v4950 = vmul.u32 %v4945, %v4946
        %v4951 = vmul.u32 %v4945, %v4947
        %v4952 = vshll.u32 %v4949, 16
        %v4953 = vshrl.u32 %v4949, 16
        %v4954 = vshll.u32 %v4950, 16
        %v4955 = vshrl.u32 %v4950, 16
        %vm4956 = vc.u32 %v4948, %v4952
        %v4957 = vsel %vm4956, 1, 0
        %v4958 = vadd.s32 %v4948, %v4952
        %v4959 = vadd.s32 %v4951, %v4957
        %vm4960 = vc.u32 %v4958, %v4954
        %v4961 = vsel %vm4960, 1, 0
        %v4962 = vadd.s32 %v4958, %v4954
        %v4963 = vadd.s32 %v4959, %v4961
        %v4964 = vadd.s32 %v4963, %v4953
        %v4965 = vadd.s32 %v4964, %v4955
        %v4966 = vmul.u32 %v4921, %v4912
        %v4967 = vadd.s32 %v4943, %v4962
        %vm4968 = vc.u32 %v4943, %v4962
        %v4969 = vadd.s32 %v4965, 1
        %v4970 = vsel %vm4968, %v4969, %v4965
        %v4971 = vadd.s32 %v4966, %v4970
        %v4972 = vadd.s32 %v4971, 536870912
        %v4973 = vshrl.u32 %v4972, 30
        %v4974 = vshll.u32 %v4973, 30
        %v4975 = vsub.s32 %v4971, %v4974
        %vm4976 = vcmp.lt.s32.totalorder %v4975, 0
        %v4977 = vsub.s32 0, %v4975
        %v4978 = vsel %vm4976, %v4977, %v4975
        %v4979 = vclz %v4978
        %v4980 = vsub.s32 %v4979, 2
        %vm4981 = vcmp.gt.s32.totalorder 0, %v4980
        %v4982 = vsel %vm4981, 0, %v4980
        %v4983 = vsub.s32 32, %v4982
        %v4984 = vshll.u32 %v4975, %v4982
        %v4985 = vshrl.u32 %v4967, %v4983
        %v4986 = vor.u32 %v4984, %v4985
        %v4987 = vsub.s32 4294967266, %v4982
        %v4988 = vadd.s32 %v4987, 127
        %v4989 = vshll.u32 %v4988, 23
        %v4990 = vor.u32 4788187, %v4989
        %v4991 = vand.u32 2147483647, %v4990
        %v4993 = vcvt.s32.f32 %v4986
        %v4994 = vmul.f32 %v4993, %v4991
        %v4995 = vxor.u32 %v4994, 2147483648
        %v4996 = vsel %vm4875, %v4995, %v4994
        %v4997 = vsub.s32 4, %v4973
        %v4998 = vsel %vm4875, %v4997, %v4973
        %v4999 = vsel %vm4874, %v373, %v4996
        %v5000 = vsel %vm4874, 0, %v4998
        %v5001 = vmul.f32 %v4999, %v4999
        %v5002 = vmul.f32 %v5001, -0.001358992
        %v5003 = vadd.f32 %v5002, 0.041655596
        %v5004 = vmul.f32 %v5001, %v5003
        %v5005 = vadd.f32 %v5004, -0.4999988
        %v5006 = vmul.f32 %v5001, %v5005
        %v5007 = vadd.f32 1.0, %v5006
        %v5008 = vmul.f32 %v4999, %v4999
        %v5009 = vmul.f32 %v5008, -0.00019511016
        %v5010 = vadd.f32 %v5009, 0.008332121
        %v5011 = vmul.f32 %v5008, %v5010
        %v5012 = vadd.f32 %v5011, -0.16666654
        %v5013 = vmul.f32 %v5008, %v5012
        %v5014 = vadd.f32 %v5013, 1.0
        %v5015 = vmul.f32 %v5014, %v4999
        %vm5016 = vweird.f32 %v373
        %v5017 = vadd.s32 %v5000, 3
        %v5018 = vand.u32 %v5017, 3
        %vm5019 = vcmp.lt.s32.totalorder %v5018, 2
        %vm5020 = vcmp.eq.s32.totalorder %v5018, 0
        %v5021 = vxor.u32 %v5015, 2147483648
        %v5022 = vsel %vm5020, %v5007, %v5021
        %vm5023 = vcmp.eq.s32.totalorder %v5018, 2
        %v5024 = vxor.u32 %v5007, 2147483648
        %v5025 = vsel %vm5023, %v5024, %v5015
        %v5026 = vsel %vm5019, %v5022, %v5025
        %v5027 = vsel %vm5016, nan, %v5026
        %v5028 = vand.u32 2147483647, %v311
        %vm5029 = vcmp.le.f32.partialorder %v5028, 0.7853982
        %vm5030 = vcmp.lt.s32.totalorder %v311, 0
        %v5031 = vand.u32 %v311, 2139095040
        %v5032 = vshrl.u32 %v5031, 23
        %v5033 = vsub.s32 %v5032, 127
        %v5034 = vand.u32 2147483647, %v311
        %v5035 = vand.u32 %v5034, 8388607
        %v5036 = vor.u32 %v5035, 8388608
        %v5037 = vsub.s32 0, %v5036
        %v5038 = vadd.s32 %v5033, 1
        %vm5039 = vcmp.gt.s32.totalorder %v5038, 0
        %v5040 = vsel %vm5039, %v5038, 0
        %v5041 = vshrl.u32 %v5040, 5
        %v5042 = vand.u32 %v5040, 31
        %v5043 = vsub.s32 32, %v5042
        %v5044 = vshrl.u32 683565275, %v5043
        %v5045 = vshll.u32 683565275, %v5042
        %v5046 = vshrl.u32 2475754826, %v5043
        %v5047 = vor.u32 %v5045, %v5046
        %v5048 = vshll.u32 2475754826, %v5042
        %v5049 = vshrl.u32 2131351028, %v5043
        %v5050 = vor.u32 %v5048, %v5049
        %v5051 = vshll.u32 2131351028, %v5042
        %v5052 = vshrl.u32 2102212464, %v5043
        %v5053 = vor.u32 %v5051, %v5052
        %v5054 = vshll.u32 2102212464, %v5042
        %v5055 = vshrl.u32 920167782, %v5043
        %v5056 = vor.u32 %v5054, %v5055
        %v5057 = vshll.u32 920167782, %v5042
        %v5058 = vshrl.u32 1326507024, %v5043
        %v5059 = vor.u32 %v5057, %v5058
        %vm5060 = vcmp.lt.s32.totalorder %v5041, 1
        %vm5061 = vcmp.lt.s32.totalorder %v5041, 2
        %vm5062 = vcmp.lt.s32.totalorder %v5041, 3
        %vm5063 = vcmp.lt.s32.totalorder %v5041, 4
        %v5064 = vsel %vm5060, %v5044, %v5047
        %v5065 = vsel %vm5063, %v5053, 2102212464
        %v5066 = vsel %vm5062, %v5050, %v5065
        %v5067 = vsel %vm5061, %v5064, %v5066
        %v5068 = vsel %vm5060, %v5047, %v5050
        %v5069 = vsel %vm5063, %v5056, 920167782
        %v5070 = vsel %vm5062, %v5053, %v5069
        %v5071 = vsel %vm5061, %v5068, %v5070
        %v5072 = vsel %vm5060, %v5050, %v5053
        %v5073 = vsel %vm5063, %v5059, 1326507024
        %v5074 = vsel %vm5062, %v5056, %v5073
        %v5075 = vsel %vm5061, %v5072, %v5074
        %v5076 = vshll.u32 %v5036, 8
        %v5077 = vand.u32 %v5076, 65535
        %v5078 = vshrl.u32 %v5076, 16
        %v5079 = vand.u32 %v5075, 65535
        %v5080 = vshrl.u32 %v5075, 16
        %v5081 = vmul.u32 %v5077, %v5079
        %v5082 = vmul.u32 %v5077, %v5080
        %v5083 = vmul.u32 %v5078, %v5079
        %v5084 = vmul.u32 %v5078, %v5080
        %v5085 = vshll.u32 %v5082, 16
        %v5086 = vshrl.u32 %v5082, 16
        %v5087 = vshll.u32 %v5083, 16
        %v5088 = vshrl.u32 %v5083, 16
        %vm5089 = vc.u32 %v5081, %v5085
        %v5090 = vsel %vm5089, 1, 0
        %v5091 = vadd.s32 %v5081, %v5085
        %v5092 = vadd.s32 %v5084, %v5090
        %vm5093 = vc.u32 %v5091, %v5087
        %v5094 = vsel %vm5093, 1, 0
        %v5095 = vadd.s32 %v5091, %v5087
        %v5096 = vadd.s32 %v5092, %v5094
        %v5097 = vadd.s32 %v5096, %v5086
        %v5098 = vadd.s32 %v5097, %v5088
        %v5099 = vand.u32 %v5076, 65535
        %v5100 = vshrl.u32 %v5076, 16
        %v5101 = vand.u32 %v5071, 65535
        %v5102 = vshrl.u32 %v5071, 16
        %v5103 = vmul.u32 %v5099, %v5101
        %v5104 = vmul.u32 %v5099, %v5102
        %v5105 = vmul.u32 %v5100, %v5101
        %v5106 = vmul.u32 %v5100, %v5102
        %v5107 = vshll.u32 %v5104, 16
        %v5108 = vshrl.u32 %v5104, 16
        %v5109 = vshll.u32 %v5105, 16
        %v5110 = vshrl.u32 %v5105, 16
        %vm5111 = vc.u32 %v5103, %v5107
        %v5112 = vsel %vm5111, 1, 0
        %v5113 = vadd.s32 %v5103, %v5107
        %v5114 = vadd.s32 %v5106, %v5112
        %vm5115 = vc.u32 %v5113, %v5109
        %v5116 = vsel %vm5115, 1, 0
        %v5117 = vadd.s32 %v5113, %v5109
        %v5118 = vadd.s32 %v5114, %v5116
        %v5119 = vadd.s32 %v5118, %v5108
        %v5120 = vadd.s32 %v5119, %v5110
        %v5121 = vmul.u32 %v5076, %v5067
        %v5122 = vadd.s32 %v5098, %v5117
        %vm5123 = vc.u32 %v5098, %v5117
        %v5124 = vadd.s32 %v5120, 1
        %v5125 = vsel %vm5123, %v5124, %v5120
        %v5126 = vadd.s32 %v5121, %v5125
        %v5127 = vadd.s32 %v5126, 536870912
        %v5128 = vshrl.u32 %v5127, 30
        %v5129 = vshll.u32 %v5128, 30
        %v5130 = vsub.s32 %v5126, %v5129
        %vm5131 = vcmp.lt.s32.totalorder %v5130, 0
        %v5132 = vsub.s32 0, %v5130
        %v5133 = vsel %vm5131, %v5132, %v5130
        %v5134 = vclz %v5133
        %v5135 = vsub.s32 %v5134, 2
        %vm5136 = vcmp.gt.s32.totalorder 0, %v5135
        %v5137 = vsel %vm5136, 0, %v5135
        %v5138 = vsub.s32 32, %v5137
        %v5139 = vshll.u32 %v5130, %v5137
        %v5140 = vshrl.u32 %v5122, %v5138
        %v5141 = vor.u32 %v5139, %v5140
        %v5142 = vsub.s32 4294967266, %v5137
        %v5143 = vadd.s32 %v5142, 127
        %v5144 = vshll.u32 %v5143, 23
        %v5145 = vor.u32 4788187, %v5144
        %v5146 = vand.u32 2147483647, %v5145
        %v5148 = vcvt.s32.f32 %v5141
        %v5149 = vmul.f32 %v5148, %v5146
        %v5150 = vxor.u32 %v5149, 2147483648
        %v5151 = vsel %vm5030, %v5150, %v5149
        %v5152 = vsub.s32 4, %v5128
        %v5153 = vsel %vm5030, %v5152, %v5128
        %v5154 = vsel %vm5029, %v311, %v5151
        %v5155 = vsel %vm5029, 0, %v5153
        %v5156 = vmul.f32 %v5154, %v5154
        %v5157 = vmul.f32 %v5156, -0.001358992
        %v5158 = vadd.f32 %v5157, 0.041655596
        %v5159 = vmul.f32 %v5156, %v5158
        %v5160 = vadd.f32 %v5159, -0.4999988
        %v5161 = vmul.f32 %v5156, %v5160
        %v5162 = vadd.f32 1.0, %v5161
        %v5163 = vmul.f32 %v5154, %v5154
        %v5164 = vmul.f32 %v5163, -0.00019511016
        %v5165 = vadd.f32 %v5164, 0.008332121
        %v5166 = vmul.f32 %v5163, %v5165
        %v5167 = vadd.f32 %v5166, -0.16666654
        %v5168 = vmul.f32 %v5163, %v5167
        %v5169 = vadd.f32 %v5168, 1.0
        %v5170 = vmul.f32 %v5169, %v5154
        %vm5171 = vweird.f32 %v311
        %v5172 = vadd.s32 %v5155, 3
        %v5173 = vand.u32 %v5172, 3
        %vm5174 = vcmp.lt.s32.totalorder %v5173, 2
        %vm5175 = vcmp.eq.s32.totalorder %v5173, 0
        %v5176 = vxor.u32 %v5170, 2147483648
        %v5177 = vsel %vm5175, %v5162, %v5176
        %vm5178 = vcmp.eq.s32.totalorder %v5173, 2
        %v5179 = vxor.u32 %v5162, 2147483648
        %v5180 = vsel %vm5178, %v5179, %v5170
        %v5181 = vsel %vm5174, %v5177, %v5180
        %v5182 = vsel %vm5171, nan, %v5181
        %v5183 = vand.u32 2147483647, %v376
        %vm5184 = vcmp.le.f32.partialorder %v5183, 0.7853982
        %vm5185 = vcmp.lt.s32.totalorder %v376, 0
        %v5186 = vand.u32 %v376, 2139095040
        %v5187 = vshrl.u32 %v5186, 23
        %v5188 = vsub.s32 %v5187, 127
        %v5189 = vand.u32 2147483647, %v376
        %v5190 = vand.u32 %v5189, 8388607
        %v5191 = vor.u32 %v5190, 8388608
        %v5192 = vsub.s32 0, %v5191
        %v5193 = vadd.s32 %v5188, 1
        %vm5194 = vcmp.gt.s32.totalorder %v5193, 0
        %v5195 = vsel %vm5194, %v5193, 0
        %v5196 = vshrl.u32 %v5195, 5
        %v5197 = vand.u32 %v5195, 31
        %v5198 = vsub.s32 32, %v5197
        %v5199 = vshrl.u32 683565275, %v5198
        %v5200 = vshll.u32 683565275, %v5197
        %v5201 = vshrl.u32 2475754826, %v5198
        %v5202 = vor.u32 %v5200, %v5201
        %v5203 = vshll.u32 2475754826, %v5197
        %v5204 = vshrl.u32 2131351028, %v5198
        %v5205 = vor.u32 %v5203, %v5204
        %v5206 = vshll.u32 2131351028, %v5197
        %v5207 = vshrl.u32 2102212464, %v5198
        %v5208 = vor.u32 %v5206, %v5207
        %v5209 = vshll.u32 2102212464, %v5197
        %v5210 = vshrl.u32 920167782, %v5198
        %v5211 = vor.u32 %v5209, %v5210
        %v5212 = vshll.u32 920167782, %v5197
        %v5213 = vshrl.u32 1326507024, %v5198
        %v5214 = vor.u32 %v5212, %v5213
        %vm5215 = vcmp.lt.s32.totalorder %v5196, 1
        %vm5216 = vcmp.lt.s32.totalorder %v5196, 2
        %vm5217 = vcmp.lt.s32.totalorder %v5196, 3
        %vm5218 = vcmp.lt.s32.totalorder %v5196, 4
        %v5219 = vsel %vm5215, %v5199, %v5202
        %v5220 = vsel %vm5218, %v5208, 2102212464
        %v5221 = vsel %vm5217, %v5205, %v5220
        %v5222 = vsel %vm5216, %v5219, %v5221
        %v5223 = vsel %vm5215, %v5202, %v5205
        %v5224 = vsel %vm5218, %v5211, 920167782
        %v5225 = vsel %vm5217, %v5208, %v5224
        %v5226 = vsel %vm5216, %v5223, %v5225
        %v5227 = vsel %vm5215, %v5205, %v5208
        %v5228 = vsel %vm5218, %v5214, 1326507024
        %v5229 = vsel %vm5217, %v5211, %v5228
        %v5230 = vsel %vm5216, %v5227, %v5229
        %v5231 = vshll.u32 %v5191, 8
        %v5232 = vand.u32 %v5231, 65535
        %v5233 = vshrl.u32 %v5231, 16
        %v5234 = vand.u32 %v5230, 65535
        %v5235 = vshrl.u32 %v5230, 16
        %v5236 = vmul.u32 %v5232, %v5234
        %v5237 = vmul.u32 %v5232, %v5235
        %v5238 = vmul.u32 %v5233, %v5234
        %v5239 = vmul.u32 %v5233, %v5235
        %v5240 = vshll.u32 %v5237, 16
        %v5241 = vshrl.u32 %v5237, 16
        %v5242 = vshll.u32 %v5238, 16
        %v5243 = vshrl.u32 %v5238, 16
        %vm5244 = vc.u32 %v5236, %v5240
        %v5245 = vsel %vm5244, 1, 0
        %v5246 = vadd.s32 %v5236, %v5240
        %v5247 = vadd.s32 %v5239, %v5245
        %vm5248 = vc.u32 %v5246, %v5242
        %v5249 = vsel %vm5248, 1, 0
        %v5250 = vadd.s32 %v5246, %v5242
        %v5251 = vadd.s32 %v5247, %v5249
        %v5252 = vadd.s32 %v5251, %v5241
        %v5253 = vadd.s32 %v5252, %v5243
        %v5254 = vand.u32 %v5231, 65535
        %v5255 = vshrl.u32 %v5231, 16
        %v5256 = vand.u32 %v5226, 65535
        %v5257 = vshrl.u32 %v5226, 16
        %v5258 = vmul.u32 %v5254, %v5256
        %v5259 = vmul.u32 %v5254, %v5257
        %v5260 = vmul.u32 %v5255, %v5256
        %v5261 = vmul.u32 %v5255, %v5257
        %v5262 = vshll.u32 %v5259, 16
        %v5263 = vshrl.u32 %v5259, 16
        %v5264 = vshll.u32 %v5260, 16
        %v5265 = vshrl.u32 %v5260, 16
        %vm5266 = vc.u32 %v5258, %v5262
        %v5267 = vsel %vm5266, 1, 0
        %v5268 = vadd.s32 %v5258, %v5262
        %v5269 = vadd.s32 %v5261, %v5267
        %vm5270 = vc.u32 %v5268, %v5264
        %v5271 = vsel %vm5270, 1, 0
        %v5272 = vadd.s32 %v5268, %v5264
        %v5273 = vadd.s32 %v5269, %v5271
        %v5274 = vadd.s32 %v5273, %v5263
        %v5275 = vadd.s32 %v5274, %v5265
        %v5276 = vmul.u32 %v5231, %v5222
        %v5277 = vadd.s32 %v5253, %v5272
        %vm5278 = vc.u32 %v5253, %v5272
        %v5279 = vadd.s32 %v5275, 1
        %v5280 = vsel %vm5278, %v5279, %v5275
        %v5281 = vadd.s32 %v5276, %v5280
        %v5282 = vadd.s32 %v5281, 536870912
        %v5283 = vshrl.u32 %v5282, 30
        %v5284 = vshll.u32 %v5283, 30
        %v5285 = vsub.s32 %v5281, %v5284
        %vm5286 = vcmp.lt.s32.totalorder %v5285, 0
        %v5287 = vsub.s32 0, %v5285
        %v5288 = vsel %vm5286, %v5287, %v5285
        %v5289 = vclz %v5288
        %v5290 = vsub.s32 %v5289, 2
        %vm5291 = vcmp.gt.s32.totalorder 0, %v5290
        %v5292 = vsel %vm5291, 0, %v5290
        %v5293 = vsub.s32 32, %v5292
        %v5294 = vshll.u32 %v5285, %v5292
        %v5295 = vshrl.u32 %v5277, %v5293
        %v5296 = vor.u32 %v5294, %v5295
        %v5297 = vsub.s32 4294967266, %v5292
        %v5298 = vadd.s32 %v5297, 127
        %v5299 = vshll.u32 %v5298, 23
        %v5300 = vor.u32 4788187, %v5299
        %v5301 = vand.u32 2147483647, %v5300
        %v5303 = vcvt.s32.f32 %v5296
        %v5304 = vmul.f32 %v5303, %v5301
        %v5305 = vxor.u32 %v5304, 2147483648
        %v5306 = vsel %vm5185, %v5305, %v5304
        %v5307 = vsub.s32 4, %v5283
        %v5308 = vsel %vm5185, %v5307, %v5283
        %v5309 = vsel %vm5184, %v376, %v5306
        %v5310 = vsel %vm5184, 0, %v5308
        %v5311 = vmul.f32 %v5309, %v5309
        %v5312 = vmul.f32 %v5311, -0.001358992
        %v5313 = vadd.f32 %v5312, 0.041655596
        %v5314 = vmul.f32 %v5311, %v5313
        %v5315 = vadd.f32 %v5314, -0.4999988
        %v5316 = vmul.f32 %v5311, %v5315
        %v5317 = vadd.f32 1.0, %v5316
        %v5318 = vmul.f32 %v5309, %v5309
        %v5319 = vmul.f32 %v5318, -0.00019511016
        %v5320 = vadd.f32 %v5319, 0.008332121
        %v5321 = vmul.f32 %v5318, %v5320
        %v5322 = vadd.f32 %v5321, -0.16666654
        %v5323 = vmul.f32 %v5318, %v5322
        %v5324 = vadd.f32 %v5323, 1.0
        %v5325 = vmul.f32 %v5324, %v5309
        %vm5326 = vweird.f32 %v376
        %v5327 = vadd.s32 %v5310, 3
        %v5328 = vand.u32 %v5327, 3
        %vm5329 = vcmp.lt.s32.totalorder %v5328, 2
        %vm5330 = vcmp.eq.s32.totalorder %v5328, 0
        %v5331 = vxor.u32 %v5325, 2147483648
        %v5332 = vsel %vm5330, %v5317, %v5331
        %vm5333 = vcmp.eq.s32.totalorder %v5328, 2
        %v5334 = vxor.u32 %v5317, 2147483648
        %v5335 = vsel %vm5333, %v5334, %v5325
        %v5336 = vsel %vm5329, %v5332, %v5335
        %v5337 = vsel %vm5326, nan, %v5336
        %5338 = vst [vmem:[%s161] sm:$0xff] %v532
        %5339 = vst [vmem:[%s161 + $0x8] sm:$0xff] %v687
        %5340 = vst [vmem:[%s161 + $0x10] sm:$0xff] %v842
        %5341 = vst [vmem:[%s161 + $0x18] sm:$0xff] %v997
        %5342 = vst [vmem:[%s161 + $0x20] sm:$0xff] %v1152
        %5343 = vst [vmem:[%s161 + $0x28] sm:$0xff] %v1307
        %5344 = vst [vmem:[%s161 + $0x30] sm:$0xff] %v1462
        %5345 = vst [vmem:[%s161 + $0x38] sm:$0xff] %v1617
        %5346 = vst [vmem:[%s161 + $0x40] sm:$0xff] %v1772
        %5347 = vst [vmem:[%s161 + $0x48] sm:$0xff] %v1927
        %5348 = vst [vmem:[%s161 + $0x50] sm:$0xff] %v2082
        %5349 = vst [vmem:[%s161 + $0x58] sm:$0xff] %v2237
        %5350 = vst [vmem:[%s161 + $0x60] sm:$0xff] %v2392
        %5351 = vst [vmem:[%s161 + $0x68] sm:$0xff] %v2547
        %5352 = vst [vmem:[%s161 + $0x70] sm:$0xff] %v2702
        %5353 = vst [vmem:[%s161 + $0x78] sm:$0xff] %v2857
        %5354 = vst [vmem:[%s161 + $0x80] sm:$0xff] %v3012
        %5355 = vst [vmem:[%s161 + $0x88] sm:$0xff] %v3167
        %5356 = vst [vmem:[%s161 + $0x90] sm:$0xff] %v3322
        %5357 = vst [vmem:[%s161 + $0x98] sm:$0xff] %v3477
        %5358 = vst [vmem:[%s161 + $0xa0] sm:$0xff] %v3632
        %5359 = vst [vmem:[%s161 + $0xa8] sm:$0xff] %v3787
        %5360 = vst [vmem:[%s161 + $0xb0] sm:$0xff] %v3942
        %5361 = vst [vmem:[%s161 + $0xb8] sm:$0xff] %v4097
        %5362 = vst [vmem:[%s161 + $0xc0] sm:$0xff] %v4252
        %5363 = vst [vmem:[%s161 + $0xc8] sm:$0xff] %v4407
        %5364 = vst [vmem:[%s161 + $0xd0] sm:$0xff] %v4562
        %5365 = vst [vmem:[%s161 + $0xd8] sm:$0xff] %v4717
        %5366 = vst [vmem:[%s161 + $0xe0] sm:$0xff] %v4872
        %5367 = vst [vmem:[%s161 + $0xe8] sm:$0xff] %v5027
        %5368 = vst [vmem:[%s161 + $0xf0] sm:$0xff] %v5182
        %5369 = vst [vmem:[%s161 + $0xf8] sm:$0xff] %v5337
        %v5370 = vand.u32 2147483647, %v266
        %vm5371 = vcmp.le.f32.partialorder %v5370, 0.7853982
        %vm5372 = vcmp.lt.s32.totalorder %v266, 0
        %v5373 = vand.u32 %v266, 2139095040
        %v5374 = vshrl.u32 %v5373, 23
        %v5375 = vsub.s32 %v5374, 127
        %v5376 = vand.u32 2147483647, %v266
        %v5377 = vand.u32 %v5376, 8388607
        %v5378 = vor.u32 %v5377, 8388608
        %v5379 = vsub.s32 0, %v5378
        %v5380 = vadd.s32 %v5375, 1
        %vm5381 = vcmp.gt.s32.totalorder %v5380, 0
        %v5382 = vsel %vm5381, %v5380, 0
        %v5383 = vshrl.u32 %v5382, 5
        %v5384 = vand.u32 %v5382, 31
        %v5385 = vsub.s32 32, %v5384
        %v5386 = vshrl.u32 683565275, %v5385
        %v5387 = vshll.u32 683565275, %v5384
        %v5388 = vshrl.u32 2475754826, %v5385
        %v5389 = vor.u32 %v5387, %v5388
        %v5390 = vshll.u32 2475754826, %v5384
        %v5391 = vshrl.u32 2131351028, %v5385
        %v5392 = vor.u32 %v5390, %v5391
        %v5393 = vshll.u32 2131351028, %v5384
        %v5394 = vshrl.u32 2102212464, %v5385
        %v5395 = vor.u32 %v5393, %v5394
        %v5396 = vshll.u32 2102212464, %v5384
        %v5397 = vshrl.u32 920167782, %v5385
        %v5398 = vor.u32 %v5396, %v5397
        %v5399 = vshll.u32 920167782, %v5384
        %v5400 = vshrl.u32 1326507024, %v5385
        %v5401 = vor.u32 %v5399, %v5400
        %vm5402 = vcmp.lt.s32.totalorder %v5383, 1
        %vm5403 = vcmp.lt.s32.totalorder %v5383, 2
        %vm5404 = vcmp.lt.s32.totalorder %v5383, 3
        %vm5405 = vcmp.lt.s32.totalorder %v5383, 4
        %v5406 = vsel %vm5402, %v5386, %v5389
        %v5407 = vsel %vm5405, %v5395, 2102212464
        %v5408 = vsel %vm5404, %v5392, %v5407
        %v5409 = vsel %vm5403, %v5406, %v5408
        %v5410 = vsel %vm5402, %v5389, %v5392
        %v5411 = vsel %vm5405, %v5398, 920167782
        %v5412 = vsel %vm5404, %v5395, %v5411
        %v5413 = vsel %vm5403, %v5410, %v5412
        %v5414 = vsel %vm5402, %v5392, %v5395
        %v5415 = vsel %vm5405, %v5401, 1326507024
        %v5416 = vsel %vm5404, %v5398, %v5415
        %v5417 = vsel %vm5403, %v5414, %v5416
        %v5418 = vshll.u32 %v5378, 8
        %v5419 = vand.u32 %v5418, 65535
        %v5420 = vshrl.u32 %v5418, 16
        %v5421 = vand.u32 %v5417, 65535
        %v5422 = vshrl.u32 %v5417, 16
        %v5423 = vmul.u32 %v5419, %v5421
        %v5424 = vmul.u32 %v5419, %v5422
        %v5425 = vmul.u32 %v5420, %v5421
        %v5426 = vmul.u32 %v5420, %v5422
        %v5427 = vshll.u32 %v5424, 16
        %v5428 = vshrl.u32 %v5424, 16
        %v5429 = vshll.u32 %v5425, 16
        %v5430 = vshrl.u32 %v5425, 16
        %vm5431 = vc.u32 %v5423, %v5427
        %v5432 = vsel %vm5431, 1, 0
        %v5433 = vadd.s32 %v5423, %v5427
        %v5434 = vadd.s32 %v5426, %v5432
        %vm5435 = vc.u32 %v5433, %v5429
        %v5436 = vsel %vm5435, 1, 0
        %v5437 = vadd.s32 %v5433, %v5429
        %v5438 = vadd.s32 %v5434, %v5436
        %v5439 = vadd.s32 %v5438, %v5428
        %v5440 = vadd.s32 %v5439, %v5430
        %v5441 = vand.u32 %v5418, 65535
        %v5442 = vshrl.u32 %v5418, 16
        %v5443 = vand.u32 %v5413, 65535
        %v5444 = vshrl.u32 %v5413, 16
        %v5445 = vmul.u32 %v5441, %v5443
        %v5446 = vmul.u32 %v5441, %v5444
        %v5447 = vmul.u32 %v5442, %v5443
        %v5448 = vmul.u32 %v5442, %v5444
        %v5449 = vshll.u32 %v5446, 16
        %v5450 = vshrl.u32 %v5446, 16
        %v5451 = vshll.u32 %v5447, 16
        %v5452 = vshrl.u32 %v5447, 16
        %vm5453 = vc.u32 %v5445, %v5449
        %v5454 = vsel %vm5453, 1, 0
        %v5455 = vadd.s32 %v5445, %v5449
        %v5456 = vadd.s32 %v5448, %v5454
        %vm5457 = vc.u32 %v5455, %v5451
        %v5458 = vsel %vm5457, 1, 0
        %v5459 = vadd.s32 %v5455, %v5451
        %v5460 = vadd.s32 %v5456, %v5458
        %v5461 = vadd.s32 %v5460, %v5450
        %v5462 = vadd.s32 %v5461, %v5452
        %v5463 = vmul.u32 %v5418, %v5409
        %v5464 = vadd.s32 %v5440, %v5459
        %vm5465 = vc.u32 %v5440, %v5459
        %v5466 = vadd.s32 %v5462, 1
        %v5467 = vsel %vm5465, %v5466, %v5462
        %v5468 = vadd.s32 %v5463, %v5467
        %v5469 = vadd.s32 %v5468, 536870912
        %v5470 = vshrl.u32 %v5469, 30
        %v5471 = vshll.u32 %v5470, 30
        %v5472 = vsub.s32 %v5468, %v5471
        %vm5473 = vcmp.lt.s32.totalorder %v5472, 0
        %v5474 = vsub.s32 0, %v5472
        %v5475 = vsel %vm5473, %v5474, %v5472
        %v5476 = vclz %v5475
        %v5477 = vsub.s32 %v5476, 2
        %vm5478 = vcmp.gt.s32.totalorder 0, %v5477
        %v5479 = vsel %vm5478, 0, %v5477
        %v5480 = vsub.s32 32, %v5479
        %v5481 = vshll.u32 %v5472, %v5479
        %v5482 = vshrl.u32 %v5464, %v5480
        %v5483 = vor.u32 %v5481, %v5482
        %v5484 = vsub.s32 4294967266, %v5479
        %v5485 = vadd.s32 %v5484, 127
        %v5486 = vshll.u32 %v5485, 23
        %v5487 = vor.u32 4788187, %v5486
        %v5488 = vand.u32 2147483647, %v5487
        %v5490 = vcvt.s32.f32 %v5483
        %v5491 = vmul.f32 %v5490, %v5488
        %v5492 = vxor.u32 %v5491, 2147483648
        %v5493 = vsel %vm5372, %v5492, %v5491
        %v5494 = vsub.s32 4, %v5470
        %v5495 = vsel %vm5372, %v5494, %v5470
        %v5496 = vsel %vm5371, %v266, %v5493
        %v5497 = vsel %vm5371, 0, %v5495
        %v5498 = vmul.f32 %v5496, %v5496
        %v5499 = vmul.f32 %v5498, -0.001358992
        %v5500 = vadd.f32 %v5499, 0.041655596
        %v5501 = vmul.f32 %v5498, %v5500
        %v5502 = vadd.f32 %v5501, -0.4999988
        %v5503 = vmul.f32 %v5498, %v5502
        %v5504 = vadd.f32 1.0, %v5503
        %v5505 = vmul.f32 %v5496, %v5496
        %v5506 = vmul.f32 %v5505, -0.00019511016
        %v5507 = vadd.f32 %v5506, 0.008332121
        %v5508 = vmul.f32 %v5505, %v5507
        %v5509 = vadd.f32 %v5508, -0.16666654
        %v5510 = vmul.f32 %v5505, %v5509
        %v5511 = vadd.f32 %v5510, 1.0
        %v5512 = vmul.f32 %v5511, %v5496
        %vm5513 = vweird.f32 %v266
        %v5514 = vand.u32 %v5497, 3
        %vm5515 = vcmp.lt.s32.totalorder %v5514, 2
        %vm5516 = vcmp.eq.s32.totalorder %v5514, 0
        %v5517 = vxor.u32 %v5512, 2147483648
        %v5518 = vsel %vm5516, %v5504, %v5517
        %vm5519 = vcmp.eq.s32.totalorder %v5514, 2
        %v5520 = vxor.u32 %v5504, 2147483648
        %v5521 = vsel %vm5519, %v5520, %v5512
        %v5522 = vsel %vm5515, %v5518, %v5521
        %v5523 = vsel %vm5513, nan, %v5522
        %v5524 = vand.u32 2147483647, %v331
        %vm5525 = vcmp.le.f32.partialorder %v5524, 0.7853982
        %vm5526 = vcmp.lt.s32.totalorder %v331, 0
        %v5527 = vand.u32 %v331, 2139095040
        %v5528 = vshrl.u32 %v5527, 23
        %v5529 = vsub.s32 %v5528, 127
        %v5530 = vand.u32 2147483647, %v331
        %v5531 = vand.u32 %v5530, 8388607
        %v5532 = vor.u32 %v5531, 8388608
        %v5533 = vsub.s32 0, %v5532
        %v5534 = vadd.s32 %v5529, 1
        %vm5535 = vcmp.gt.s32.totalorder %v5534, 0
        %v5536 = vsel %vm5535, %v5534, 0
        %v5537 = vshrl.u32 %v5536, 5
        %v5538 = vand.u32 %v5536, 31
        %v5539 = vsub.s32 32, %v5538
        %v5540 = vshrl.u32 683565275, %v5539
        %v5541 = vshll.u32 683565275, %v5538
        %v5542 = vshrl.u32 2475754826, %v5539
        %v5543 = vor.u32 %v5541, %v5542
        %v5544 = vshll.u32 2475754826, %v5538
        %v5545 = vshrl.u32 2131351028, %v5539
        %v5546 = vor.u32 %v5544, %v5545
        %v5547 = vshll.u32 2131351028, %v5538
        %v5548 = vshrl.u32 2102212464, %v5539
        %v5549 = vor.u32 %v5547, %v5548
        %v5550 = vshll.u32 2102212464, %v5538
        %v5551 = vshrl.u32 920167782, %v5539
        %v5552 = vor.u32 %v5550, %v5551
        %v5553 = vshll.u32 920167782, %v5538
        %v5554 = vshrl.u32 1326507024, %v5539
        %v5555 = vor.u32 %v5553, %v5554
        %vm5556 = vcmp.lt.s32.totalorder %v5537, 1
        %vm5557 = vcmp.lt.s32.totalorder %v5537, 2
        %vm5558 = vcmp.lt.s32.totalorder %v5537, 3
        %vm5559 = vcmp.lt.s32.totalorder %v5537, 4
        %v5560 = vsel %vm5556, %v5540, %v5543
        %v5561 = vsel %vm5559, %v5549, 2102212464
        %v5562 = vsel %vm5558, %v5546, %v5561
        %v5563 = vsel %vm5557, %v5560, %v5562
        %v5564 = vsel %vm5556, %v5543, %v5546
        %v5565 = vsel %vm5559, %v5552, 920167782
        %v5566 = vsel %vm5558, %v5549, %v5565
        %v5567 = vsel %vm5557, %v5564, %v5566
        %v5568 = vsel %vm5556, %v5546, %v5549
        %v5569 = vsel %vm5559, %v5555, 1326507024
        %v5570 = vsel %vm5558, %v5552, %v5569
        %v5571 = vsel %vm5557, %v5568, %v5570
        %v5572 = vshll.u32 %v5532, 8
        %v5573 = vand.u32 %v5572, 65535
        %v5574 = vshrl.u32 %v5572, 16
        %v5575 = vand.u32 %v5571, 65535
        %v5576 = vshrl.u32 %v5571, 16
        %v5577 = vmul.u32 %v5573, %v5575
        %v5578 = vmul.u32 %v5573, %v5576
        %v5579 = vmul.u32 %v5574, %v5575
        %v5580 = vmul.u32 %v5574, %v5576
        %v5581 = vshll.u32 %v5578, 16
        %v5582 = vshrl.u32 %v5578, 16
        %v5583 = vshll.u32 %v5579, 16
        %v5584 = vshrl.u32 %v5579, 16
        %vm5585 = vc.u32 %v5577, %v5581
        %v5586 = vsel %vm5585, 1, 0
        %v5587 = vadd.s32 %v5577, %v5581
        %v5588 = vadd.s32 %v5580, %v5586
        %vm5589 = vc.u32 %v5587, %v5583
        %v5590 = vsel %vm5589, 1, 0
        %v5591 = vadd.s32 %v5587, %v5583
        %v5592 = vadd.s32 %v5588, %v5590
        %v5593 = vadd.s32 %v5592, %v5582
        %v5594 = vadd.s32 %v5593, %v5584
        %v5595 = vand.u32 %v5572, 65535
        %v5596 = vshrl.u32 %v5572, 16
        %v5597 = vand.u32 %v5567, 65535
        %v5598 = vshrl.u32 %v5567, 16
        %v5599 = vmul.u32 %v5595, %v5597
        %v5600 = vmul.u32 %v5595, %v5598
        %v5601 = vmul.u32 %v5596, %v5597
        %v5602 = vmul.u32 %v5596, %v5598
        %v5603 = vshll.u32 %v5600, 16
        %v5604 = vshrl.u32 %v5600, 16
        %v5605 = vshll.u32 %v5601, 16
        %v5606 = vshrl.u32 %v5601, 16
        %vm5607 = vc.u32 %v5599, %v5603
        %v5608 = vsel %vm5607, 1, 0
        %v5609 = vadd.s32 %v5599, %v5603
        %v5610 = vadd.s32 %v5602, %v5608
        %vm5611 = vc.u32 %v5609, %v5605
        %v5612 = vsel %vm5611, 1, 0
        %v5613 = vadd.s32 %v5609, %v5605
        %v5614 = vadd.s32 %v5610, %v5612
        %v5615 = vadd.s32 %v5614, %v5604
        %v5616 = vadd.s32 %v5615, %v5606
        %v5617 = vmul.u32 %v5572, %v5563
        %v5618 = vadd.s32 %v5594, %v5613
        %vm5619 = vc.u32 %v5594, %v5613
        %v5620 = vadd.s32 %v5616, 1
        %v5621 = vsel %vm5619, %v5620, %v5616
        %v5622 = vadd.s32 %v5617, %v5621
        %v5623 = vadd.s32 %v5622, 536870912
        %v5624 = vshrl.u32 %v5623, 30
        %v5625 = vshll.u32 %v5624, 30
        %v5626 = vsub.s32 %v5622, %v5625
        %vm5627 = vcmp.lt.s32.totalorder %v5626, 0
        %v5628 = vsub.s32 0, %v5626
        %v5629 = vsel %vm5627, %v5628, %v5626
        %v5630 = vclz %v5629
        %v5631 = vsub.s32 %v5630, 2
        %vm5632 = vcmp.gt.s32.totalorder 0, %v5631
        %v5633 = vsel %vm5632, 0, %v5631
        %v5634 = vsub.s32 32, %v5633
        %v5635 = vshll.u32 %v5626, %v5633
        %v5636 = vshrl.u32 %v5618, %v5634
        %v5637 = vor.u32 %v5635, %v5636
        %v5638 = vsub.s32 4294967266, %v5633
        %v5639 = vadd.s32 %v5638, 127
        %v5640 = vshll.u32 %v5639, 23
        %v5641 = vor.u32 4788187, %v5640
        %v5642 = vand.u32 2147483647, %v5641
        %v5644 = vcvt.s32.f32 %v5637
        %v5645 = vmul.f32 %v5644, %v5642
        %v5646 = vxor.u32 %v5645, 2147483648
        %v5647 = vsel %vm5526, %v5646, %v5645
        %v5648 = vsub.s32 4, %v5624
        %v5649 = vsel %vm5526, %v5648, %v5624
        %v5650 = vsel %vm5525, %v331, %v5647
        %v5651 = vsel %vm5525, 0, %v5649
        %v5652 = vmul.f32 %v5650, %v5650
        %v5653 = vmul.f32 %v5652, -0.001358992
        %v5654 = vadd.f32 %v5653, 0.041655596
        %v5655 = vmul.f32 %v5652, %v5654
        %v5656 = vadd.f32 %v5655, -0.4999988
        %v5657 = vmul.f32 %v5652, %v5656
        %v5658 = vadd.f32 1.0, %v5657
        %v5659 = vmul.f32 %v5650, %v5650
        %v5660 = vmul.f32 %v5659, -0.00019511016
        %v5661 = vadd.f32 %v5660, 0.008332121
        %v5662 = vmul.f32 %v5659, %v5661
        %v5663 = vadd.f32 %v5662, -0.16666654
        %v5664 = vmul.f32 %v5659, %v5663
        %v5665 = vadd.f32 %v5664, 1.0
        %v5666 = vmul.f32 %v5665, %v5650
        %vm5667 = vweird.f32 %v331
        %v5668 = vand.u32 %v5651, 3
        %vm5669 = vcmp.lt.s32.totalorder %v5668, 2
        %vm5670 = vcmp.eq.s32.totalorder %v5668, 0
        %v5671 = vxor.u32 %v5666, 2147483648
        %v5672 = vsel %vm5670, %v5658, %v5671
        %vm5673 = vcmp.eq.s32.totalorder %v5668, 2
        %v5674 = vxor.u32 %v5658, 2147483648
        %v5675 = vsel %vm5673, %v5674, %v5666
        %v5676 = vsel %vm5669, %v5672, %v5675
        %v5677 = vsel %vm5667, nan, %v5676
        %v5678 = vand.u32 2147483647, %v269
        %vm5679 = vcmp.le.f32.partialorder %v5678, 0.7853982
        %vm5680 = vcmp.lt.s32.totalorder %v269, 0
        %v5681 = vand.u32 %v269, 2139095040
        %v5682 = vshrl.u32 %v5681, 23
        %v5683 = vsub.s32 %v5682, 127
        %v5684 = vand.u32 2147483647, %v269
        %v5685 = vand.u32 %v5684, 8388607
        %v5686 = vor.u32 %v5685, 8388608
        %v5687 = vsub.s32 0, %v5686
        %v5688 = vadd.s32 %v5683, 1
        %vm5689 = vcmp.gt.s32.totalorder %v5688, 0
        %v5690 = vsel %vm5689, %v5688, 0
        %v5691 = vshrl.u32 %v5690, 5
        %v5692 = vand.u32 %v5690, 31
        %v5693 = vsub.s32 32, %v5692
        %v5694 = vshrl.u32 683565275, %v5693
        %v5695 = vshll.u32 683565275, %v5692
        %v5696 = vshrl.u32 2475754826, %v5693
        %v5697 = vor.u32 %v5695, %v5696
        %v5698 = vshll.u32 2475754826, %v5692
        %v5699 = vshrl.u32 2131351028, %v5693
        %v5700 = vor.u32 %v5698, %v5699
        %v5701 = vshll.u32 2131351028, %v5692
        %v5702 = vshrl.u32 2102212464, %v5693
        %v5703 = vor.u32 %v5701, %v5702
        %v5704 = vshll.u32 2102212464, %v5692
        %v5705 = vshrl.u32 920167782, %v5693
        %v5706 = vor.u32 %v5704, %v5705
        %v5707 = vshll.u32 920167782, %v5692
        %v5708 = vshrl.u32 1326507024, %v5693
        %v5709 = vor.u32 %v5707, %v5708
        %vm5710 = vcmp.lt.s32.totalorder %v5691, 1
        %vm5711 = vcmp.lt.s32.totalorder %v5691, 2
        %vm5712 = vcmp.lt.s32.totalorder %v5691, 3
        %vm5713 = vcmp.lt.s32.totalorder %v5691, 4
        %v5714 = vsel %vm5710, %v5694, %v5697
        %v5715 = vsel %vm5713, %v5703, 2102212464
        %v5716 = vsel %vm5712, %v5700, %v5715
        %v5717 = vsel %vm5711, %v5714, %v5716
        %v5718 = vsel %vm5710, %v5697, %v5700
        %v5719 = vsel %vm5713, %v5706, 920167782
        %v5720 = vsel %vm5712, %v5703, %v5719
        %v5721 = vsel %vm5711, %v5718, %v5720
        %v5722 = vsel %vm5710, %v5700, %v5703
        %v5723 = vsel %vm5713, %v5709, 1326507024
        %v5724 = vsel %vm5712, %v5706, %v5723
        %v5725 = vsel %vm5711, %v5722, %v5724
        %v5726 = vshll.u32 %v5686, 8
        %v5727 = vand.u32 %v5726, 65535
        %v5728 = vshrl.u32 %v5726, 16
        %v5729 = vand.u32 %v5725, 65535
        %v5730 = vshrl.u32 %v5725, 16
        %v5731 = vmul.u32 %v5727, %v5729
        %v5732 = vmul.u32 %v5727, %v5730
        %v5733 = vmul.u32 %v5728, %v5729
        %v5734 = vmul.u32 %v5728, %v5730
        %v5735 = vshll.u32 %v5732, 16
        %v5736 = vshrl.u32 %v5732, 16
        %v5737 = vshll.u32 %v5733, 16
        %v5738 = vshrl.u32 %v5733, 16
        %vm5739 = vc.u32 %v5731, %v5735
        %v5740 = vsel %vm5739, 1, 0
        %v5741 = vadd.s32 %v5731, %v5735
        %v5742 = vadd.s32 %v5734, %v5740
        %vm5743 = vc.u32 %v5741, %v5737
        %v5744 = vsel %vm5743, 1, 0
        %v5745 = vadd.s32 %v5741, %v5737
        %v5746 = vadd.s32 %v5742, %v5744
        %v5747 = vadd.s32 %v5746, %v5736
        %v5748 = vadd.s32 %v5747, %v5738
        %v5749 = vand.u32 %v5726, 65535
        %v5750 = vshrl.u32 %v5726, 16
        %v5751 = vand.u32 %v5721, 65535
        %v5752 = vshrl.u32 %v5721, 16
        %v5753 = vmul.u32 %v5749, %v5751
        %v5754 = vmul.u32 %v5749, %v5752
        %v5755 = vmul.u32 %v5750, %v5751
        %v5756 = vmul.u32 %v5750, %v5752
        %v5757 = vshll.u32 %v5754, 16
        %v5758 = vshrl.u32 %v5754, 16
        %v5759 = vshll.u32 %v5755, 16
        %v5760 = vshrl.u32 %v5755, 16
        %vm5761 = vc.u32 %v5753, %v5757
        %v5762 = vsel %vm5761, 1, 0
        %v5763 = vadd.s32 %v5753, %v5757
        %v5764 = vadd.s32 %v5756, %v5762
        %vm5765 = vc.u32 %v5763, %v5759
        %v5766 = vsel %vm5765, 1, 0
        %v5767 = vadd.s32 %v5763, %v5759
        %v5768 = vadd.s32 %v5764, %v5766
        %v5769 = vadd.s32 %v5768, %v5758
        %v5770 = vadd.s32 %v5769, %v5760
        %v5771 = vmul.u32 %v5726, %v5717
        %v5772 = vadd.s32 %v5748, %v5767
        %vm5773 = vc.u32 %v5748, %v5767
        %v5774 = vadd.s32 %v5770, 1
        %v5775 = vsel %vm5773, %v5774, %v5770
        %v5776 = vadd.s32 %v5771, %v5775
        %v5777 = vadd.s32 %v5776, 536870912
        %v5778 = vshrl.u32 %v5777, 30
        %v5779 = vshll.u32 %v5778, 30
        %v5780 = vsub.s32 %v5776, %v5779
        %vm5781 = vcmp.lt.s32.totalorder %v5780, 0
        %v5782 = vsub.s32 0, %v5780
        %v5783 = vsel %vm5781, %v5782, %v5780
        %v5784 = vclz %v5783
        %v5785 = vsub.s32 %v5784, 2
        %vm5786 = vcmp.gt.s32.totalorder 0, %v5785
        %v5787 = vsel %vm5786, 0, %v5785
        %v5788 = vsub.s32 32, %v5787
        %v5789 = vshll.u32 %v5780, %v5787
        %v5790 = vshrl.u32 %v5772, %v5788
        %v5791 = vor.u32 %v5789, %v5790
        %v5792 = vsub.s32 4294967266, %v5787
        %v5793 = vadd.s32 %v5792, 127
        %v5794 = vshll.u32 %v5793, 23
        %v5795 = vor.u32 4788187, %v5794
        %v5796 = vand.u32 2147483647, %v5795
        %v5798 = vcvt.s32.f32 %v5791
        %v5799 = vmul.f32 %v5798, %v5796
        %v5800 = vxor.u32 %v5799, 2147483648
        %v5801 = vsel %vm5680, %v5800, %v5799
        %v5802 = vsub.s32 4, %v5778
        %v5803 = vsel %vm5680, %v5802, %v5778
        %v5804 = vsel %vm5679, %v269, %v5801
        %v5805 = vsel %vm5679, 0, %v5803
        %v5806 = vmul.f32 %v5804, %v5804
        %v5807 = vmul.f32 %v5806, -0.001358992
        %v5808 = vadd.f32 %v5807, 0.041655596
        %v5809 = vmul.f32 %v5806, %v5808
        %v5810 = vadd.f32 %v5809, -0.4999988
        %v5811 = vmul.f32 %v5806, %v5810
        %v5812 = vadd.f32 1.0, %v5811
        %v5813 = vmul.f32 %v5804, %v5804
        %v5814 = vmul.f32 %v5813, -0.00019511016
        %v5815 = vadd.f32 %v5814, 0.008332121
        %v5816 = vmul.f32 %v5813, %v5815
        %v5817 = vadd.f32 %v5816, -0.16666654
        %v5818 = vmul.f32 %v5813, %v5817
        %v5819 = vadd.f32 %v5818, 1.0
        %v5820 = vmul.f32 %v5819, %v5804
        %vm5821 = vweird.f32 %v269
        %v5822 = vand.u32 %v5805, 3
        %vm5823 = vcmp.lt.s32.totalorder %v5822, 2
        %vm5824 = vcmp.eq.s32.totalorder %v5822, 0
        %v5825 = vxor.u32 %v5820, 2147483648
        %v5826 = vsel %vm5824, %v5812, %v5825
        %vm5827 = vcmp.eq.s32.totalorder %v5822, 2
        %v5828 = vxor.u32 %v5812, 2147483648
        %v5829 = vsel %vm5827, %v5828, %v5820
        %v5830 = vsel %vm5823, %v5826, %v5829
        %v5831 = vsel %vm5821, nan, %v5830
        %v5832 = vand.u32 2147483647, %v334
        %vm5833 = vcmp.le.f32.partialorder %v5832, 0.7853982
        %vm5834 = vcmp.lt.s32.totalorder %v334, 0
        %v5835 = vand.u32 %v334, 2139095040
        %v5836 = vshrl.u32 %v5835, 23
        %v5837 = vsub.s32 %v5836, 127
        %v5838 = vand.u32 2147483647, %v334
        %v5839 = vand.u32 %v5838, 8388607
        %v5840 = vor.u32 %v5839, 8388608
        %v5841 = vsub.s32 0, %v5840
        %v5842 = vadd.s32 %v5837, 1
        %vm5843 = vcmp.gt.s32.totalorder %v5842, 0
        %v5844 = vsel %vm5843, %v5842, 0
        %v5845 = vshrl.u32 %v5844, 5
        %v5846 = vand.u32 %v5844, 31
        %v5847 = vsub.s32 32, %v5846
        %v5848 = vshrl.u32 683565275, %v5847
        %v5849 = vshll.u32 683565275, %v5846
        %v5850 = vshrl.u32 2475754826, %v5847
        %v5851 = vor.u32 %v5849, %v5850
        %v5852 = vshll.u32 2475754826, %v5846
        %v5853 = vshrl.u32 2131351028, %v5847
        %v5854 = vor.u32 %v5852, %v5853
        %v5855 = vshll.u32 2131351028, %v5846
        %v5856 = vshrl.u32 2102212464, %v5847
        %v5857 = vor.u32 %v5855, %v5856
        %v5858 = vshll.u32 2102212464, %v5846
        %v5859 = vshrl.u32 920167782, %v5847
        %v5860 = vor.u32 %v5858, %v5859
        %v5861 = vshll.u32 920167782, %v5846
        %v5862 = vshrl.u32 1326507024, %v5847
        %v5863 = vor.u32 %v5861, %v5862
        %vm5864 = vcmp.lt.s32.totalorder %v5845, 1
        %vm5865 = vcmp.lt.s32.totalorder %v5845, 2
        %vm5866 = vcmp.lt.s32.totalorder %v5845, 3
        %vm5867 = vcmp.lt.s32.totalorder %v5845, 4
        %v5868 = vsel %vm5864, %v5848, %v5851
        %v5869 = vsel %vm5867, %v5857, 2102212464
        %v5870 = vsel %vm5866, %v5854, %v5869
        %v5871 = vsel %vm5865, %v5868, %v5870
        %v5872 = vsel %vm5864, %v5851, %v5854
        %v5873 = vsel %vm5867, %v5860, 920167782
        %v5874 = vsel %vm5866, %v5857, %v5873
        %v5875 = vsel %vm5865, %v5872, %v5874
        %v5876 = vsel %vm5864, %v5854, %v5857
        %v5877 = vsel %vm5867, %v5863, 1326507024
        %v5878 = vsel %vm5866, %v5860, %v5877
        %v5879 = vsel %vm5865, %v5876, %v5878
        %v5880 = vshll.u32 %v5840, 8
        %v5881 = vand.u32 %v5880, 65535
        %v5882 = vshrl.u32 %v5880, 16
        %v5883 = vand.u32 %v5879, 65535
        %v5884 = vshrl.u32 %v5879, 16
        %v5885 = vmul.u32 %v5881, %v5883
        %v5886 = vmul.u32 %v5881, %v5884
        %v5887 = vmul.u32 %v5882, %v5883
        %v5888 = vmul.u32 %v5882, %v5884
        %v5889 = vshll.u32 %v5886, 16
        %v5890 = vshrl.u32 %v5886, 16
        %v5891 = vshll.u32 %v5887, 16
        %v5892 = vshrl.u32 %v5887, 16
        %vm5893 = vc.u32 %v5885, %v5889
        %v5894 = vsel %vm5893, 1, 0
        %v5895 = vadd.s32 %v5885, %v5889
        %v5896 = vadd.s32 %v5888, %v5894
        %vm5897 = vc.u32 %v5895, %v5891
        %v5898 = vsel %vm5897, 1, 0
        %v5899 = vadd.s32 %v5895, %v5891
        %v5900 = vadd.s32 %v5896, %v5898
        %v5901 = vadd.s32 %v5900, %v5890
        %v5902 = vadd.s32 %v5901, %v5892
        %v5903 = vand.u32 %v5880, 65535
        %v5904 = vshrl.u32 %v5880, 16
        %v5905 = vand.u32 %v5875, 65535
        %v5906 = vshrl.u32 %v5875, 16
        %v5907 = vmul.u32 %v5903, %v5905
        %v5908 = vmul.u32 %v5903, %v5906
        %v5909 = vmul.u32 %v5904, %v5905
        %v5910 = vmul.u32 %v5904, %v5906
        %v5911 = vshll.u32 %v5908, 16
        %v5912 = vshrl.u32 %v5908, 16
        %v5913 = vshll.u32 %v5909, 16
        %v5914 = vshrl.u32 %v5909, 16
        %vm5915 = vc.u32 %v5907, %v5911
        %v5916 = vsel %vm5915, 1, 0
        %v5917 = vadd.s32 %v5907, %v5911
        %v5918 = vadd.s32 %v5910, %v5916
        %vm5919 = vc.u32 %v5917, %v5913
        %v5920 = vsel %vm5919, 1, 0
        %v5921 = vadd.s32 %v5917, %v5913
        %v5922 = vadd.s32 %v5918, %v5920
        %v5923 = vadd.s32 %v5922, %v5912
        %v5924 = vadd.s32 %v5923, %v5914
        %v5925 = vmul.u32 %v5880, %v5871
        %v5926 = vadd.s32 %v5902, %v5921
        %vm5927 = vc.u32 %v5902, %v5921
        %v5928 = vadd.s32 %v5924, 1
        %v5929 = vsel %vm5927, %v5928, %v5924
        %v5930 = vadd.s32 %v5925, %v5929
        %v5931 = vadd.s32 %v5930, 536870912
        %v5932 = vshrl.u32 %v5931, 30
        %v5933 = vshll.u32 %v5932, 30
        %v5934 = vsub.s32 %v5930, %v5933
        %vm5935 = vcmp.lt.s32.totalorder %v5934, 0
        %v5936 = vsub.s32 0, %v5934
        %v5937 = vsel %vm5935, %v5936, %v5934
        %v5938 = vclz %v5937
        %v5939 = vsub.s32 %v5938, 2
        %vm5940 = vcmp.gt.s32.totalorder 0, %v5939
        %v5941 = vsel %vm5940, 0, %v5939
        %v5942 = vsub.s32 32, %v5941
        %v5943 = vshll.u32 %v5934, %v5941
        %v5944 = vshrl.u32 %v5926, %v5942
        %v5945 = vor.u32 %v5943, %v5944
        %v5946 = vsub.s32 4294967266, %v5941
        %v5947 = vadd.s32 %v5946, 127
        %v5948 = vshll.u32 %v5947, 23
        %v5949 = vor.u32 4788187, %v5948
        %v5950 = vand.u32 2147483647, %v5949
        %v5952 = vcvt.s32.f32 %v5945
        %v5953 = vmul.f32 %v5952, %v5950
        %v5954 = vxor.u32 %v5953, 2147483648
        %v5955 = vsel %vm5834, %v5954, %v5953
        %v5956 = vsub.s32 4, %v5932
        %v5957 = vsel %vm5834, %v5956, %v5932
        %v5958 = vsel %vm5833, %v334, %v5955
        %v5959 = vsel %vm5833, 0, %v5957
        %v5960 = vmul.f32 %v5958, %v5958
        %v5961 = vmul.f32 %v5960, -0.001358992
        %v5962 = vadd.f32 %v5961, 0.041655596
        %v5963 = vmul.f32 %v5960, %v5962
        %v5964 = vadd.f32 %v5963, -0.4999988
        %v5965 = vmul.f32 %v5960, %v5964
        %v5966 = vadd.f32 1.0, %v5965
        %v5967 = vmul.f32 %v5958, %v5958
        %v5968 = vmul.f32 %v5967, -0.00019511016
        %v5969 = vadd.f32 %v5968, 0.008332121
        %v5970 = vmul.f32 %v5967, %v5969
        %v5971 = vadd.f32 %v5970, -0.16666654
        %v5972 = vmul.f32 %v5967, %v5971
        %v5973 = vadd.f32 %v5972, 1.0
        %v5974 = vmul.f32 %v5973, %v5958
        %vm5975 = vweird.f32 %v334
        %v5976 = vand.u32 %v5959, 3
        %vm5977 = vcmp.lt.s32.totalorder %v5976, 2
        %vm5978 = vcmp.eq.s32.totalorder %v5976, 0
        %v5979 = vxor.u32 %v5974, 2147483648
        %v5980 = vsel %vm5978, %v5966, %v5979
        %vm5981 = vcmp.eq.s32.totalorder %v5976, 2
        %v5982 = vxor.u32 %v5966, 2147483648
        %v5983 = vsel %vm5981, %v5982, %v5974
        %v5984 = vsel %vm5977, %v5980, %v5983
        %v5985 = vsel %vm5975, nan, %v5984
        %v5986 = vand.u32 2147483647, %v272
        %vm5987 = vcmp.le.f32.partialorder %v5986, 0.7853982
        %vm5988 = vcmp.lt.s32.totalorder %v272, 0
        %v5989 = vand.u32 %v272, 2139095040
        %v5990 = vshrl.u32 %v5989, 23
        %v5991 = vsub.s32 %v5990, 127
        %v5992 = vand.u32 2147483647, %v272
        %v5993 = vand.u32 %v5992, 8388607
        %v5994 = vor.u32 %v5993, 8388608
        %v5995 = vsub.s32 0, %v5994
        %v5996 = vadd.s32 %v5991, 1
        %vm5997 = vcmp.gt.s32.totalorder %v5996, 0
        %v5998 = vsel %vm5997, %v5996, 0
        %v5999 = vshrl.u32 %v5998, 5
        %v6000 = vand.u32 %v5998, 31
        %v6001 = vsub.s32 32, %v6000
        %v6002 = vshrl.u32 683565275, %v6001
        %v6003 = vshll.u32 683565275, %v6000
        %v6004 = vshrl.u32 2475754826, %v6001
        %v6005 = vor.u32 %v6003, %v6004
        %v6006 = vshll.u32 2475754826, %v6000
        %v6007 = vshrl.u32 2131351028, %v6001
        %v6008 = vor.u32 %v6006, %v6007
        %v6009 = vshll.u32 2131351028, %v6000
        %v6010 = vshrl.u32 2102212464, %v6001
        %v6011 = vor.u32 %v6009, %v6010
        %v6012 = vshll.u32 2102212464, %v6000
        %v6013 = vshrl.u32 920167782, %v6001
        %v6014 = vor.u32 %v6012, %v6013
        %v6015 = vshll.u32 920167782, %v6000
        %v6016 = vshrl.u32 1326507024, %v6001
        %v6017 = vor.u32 %v6015, %v6016
        %vm6018 = vcmp.lt.s32.totalorder %v5999, 1
        %vm6019 = vcmp.lt.s32.totalorder %v5999, 2
        %vm6020 = vcmp.lt.s32.totalorder %v5999, 3
        %vm6021 = vcmp.lt.s32.totalorder %v5999, 4
        %v6022 = vsel %vm6018, %v6002, %v6005
        %v6023 = vsel %vm6021, %v6011, 2102212464
        %v6024 = vsel %vm6020, %v6008, %v6023
        %v6025 = vsel %vm6019, %v6022, %v6024
        %v6026 = vsel %vm6018, %v6005, %v6008
        %v6027 = vsel %vm6021, %v6014, 920167782
        %v6028 = vsel %vm6020, %v6011, %v6027
        %v6029 = vsel %vm6019, %v6026, %v6028
        %v6030 = vsel %vm6018, %v6008, %v6011
        %v6031 = vsel %vm6021, %v6017, 1326507024
        %v6032 = vsel %vm6020, %v6014, %v6031
        %v6033 = vsel %vm6019, %v6030, %v6032
        %v6034 = vshll.u32 %v5994, 8
        %v6035 = vand.u32 %v6034, 65535
        %v6036 = vshrl.u32 %v6034, 16
        %v6037 = vand.u32 %v6033, 65535
        %v6038 = vshrl.u32 %v6033, 16
        %v6039 = vmul.u32 %v6035, %v6037
        %v6040 = vmul.u32 %v6035, %v6038
        %v6041 = vmul.u32 %v6036, %v6037
        %v6042 = vmul.u32 %v6036, %v6038
        %v6043 = vshll.u32 %v6040, 16
        %v6044 = vshrl.u32 %v6040, 16
        %v6045 = vshll.u32 %v6041, 16
        %v6046 = vshrl.u32 %v6041, 16
        %vm6047 = vc.u32 %v6039, %v6043
        %v6048 = vsel %vm6047, 1, 0
        %v6049 = vadd.s32 %v6039, %v6043
        %v6050 = vadd.s32 %v6042, %v6048
        %vm6051 = vc.u32 %v6049, %v6045
        %v6052 = vsel %vm6051, 1, 0
        %v6053 = vadd.s32 %v6049, %v6045
        %v6054 = vadd.s32 %v6050, %v6052
        %v6055 = vadd.s32 %v6054, %v6044
        %v6056 = vadd.s32 %v6055, %v6046
        %v6057 = vand.u32 %v6034, 65535
        %v6058 = vshrl.u32 %v6034, 16
        %v6059 = vand.u32 %v6029, 65535
        %v6060 = vshrl.u32 %v6029, 16
        %v6061 = vmul.u32 %v6057, %v6059
        %v6062 = vmul.u32 %v6057, %v6060
        %v6063 = vmul.u32 %v6058, %v6059
        %v6064 = vmul.u32 %v6058, %v6060
        %v6065 = vshll.u32 %v6062, 16
        %v6066 = vshrl.u32 %v6062, 16
        %v6067 = vshll.u32 %v6063, 16
        %v6068 = vshrl.u32 %v6063, 16
        %vm6069 = vc.u32 %v6061, %v6065
        %v6070 = vsel %vm6069, 1, 0
        %v6071 = vadd.s32 %v6061, %v6065
        %v6072 = vadd.s32 %v6064, %v6070
        %vm6073 = vc.u32 %v6071, %v6067
        %v6074 = vsel %vm6073, 1, 0
        %v6075 = vadd.s32 %v6071, %v6067
        %v6076 = vadd.s32 %v6072, %v6074
        %v6077 = vadd.s32 %v6076, %v6066
        %v6078 = vadd.s32 %v6077, %v6068
        %v6079 = vmul.u32 %v6034, %v6025
        %v6080 = vadd.s32 %v6056, %v6075
        %vm6081 = vc.u32 %v6056, %v6075
        %v6082 = vadd.s32 %v6078, 1
        %v6083 = vsel %vm6081, %v6082, %v6078
        %v6084 = vadd.s32 %v6079, %v6083
        %v6085 = vadd.s32 %v6084, 536870912
        %v6086 = vshrl.u32 %v6085, 30
        %v6087 = vshll.u32 %v6086, 30
        %v6088 = vsub.s32 %v6084, %v6087
        %vm6089 = vcmp.lt.s32.totalorder %v6088, 0
        %v6090 = vsub.s32 0, %v6088
        %v6091 = vsel %vm6089, %v6090, %v6088
        %v6092 = vclz %v6091
        %v6093 = vsub.s32 %v6092, 2
        %vm6094 = vcmp.gt.s32.totalorder 0, %v6093
        %v6095 = vsel %vm6094, 0, %v6093
        %v6096 = vsub.s32 32, %v6095
        %v6097 = vshll.u32 %v6088, %v6095
        %v6098 = vshrl.u32 %v6080, %v6096
        %v6099 = vor.u32 %v6097, %v6098
        %v6100 = vsub.s32 4294967266, %v6095
        %v6101 = vadd.s32 %v6100, 127
        %v6102 = vshll.u32 %v6101, 23
        %v6103 = vor.u32 4788187, %v6102
        %v6104 = vand.u32 2147483647, %v6103
        %v6106 = vcvt.s32.f32 %v6099
        %v6107 = vmul.f32 %v6106, %v6104
        %v6108 = vxor.u32 %v6107, 2147483648
        %v6109 = vsel %vm5988, %v6108, %v6107
        %v6110 = vsub.s32 4, %v6086
        %v6111 = vsel %vm5988, %v6110, %v6086
        %v6112 = vsel %vm5987, %v272, %v6109
        %v6113 = vsel %vm5987, 0, %v6111
        %v6114 = vmul.f32 %v6112, %v6112
        %v6115 = vmul.f32 %v6114, -0.001358992
        %v6116 = vadd.f32 %v6115, 0.041655596
        %v6117 = vmul.f32 %v6114, %v6116
        %v6118 = vadd.f32 %v6117, -0.4999988
        %v6119 = vmul.f32 %v6114, %v6118
        %v6120 = vadd.f32 1.0, %v6119
        %v6121 = vmul.f32 %v6112, %v6112
        %v6122 = vmul.f32 %v6121, -0.00019511016
        %v6123 = vadd.f32 %v6122, 0.008332121
        %v6124 = vmul.f32 %v6121, %v6123
        %v6125 = vadd.f32 %v6124, -0.16666654
        %v6126 = vmul.f32 %v6121, %v6125
        %v6127 = vadd.f32 %v6126, 1.0
        %v6128 = vmul.f32 %v6127, %v6112
        %vm6129 = vweird.f32 %v272
        %v6130 = vand.u32 %v6113, 3
        %vm6131 = vcmp.lt.s32.totalorder %v6130, 2
        %vm6132 = vcmp.eq.s32.totalorder %v6130, 0
        %v6133 = vxor.u32 %v6128, 2147483648
        %v6134 = vsel %vm6132, %v6120, %v6133
        %vm6135 = vcmp.eq.s32.totalorder %v6130, 2
        %v6136 = vxor.u32 %v6120, 2147483648
        %v6137 = vsel %vm6135, %v6136, %v6128
        %v6138 = vsel %vm6131, %v6134, %v6137
        %v6139 = vsel %vm6129, nan, %v6138
        %v6140 = vand.u32 2147483647, %v337
        %vm6141 = vcmp.le.f32.partialorder %v6140, 0.7853982
        %vm6142 = vcmp.lt.s32.totalorder %v337, 0
        %v6143 = vand.u32 %v337, 2139095040
        %v6144 = vshrl.u32 %v6143, 23
        %v6145 = vsub.s32 %v6144, 127
        %v6146 = vand.u32 2147483647, %v337
        %v6147 = vand.u32 %v6146, 8388607
        %v6148 = vor.u32 %v6147, 8388608
        %v6149 = vsub.s32 0, %v6148
        %v6150 = vadd.s32 %v6145, 1
        %vm6151 = vcmp.gt.s32.totalorder %v6150, 0
        %v6152 = vsel %vm6151, %v6150, 0
        %v6153 = vshrl.u32 %v6152, 5
        %v6154 = vand.u32 %v6152, 31
        %v6155 = vsub.s32 32, %v6154
        %v6156 = vshrl.u32 683565275, %v6155
        %v6157 = vshll.u32 683565275, %v6154
        %v6158 = vshrl.u32 2475754826, %v6155
        %v6159 = vor.u32 %v6157, %v6158
        %v6160 = vshll.u32 2475754826, %v6154
        %v6161 = vshrl.u32 2131351028, %v6155
        %v6162 = vor.u32 %v6160, %v6161
        %v6163 = vshll.u32 2131351028, %v6154
        %v6164 = vshrl.u32 2102212464, %v6155
        %v6165 = vor.u32 %v6163, %v6164
        %v6166 = vshll.u32 2102212464, %v6154
        %v6167 = vshrl.u32 920167782, %v6155
        %v6168 = vor.u32 %v6166, %v6167
        %v6169 = vshll.u32 920167782, %v6154
        %v6170 = vshrl.u32 1326507024, %v6155
        %v6171 = vor.u32 %v6169, %v6170
        %vm6172 = vcmp.lt.s32.totalorder %v6153, 1
        %vm6173 = vcmp.lt.s32.totalorder %v6153, 2
        %vm6174 = vcmp.lt.s32.totalorder %v6153, 3
        %vm6175 = vcmp.lt.s32.totalorder %v6153, 4
        %v6176 = vsel %vm6172, %v6156, %v6159
        %v6177 = vsel %vm6175, %v6165, 2102212464
        %v6178 = vsel %vm6174, %v6162, %v6177
        %v6179 = vsel %vm6173, %v6176, %v6178
        %v6180 = vsel %vm6172, %v6159, %v6162
        %v6181 = vsel %vm6175, %v6168, 920167782
        %v6182 = vsel %vm6174, %v6165, %v6181
        %v6183 = vsel %vm6173, %v6180, %v6182
        %v6184 = vsel %vm6172, %v6162, %v6165
        %v6185 = vsel %vm6175, %v6171, 1326507024
        %v6186 = vsel %vm6174, %v6168, %v6185
        %v6187 = vsel %vm6173, %v6184, %v6186
        %v6188 = vshll.u32 %v6148, 8
        %v6189 = vand.u32 %v6188, 65535
        %v6190 = vshrl.u32 %v6188, 16
        %v6191 = vand.u32 %v6187, 65535
        %v6192 = vshrl.u32 %v6187, 16
        %v6193 = vmul.u32 %v6189, %v6191
        %v6194 = vmul.u32 %v6189, %v6192
        %v6195 = vmul.u32 %v6190, %v6191
        %v6196 = vmul.u32 %v6190, %v6192
        %v6197 = vshll.u32 %v6194, 16
        %v6198 = vshrl.u32 %v6194, 16
        %v6199 = vshll.u32 %v6195, 16
        %v6200 = vshrl.u32 %v6195, 16
        %vm6201 = vc.u32 %v6193, %v6197
        %v6202 = vsel %vm6201, 1, 0
        %v6203 = vadd.s32 %v6193, %v6197
        %v6204 = vadd.s32 %v6196, %v6202
        %vm6205 = vc.u32 %v6203, %v6199
        %v6206 = vsel %vm6205, 1, 0
        %v6207 = vadd.s32 %v6203, %v6199
        %v6208 = vadd.s32 %v6204, %v6206
        %v6209 = vadd.s32 %v6208, %v6198
        %v6210 = vadd.s32 %v6209, %v6200
        %v6211 = vand.u32 %v6188, 65535
        %v6212 = vshrl.u32 %v6188, 16
        %v6213 = vand.u32 %v6183, 65535
        %v6214 = vshrl.u32 %v6183, 16
        %v6215 = vmul.u32 %v6211, %v6213
        %v6216 = vmul.u32 %v6211, %v6214
        %v6217 = vmul.u32 %v6212, %v6213
        %v6218 = vmul.u32 %v6212, %v6214
        %v6219 = vshll.u32 %v6216, 16
        %v6220 = vshrl.u32 %v6216, 16
        %v6221 = vshll.u32 %v6217, 16
        %v6222 = vshrl.u32 %v6217, 16
        %vm6223 = vc.u32 %v6215, %v6219
        %v6224 = vsel %vm6223, 1, 0
        %v6225 = vadd.s32 %v6215, %v6219
        %v6226 = vadd.s32 %v6218, %v6224
        %vm6227 = vc.u32 %v6225, %v6221
        %v6228 = vsel %vm6227, 1, 0
        %v6229 = vadd.s32 %v6225, %v6221
        %v6230 = vadd.s32 %v6226, %v6228
        %v6231 = vadd.s32 %v6230, %v6220
        %v6232 = vadd.s32 %v6231, %v6222
        %v6233 = vmul.u32 %v6188, %v6179
        %v6234 = vadd.s32 %v6210, %v6229
        %vm6235 = vc.u32 %v6210, %v6229
        %v6236 = vadd.s32 %v6232, 1
        %v6237 = vsel %vm6235, %v6236, %v6232
        %v6238 = vadd.s32 %v6233, %v6237
        %v6239 = vadd.s32 %v6238, 536870912
        %v6240 = vshrl.u32 %v6239, 30
        %v6241 = vshll.u32 %v6240, 30
        %v6242 = vsub.s32 %v6238, %v6241
        %vm6243 = vcmp.lt.s32.totalorder %v6242, 0
        %v6244 = vsub.s32 0, %v6242
        %v6245 = vsel %vm6243, %v6244, %v6242
        %v6246 = vclz %v6245
        %v6247 = vsub.s32 %v6246, 2
        %vm6248 = vcmp.gt.s32.totalorder 0, %v6247
        %v6249 = vsel %vm6248, 0, %v6247
        %v6250 = vsub.s32 32, %v6249
        %v6251 = vshll.u32 %v6242, %v6249
        %v6252 = vshrl.u32 %v6234, %v6250
        %v6253 = vor.u32 %v6251, %v6252
        %v6254 = vsub.s32 4294967266, %v6249
        %v6255 = vadd.s32 %v6254, 127
        %v6256 = vshll.u32 %v6255, 23
        %v6257 = vor.u32 4788187, %v6256
        %v6258 = vand.u32 2147483647, %v6257
        %v6260 = vcvt.s32.f32 %v6253
        %v6261 = vmul.f32 %v6260, %v6258
        %v6262 = vxor.u32 %v6261, 2147483648
        %v6263 = vsel %vm6142, %v6262, %v6261
        %v6264 = vsub.s32 4, %v6240
        %v6265 = vsel %vm6142, %v6264, %v6240
        %v6266 = vsel %vm6141, %v337, %v6263
        %v6267 = vsel %vm6141, 0, %v6265
        %v6268 = vmul.f32 %v6266, %v6266
        %v6269 = vmul.f32 %v6268, -0.001358992
        %v6270 = vadd.f32 %v6269, 0.041655596
        %v6271 = vmul.f32 %v6268, %v6270
        %v6272 = vadd.f32 %v6271, -0.4999988
        %v6273 = vmul.f32 %v6268, %v6272
        %v6274 = vadd.f32 1.0, %v6273
        %v6275 = vmul.f32 %v6266, %v6266
        %v6276 = vmul.f32 %v6275, -0.00019511016
        %v6277 = vadd.f32 %v6276, 0.008332121
        %v6278 = vmul.f32 %v6275, %v6277
        %v6279 = vadd.f32 %v6278, -0.16666654
        %v6280 = vmul.f32 %v6275, %v6279
        %v6281 = vadd.f32 %v6280, 1.0
        %v6282 = vmul.f32 %v6281, %v6266
        %vm6283 = vweird.f32 %v337
        %v6284 = vand.u32 %v6267, 3
        %vm6285 = vcmp.lt.s32.totalorder %v6284, 2
        %vm6286 = vcmp.eq.s32.totalorder %v6284, 0
        %v6287 = vxor.u32 %v6282, 2147483648
        %v6288 = vsel %vm6286, %v6274, %v6287
        %vm6289 = vcmp.eq.s32.totalorder %v6284, 2
        %v6290 = vxor.u32 %v6274, 2147483648
        %v6291 = vsel %vm6289, %v6290, %v6282
        %v6292 = vsel %vm6285, %v6288, %v6291
        %v6293 = vsel %vm6283, nan, %v6292
        %v6294 = vand.u32 2147483647, %v275
        %vm6295 = vcmp.le.f32.partialorder %v6294, 0.7853982
        %vm6296 = vcmp.lt.s32.totalorder %v275, 0
        %v6297 = vand.u32 %v275, 2139095040
        %v6298 = vshrl.u32 %v6297, 23
        %v6299 = vsub.s32 %v6298, 127
        %v6300 = vand.u32 2147483647, %v275
        %v6301 = vand.u32 %v6300, 8388607
        %v6302 = vor.u32 %v6301, 8388608
        %v6303 = vsub.s32 0, %v6302
        %v6304 = vadd.s32 %v6299, 1
        %vm6305 = vcmp.gt.s32.totalorder %v6304, 0
        %v6306 = vsel %vm6305, %v6304, 0
        %v6307 = vshrl.u32 %v6306, 5
        %v6308 = vand.u32 %v6306, 31
        %v6309 = vsub.s32 32, %v6308
        %v6310 = vshrl.u32 683565275, %v6309
        %v6311 = vshll.u32 683565275, %v6308
        %v6312 = vshrl.u32 2475754826, %v6309
        %v6313 = vor.u32 %v6311, %v6312
        %v6314 = vshll.u32 2475754826, %v6308
        %v6315 = vshrl.u32 2131351028, %v6309
        %v6316 = vor.u32 %v6314, %v6315
        %v6317 = vshll.u32 2131351028, %v6308
        %v6318 = vshrl.u32 2102212464, %v6309
        %v6319 = vor.u32 %v6317, %v6318
        %v6320 = vshll.u32 2102212464, %v6308
        %v6321 = vshrl.u32 920167782, %v6309
        %v6322 = vor.u32 %v6320, %v6321
        %v6323 = vshll.u32 920167782, %v6308
        %v6324 = vshrl.u32 1326507024, %v6309
        %v6325 = vor.u32 %v6323, %v6324
        %vm6326 = vcmp.lt.s32.totalorder %v6307, 1
        %vm6327 = vcmp.lt.s32.totalorder %v6307, 2
        %vm6328 = vcmp.lt.s32.totalorder %v6307, 3
        %vm6329 = vcmp.lt.s32.totalorder %v6307, 4
        %v6330 = vsel %vm6326, %v6310, %v6313
        %v6331 = vsel %vm6329, %v6319, 2102212464
        %v6332 = vsel %vm6328, %v6316, %v6331
        %v6333 = vsel %vm6327, %v6330, %v6332
        %v6334 = vsel %vm6326, %v6313, %v6316
        %v6335 = vsel %vm6329, %v6322, 920167782
        %v6336 = vsel %vm6328, %v6319, %v6335
        %v6337 = vsel %vm6327, %v6334, %v6336
        %v6338 = vsel %vm6326, %v6316, %v6319
        %v6339 = vsel %vm6329, %v6325, 1326507024
        %v6340 = vsel %vm6328, %v6322, %v6339
        %v6341 = vsel %vm6327, %v6338, %v6340
        %v6342 = vshll.u32 %v6302, 8
        %v6343 = vand.u32 %v6342, 65535
        %v6344 = vshrl.u32 %v6342, 16
        %v6345 = vand.u32 %v6341, 65535
        %v6346 = vshrl.u32 %v6341, 16
        %v6347 = vmul.u32 %v6343, %v6345
        %v6348 = vmul.u32 %v6343, %v6346
        %v6349 = vmul.u32 %v6344, %v6345
        %v6350 = vmul.u32 %v6344, %v6346
        %v6351 = vshll.u32 %v6348, 16
        %v6352 = vshrl.u32 %v6348, 16
        %v6353 = vshll.u32 %v6349, 16
        %v6354 = vshrl.u32 %v6349, 16
        %vm6355 = vc.u32 %v6347, %v6351
        %v6356 = vsel %vm6355, 1, 0
        %v6357 = vadd.s32 %v6347, %v6351
        %v6358 = vadd.s32 %v6350, %v6356
        %vm6359 = vc.u32 %v6357, %v6353
        %v6360 = vsel %vm6359, 1, 0
        %v6361 = vadd.s32 %v6357, %v6353
        %v6362 = vadd.s32 %v6358, %v6360
        %v6363 = vadd.s32 %v6362, %v6352
        %v6364 = vadd.s32 %v6363, %v6354
        %v6365 = vand.u32 %v6342, 65535
        %v6366 = vshrl.u32 %v6342, 16
        %v6367 = vand.u32 %v6337, 65535
        %v6368 = vshrl.u32 %v6337, 16
        %v6369 = vmul.u32 %v6365, %v6367
        %v6370 = vmul.u32 %v6365, %v6368
        %v6371 = vmul.u32 %v6366, %v6367
        %v6372 = vmul.u32 %v6366, %v6368
        %v6373 = vshll.u32 %v6370, 16
        %v6374 = vshrl.u32 %v6370, 16
        %v6375 = vshll.u32 %v6371, 16
        %v6376 = vshrl.u32 %v6371, 16
        %vm6377 = vc.u32 %v6369, %v6373
        %v6378 = vsel %vm6377, 1, 0
        %v6379 = vadd.s32 %v6369, %v6373
        %v6380 = vadd.s32 %v6372, %v6378
        %vm6381 = vc.u32 %v6379, %v6375
        %v6382 = vsel %vm6381, 1, 0
        %v6383 = vadd.s32 %v6379, %v6375
        %v6384 = vadd.s32 %v6380, %v6382
        %v6385 = vadd.s32 %v6384, %v6374
        %v6386 = vadd.s32 %v6385, %v6376
        %v6387 = vmul.u32 %v6342, %v6333
        %v6388 = vadd.s32 %v6364, %v6383
        %vm6389 = vc.u32 %v6364, %v6383
        %v6390 = vadd.s32 %v6386, 1
        %v6391 = vsel %vm6389, %v6390, %v6386
        %v6392 = vadd.s32 %v6387, %v6391
        %v6393 = vadd.s32 %v6392, 536870912
        %v6394 = vshrl.u32 %v6393, 30
        %v6395 = vshll.u32 %v6394, 30
        %v6396 = vsub.s32 %v6392, %v6395
        %vm6397 = vcmp.lt.s32.totalorder %v6396, 0
        %v6398 = vsub.s32 0, %v6396
        %v6399 = vsel %vm6397, %v6398, %v6396
        %v6400 = vclz %v6399
        %v6401 = vsub.s32 %v6400, 2
        %vm6402 = vcmp.gt.s32.totalorder 0, %v6401
        %v6403 = vsel %vm6402, 0, %v6401
        %v6404 = vsub.s32 32, %v6403
        %v6405 = vshll.u32 %v6396, %v6403
        %v6406 = vshrl.u32 %v6388, %v6404
        %v6407 = vor.u32 %v6405, %v6406
        %v6408 = vsub.s32 4294967266, %v6403
        %v6409 = vadd.s32 %v6408, 127
        %v6410 = vshll.u32 %v6409, 23
        %v6411 = vor.u32 4788187, %v6410
        %v6412 = vand.u32 2147483647, %v6411
        %v6414 = vcvt.s32.f32 %v6407
        %v6415 = vmul.f32 %v6414, %v6412
        %v6416 = vxor.u32 %v6415, 2147483648
        %v6417 = vsel %vm6296, %v6416, %v6415
        %v6418 = vsub.s32 4, %v6394
        %v6419 = vsel %vm6296, %v6418, %v6394
        %v6420 = vsel %vm6295, %v275, %v6417
        %v6421 = vsel %vm6295, 0, %v6419
        %v6422 = vmul.f32 %v6420, %v6420
        %v6423 = vmul.f32 %v6422, -0.001358992
        %v6424 = vadd.f32 %v6423, 0.041655596
        %v6425 = vmul.f32 %v6422, %v6424
        %v6426 = vadd.f32 %v6425, -0.4999988
        %v6427 = vmul.f32 %v6422, %v6426
        %v6428 = vadd.f32 1.0, %v6427
        %v6429 = vmul.f32 %v6420, %v6420
        %v6430 = vmul.f32 %v6429, -0.00019511016
        %v6431 = vadd.f32 %v6430, 0.008332121
        %v6432 = vmul.f32 %v6429, %v6431
        %v6433 = vadd.f32 %v6432, -0.16666654
        %v6434 = vmul.f32 %v6429, %v6433
        %v6435 = vadd.f32 %v6434, 1.0
        %v6436 = vmul.f32 %v6435, %v6420
        %vm6437 = vweird.f32 %v275
        %v6438 = vand.u32 %v6421, 3
        %vm6439 = vcmp.lt.s32.totalorder %v6438, 2
        %vm6440 = vcmp.eq.s32.totalorder %v6438, 0
        %v6441 = vxor.u32 %v6436, 2147483648
        %v6442 = vsel %vm6440, %v6428, %v6441
        %vm6443 = vcmp.eq.s32.totalorder %v6438, 2
        %v6444 = vxor.u32 %v6428, 2147483648
        %v6445 = vsel %vm6443, %v6444, %v6436
        %v6446 = vsel %vm6439, %v6442, %v6445
        %v6447 = vsel %vm6437, nan, %v6446
        %v6448 = vand.u32 2147483647, %v340
        %vm6449 = vcmp.le.f32.partialorder %v6448, 0.7853982
        %vm6450 = vcmp.lt.s32.totalorder %v340, 0
        %v6451 = vand.u32 %v340, 2139095040
        %v6452 = vshrl.u32 %v6451, 23
        %v6453 = vsub.s32 %v6452, 127
        %v6454 = vand.u32 2147483647, %v340
        %v6455 = vand.u32 %v6454, 8388607
        %v6456 = vor.u32 %v6455, 8388608
        %v6457 = vsub.s32 0, %v6456
        %v6458 = vadd.s32 %v6453, 1
        %vm6459 = vcmp.gt.s32.totalorder %v6458, 0
        %v6460 = vsel %vm6459, %v6458, 0
        %v6461 = vshrl.u32 %v6460, 5
        %v6462 = vand.u32 %v6460, 31
        %v6463 = vsub.s32 32, %v6462
        %v6464 = vshrl.u32 683565275, %v6463
        %v6465 = vshll.u32 683565275, %v6462
        %v6466 = vshrl.u32 2475754826, %v6463
        %v6467 = vor.u32 %v6465, %v6466
        %v6468 = vshll.u32 2475754826, %v6462
        %v6469 = vshrl.u32 2131351028, %v6463
        %v6470 = vor.u32 %v6468, %v6469
        %v6471 = vshll.u32 2131351028, %v6462
        %v6472 = vshrl.u32 2102212464, %v6463
        %v6473 = vor.u32 %v6471, %v6472
        %v6474 = vshll.u32 2102212464, %v6462
        %v6475 = vshrl.u32 920167782, %v6463
        %v6476 = vor.u32 %v6474, %v6475
        %v6477 = vshll.u32 920167782, %v6462
        %v6478 = vshrl.u32 1326507024, %v6463
        %v6479 = vor.u32 %v6477, %v6478
        %vm6480 = vcmp.lt.s32.totalorder %v6461, 1
        %vm6481 = vcmp.lt.s32.totalorder %v6461, 2
        %vm6482 = vcmp.lt.s32.totalorder %v6461, 3
        %vm6483 = vcmp.lt.s32.totalorder %v6461, 4
        %v6484 = vsel %vm6480, %v6464, %v6467
        %v6485 = vsel %vm6483, %v6473, 2102212464
        %v6486 = vsel %vm6482, %v6470, %v6485
        %v6487 = vsel %vm6481, %v6484, %v6486
        %v6488 = vsel %vm6480, %v6467, %v6470
        %v6489 = vsel %vm6483, %v6476, 920167782
        %v6490 = vsel %vm6482, %v6473, %v6489
        %v6491 = vsel %vm6481, %v6488, %v6490
        %v6492 = vsel %vm6480, %v6470, %v6473
        %v6493 = vsel %vm6483, %v6479, 1326507024
        %v6494 = vsel %vm6482, %v6476, %v6493
        %v6495 = vsel %vm6481, %v6492, %v6494
        %v6496 = vshll.u32 %v6456, 8
        %v6497 = vand.u32 %v6496, 65535
        %v6498 = vshrl.u32 %v6496, 16
        %v6499 = vand.u32 %v6495, 65535
        %v6500 = vshrl.u32 %v6495, 16
        %v6501 = vmul.u32 %v6497, %v6499
        %v6502 = vmul.u32 %v6497, %v6500
        %v6503 = vmul.u32 %v6498, %v6499
        %v6504 = vmul.u32 %v6498, %v6500
        %v6505 = vshll.u32 %v6502, 16
        %v6506 = vshrl.u32 %v6502, 16
        %v6507 = vshll.u32 %v6503, 16
        %v6508 = vshrl.u32 %v6503, 16
        %vm6509 = vc.u32 %v6501, %v6505
        %v6510 = vsel %vm6509, 1, 0
        %v6511 = vadd.s32 %v6501, %v6505
        %v6512 = vadd.s32 %v6504, %v6510
        %vm6513 = vc.u32 %v6511, %v6507
        %v6514 = vsel %vm6513, 1, 0
        %v6515 = vadd.s32 %v6511, %v6507
        %v6516 = vadd.s32 %v6512, %v6514
        %v6517 = vadd.s32 %v6516, %v6506
        %v6518 = vadd.s32 %v6517, %v6508
        %v6519 = vand.u32 %v6496, 65535
        %v6520 = vshrl.u32 %v6496, 16
        %v6521 = vand.u32 %v6491, 65535
        %v6522 = vshrl.u32 %v6491, 16
        %v6523 = vmul.u32 %v6519, %v6521
        %v6524 = vmul.u32 %v6519, %v6522
        %v6525 = vmul.u32 %v6520, %v6521
        %v6526 = vmul.u32 %v6520, %v6522
        %v6527 = vshll.u32 %v6524, 16
        %v6528 = vshrl.u32 %v6524, 16
        %v6529 = vshll.u32 %v6525, 16
        %v6530 = vshrl.u32 %v6525, 16
        %vm6531 = vc.u32 %v6523, %v6527
        %v6532 = vsel %vm6531, 1, 0
        %v6533 = vadd.s32 %v6523, %v6527
        %v6534 = vadd.s32 %v6526, %v6532
        %vm6535 = vc.u32 %v6533, %v6529
        %v6536 = vsel %vm6535, 1, 0
        %v6537 = vadd.s32 %v6533, %v6529
        %v6538 = vadd.s32 %v6534, %v6536
        %v6539 = vadd.s32 %v6538, %v6528
        %v6540 = vadd.s32 %v6539, %v6530
        %v6541 = vmul.u32 %v6496, %v6487
        %v6542 = vadd.s32 %v6518, %v6537
        %vm6543 = vc.u32 %v6518, %v6537
        %v6544 = vadd.s32 %v6540, 1
        %v6545 = vsel %vm6543, %v6544, %v6540
        %v6546 = vadd.s32 %v6541, %v6545
        %v6547 = vadd.s32 %v6546, 536870912
        %v6548 = vshrl.u32 %v6547, 30
        %v6549 = vshll.u32 %v6548, 30
        %v6550 = vsub.s32 %v6546, %v6549
        %vm6551 = vcmp.lt.s32.totalorder %v6550, 0
        %v6552 = vsub.s32 0, %v6550
        %v6553 = vsel %vm6551, %v6552, %v6550
        %v6554 = vclz %v6553
        %v6555 = vsub.s32 %v6554, 2
        %vm6556 = vcmp.gt.s32.totalorder 0, %v6555
        %v6557 = vsel %vm6556, 0, %v6555
        %v6558 = vsub.s32 32, %v6557
        %v6559 = vshll.u32 %v6550, %v6557
        %v6560 = vshrl.u32 %v6542, %v6558
        %v6561 = vor.u32 %v6559, %v6560
        %v6562 = vsub.s32 4294967266, %v6557
        %v6563 = vadd.s32 %v6562, 127
        %v6564 = vshll.u32 %v6563, 23
        %v6565 = vor.u32 4788187, %v6564
        %v6566 = vand.u32 2147483647, %v6565
        %v6568 = vcvt.s32.f32 %v6561
        %v6569 = vmul.f32 %v6568, %v6566
        %v6570 = vxor.u32 %v6569, 2147483648
        %v6571 = vsel %vm6450, %v6570, %v6569
        %v6572 = vsub.s32 4, %v6548
        %v6573 = vsel %vm6450, %v6572, %v6548
        %v6574 = vsel %vm6449, %v340, %v6571
        %v6575 = vsel %vm6449, 0, %v6573
        %v6576 = vmul.f32 %v6574, %v6574
        %v6577 = vmul.f32 %v6576, -0.001358992
        %v6578 = vadd.f32 %v6577, 0.041655596
        %v6579 = vmul.f32 %v6576, %v6578
        %v6580 = vadd.f32 %v6579, -0.4999988
        %v6581 = vmul.f32 %v6576, %v6580
        %v6582 = vadd.f32 1.0, %v6581
        %v6583 = vmul.f32 %v6574, %v6574
        %v6584 = vmul.f32 %v6583, -0.00019511016
        %v6585 = vadd.f32 %v6584, 0.008332121
        %v6586 = vmul.f32 %v6583, %v6585
        %v6587 = vadd.f32 %v6586, -0.16666654
        %v6588 = vmul.f32 %v6583, %v6587
        %v6589 = vadd.f32 %v6588, 1.0
        %v6590 = vmul.f32 %v6589, %v6574
        %vm6591 = vweird.f32 %v340
        %v6592 = vand.u32 %v6575, 3
        %vm6593 = vcmp.lt.s32.totalorder %v6592, 2
        %vm6594 = vcmp.eq.s32.totalorder %v6592, 0
        %v6595 = vxor.u32 %v6590, 2147483648
        %v6596 = vsel %vm6594, %v6582, %v6595
        %vm6597 = vcmp.eq.s32.totalorder %v6592, 2
        %v6598 = vxor.u32 %v6582, 2147483648
        %v6599 = vsel %vm6597, %v6598, %v6590
        %v6600 = vsel %vm6593, %v6596, %v6599
        %v6601 = vsel %vm6591, nan, %v6600
        %v6602 = vand.u32 2147483647, %v278
        %vm6603 = vcmp.le.f32.partialorder %v6602, 0.7853982
        %vm6604 = vcmp.lt.s32.totalorder %v278, 0
        %v6605 = vand.u32 %v278, 2139095040
        %v6606 = vshrl.u32 %v6605, 23
        %v6607 = vsub.s32 %v6606, 127
        %v6608 = vand.u32 2147483647, %v278
        %v6609 = vand.u32 %v6608, 8388607
        %v6610 = vor.u32 %v6609, 8388608
        %v6611 = vsub.s32 0, %v6610
        %v6612 = vadd.s32 %v6607, 1
        %vm6613 = vcmp.gt.s32.totalorder %v6612, 0
        %v6614 = vsel %vm6613, %v6612, 0
        %v6615 = vshrl.u32 %v6614, 5
        %v6616 = vand.u32 %v6614, 31
        %v6617 = vsub.s32 32, %v6616
        %v6618 = vshrl.u32 683565275, %v6617
        %v6619 = vshll.u32 683565275, %v6616
        %v6620 = vshrl.u32 2475754826, %v6617
        %v6621 = vor.u32 %v6619, %v6620
        %v6622 = vshll.u32 2475754826, %v6616
        %v6623 = vshrl.u32 2131351028, %v6617
        %v6624 = vor.u32 %v6622, %v6623
        %v6625 = vshll.u32 2131351028, %v6616
        %v6626 = vshrl.u32 2102212464, %v6617
        %v6627 = vor.u32 %v6625, %v6626
        %v6628 = vshll.u32 2102212464, %v6616
        %v6629 = vshrl.u32 920167782, %v6617
        %v6630 = vor.u32 %v6628, %v6629
        %v6631 = vshll.u32 920167782, %v6616
        %v6632 = vshrl.u32 1326507024, %v6617
        %v6633 = vor.u32 %v6631, %v6632
        %vm6634 = vcmp.lt.s32.totalorder %v6615, 1
        %vm6635 = vcmp.lt.s32.totalorder %v6615, 2
        %vm6636 = vcmp.lt.s32.totalorder %v6615, 3
        %vm6637 = vcmp.lt.s32.totalorder %v6615, 4
        %v6638 = vsel %vm6634, %v6618, %v6621
        %v6639 = vsel %vm6637, %v6627, 2102212464
        %v6640 = vsel %vm6636, %v6624, %v6639
        %v6641 = vsel %vm6635, %v6638, %v6640
        %v6642 = vsel %vm6634, %v6621, %v6624
        %v6643 = vsel %vm6637, %v6630, 920167782
        %v6644 = vsel %vm6636, %v6627, %v6643
        %v6645 = vsel %vm6635, %v6642, %v6644
        %v6646 = vsel %vm6634, %v6624, %v6627
        %v6647 = vsel %vm6637, %v6633, 1326507024
        %v6648 = vsel %vm6636, %v6630, %v6647
        %v6649 = vsel %vm6635, %v6646, %v6648
        %v6650 = vshll.u32 %v6610, 8
        %v6651 = vand.u32 %v6650, 65535
        %v6652 = vshrl.u32 %v6650, 16
        %v6653 = vand.u32 %v6649, 65535
        %v6654 = vshrl.u32 %v6649, 16
        %v6655 = vmul.u32 %v6651, %v6653
        %v6656 = vmul.u32 %v6651, %v6654
        %v6657 = vmul.u32 %v6652, %v6653
        %v6658 = vmul.u32 %v6652, %v6654
        %v6659 = vshll.u32 %v6656, 16
        %v6660 = vshrl.u32 %v6656, 16
        %v6661 = vshll.u32 %v6657, 16
        %v6662 = vshrl.u32 %v6657, 16
        %vm6663 = vc.u32 %v6655, %v6659
        %v6664 = vsel %vm6663, 1, 0
        %v6665 = vadd.s32 %v6655, %v6659
        %v6666 = vadd.s32 %v6658, %v6664
        %vm6667 = vc.u32 %v6665, %v6661
        %v6668 = vsel %vm6667, 1, 0
        %v6669 = vadd.s32 %v6665, %v6661
        %v6670 = vadd.s32 %v6666, %v6668
        %v6671 = vadd.s32 %v6670, %v6660
        %v6672 = vadd.s32 %v6671, %v6662
        %v6673 = vand.u32 %v6650, 65535
        %v6674 = vshrl.u32 %v6650, 16
        %v6675 = vand.u32 %v6645, 65535
        %v6676 = vshrl.u32 %v6645, 16
        %v6677 = vmul.u32 %v6673, %v6675
        %v6678 = vmul.u32 %v6673, %v6676
        %v6679 = vmul.u32 %v6674, %v6675
        %v6680 = vmul.u32 %v6674, %v6676
        %v6681 = vshll.u32 %v6678, 16
        %v6682 = vshrl.u32 %v6678, 16
        %v6683 = vshll.u32 %v6679, 16
        %v6684 = vshrl.u32 %v6679, 16
        %vm6685 = vc.u32 %v6677, %v6681
        %v6686 = vsel %vm6685, 1, 0
        %v6687 = vadd.s32 %v6677, %v6681
        %v6688 = vadd.s32 %v6680, %v6686
        %vm6689 = vc.u32 %v6687, %v6683
        %v6690 = vsel %vm6689, 1, 0
        %v6691 = vadd.s32 %v6687, %v6683
        %v6692 = vadd.s32 %v6688, %v6690
        %v6693 = vadd.s32 %v6692, %v6682
        %v6694 = vadd.s32 %v6693, %v6684
        %v6695 = vmul.u32 %v6650, %v6641
        %v6696 = vadd.s32 %v6672, %v6691
        %vm6697 = vc.u32 %v6672, %v6691
        %v6698 = vadd.s32 %v6694, 1
        %v6699 = vsel %vm6697, %v6698, %v6694
        %v6700 = vadd.s32 %v6695, %v6699
        %v6701 = vadd.s32 %v6700, 536870912
        %v6702 = vshrl.u32 %v6701, 30
        %v6703 = vshll.u32 %v6702, 30
        %v6704 = vsub.s32 %v6700, %v6703
        %vm6705 = vcmp.lt.s32.totalorder %v6704, 0
        %v6706 = vsub.s32 0, %v6704
        %v6707 = vsel %vm6705, %v6706, %v6704
        %v6708 = vclz %v6707
        %v6709 = vsub.s32 %v6708, 2
        %vm6710 = vcmp.gt.s32.totalorder 0, %v6709
        %v6711 = vsel %vm6710, 0, %v6709
        %v6712 = vsub.s32 32, %v6711
        %v6713 = vshll.u32 %v6704, %v6711
        %v6714 = vshrl.u32 %v6696, %v6712
        %v6715 = vor.u32 %v6713, %v6714
        %v6716 = vsub.s32 4294967266, %v6711
        %v6717 = vadd.s32 %v6716, 127
        %v6718 = vshll.u32 %v6717, 23
        %v6719 = vor.u32 4788187, %v6718
        %v6720 = vand.u32 2147483647, %v6719
        %v6722 = vcvt.s32.f32 %v6715
        %v6723 = vmul.f32 %v6722, %v6720
        %v6724 = vxor.u32 %v6723, 2147483648
        %v6725 = vsel %vm6604, %v6724, %v6723
        %v6726 = vsub.s32 4, %v6702
        %v6727 = vsel %vm6604, %v6726, %v6702
        %v6728 = vsel %vm6603, %v278, %v6725
        %v6729 = vsel %vm6603, 0, %v6727
        %v6730 = vmul.f32 %v6728, %v6728
        %v6731 = vmul.f32 %v6730, -0.001358992
        %v6732 = vadd.f32 %v6731, 0.041655596
        %v6733 = vmul.f32 %v6730, %v6732
        %v6734 = vadd.f32 %v6733, -0.4999988
        %v6735 = vmul.f32 %v6730, %v6734
        %v6736 = vadd.f32 1.0, %v6735
        %v6737 = vmul.f32 %v6728, %v6728
        %v6738 = vmul.f32 %v6737, -0.00019511016
        %v6739 = vadd.f32 %v6738, 0.008332121
        %v6740 = vmul.f32 %v6737, %v6739
        %v6741 = vadd.f32 %v6740, -0.16666654
        %v6742 = vmul.f32 %v6737, %v6741
        %v6743 = vadd.f32 %v6742, 1.0
        %v6744 = vmul.f32 %v6743, %v6728
        %vm6745 = vweird.f32 %v278
        %v6746 = vand.u32 %v6729, 3
        %vm6747 = vcmp.lt.s32.totalorder %v6746, 2
        %vm6748 = vcmp.eq.s32.totalorder %v6746, 0
        %v6749 = vxor.u32 %v6744, 2147483648
        %v6750 = vsel %vm6748, %v6736, %v6749
        %vm6751 = vcmp.eq.s32.totalorder %v6746, 2
        %v6752 = vxor.u32 %v6736, 2147483648
        %v6753 = vsel %vm6751, %v6752, %v6744
        %v6754 = vsel %vm6747, %v6750, %v6753
        %v6755 = vsel %vm6745, nan, %v6754
        %v6756 = vand.u32 2147483647, %v343
        %vm6757 = vcmp.le.f32.partialorder %v6756, 0.7853982
        %vm6758 = vcmp.lt.s32.totalorder %v343, 0
        %v6759 = vand.u32 %v343, 2139095040
        %v6760 = vshrl.u32 %v6759, 23
        %v6761 = vsub.s32 %v6760, 127
        %v6762 = vand.u32 2147483647, %v343
        %v6763 = vand.u32 %v6762, 8388607
        %v6764 = vor.u32 %v6763, 8388608
        %v6765 = vsub.s32 0, %v6764
        %v6766 = vadd.s32 %v6761, 1
        %vm6767 = vcmp.gt.s32.totalorder %v6766, 0
        %v6768 = vsel %vm6767, %v6766, 0
        %v6769 = vshrl.u32 %v6768, 5
        %v6770 = vand.u32 %v6768, 31
        %v6771 = vsub.s32 32, %v6770
        %v6772 = vshrl.u32 683565275, %v6771
        %v6773 = vshll.u32 683565275, %v6770
        %v6774 = vshrl.u32 2475754826, %v6771
        %v6775 = vor.u32 %v6773, %v6774
        %v6776 = vshll.u32 2475754826, %v6770
        %v6777 = vshrl.u32 2131351028, %v6771
        %v6778 = vor.u32 %v6776, %v6777
        %v6779 = vshll.u32 2131351028, %v6770
        %v6780 = vshrl.u32 2102212464, %v6771
        %v6781 = vor.u32 %v6779, %v6780
        %v6782 = vshll.u32 2102212464, %v6770
        %v6783 = vshrl.u32 920167782, %v6771
        %v6784 = vor.u32 %v6782, %v6783
        %v6785 = vshll.u32 920167782, %v6770
        %v6786 = vshrl.u32 1326507024, %v6771
        %v6787 = vor.u32 %v6785, %v6786
        %vm6788 = vcmp.lt.s32.totalorder %v6769, 1
        %vm6789 = vcmp.lt.s32.totalorder %v6769, 2
        %vm6790 = vcmp.lt.s32.totalorder %v6769, 3
        %vm6791 = vcmp.lt.s32.totalorder %v6769, 4
        %v6792 = vsel %vm6788, %v6772, %v6775
        %v6793 = vsel %vm6791, %v6781, 2102212464
        %v6794 = vsel %vm6790, %v6778, %v6793
        %v6795 = vsel %vm6789, %v6792, %v6794
        %v6796 = vsel %vm6788, %v6775, %v6778
        %v6797 = vsel %vm6791, %v6784, 920167782
        %v6798 = vsel %vm6790, %v6781, %v6797
        %v6799 = vsel %vm6789, %v6796, %v6798
        %v6800 = vsel %vm6788, %v6778, %v6781
        %v6801 = vsel %vm6791, %v6787, 1326507024
        %v6802 = vsel %vm6790, %v6784, %v6801
        %v6803 = vsel %vm6789, %v6800, %v6802
        %v6804 = vshll.u32 %v6764, 8
        %v6805 = vand.u32 %v6804, 65535
        %v6806 = vshrl.u32 %v6804, 16
        %v6807 = vand.u32 %v6803, 65535
        %v6808 = vshrl.u32 %v6803, 16
        %v6809 = vmul.u32 %v6805, %v6807
        %v6810 = vmul.u32 %v6805, %v6808
        %v6811 = vmul.u32 %v6806, %v6807
        %v6812 = vmul.u32 %v6806, %v6808
        %v6813 = vshll.u32 %v6810, 16
        %v6814 = vshrl.u32 %v6810, 16
        %v6815 = vshll.u32 %v6811, 16
        %v6816 = vshrl.u32 %v6811, 16
        %vm6817 = vc.u32 %v6809, %v6813
        %v6818 = vsel %vm6817, 1, 0
        %v6819 = vadd.s32 %v6809, %v6813
        %v6820 = vadd.s32 %v6812, %v6818
        %vm6821 = vc.u32 %v6819, %v6815
        %v6822 = vsel %vm6821, 1, 0
        %v6823 = vadd.s32 %v6819, %v6815
        %v6824 = vadd.s32 %v6820, %v6822
        %v6825 = vadd.s32 %v6824, %v6814
        %v6826 = vadd.s32 %v6825, %v6816
        %v6827 = vand.u32 %v6804, 65535
        %v6828 = vshrl.u32 %v6804, 16
        %v6829 = vand.u32 %v6799, 65535
        %v6830 = vshrl.u32 %v6799, 16
        %v6831 = vmul.u32 %v6827, %v6829
        %v6832 = vmul.u32 %v6827, %v6830
        %v6833 = vmul.u32 %v6828, %v6829
        %v6834 = vmul.u32 %v6828, %v6830
        %v6835 = vshll.u32 %v6832, 16
        %v6836 = vshrl.u32 %v6832, 16
        %v6837 = vshll.u32 %v6833, 16
        %v6838 = vshrl.u32 %v6833, 16
        %vm6839 = vc.u32 %v6831, %v6835
        %v6840 = vsel %vm6839, 1, 0
        %v6841 = vadd.s32 %v6831, %v6835
        %v6842 = vadd.s32 %v6834, %v6840
        %vm6843 = vc.u32 %v6841, %v6837
        %v6844 = vsel %vm6843, 1, 0
        %v6845 = vadd.s32 %v6841, %v6837
        %v6846 = vadd.s32 %v6842, %v6844
        %v6847 = vadd.s32 %v6846, %v6836
        %v6848 = vadd.s32 %v6847, %v6838
        %v6849 = vmul.u32 %v6804, %v6795
        %v6850 = vadd.s32 %v6826, %v6845
        %vm6851 = vc.u32 %v6826, %v6845
        %v6852 = vadd.s32 %v6848, 1
        %v6853 = vsel %vm6851, %v6852, %v6848
        %v6854 = vadd.s32 %v6849, %v6853
        %v6855 = vadd.s32 %v6854, 536870912
        %v6856 = vshrl.u32 %v6855, 30
        %v6857 = vshll.u32 %v6856, 30
        %v6858 = vsub.s32 %v6854, %v6857
        %vm6859 = vcmp.lt.s32.totalorder %v6858, 0
        %v6860 = vsub.s32 0, %v6858
        %v6861 = vsel %vm6859, %v6860, %v6858
        %v6862 = vclz %v6861
        %v6863 = vsub.s32 %v6862, 2
        %vm6864 = vcmp.gt.s32.totalorder 0, %v6863
        %v6865 = vsel %vm6864, 0, %v6863
        %v6866 = vsub.s32 32, %v6865
        %v6867 = vshll.u32 %v6858, %v6865
        %v6868 = vshrl.u32 %v6850, %v6866
        %v6869 = vor.u32 %v6867, %v6868
        %v6870 = vsub.s32 4294967266, %v6865
        %v6871 = vadd.s32 %v6870, 127
        %v6872 = vshll.u32 %v6871, 23
        %v6873 = vor.u32 4788187, %v6872
        %v6874 = vand.u32 2147483647, %v6873
        %v6876 = vcvt.s32.f32 %v6869
        %v6877 = vmul.f32 %v6876, %v6874
        %v6878 = vxor.u32 %v6877, 2147483648
        %v6879 = vsel %vm6758, %v6878, %v6877
        %v6880 = vsub.s32 4, %v6856
        %v6881 = vsel %vm6758, %v6880, %v6856
        %v6882 = vsel %vm6757, %v343, %v6879
        %v6883 = vsel %vm6757, 0, %v6881
        %v6884 = vmul.f32 %v6882, %v6882
        %v6885 = vmul.f32 %v6884, -0.001358992
        %v6886 = vadd.f32 %v6885, 0.041655596
        %v6887 = vmul.f32 %v6884, %v6886
        %v6888 = vadd.f32 %v6887, -0.4999988
        %v6889 = vmul.f32 %v6884, %v6888
        %v6890 = vadd.f32 1.0, %v6889
        %v6891 = vmul.f32 %v6882, %v6882
        %v6892 = vmul.f32 %v6891, -0.00019511016
        %v6893 = vadd.f32 %v6892, 0.008332121
        %v6894 = vmul.f32 %v6891, %v6893
        %v6895 = vadd.f32 %v6894, -0.16666654
        %v6896 = vmul.f32 %v6891, %v6895
        %v6897 = vadd.f32 %v6896, 1.0
        %v6898 = vmul.f32 %v6897, %v6882
        %vm6899 = vweird.f32 %v343
        %v6900 = vand.u32 %v6883, 3
        %vm6901 = vcmp.lt.s32.totalorder %v6900, 2
        %vm6902 = vcmp.eq.s32.totalorder %v6900, 0
        %v6903 = vxor.u32 %v6898, 2147483648
        %v6904 = vsel %vm6902, %v6890, %v6903
        %vm6905 = vcmp.eq.s32.totalorder %v6900, 2
        %v6906 = vxor.u32 %v6890, 2147483648
        %v6907 = vsel %vm6905, %v6906, %v6898
        %v6908 = vsel %vm6901, %v6904, %v6907
        %v6909 = vsel %vm6899, nan, %v6908
        %v6910 = vand.u32 2147483647, %v281
        %vm6911 = vcmp.le.f32.partialorder %v6910, 0.7853982
        %vm6912 = vcmp.lt.s32.totalorder %v281, 0
        %v6913 = vand.u32 %v281, 2139095040
        %v6914 = vshrl.u32 %v6913, 23
        %v6915 = vsub.s32 %v6914, 127
        %v6916 = vand.u32 2147483647, %v281
        %v6917 = vand.u32 %v6916, 8388607
        %v6918 = vor.u32 %v6917, 8388608
        %v6919 = vsub.s32 0, %v6918
        %v6920 = vadd.s32 %v6915, 1
        %vm6921 = vcmp.gt.s32.totalorder %v6920, 0
        %v6922 = vsel %vm6921, %v6920, 0
        %v6923 = vshrl.u32 %v6922, 5
        %v6924 = vand.u32 %v6922, 31
        %v6925 = vsub.s32 32, %v6924
        %v6926 = vshrl.u32 683565275, %v6925
        %v6927 = vshll.u32 683565275, %v6924
        %v6928 = vshrl.u32 2475754826, %v6925
        %v6929 = vor.u32 %v6927, %v6928
        %v6930 = vshll.u32 2475754826, %v6924
        %v6931 = vshrl.u32 2131351028, %v6925
        %v6932 = vor.u32 %v6930, %v6931
        %v6933 = vshll.u32 2131351028, %v6924
        %v6934 = vshrl.u32 2102212464, %v6925
        %v6935 = vor.u32 %v6933, %v6934
        %v6936 = vshll.u32 2102212464, %v6924
        %v6937 = vshrl.u32 920167782, %v6925
        %v6938 = vor.u32 %v6936, %v6937
        %v6939 = vshll.u32 920167782, %v6924
        %v6940 = vshrl.u32 1326507024, %v6925
        %v6941 = vor.u32 %v6939, %v6940
        %vm6942 = vcmp.lt.s32.totalorder %v6923, 1
        %vm6943 = vcmp.lt.s32.totalorder %v6923, 2
        %vm6944 = vcmp.lt.s32.totalorder %v6923, 3
        %vm6945 = vcmp.lt.s32.totalorder %v6923, 4
        %v6946 = vsel %vm6942, %v6926, %v6929
        %v6947 = vsel %vm6945, %v6935, 2102212464
        %v6948 = vsel %vm6944, %v6932, %v6947
        %v6949 = vsel %vm6943, %v6946, %v6948
        %v6950 = vsel %vm6942, %v6929, %v6932
        %v6951 = vsel %vm6945, %v6938, 920167782
        %v6952 = vsel %vm6944, %v6935, %v6951
        %v6953 = vsel %vm6943, %v6950, %v6952
        %v6954 = vsel %vm6942, %v6932, %v6935
        %v6955 = vsel %vm6945, %v6941, 1326507024
        %v6956 = vsel %vm6944, %v6938, %v6955
        %v6957 = vsel %vm6943, %v6954, %v6956
        %v6958 = vshll.u32 %v6918, 8
        %v6959 = vand.u32 %v6958, 65535
        %v6960 = vshrl.u32 %v6958, 16
        %v6961 = vand.u32 %v6957, 65535
        %v6962 = vshrl.u32 %v6957, 16
        %v6963 = vmul.u32 %v6959, %v6961
        %v6964 = vmul.u32 %v6959, %v6962
        %v6965 = vmul.u32 %v6960, %v6961
        %v6966 = vmul.u32 %v6960, %v6962
        %v6967 = vshll.u32 %v6964, 16
        %v6968 = vshrl.u32 %v6964, 16
        %v6969 = vshll.u32 %v6965, 16
        %v6970 = vshrl.u32 %v6965, 16
        %vm6971 = vc.u32 %v6963, %v6967
        %v6972 = vsel %vm6971, 1, 0
        %v6973 = vadd.s32 %v6963, %v6967
        %v6974 = vadd.s32 %v6966, %v6972
        %vm6975 = vc.u32 %v6973, %v6969
        %v6976 = vsel %vm6975, 1, 0
        %v6977 = vadd.s32 %v6973, %v6969
        %v6978 = vadd.s32 %v6974, %v6976
        %v6979 = vadd.s32 %v6978, %v6968
        %v6980 = vadd.s32 %v6979, %v6970
        %v6981 = vand.u32 %v6958, 65535
        %v6982 = vshrl.u32 %v6958, 16
        %v6983 = vand.u32 %v6953, 65535
        %v6984 = vshrl.u32 %v6953, 16
        %v6985 = vmul.u32 %v6981, %v6983
        %v6986 = vmul.u32 %v6981, %v6984
        %v6987 = vmul.u32 %v6982, %v6983
        %v6988 = vmul.u32 %v6982, %v6984
        %v6989 = vshll.u32 %v6986, 16
        %v6990 = vshrl.u32 %v6986, 16
        %v6991 = vshll.u32 %v6987, 16
        %v6992 = vshrl.u32 %v6987, 16
        %vm6993 = vc.u32 %v6985, %v6989
        %v6994 = vsel %vm6993, 1, 0
        %v6995 = vadd.s32 %v6985, %v6989
        %v6996 = vadd.s32 %v6988, %v6994
        %vm6997 = vc.u32 %v6995, %v6991
        %v6998 = vsel %vm6997, 1, 0
        %v6999 = vadd.s32 %v6995, %v6991
        %v7000 = vadd.s32 %v6996, %v6998
        %v7001 = vadd.s32 %v7000, %v6990
        %v7002 = vadd.s32 %v7001, %v6992
        %v7003 = vmul.u32 %v6958, %v6949
        %v7004 = vadd.s32 %v6980, %v6999
        %vm7005 = vc.u32 %v6980, %v6999
        %v7006 = vadd.s32 %v7002, 1
        %v7007 = vsel %vm7005, %v7006, %v7002
        %v7008 = vadd.s32 %v7003, %v7007
        %v7009 = vadd.s32 %v7008, 536870912
        %v7010 = vshrl.u32 %v7009, 30
        %v7011 = vshll.u32 %v7010, 30
        %v7012 = vsub.s32 %v7008, %v7011
        %vm7013 = vcmp.lt.s32.totalorder %v7012, 0
        %v7014 = vsub.s32 0, %v7012
        %v7015 = vsel %vm7013, %v7014, %v7012
        %v7016 = vclz %v7015
        %v7017 = vsub.s32 %v7016, 2
        %vm7018 = vcmp.gt.s32.totalorder 0, %v7017
        %v7019 = vsel %vm7018, 0, %v7017
        %v7020 = vsub.s32 32, %v7019
        %v7021 = vshll.u32 %v7012, %v7019
        %v7022 = vshrl.u32 %v7004, %v7020
        %v7023 = vor.u32 %v7021, %v7022
        %v7024 = vsub.s32 4294967266, %v7019
        %v7025 = vadd.s32 %v7024, 127
        %v7026 = vshll.u32 %v7025, 23
        %v7027 = vor.u32 4788187, %v7026
        %v7028 = vand.u32 2147483647, %v7027
        %v7030 = vcvt.s32.f32 %v7023
        %v7031 = vmul.f32 %v7030, %v7028
        %v7032 = vxor.u32 %v7031, 2147483648
        %v7033 = vsel %vm6912, %v7032, %v7031
        %v7034 = vsub.s32 4, %v7010
        %v7035 = vsel %vm6912, %v7034, %v7010
        %v7036 = vsel %vm6911, %v281, %v7033
        %v7037 = vsel %vm6911, 0, %v7035
        %v7038 = vmul.f32 %v7036, %v7036
        %v7039 = vmul.f32 %v7038, -0.001358992
        %v7040 = vadd.f32 %v7039, 0.041655596
        %v7041 = vmul.f32 %v7038, %v7040
        %v7042 = vadd.f32 %v7041, -0.4999988
        %v7043 = vmul.f32 %v7038, %v7042
        %v7044 = vadd.f32 1.0, %v7043
        %v7045 = vmul.f32 %v7036, %v7036
        %v7046 = vmul.f32 %v7045, -0.00019511016
        %v7047 = vadd.f32 %v7046, 0.008332121
        %v7048 = vmul.f32 %v7045, %v7047
        %v7049 = vadd.f32 %v7048, -0.16666654
        %v7050 = vmul.f32 %v7045, %v7049
        %v7051 = vadd.f32 %v7050, 1.0
        %v7052 = vmul.f32 %v7051, %v7036
        %vm7053 = vweird.f32 %v281
        %v7054 = vand.u32 %v7037, 3
        %vm7055 = vcmp.lt.s32.totalorder %v7054, 2
        %vm7056 = vcmp.eq.s32.totalorder %v7054, 0
        %v7057 = vxor.u32 %v7052, 2147483648
        %v7058 = vsel %vm7056, %v7044, %v7057
        %vm7059 = vcmp.eq.s32.totalorder %v7054, 2
        %v7060 = vxor.u32 %v7044, 2147483648
        %v7061 = vsel %vm7059, %v7060, %v7052
        %v7062 = vsel %vm7055, %v7058, %v7061
        %v7063 = vsel %vm7053, nan, %v7062
        %v7064 = vand.u32 2147483647, %v346
        %vm7065 = vcmp.le.f32.partialorder %v7064, 0.7853982
        %vm7066 = vcmp.lt.s32.totalorder %v346, 0
        %v7067 = vand.u32 %v346, 2139095040
        %v7068 = vshrl.u32 %v7067, 23
        %v7069 = vsub.s32 %v7068, 127
        %v7070 = vand.u32 2147483647, %v346
        %v7071 = vand.u32 %v7070, 8388607
        %v7072 = vor.u32 %v7071, 8388608
        %v7073 = vsub.s32 0, %v7072
        %v7074 = vadd.s32 %v7069, 1
        %vm7075 = vcmp.gt.s32.totalorder %v7074, 0
        %v7076 = vsel %vm7075, %v7074, 0
        %v7077 = vshrl.u32 %v7076, 5
        %v7078 = vand.u32 %v7076, 31
        %v7079 = vsub.s32 32, %v7078
        %v7080 = vshrl.u32 683565275, %v7079
        %v7081 = vshll.u32 683565275, %v7078
        %v7082 = vshrl.u32 2475754826, %v7079
        %v7083 = vor.u32 %v7081, %v7082
        %v7084 = vshll.u32 2475754826, %v7078
        %v7085 = vshrl.u32 2131351028, %v7079
        %v7086 = vor.u32 %v7084, %v7085
        %v7087 = vshll.u32 2131351028, %v7078
        %v7088 = vshrl.u32 2102212464, %v7079
        %v7089 = vor.u32 %v7087, %v7088
        %v7090 = vshll.u32 2102212464, %v7078
        %v7091 = vshrl.u32 920167782, %v7079
        %v7092 = vor.u32 %v7090, %v7091
        %v7093 = vshll.u32 920167782, %v7078
        %v7094 = vshrl.u32 1326507024, %v7079
        %v7095 = vor.u32 %v7093, %v7094
        %vm7096 = vcmp.lt.s32.totalorder %v7077, 1
        %vm7097 = vcmp.lt.s32.totalorder %v7077, 2
        %vm7098 = vcmp.lt.s32.totalorder %v7077, 3
        %vm7099 = vcmp.lt.s32.totalorder %v7077, 4
        %v7100 = vsel %vm7096, %v7080, %v7083
        %v7101 = vsel %vm7099, %v7089, 2102212464
        %v7102 = vsel %vm7098, %v7086, %v7101
        %v7103 = vsel %vm7097, %v7100, %v7102
        %v7104 = vsel %vm7096, %v7083, %v7086
        %v7105 = vsel %vm7099, %v7092, 920167782
        %v7106 = vsel %vm7098, %v7089, %v7105
        %v7107 = vsel %vm7097, %v7104, %v7106
        %v7108 = vsel %vm7096, %v7086, %v7089
        %v7109 = vsel %vm7099, %v7095, 1326507024
        %v7110 = vsel %vm7098, %v7092, %v7109
        %v7111 = vsel %vm7097, %v7108, %v7110
        %v7112 = vshll.u32 %v7072, 8
        %v7113 = vand.u32 %v7112, 65535
        %v7114 = vshrl.u32 %v7112, 16
        %v7115 = vand.u32 %v7111, 65535
        %v7116 = vshrl.u32 %v7111, 16
        %v7117 = vmul.u32 %v7113, %v7115
        %v7118 = vmul.u32 %v7113, %v7116
        %v7119 = vmul.u32 %v7114, %v7115
        %v7120 = vmul.u32 %v7114, %v7116
        %v7121 = vshll.u32 %v7118, 16
        %v7122 = vshrl.u32 %v7118, 16
        %v7123 = vshll.u32 %v7119, 16
        %v7124 = vshrl.u32 %v7119, 16
        %vm7125 = vc.u32 %v7117, %v7121
        %v7126 = vsel %vm7125, 1, 0
        %v7127 = vadd.s32 %v7117, %v7121
        %v7128 = vadd.s32 %v7120, %v7126
        %vm7129 = vc.u32 %v7127, %v7123
        %v7130 = vsel %vm7129, 1, 0
        %v7131 = vadd.s32 %v7127, %v7123
        %v7132 = vadd.s32 %v7128, %v7130
        %v7133 = vadd.s32 %v7132, %v7122
        %v7134 = vadd.s32 %v7133, %v7124
        %v7135 = vand.u32 %v7112, 65535
        %v7136 = vshrl.u32 %v7112, 16
        %v7137 = vand.u32 %v7107, 65535
        %v7138 = vshrl.u32 %v7107, 16
        %v7139 = vmul.u32 %v7135, %v7137
        %v7140 = vmul.u32 %v7135, %v7138
        %v7141 = vmul.u32 %v7136, %v7137
        %v7142 = vmul.u32 %v7136, %v7138
        %v7143 = vshll.u32 %v7140, 16
        %v7144 = vshrl.u32 %v7140, 16
        %v7145 = vshll.u32 %v7141, 16
        %v7146 = vshrl.u32 %v7141, 16
        %vm7147 = vc.u32 %v7139, %v7143
        %v7148 = vsel %vm7147, 1, 0
        %v7149 = vadd.s32 %v7139, %v7143
        %v7150 = vadd.s32 %v7142, %v7148
        %vm7151 = vc.u32 %v7149, %v7145
        %v7152 = vsel %vm7151, 1, 0
        %v7153 = vadd.s32 %v7149, %v7145
        %v7154 = vadd.s32 %v7150, %v7152
        %v7155 = vadd.s32 %v7154, %v7144
        %v7156 = vadd.s32 %v7155, %v7146
        %v7157 = vmul.u32 %v7112, %v7103
        %v7158 = vadd.s32 %v7134, %v7153
        %vm7159 = vc.u32 %v7134, %v7153
        %v7160 = vadd.s32 %v7156, 1
        %v7161 = vsel %vm7159, %v7160, %v7156
        %v7162 = vadd.s32 %v7157, %v7161
        %v7163 = vadd.s32 %v7162, 536870912
        %v7164 = vshrl.u32 %v7163, 30
        %v7165 = vshll.u32 %v7164, 30
        %v7166 = vsub.s32 %v7162, %v7165
        %vm7167 = vcmp.lt.s32.totalorder %v7166, 0
        %v7168 = vsub.s32 0, %v7166
        %v7169 = vsel %vm7167, %v7168, %v7166
        %v7170 = vclz %v7169
        %v7171 = vsub.s32 %v7170, 2
        %vm7172 = vcmp.gt.s32.totalorder 0, %v7171
        %v7173 = vsel %vm7172, 0, %v7171
        %v7174 = vsub.s32 32, %v7173
        %v7175 = vshll.u32 %v7166, %v7173
        %v7176 = vshrl.u32 %v7158, %v7174
        %v7177 = vor.u32 %v7175, %v7176
        %v7178 = vsub.s32 4294967266, %v7173
        %v7179 = vadd.s32 %v7178, 127
        %v7180 = vshll.u32 %v7179, 23
        %v7181 = vor.u32 4788187, %v7180
        %v7182 = vand.u32 2147483647, %v7181
        %v7184 = vcvt.s32.f32 %v7177
        %v7185 = vmul.f32 %v7184, %v7182
        %v7186 = vxor.u32 %v7185, 2147483648
        %v7187 = vsel %vm7066, %v7186, %v7185
        %v7188 = vsub.s32 4, %v7164
        %v7189 = vsel %vm7066, %v7188, %v7164
        %v7190 = vsel %vm7065, %v346, %v7187
        %v7191 = vsel %vm7065, 0, %v7189
        %v7192 = vmul.f32 %v7190, %v7190
        %v7193 = vmul.f32 %v7192, -0.001358992
        %v7194 = vadd.f32 %v7193, 0.041655596
        %v7195 = vmul.f32 %v7192, %v7194
        %v7196 = vadd.f32 %v7195, -0.4999988
        %v7197 = vmul.f32 %v7192, %v7196
        %v7198 = vadd.f32 1.0, %v7197
        %v7199 = vmul.f32 %v7190, %v7190
        %v7200 = vmul.f32 %v7199, -0.00019511016
        %v7201 = vadd.f32 %v7200, 0.008332121
        %v7202 = vmul.f32 %v7199, %v7201
        %v7203 = vadd.f32 %v7202, -0.16666654
        %v7204 = vmul.f32 %v7199, %v7203
        %v7205 = vadd.f32 %v7204, 1.0
        %v7206 = vmul.f32 %v7205, %v7190
        %vm7207 = vweird.f32 %v346
        %v7208 = vand.u32 %v7191, 3
        %vm7209 = vcmp.lt.s32.totalorder %v7208, 2
        %vm7210 = vcmp.eq.s32.totalorder %v7208, 0
        %v7211 = vxor.u32 %v7206, 2147483648
        %v7212 = vsel %vm7210, %v7198, %v7211
        %vm7213 = vcmp.eq.s32.totalorder %v7208, 2
        %v7214 = vxor.u32 %v7198, 2147483648
        %v7215 = vsel %vm7213, %v7214, %v7206
        %v7216 = vsel %vm7209, %v7212, %v7215
        %v7217 = vsel %vm7207, nan, %v7216
        %v7218 = vand.u32 2147483647, %v284
        %vm7219 = vcmp.le.f32.partialorder %v7218, 0.7853982
        %vm7220 = vcmp.lt.s32.totalorder %v284, 0
        %v7221 = vand.u32 %v284, 2139095040
        %v7222 = vshrl.u32 %v7221, 23
        %v7223 = vsub.s32 %v7222, 127
        %v7224 = vand.u32 2147483647, %v284
        %v7225 = vand.u32 %v7224, 8388607
        %v7226 = vor.u32 %v7225, 8388608
        %v7227 = vsub.s32 0, %v7226
        %v7228 = vadd.s32 %v7223, 1
        %vm7229 = vcmp.gt.s32.totalorder %v7228, 0
        %v7230 = vsel %vm7229, %v7228, 0
        %v7231 = vshrl.u32 %v7230, 5
        %v7232 = vand.u32 %v7230, 31
        %v7233 = vsub.s32 32, %v7232
        %v7234 = vshrl.u32 683565275, %v7233
        %v7235 = vshll.u32 683565275, %v7232
        %v7236 = vshrl.u32 2475754826, %v7233
        %v7237 = vor.u32 %v7235, %v7236
        %v7238 = vshll.u32 2475754826, %v7232
        %v7239 = vshrl.u32 2131351028, %v7233
        %v7240 = vor.u32 %v7238, %v7239
        %v7241 = vshll.u32 2131351028, %v7232
        %v7242 = vshrl.u32 2102212464, %v7233
        %v7243 = vor.u32 %v7241, %v7242
        %v7244 = vshll.u32 2102212464, %v7232
        %v7245 = vshrl.u32 920167782, %v7233
        %v7246 = vor.u32 %v7244, %v7245
        %v7247 = vshll.u32 920167782, %v7232
        %v7248 = vshrl.u32 1326507024, %v7233
        %v7249 = vor.u32 %v7247, %v7248
        %vm7250 = vcmp.lt.s32.totalorder %v7231, 1
        %vm7251 = vcmp.lt.s32.totalorder %v7231, 2
        %vm7252 = vcmp.lt.s32.totalorder %v7231, 3
        %vm7253 = vcmp.lt.s32.totalorder %v7231, 4
        %v7254 = vsel %vm7250, %v7234, %v7237
        %v7255 = vsel %vm7253, %v7243, 2102212464
        %v7256 = vsel %vm7252, %v7240, %v7255
        %v7257 = vsel %vm7251, %v7254, %v7256
        %v7258 = vsel %vm7250, %v7237, %v7240
        %v7259 = vsel %vm7253, %v7246, 920167782
        %v7260 = vsel %vm7252, %v7243, %v7259
        %v7261 = vsel %vm7251, %v7258, %v7260
        %v7262 = vsel %vm7250, %v7240, %v7243
        %v7263 = vsel %vm7253, %v7249, 1326507024
        %v7264 = vsel %vm7252, %v7246, %v7263
        %v7265 = vsel %vm7251, %v7262, %v7264
        %v7266 = vshll.u32 %v7226, 8
        %v7267 = vand.u32 %v7266, 65535
        %v7268 = vshrl.u32 %v7266, 16
        %v7269 = vand.u32 %v7265, 65535
        %v7270 = vshrl.u32 %v7265, 16
        %v7271 = vmul.u32 %v7267, %v7269
        %v7272 = vmul.u32 %v7267, %v7270
        %v7273 = vmul.u32 %v7268, %v7269
        %v7274 = vmul.u32 %v7268, %v7270
        %v7275 = vshll.u32 %v7272, 16
        %v7276 = vshrl.u32 %v7272, 16
        %v7277 = vshll.u32 %v7273, 16
        %v7278 = vshrl.u32 %v7273, 16
        %vm7279 = vc.u32 %v7271, %v7275
        %v7280 = vsel %vm7279, 1, 0
        %v7281 = vadd.s32 %v7271, %v7275
        %v7282 = vadd.s32 %v7274, %v7280
        %vm7283 = vc.u32 %v7281, %v7277
        %v7284 = vsel %vm7283, 1, 0
        %v7285 = vadd.s32 %v7281, %v7277
        %v7286 = vadd.s32 %v7282, %v7284
        %v7287 = vadd.s32 %v7286, %v7276
        %v7288 = vadd.s32 %v7287, %v7278
        %v7289 = vand.u32 %v7266, 65535
        %v7290 = vshrl.u32 %v7266, 16
        %v7291 = vand.u32 %v7261, 65535
        %v7292 = vshrl.u32 %v7261, 16
        %v7293 = vmul.u32 %v7289, %v7291
        %v7294 = vmul.u32 %v7289, %v7292
        %v7295 = vmul.u32 %v7290, %v7291
        %v7296 = vmul.u32 %v7290, %v7292
        %v7297 = vshll.u32 %v7294, 16
        %v7298 = vshrl.u32 %v7294, 16
        %v7299 = vshll.u32 %v7295, 16
        %v7300 = vshrl.u32 %v7295, 16
        %vm7301 = vc.u32 %v7293, %v7297
        %v7302 = vsel %vm7301, 1, 0
        %v7303 = vadd.s32 %v7293, %v7297
        %v7304 = vadd.s32 %v7296, %v7302
        %vm7305 = vc.u32 %v7303, %v7299
        %v7306 = vsel %vm7305, 1, 0
        %v7307 = vadd.s32 %v7303, %v7299
        %v7308 = vadd.s32 %v7304, %v7306
        %v7309 = vadd.s32 %v7308, %v7298
        %v7310 = vadd.s32 %v7309, %v7300
        %v7311 = vmul.u32 %v7266, %v7257
        %v7312 = vadd.s32 %v7288, %v7307
        %vm7313 = vc.u32 %v7288, %v7307
        %v7314 = vadd.s32 %v7310, 1
        %v7315 = vsel %vm7313, %v7314, %v7310
        %v7316 = vadd.s32 %v7311, %v7315
        %v7317 = vadd.s32 %v7316, 536870912
        %v7318 = vshrl.u32 %v7317, 30
        %v7319 = vshll.u32 %v7318, 30
        %v7320 = vsub.s32 %v7316, %v7319
        %vm7321 = vcmp.lt.s32.totalorder %v7320, 0
        %v7322 = vsub.s32 0, %v7320
        %v7323 = vsel %vm7321, %v7322, %v7320
        %v7324 = vclz %v7323
        %v7325 = vsub.s32 %v7324, 2
        %vm7326 = vcmp.gt.s32.totalorder 0, %v7325
        %v7327 = vsel %vm7326, 0, %v7325
        %v7328 = vsub.s32 32, %v7327
        %v7329 = vshll.u32 %v7320, %v7327
        %v7330 = vshrl.u32 %v7312, %v7328
        %v7331 = vor.u32 %v7329, %v7330
        %v7332 = vsub.s32 4294967266, %v7327
        %v7333 = vadd.s32 %v7332, 127
        %v7334 = vshll.u32 %v7333, 23
        %v7335 = vor.u32 4788187, %v7334
        %v7336 = vand.u32 2147483647, %v7335
        %v7338 = vcvt.s32.f32 %v7331
        %v7339 = vmul.f32 %v7338, %v7336
        %v7340 = vxor.u32 %v7339, 2147483648
        %v7341 = vsel %vm7220, %v7340, %v7339
        %v7342 = vsub.s32 4, %v7318
        %v7343 = vsel %vm7220, %v7342, %v7318
        %v7344 = vsel %vm7219, %v284, %v7341
        %v7345 = vsel %vm7219, 0, %v7343
        %v7346 = vmul.f32 %v7344, %v7344
        %v7347 = vmul.f32 %v7346, -0.001358992
        %v7348 = vadd.f32 %v7347, 0.041655596
        %v7349 = vmul.f32 %v7346, %v7348
        %v7350 = vadd.f32 %v7349, -0.4999988
        %v7351 = vmul.f32 %v7346, %v7350
        %v7352 = vadd.f32 1.0, %v7351
        %v7353 = vmul.f32 %v7344, %v7344
        %v7354 = vmul.f32 %v7353, -0.00019511016
        %v7355 = vadd.f32 %v7354, 0.008332121
        %v7356 = vmul.f32 %v7353, %v7355
        %v7357 = vadd.f32 %v7356, -0.16666654
        %v7358 = vmul.f32 %v7353, %v7357
        %v7359 = vadd.f32 %v7358, 1.0
        %v7360 = vmul.f32 %v7359, %v7344
        %vm7361 = vweird.f32 %v284
        %v7362 = vand.u32 %v7345, 3
        %vm7363 = vcmp.lt.s32.totalorder %v7362, 2
        %vm7364 = vcmp.eq.s32.totalorder %v7362, 0
        %v7365 = vxor.u32 %v7360, 2147483648
        %v7366 = vsel %vm7364, %v7352, %v7365
        %vm7367 = vcmp.eq.s32.totalorder %v7362, 2
        %v7368 = vxor.u32 %v7352, 2147483648
        %v7369 = vsel %vm7367, %v7368, %v7360
        %v7370 = vsel %vm7363, %v7366, %v7369
        %v7371 = vsel %vm7361, nan, %v7370
        %v7372 = vand.u32 2147483647, %v349
        %vm7373 = vcmp.le.f32.partialorder %v7372, 0.7853982
        %vm7374 = vcmp.lt.s32.totalorder %v349, 0
        %v7375 = vand.u32 %v349, 2139095040
        %v7376 = vshrl.u32 %v7375, 23
        %v7377 = vsub.s32 %v7376, 127
        %v7378 = vand.u32 2147483647, %v349
        %v7379 = vand.u32 %v7378, 8388607
        %v7380 = vor.u32 %v7379, 8388608
        %v7381 = vsub.s32 0, %v7380
        %v7382 = vadd.s32 %v7377, 1
        %vm7383 = vcmp.gt.s32.totalorder %v7382, 0
        %v7384 = vsel %vm7383, %v7382, 0
        %v7385 = vshrl.u32 %v7384, 5
        %v7386 = vand.u32 %v7384, 31
        %v7387 = vsub.s32 32, %v7386
        %v7388 = vshrl.u32 683565275, %v7387
        %v7389 = vshll.u32 683565275, %v7386
        %v7390 = vshrl.u32 2475754826, %v7387
        %v7391 = vor.u32 %v7389, %v7390
        %v7392 = vshll.u32 2475754826, %v7386
        %v7393 = vshrl.u32 2131351028, %v7387
        %v7394 = vor.u32 %v7392, %v7393
        %v7395 = vshll.u32 2131351028, %v7386
        %v7396 = vshrl.u32 2102212464, %v7387
        %v7397 = vor.u32 %v7395, %v7396
        %v7398 = vshll.u32 2102212464, %v7386
        %v7399 = vshrl.u32 920167782, %v7387
        %v7400 = vor.u32 %v7398, %v7399
        %v7401 = vshll.u32 920167782, %v7386
        %v7402 = vshrl.u32 1326507024, %v7387
        %v7403 = vor.u32 %v7401, %v7402
        %vm7404 = vcmp.lt.s32.totalorder %v7385, 1
        %vm7405 = vcmp.lt.s32.totalorder %v7385, 2
        %vm7406 = vcmp.lt.s32.totalorder %v7385, 3
        %vm7407 = vcmp.lt.s32.totalorder %v7385, 4
        %v7408 = vsel %vm7404, %v7388, %v7391
        %v7409 = vsel %vm7407, %v7397, 2102212464
        %v7410 = vsel %vm7406, %v7394, %v7409
        %v7411 = vsel %vm7405, %v7408, %v7410
        %v7412 = vsel %vm7404, %v7391, %v7394
        %v7413 = vsel %vm7407, %v7400, 920167782
        %v7414 = vsel %vm7406, %v7397, %v7413
        %v7415 = vsel %vm7405, %v7412, %v7414
        %v7416 = vsel %vm7404, %v7394, %v7397
        %v7417 = vsel %vm7407, %v7403, 1326507024
        %v7418 = vsel %vm7406, %v7400, %v7417
        %v7419 = vsel %vm7405, %v7416, %v7418
        %v7420 = vshll.u32 %v7380, 8
        %v7421 = vand.u32 %v7420, 65535
        %v7422 = vshrl.u32 %v7420, 16
        %v7423 = vand.u32 %v7419, 65535
        %v7424 = vshrl.u32 %v7419, 16
        %v7425 = vmul.u32 %v7421, %v7423
        %v7426 = vmul.u32 %v7421, %v7424
        %v7427 = vmul.u32 %v7422, %v7423
        %v7428 = vmul.u32 %v7422, %v7424
        %v7429 = vshll.u32 %v7426, 16
        %v7430 = vshrl.u32 %v7426, 16
        %v7431 = vshll.u32 %v7427, 16
        %v7432 = vshrl.u32 %v7427, 16
        %vm7433 = vc.u32 %v7425, %v7429
        %v7434 = vsel %vm7433, 1, 0
        %v7435 = vadd.s32 %v7425, %v7429
        %v7436 = vadd.s32 %v7428, %v7434
        %vm7437 = vc.u32 %v7435, %v7431
        %v7438 = vsel %vm7437, 1, 0
        %v7439 = vadd.s32 %v7435, %v7431
        %v7440 = vadd.s32 %v7436, %v7438
        %v7441 = vadd.s32 %v7440, %v7430
        %v7442 = vadd.s32 %v7441, %v7432
        %v7443 = vand.u32 %v7420, 65535
        %v7444 = vshrl.u32 %v7420, 16
        %v7445 = vand.u32 %v7415, 65535
        %v7446 = vshrl.u32 %v7415, 16
        %v7447 = vmul.u32 %v7443, %v7445
        %v7448 = vmul.u32 %v7443, %v7446
        %v7449 = vmul.u32 %v7444, %v7445
        %v7450 = vmul.u32 %v7444, %v7446
        %v7451 = vshll.u32 %v7448, 16
        %v7452 = vshrl.u32 %v7448, 16
        %v7453 = vshll.u32 %v7449, 16
        %v7454 = vshrl.u32 %v7449, 16
        %vm7455 = vc.u32 %v7447, %v7451
        %v7456 = vsel %vm7455, 1, 0
        %v7457 = vadd.s32 %v7447, %v7451
        %v7458 = vadd.s32 %v7450, %v7456
        %vm7459 = vc.u32 %v7457, %v7453
        %v7460 = vsel %vm7459, 1, 0
        %v7461 = vadd.s32 %v7457, %v7453
        %v7462 = vadd.s32 %v7458, %v7460
        %v7463 = vadd.s32 %v7462, %v7452
        %v7464 = vadd.s32 %v7463, %v7454
        %v7465 = vmul.u32 %v7420, %v7411
        %v7466 = vadd.s32 %v7442, %v7461
        %vm7467 = vc.u32 %v7442, %v7461
        %v7468 = vadd.s32 %v7464, 1
        %v7469 = vsel %vm7467, %v7468, %v7464
        %v7470 = vadd.s32 %v7465, %v7469
        %v7471 = vadd.s32 %v7470, 536870912
        %v7472 = vshrl.u32 %v7471, 30
        %v7473 = vshll.u32 %v7472, 30
        %v7474 = vsub.s32 %v7470, %v7473
        %vm7475 = vcmp.lt.s32.totalorder %v7474, 0
        %v7476 = vsub.s32 0, %v7474
        %v7477 = vsel %vm7475, %v7476, %v7474
        %v7478 = vclz %v7477
        %v7479 = vsub.s32 %v7478, 2
        %vm7480 = vcmp.gt.s32.totalorder 0, %v7479
        %v7481 = vsel %vm7480, 0, %v7479
        %v7482 = vsub.s32 32, %v7481
        %v7483 = vshll.u32 %v7474, %v7481
        %v7484 = vshrl.u32 %v7466, %v7482
        %v7485 = vor.u32 %v7483, %v7484
        %v7486 = vsub.s32 4294967266, %v7481
        %v7487 = vadd.s32 %v7486, 127
        %v7488 = vshll.u32 %v7487, 23
        %v7489 = vor.u32 4788187, %v7488
        %v7490 = vand.u32 2147483647, %v7489
        %v7492 = vcvt.s32.f32 %v7485
        %v7493 = vmul.f32 %v7492, %v7490
        %v7494 = vxor.u32 %v7493, 2147483648
        %v7495 = vsel %vm7374, %v7494, %v7493
        %v7496 = vsub.s32 4, %v7472
        %v7497 = vsel %vm7374, %v7496, %v7472
        %v7498 = vsel %vm7373, %v349, %v7495
        %v7499 = vsel %vm7373, 0, %v7497
        %v7500 = vmul.f32 %v7498, %v7498
        %v7501 = vmul.f32 %v7500, -0.001358992
        %v7502 = vadd.f32 %v7501, 0.041655596
        %v7503 = vmul.f32 %v7500, %v7502
        %v7504 = vadd.f32 %v7503, -0.4999988
        %v7505 = vmul.f32 %v7500, %v7504
        %v7506 = vadd.f32 1.0, %v7505
        %v7507 = vmul.f32 %v7498, %v7498
        %v7508 = vmul.f32 %v7507, -0.00019511016
        %v7509 = vadd.f32 %v7508, 0.008332121
        %v7510 = vmul.f32 %v7507, %v7509
        %v7511 = vadd.f32 %v7510, -0.16666654
        %v7512 = vmul.f32 %v7507, %v7511
        %v7513 = vadd.f32 %v7512, 1.0
        %v7514 = vmul.f32 %v7513, %v7498
        %vm7515 = vweird.f32 %v349
        %v7516 = vand.u32 %v7499, 3
        %vm7517 = vcmp.lt.s32.totalorder %v7516, 2
        %vm7518 = vcmp.eq.s32.totalorder %v7516, 0
        %v7519 = vxor.u32 %v7514, 2147483648
        %v7520 = vsel %vm7518, %v7506, %v7519
        %vm7521 = vcmp.eq.s32.totalorder %v7516, 2
        %v7522 = vxor.u32 %v7506, 2147483648
        %v7523 = vsel %vm7521, %v7522, %v7514
        %v7524 = vsel %vm7517, %v7520, %v7523
        %v7525 = vsel %vm7515, nan, %v7524
        %v7526 = vand.u32 2147483647, %v287
        %vm7527 = vcmp.le.f32.partialorder %v7526, 0.7853982
        %vm7528 = vcmp.lt.s32.totalorder %v287, 0
        %v7529 = vand.u32 %v287, 2139095040
        %v7530 = vshrl.u32 %v7529, 23
        %v7531 = vsub.s32 %v7530, 127
        %v7532 = vand.u32 2147483647, %v287
        %v7533 = vand.u32 %v7532, 8388607
        %v7534 = vor.u32 %v7533, 8388608
        %v7535 = vsub.s32 0, %v7534
        %v7536 = vadd.s32 %v7531, 1
        %vm7537 = vcmp.gt.s32.totalorder %v7536, 0
        %v7538 = vsel %vm7537, %v7536, 0
        %v7539 = vshrl.u32 %v7538, 5
        %v7540 = vand.u32 %v7538, 31
        %v7541 = vsub.s32 32, %v7540
        %v7542 = vshrl.u32 683565275, %v7541
        %v7543 = vshll.u32 683565275, %v7540
        %v7544 = vshrl.u32 2475754826, %v7541
        %v7545 = vor.u32 %v7543, %v7544
        %v7546 = vshll.u32 2475754826, %v7540
        %v7547 = vshrl.u32 2131351028, %v7541
        %v7548 = vor.u32 %v7546, %v7547
        %v7549 = vshll.u32 2131351028, %v7540
        %v7550 = vshrl.u32 2102212464, %v7541
        %v7551 = vor.u32 %v7549, %v7550
        %v7552 = vshll.u32 2102212464, %v7540
        %v7553 = vshrl.u32 920167782, %v7541
        %v7554 = vor.u32 %v7552, %v7553
        %v7555 = vshll.u32 920167782, %v7540
        %v7556 = vshrl.u32 1326507024, %v7541
        %v7557 = vor.u32 %v7555, %v7556
        %vm7558 = vcmp.lt.s32.totalorder %v7539, 1
        %vm7559 = vcmp.lt.s32.totalorder %v7539, 2
        %vm7560 = vcmp.lt.s32.totalorder %v7539, 3
        %vm7561 = vcmp.lt.s32.totalorder %v7539, 4
        %v7562 = vsel %vm7558, %v7542, %v7545
        %v7563 = vsel %vm7561, %v7551, 2102212464
        %v7564 = vsel %vm7560, %v7548, %v7563
        %v7565 = vsel %vm7559, %v7562, %v7564
        %v7566 = vsel %vm7558, %v7545, %v7548
        %v7567 = vsel %vm7561, %v7554, 920167782
        %v7568 = vsel %vm7560, %v7551, %v7567
        %v7569 = vsel %vm7559, %v7566, %v7568
        %v7570 = vsel %vm7558, %v7548, %v7551
        %v7571 = vsel %vm7561, %v7557, 1326507024
        %v7572 = vsel %vm7560, %v7554, %v7571
        %v7573 = vsel %vm7559, %v7570, %v7572
        %v7574 = vshll.u32 %v7534, 8
        %v7575 = vand.u32 %v7574, 65535
        %v7576 = vshrl.u32 %v7574, 16
        %v7577 = vand.u32 %v7573, 65535
        %v7578 = vshrl.u32 %v7573, 16
        %v7579 = vmul.u32 %v7575, %v7577
        %v7580 = vmul.u32 %v7575, %v7578
        %v7581 = vmul.u32 %v7576, %v7577
        %v7582 = vmul.u32 %v7576, %v7578
        %v7583 = vshll.u32 %v7580, 16
        %v7584 = vshrl.u32 %v7580, 16
        %v7585 = vshll.u32 %v7581, 16
        %v7586 = vshrl.u32 %v7581, 16
        %vm7587 = vc.u32 %v7579, %v7583
        %v7588 = vsel %vm7587, 1, 0
        %v7589 = vadd.s32 %v7579, %v7583
        %v7590 = vadd.s32 %v7582, %v7588
        %vm7591 = vc.u32 %v7589, %v7585
        %v7592 = vsel %vm7591, 1, 0
        %v7593 = vadd.s32 %v7589, %v7585
        %v7594 = vadd.s32 %v7590, %v7592
        %v7595 = vadd.s32 %v7594, %v7584
        %v7596 = vadd.s32 %v7595, %v7586
        %v7597 = vand.u32 %v7574, 65535
        %v7598 = vshrl.u32 %v7574, 16
        %v7599 = vand.u32 %v7569, 65535
        %v7600 = vshrl.u32 %v7569, 16
        %v7601 = vmul.u32 %v7597, %v7599
        %v7602 = vmul.u32 %v7597, %v7600
        %v7603 = vmul.u32 %v7598, %v7599
        %v7604 = vmul.u32 %v7598, %v7600
        %v7605 = vshll.u32 %v7602, 16
        %v7606 = vshrl.u32 %v7602, 16
        %v7607 = vshll.u32 %v7603, 16
        %v7608 = vshrl.u32 %v7603, 16
        %vm7609 = vc.u32 %v7601, %v7605
        %v7610 = vsel %vm7609, 1, 0
        %v7611 = vadd.s32 %v7601, %v7605
        %v7612 = vadd.s32 %v7604, %v7610
        %vm7613 = vc.u32 %v7611, %v7607
        %v7614 = vsel %vm7613, 1, 0
        %v7615 = vadd.s32 %v7611, %v7607
        %v7616 = vadd.s32 %v7612, %v7614
        %v7617 = vadd.s32 %v7616, %v7606
        %v7618 = vadd.s32 %v7617, %v7608
        %v7619 = vmul.u32 %v7574, %v7565
        %v7620 = vadd.s32 %v7596, %v7615
        %vm7621 = vc.u32 %v7596, %v7615
        %v7622 = vadd.s32 %v7618, 1
        %v7623 = vsel %vm7621, %v7622, %v7618
        %v7624 = vadd.s32 %v7619, %v7623
        %v7625 = vadd.s32 %v7624, 536870912
        %v7626 = vshrl.u32 %v7625, 30
        %v7627 = vshll.u32 %v7626, 30
        %v7628 = vsub.s32 %v7624, %v7627
        %vm7629 = vcmp.lt.s32.totalorder %v7628, 0
        %v7630 = vsub.s32 0, %v7628
        %v7631 = vsel %vm7629, %v7630, %v7628
        %v7632 = vclz %v7631
        %v7633 = vsub.s32 %v7632, 2
        %vm7634 = vcmp.gt.s32.totalorder 0, %v7633
        %v7635 = vsel %vm7634, 0, %v7633
        %v7636 = vsub.s32 32, %v7635
        %v7637 = vshll.u32 %v7628, %v7635
        %v7638 = vshrl.u32 %v7620, %v7636
        %v7639 = vor.u32 %v7637, %v7638
        %v7640 = vsub.s32 4294967266, %v7635
        %v7641 = vadd.s32 %v7640, 127
        %v7642 = vshll.u32 %v7641, 23
        %v7643 = vor.u32 4788187, %v7642
        %v7644 = vand.u32 2147483647, %v7643
        %v7646 = vcvt.s32.f32 %v7639
        %v7647 = vmul.f32 %v7646, %v7644
        %v7648 = vxor.u32 %v7647, 2147483648
        %v7649 = vsel %vm7528, %v7648, %v7647
        %v7650 = vsub.s32 4, %v7626
        %v7651 = vsel %vm7528, %v7650, %v7626
        %v7652 = vsel %vm7527, %v287, %v7649
        %v7653 = vsel %vm7527, 0, %v7651
        %v7654 = vmul.f32 %v7652, %v7652
        %v7655 = vmul.f32 %v7654, -0.001358992
        %v7656 = vadd.f32 %v7655, 0.041655596
        %v7657 = vmul.f32 %v7654, %v7656
        %v7658 = vadd.f32 %v7657, -0.4999988
        %v7659 = vmul.f32 %v7654, %v7658
        %v7660 = vadd.f32 1.0, %v7659
        %v7661 = vmul.f32 %v7652, %v7652
        %v7662 = vmul.f32 %v7661, -0.00019511016
        %v7663 = vadd.f32 %v7662, 0.008332121
        %v7664 = vmul.f32 %v7661, %v7663
        %v7665 = vadd.f32 %v7664, -0.16666654
        %v7666 = vmul.f32 %v7661, %v7665
        %v7667 = vadd.f32 %v7666, 1.0
        %v7668 = vmul.f32 %v7667, %v7652
        %vm7669 = vweird.f32 %v287
        %v7670 = vand.u32 %v7653, 3
        %vm7671 = vcmp.lt.s32.totalorder %v7670, 2
        %vm7672 = vcmp.eq.s32.totalorder %v7670, 0
        %v7673 = vxor.u32 %v7668, 2147483648
        %v7674 = vsel %vm7672, %v7660, %v7673
        %vm7675 = vcmp.eq.s32.totalorder %v7670, 2
        %v7676 = vxor.u32 %v7660, 2147483648
        %v7677 = vsel %vm7675, %v7676, %v7668
        %v7678 = vsel %vm7671, %v7674, %v7677
        %v7679 = vsel %vm7669, nan, %v7678
        %v7680 = vand.u32 2147483647, %v352
        %vm7681 = vcmp.le.f32.partialorder %v7680, 0.7853982
        %vm7682 = vcmp.lt.s32.totalorder %v352, 0
        %v7683 = vand.u32 %v352, 2139095040
        %v7684 = vshrl.u32 %v7683, 23
        %v7685 = vsub.s32 %v7684, 127
        %v7686 = vand.u32 2147483647, %v352
        %v7687 = vand.u32 %v7686, 8388607
        %v7688 = vor.u32 %v7687, 8388608
        %v7689 = vsub.s32 0, %v7688
        %v7690 = vadd.s32 %v7685, 1
        %vm7691 = vcmp.gt.s32.totalorder %v7690, 0
        %v7692 = vsel %vm7691, %v7690, 0
        %v7693 = vshrl.u32 %v7692, 5
        %v7694 = vand.u32 %v7692, 31
        %v7695 = vsub.s32 32, %v7694
        %v7696 = vshrl.u32 683565275, %v7695
        %v7697 = vshll.u32 683565275, %v7694
        %v7698 = vshrl.u32 2475754826, %v7695
        %v7699 = vor.u32 %v7697, %v7698
        %v7700 = vshll.u32 2475754826, %v7694
        %v7701 = vshrl.u32 2131351028, %v7695
        %v7702 = vor.u32 %v7700, %v7701
        %v7703 = vshll.u32 2131351028, %v7694
        %v7704 = vshrl.u32 2102212464, %v7695
        %v7705 = vor.u32 %v7703, %v7704
        %v7706 = vshll.u32 2102212464, %v7694
        %v7707 = vshrl.u32 920167782, %v7695
        %v7708 = vor.u32 %v7706, %v7707
        %v7709 = vshll.u32 920167782, %v7694
        %v7710 = vshrl.u32 1326507024, %v7695
        %v7711 = vor.u32 %v7709, %v7710
        %vm7712 = vcmp.lt.s32.totalorder %v7693, 1
        %vm7713 = vcmp.lt.s32.totalorder %v7693, 2
        %vm7714 = vcmp.lt.s32.totalorder %v7693, 3
        %vm7715 = vcmp.lt.s32.totalorder %v7693, 4
        %v7716 = vsel %vm7712, %v7696, %v7699
        %v7717 = vsel %vm7715, %v7705, 2102212464
        %v7718 = vsel %vm7714, %v7702, %v7717
        %v7719 = vsel %vm7713, %v7716, %v7718
        %v7720 = vsel %vm7712, %v7699, %v7702
        %v7721 = vsel %vm7715, %v7708, 920167782
        %v7722 = vsel %vm7714, %v7705, %v7721
        %v7723 = vsel %vm7713, %v7720, %v7722
        %v7724 = vsel %vm7712, %v7702, %v7705
        %v7725 = vsel %vm7715, %v7711, 1326507024
        %v7726 = vsel %vm7714, %v7708, %v7725
        %v7727 = vsel %vm7713, %v7724, %v7726
        %v7728 = vshll.u32 %v7688, 8
        %v7729 = vand.u32 %v7728, 65535
        %v7730 = vshrl.u32 %v7728, 16
        %v7731 = vand.u32 %v7727, 65535
        %v7732 = vshrl.u32 %v7727, 16
        %v7733 = vmul.u32 %v7729, %v7731
        %v7734 = vmul.u32 %v7729, %v7732
        %v7735 = vmul.u32 %v7730, %v7731
        %v7736 = vmul.u32 %v7730, %v7732
        %v7737 = vshll.u32 %v7734, 16
        %v7738 = vshrl.u32 %v7734, 16
        %v7739 = vshll.u32 %v7735, 16
        %v7740 = vshrl.u32 %v7735, 16
        %vm7741 = vc.u32 %v7733, %v7737
        %v7742 = vsel %vm7741, 1, 0
        %v7743 = vadd.s32 %v7733, %v7737
        %v7744 = vadd.s32 %v7736, %v7742
        %vm7745 = vc.u32 %v7743, %v7739
        %v7746 = vsel %vm7745, 1, 0
        %v7747 = vadd.s32 %v7743, %v7739
        %v7748 = vadd.s32 %v7744, %v7746
        %v7749 = vadd.s32 %v7748, %v7738
        %v7750 = vadd.s32 %v7749, %v7740
        %v7751 = vand.u32 %v7728, 65535
        %v7752 = vshrl.u32 %v7728, 16
        %v7753 = vand.u32 %v7723, 65535
        %v7754 = vshrl.u32 %v7723, 16
        %v7755 = vmul.u32 %v7751, %v7753
        %v7756 = vmul.u32 %v7751, %v7754
        %v7757 = vmul.u32 %v7752, %v7753
        %v7758 = vmul.u32 %v7752, %v7754
        %v7759 = vshll.u32 %v7756, 16
        %v7760 = vshrl.u32 %v7756, 16
        %v7761 = vshll.u32 %v7757, 16
        %v7762 = vshrl.u32 %v7757, 16
        %vm7763 = vc.u32 %v7755, %v7759
        %v7764 = vsel %vm7763, 1, 0
        %v7765 = vadd.s32 %v7755, %v7759
        %v7766 = vadd.s32 %v7758, %v7764
        %vm7767 = vc.u32 %v7765, %v7761
        %v7768 = vsel %vm7767, 1, 0
        %v7769 = vadd.s32 %v7765, %v7761
        %v7770 = vadd.s32 %v7766, %v7768
        %v7771 = vadd.s32 %v7770, %v7760
        %v7772 = vadd.s32 %v7771, %v7762
        %v7773 = vmul.u32 %v7728, %v7719
        %v7774 = vadd.s32 %v7750, %v7769
        %vm7775 = vc.u32 %v7750, %v7769
        %v7776 = vadd.s32 %v7772, 1
        %v7777 = vsel %vm7775, %v7776, %v7772
        %v7778 = vadd.s32 %v7773, %v7777
        %v7779 = vadd.s32 %v7778, 536870912
        %v7780 = vshrl.u32 %v7779, 30
        %v7781 = vshll.u32 %v7780, 30
        %v7782 = vsub.s32 %v7778, %v7781
        %vm7783 = vcmp.lt.s32.totalorder %v7782, 0
        %v7784 = vsub.s32 0, %v7782
        %v7785 = vsel %vm7783, %v7784, %v7782
        %v7786 = vclz %v7785
        %v7787 = vsub.s32 %v7786, 2
        %vm7788 = vcmp.gt.s32.totalorder 0, %v7787
        %v7789 = vsel %vm7788, 0, %v7787
        %v7790 = vsub.s32 32, %v7789
        %v7791 = vshll.u32 %v7782, %v7789
        %v7792 = vshrl.u32 %v7774, %v7790
        %v7793 = vor.u32 %v7791, %v7792
        %v7794 = vsub.s32 4294967266, %v7789
        %v7795 = vadd.s32 %v7794, 127
        %v7796 = vshll.u32 %v7795, 23
        %v7797 = vor.u32 4788187, %v7796
        %v7798 = vand.u32 2147483647, %v7797
        %v7800 = vcvt.s32.f32 %v7793
        %v7801 = vmul.f32 %v7800, %v7798
        %v7802 = vxor.u32 %v7801, 2147483648
        %v7803 = vsel %vm7682, %v7802, %v7801
        %v7804 = vsub.s32 4, %v7780
        %v7805 = vsel %vm7682, %v7804, %v7780
        %v7806 = vsel %vm7681, %v352, %v7803
        %v7807 = vsel %vm7681, 0, %v7805
        %v7808 = vmul.f32 %v7806, %v7806
        %v7809 = vmul.f32 %v7808, -0.001358992
        %v7810 = vadd.f32 %v7809, 0.041655596
        %v7811 = vmul.f32 %v7808, %v7810
        %v7812 = vadd.f32 %v7811, -0.4999988
        %v7813 = vmul.f32 %v7808, %v7812
        %v7814 = vadd.f32 1.0, %v7813
        %v7815 = vmul.f32 %v7806, %v7806
        %v7816 = vmul.f32 %v7815, -0.00019511016
        %v7817 = vadd.f32 %v7816, 0.008332121
        %v7818 = vmul.f32 %v7815, %v7817
        %v7819 = vadd.f32 %v7818, -0.16666654
        %v7820 = vmul.f32 %v7815, %v7819
        %v7821 = vadd.f32 %v7820, 1.0
        %v7822 = vmul.f32 %v7821, %v7806
        %vm7823 = vweird.f32 %v352
        %v7824 = vand.u32 %v7807, 3
        %vm7825 = vcmp.lt.s32.totalorder %v7824, 2
        %vm7826 = vcmp.eq.s32.totalorder %v7824, 0
        %v7827 = vxor.u32 %v7822, 2147483648
        %v7828 = vsel %vm7826, %v7814, %v7827
        %vm7829 = vcmp.eq.s32.totalorder %v7824, 2
        %v7830 = vxor.u32 %v7814, 2147483648
        %v7831 = vsel %vm7829, %v7830, %v7822
        %v7832 = vsel %vm7825, %v7828, %v7831
        %v7833 = vsel %vm7823, nan, %v7832
        %v7834 = vand.u32 2147483647, %v290
        %vm7835 = vcmp.le.f32.partialorder %v7834, 0.7853982
        %vm7836 = vcmp.lt.s32.totalorder %v290, 0
        %v7837 = vand.u32 %v290, 2139095040
        %v7838 = vshrl.u32 %v7837, 23
        %v7839 = vsub.s32 %v7838, 127
        %v7840 = vand.u32 2147483647, %v290
        %v7841 = vand.u32 %v7840, 8388607
        %v7842 = vor.u32 %v7841, 8388608
        %v7843 = vsub.s32 0, %v7842
        %v7844 = vadd.s32 %v7839, 1
        %vm7845 = vcmp.gt.s32.totalorder %v7844, 0
        %v7846 = vsel %vm7845, %v7844, 0
        %v7847 = vshrl.u32 %v7846, 5
        %v7848 = vand.u32 %v7846, 31
        %v7849 = vsub.s32 32, %v7848
        %v7850 = vshrl.u32 683565275, %v7849
        %v7851 = vshll.u32 683565275, %v7848
        %v7852 = vshrl.u32 2475754826, %v7849
        %v7853 = vor.u32 %v7851, %v7852
        %v7854 = vshll.u32 2475754826, %v7848
        %v7855 = vshrl.u32 2131351028, %v7849
        %v7856 = vor.u32 %v7854, %v7855
        %v7857 = vshll.u32 2131351028, %v7848
        %v7858 = vshrl.u32 2102212464, %v7849
        %v7859 = vor.u32 %v7857, %v7858
        %v7860 = vshll.u32 2102212464, %v7848
        %v7861 = vshrl.u32 920167782, %v7849
        %v7862 = vor.u32 %v7860, %v7861
        %v7863 = vshll.u32 920167782, %v7848
        %v7864 = vshrl.u32 1326507024, %v7849
        %v7865 = vor.u32 %v7863, %v7864
        %vm7866 = vcmp.lt.s32.totalorder %v7847, 1
        %vm7867 = vcmp.lt.s32.totalorder %v7847, 2
        %vm7868 = vcmp.lt.s32.totalorder %v7847, 3
        %vm7869 = vcmp.lt.s32.totalorder %v7847, 4
        %v7870 = vsel %vm7866, %v7850, %v7853
        %v7871 = vsel %vm7869, %v7859, 2102212464
        %v7872 = vsel %vm7868, %v7856, %v7871
        %v7873 = vsel %vm7867, %v7870, %v7872
        %v7874 = vsel %vm7866, %v7853, %v7856
        %v7875 = vsel %vm7869, %v7862, 920167782
        %v7876 = vsel %vm7868, %v7859, %v7875
        %v7877 = vsel %vm7867, %v7874, %v7876
        %v7878 = vsel %vm7866, %v7856, %v7859
        %v7879 = vsel %vm7869, %v7865, 1326507024
        %v7880 = vsel %vm7868, %v7862, %v7879
        %v7881 = vsel %vm7867, %v7878, %v7880
        %v7882 = vshll.u32 %v7842, 8
        %v7883 = vand.u32 %v7882, 65535
        %v7884 = vshrl.u32 %v7882, 16
        %v7885 = vand.u32 %v7881, 65535
        %v7886 = vshrl.u32 %v7881, 16
        %v7887 = vmul.u32 %v7883, %v7885
        %v7888 = vmul.u32 %v7883, %v7886
        %v7889 = vmul.u32 %v7884, %v7885
        %v7890 = vmul.u32 %v7884, %v7886
        %v7891 = vshll.u32 %v7888, 16
        %v7892 = vshrl.u32 %v7888, 16
        %v7893 = vshll.u32 %v7889, 16
        %v7894 = vshrl.u32 %v7889, 16
        %vm7895 = vc.u32 %v7887, %v7891
        %v7896 = vsel %vm7895, 1, 0
        %v7897 = vadd.s32 %v7887, %v7891
        %v7898 = vadd.s32 %v7890, %v7896
        %vm7899 = vc.u32 %v7897, %v7893
        %v7900 = vsel %vm7899, 1, 0
        %v7901 = vadd.s32 %v7897, %v7893
        %v7902 = vadd.s32 %v7898, %v7900
        %v7903 = vadd.s32 %v7902, %v7892
        %v7904 = vadd.s32 %v7903, %v7894
        %v7905 = vand.u32 %v7882, 65535
        %v7906 = vshrl.u32 %v7882, 16
        %v7907 = vand.u32 %v7877, 65535
        %v7908 = vshrl.u32 %v7877, 16
        %v7909 = vmul.u32 %v7905, %v7907
        %v7910 = vmul.u32 %v7905, %v7908
        %v7911 = vmul.u32 %v7906, %v7907
        %v7912 = vmul.u32 %v7906, %v7908
        %v7913 = vshll.u32 %v7910, 16
        %v7914 = vshrl.u32 %v7910, 16
        %v7915 = vshll.u32 %v7911, 16
        %v7916 = vshrl.u32 %v7911, 16
        %vm7917 = vc.u32 %v7909, %v7913
        %v7918 = vsel %vm7917, 1, 0
        %v7919 = vadd.s32 %v7909, %v7913
        %v7920 = vadd.s32 %v7912, %v7918
        %vm7921 = vc.u32 %v7919, %v7915
        %v7922 = vsel %vm7921, 1, 0
        %v7923 = vadd.s32 %v7919, %v7915
        %v7924 = vadd.s32 %v7920, %v7922
        %v7925 = vadd.s32 %v7924, %v7914
        %v7926 = vadd.s32 %v7925, %v7916
        %v7927 = vmul.u32 %v7882, %v7873
        %v7928 = vadd.s32 %v7904, %v7923
        %vm7929 = vc.u32 %v7904, %v7923
        %v7930 = vadd.s32 %v7926, 1
        %v7931 = vsel %vm7929, %v7930, %v7926
        %v7932 = vadd.s32 %v7927, %v7931
        %v7933 = vadd.s32 %v7932, 536870912
        %v7934 = vshrl.u32 %v7933, 30
        %v7935 = vshll.u32 %v7934, 30
        %v7936 = vsub.s32 %v7932, %v7935
        %vm7937 = vcmp.lt.s32.totalorder %v7936, 0
        %v7938 = vsub.s32 0, %v7936
        %v7939 = vsel %vm7937, %v7938, %v7936
        %v7940 = vclz %v7939
        %v7941 = vsub.s32 %v7940, 2
        %vm7942 = vcmp.gt.s32.totalorder 0, %v7941
        %v7943 = vsel %vm7942, 0, %v7941
        %v7944 = vsub.s32 32, %v7943
        %v7945 = vshll.u32 %v7936, %v7943
        %v7946 = vshrl.u32 %v7928, %v7944
        %v7947 = vor.u32 %v7945, %v7946
        %v7948 = vsub.s32 4294967266, %v7943
        %v7949 = vadd.s32 %v7948, 127
        %v7950 = vshll.u32 %v7949, 23
        %v7951 = vor.u32 4788187, %v7950
        %v7952 = vand.u32 2147483647, %v7951
        %v7954 = vcvt.s32.f32 %v7947
        %v7955 = vmul.f32 %v7954, %v7952
        %v7956 = vxor.u32 %v7955, 2147483648
        %v7957 = vsel %vm7836, %v7956, %v7955
        %v7958 = vsub.s32 4, %v7934
        %v7959 = vsel %vm7836, %v7958, %v7934
        %v7960 = vsel %vm7835, %v290, %v7957
        %v7961 = vsel %vm7835, 0, %v7959
        %v7962 = vmul.f32 %v7960, %v7960
        %v7963 = vmul.f32 %v7962, -0.001358992
        %v7964 = vadd.f32 %v7963, 0.041655596
        %v7965 = vmul.f32 %v7962, %v7964
        %v7966 = vadd.f32 %v7965, -0.4999988
        %v7967 = vmul.f32 %v7962, %v7966
        %v7968 = vadd.f32 1.0, %v7967
        %v7969 = vmul.f32 %v7960, %v7960
        %v7970 = vmul.f32 %v7969, -0.00019511016
        %v7971 = vadd.f32 %v7970, 0.008332121
        %v7972 = vmul.f32 %v7969, %v7971
        %v7973 = vadd.f32 %v7972, -0.16666654
        %v7974 = vmul.f32 %v7969, %v7973
        %v7975 = vadd.f32 %v7974, 1.0
        %v7976 = vmul.f32 %v7975, %v7960
        %vm7977 = vweird.f32 %v290
        %v7978 = vand.u32 %v7961, 3
        %vm7979 = vcmp.lt.s32.totalorder %v7978, 2
        %vm7980 = vcmp.eq.s32.totalorder %v7978, 0
        %v7981 = vxor.u32 %v7976, 2147483648
        %v7982 = vsel %vm7980, %v7968, %v7981
        %vm7983 = vcmp.eq.s32.totalorder %v7978, 2
        %v7984 = vxor.u32 %v7968, 2147483648
        %v7985 = vsel %vm7983, %v7984, %v7976
        %v7986 = vsel %vm7979, %v7982, %v7985
        %v7987 = vsel %vm7977, nan, %v7986
        %v7988 = vand.u32 2147483647, %v355
        %vm7989 = vcmp.le.f32.partialorder %v7988, 0.7853982
        %vm7990 = vcmp.lt.s32.totalorder %v355, 0
        %v7991 = vand.u32 %v355, 2139095040
        %v7992 = vshrl.u32 %v7991, 23
        %v7993 = vsub.s32 %v7992, 127
        %v7994 = vand.u32 2147483647, %v355
        %v7995 = vand.u32 %v7994, 8388607
        %v7996 = vor.u32 %v7995, 8388608
        %v7997 = vsub.s32 0, %v7996
        %v7998 = vadd.s32 %v7993, 1
        %vm7999 = vcmp.gt.s32.totalorder %v7998, 0
        %v8000 = vsel %vm7999, %v7998, 0
        %v8001 = vshrl.u32 %v8000, 5
        %v8002 = vand.u32 %v8000, 31
        %v8003 = vsub.s32 32, %v8002
        %v8004 = vshrl.u32 683565275, %v8003
        %v8005 = vshll.u32 683565275, %v8002
        %v8006 = vshrl.u32 2475754826, %v8003
        %v8007 = vor.u32 %v8005, %v8006
        %v8008 = vshll.u32 2475754826, %v8002
        %v8009 = vshrl.u32 2131351028, %v8003
        %v8010 = vor.u32 %v8008, %v8009
        %v8011 = vshll.u32 2131351028, %v8002
        %v8012 = vshrl.u32 2102212464, %v8003
        %v8013 = vor.u32 %v8011, %v8012
        %v8014 = vshll.u32 2102212464, %v8002
        %v8015 = vshrl.u32 920167782, %v8003
        %v8016 = vor.u32 %v8014, %v8015
        %v8017 = vshll.u32 920167782, %v8002
        %v8018 = vshrl.u32 1326507024, %v8003
        %v8019 = vor.u32 %v8017, %v8018
        %vm8020 = vcmp.lt.s32.totalorder %v8001, 1
        %vm8021 = vcmp.lt.s32.totalorder %v8001, 2
        %vm8022 = vcmp.lt.s32.totalorder %v8001, 3
        %vm8023 = vcmp.lt.s32.totalorder %v8001, 4
        %v8024 = vsel %vm8020, %v8004, %v8007
        %v8025 = vsel %vm8023, %v8013, 2102212464
        %v8026 = vsel %vm8022, %v8010, %v8025
        %v8027 = vsel %vm8021, %v8024, %v8026
        %v8028 = vsel %vm8020, %v8007, %v8010
        %v8029 = vsel %vm8023, %v8016, 920167782
        %v8030 = vsel %vm8022, %v8013, %v8029
        %v8031 = vsel %vm8021, %v8028, %v8030
        %v8032 = vsel %vm8020, %v8010, %v8013
        %v8033 = vsel %vm8023, %v8019, 1326507024
        %v8034 = vsel %vm8022, %v8016, %v8033
        %v8035 = vsel %vm8021, %v8032, %v8034
        %v8036 = vshll.u32 %v7996, 8
        %v8037 = vand.u32 %v8036, 65535
        %v8038 = vshrl.u32 %v8036, 16
        %v8039 = vand.u32 %v8035, 65535
        %v8040 = vshrl.u32 %v8035, 16
        %v8041 = vmul.u32 %v8037, %v8039
        %v8042 = vmul.u32 %v8037, %v8040
        %v8043 = vmul.u32 %v8038, %v8039
        %v8044 = vmul.u32 %v8038, %v8040
        %v8045 = vshll.u32 %v8042, 16
        %v8046 = vshrl.u32 %v8042, 16
        %v8047 = vshll.u32 %v8043, 16
        %v8048 = vshrl.u32 %v8043, 16
        %vm8049 = vc.u32 %v8041, %v8045
        %v8050 = vsel %vm8049, 1, 0
        %v8051 = vadd.s32 %v8041, %v8045
        %v8052 = vadd.s32 %v8044, %v8050
        %vm8053 = vc.u32 %v8051, %v8047
        %v8054 = vsel %vm8053, 1, 0
        %v8055 = vadd.s32 %v8051, %v8047
        %v8056 = vadd.s32 %v8052, %v8054
        %v8057 = vadd.s32 %v8056, %v8046
        %v8058 = vadd.s32 %v8057, %v8048
        %v8059 = vand.u32 %v8036, 65535
        %v8060 = vshrl.u32 %v8036, 16
        %v8061 = vand.u32 %v8031, 65535
        %v8062 = vshrl.u32 %v8031, 16
        %v8063 = vmul.u32 %v8059, %v8061
        %v8064 = vmul.u32 %v8059, %v8062
        %v8065 = vmul.u32 %v8060, %v8061
        %v8066 = vmul.u32 %v8060, %v8062
        %v8067 = vshll.u32 %v8064, 16
        %v8068 = vshrl.u32 %v8064, 16
        %v8069 = vshll.u32 %v8065, 16
        %v8070 = vshrl.u32 %v8065, 16
        %vm8071 = vc.u32 %v8063, %v8067
        %v8072 = vsel %vm8071, 1, 0
        %v8073 = vadd.s32 %v8063, %v8067
        %v8074 = vadd.s32 %v8066, %v8072
        %vm8075 = vc.u32 %v8073, %v8069
        %v8076 = vsel %vm8075, 1, 0
        %v8077 = vadd.s32 %v8073, %v8069
        %v8078 = vadd.s32 %v8074, %v8076
        %v8079 = vadd.s32 %v8078, %v8068
        %v8080 = vadd.s32 %v8079, %v8070
        %v8081 = vmul.u32 %v8036, %v8027
        %v8082 = vadd.s32 %v8058, %v8077
        %vm8083 = vc.u32 %v8058, %v8077
        %v8084 = vadd.s32 %v8080, 1
        %v8085 = vsel %vm8083, %v8084, %v8080
        %v8086 = vadd.s32 %v8081, %v8085
        %v8087 = vadd.s32 %v8086, 536870912
        %v8088 = vshrl.u32 %v8087, 30
        %v8089 = vshll.u32 %v8088, 30
        %v8090 = vsub.s32 %v8086, %v8089
        %vm8091 = vcmp.lt.s32.totalorder %v8090, 0
        %v8092 = vsub.s32 0, %v8090
        %v8093 = vsel %vm8091, %v8092, %v8090
        %v8094 = vclz %v8093
        %v8095 = vsub.s32 %v8094, 2
        %vm8096 = vcmp.gt.s32.totalorder 0, %v8095
        %v8097 = vsel %vm8096, 0, %v8095
        %v8098 = vsub.s32 32, %v8097
        %v8099 = vshll.u32 %v8090, %v8097
        %v8100 = vshrl.u32 %v8082, %v8098
        %v8101 = vor.u32 %v8099, %v8100
        %v8102 = vsub.s32 4294967266, %v8097
        %v8103 = vadd.s32 %v8102, 127
        %v8104 = vshll.u32 %v8103, 23
        %v8105 = vor.u32 4788187, %v8104
        %v8106 = vand.u32 2147483647, %v8105
        %v8108 = vcvt.s32.f32 %v8101
        %v8109 = vmul.f32 %v8108, %v8106
        %v8110 = vxor.u32 %v8109, 2147483648
        %v8111 = vsel %vm7990, %v8110, %v8109
        %v8112 = vsub.s32 4, %v8088
        %v8113 = vsel %vm7990, %v8112, %v8088
        %v8114 = vsel %vm7989, %v355, %v8111
        %v8115 = vsel %vm7989, 0, %v8113
        %v8116 = vmul.f32 %v8114, %v8114
        %v8117 = vmul.f32 %v8116, -0.001358992
        %v8118 = vadd.f32 %v8117, 0.041655596
        %v8119 = vmul.f32 %v8116, %v8118
        %v8120 = vadd.f32 %v8119, -0.4999988
        %v8121 = vmul.f32 %v8116, %v8120
        %v8122 = vadd.f32 1.0, %v8121
        %v8123 = vmul.f32 %v8114, %v8114
        %v8124 = vmul.f32 %v8123, -0.00019511016
        %v8125 = vadd.f32 %v8124, 0.008332121
        %v8126 = vmul.f32 %v8123, %v8125
        %v8127 = vadd.f32 %v8126, -0.16666654
        %v8128 = vmul.f32 %v8123, %v8127
        %v8129 = vadd.f32 %v8128, 1.0
        %v8130 = vmul.f32 %v8129, %v8114
        %vm8131 = vweird.f32 %v355
        %v8132 = vand.u32 %v8115, 3
        %vm8133 = vcmp.lt.s32.totalorder %v8132, 2
        %vm8134 = vcmp.eq.s32.totalorder %v8132, 0
        %v8135 = vxor.u32 %v8130, 2147483648
        %v8136 = vsel %vm8134, %v8122, %v8135
        %vm8137 = vcmp.eq.s32.totalorder %v8132, 2
        %v8138 = vxor.u32 %v8122, 2147483648
        %v8139 = vsel %vm8137, %v8138, %v8130
        %v8140 = vsel %vm8133, %v8136, %v8139
        %v8141 = vsel %vm8131, nan, %v8140
        %v8142 = vand.u32 2147483647, %v293
        %vm8143 = vcmp.le.f32.partialorder %v8142, 0.7853982
        %vm8144 = vcmp.lt.s32.totalorder %v293, 0
        %v8145 = vand.u32 %v293, 2139095040
        %v8146 = vshrl.u32 %v8145, 23
        %v8147 = vsub.s32 %v8146, 127
        %v8148 = vand.u32 2147483647, %v293
        %v8149 = vand.u32 %v8148, 8388607
        %v8150 = vor.u32 %v8149, 8388608
        %v8151 = vsub.s32 0, %v8150
        %v8152 = vadd.s32 %v8147, 1
        %vm8153 = vcmp.gt.s32.totalorder %v8152, 0
        %v8154 = vsel %vm8153, %v8152, 0
        %v8155 = vshrl.u32 %v8154, 5
        %v8156 = vand.u32 %v8154, 31
        %v8157 = vsub.s32 32, %v8156
        %v8158 = vshrl.u32 683565275, %v8157
        %v8159 = vshll.u32 683565275, %v8156
        %v8160 = vshrl.u32 2475754826, %v8157
        %v8161 = vor.u32 %v8159, %v8160
        %v8162 = vshll.u32 2475754826, %v8156
        %v8163 = vshrl.u32 2131351028, %v8157
        %v8164 = vor.u32 %v8162, %v8163
        %v8165 = vshll.u32 2131351028, %v8156
        %v8166 = vshrl.u32 2102212464, %v8157
        %v8167 = vor.u32 %v8165, %v8166
        %v8168 = vshll.u32 2102212464, %v8156
        %v8169 = vshrl.u32 920167782, %v8157
        %v8170 = vor.u32 %v8168, %v8169
        %v8171 = vshll.u32 920167782, %v8156
        %v8172 = vshrl.u32 1326507024, %v8157
        %v8173 = vor.u32 %v8171, %v8172
        %vm8174 = vcmp.lt.s32.totalorder %v8155, 1
        %vm8175 = vcmp.lt.s32.totalorder %v8155, 2
        %vm8176 = vcmp.lt.s32.totalorder %v8155, 3
        %vm8177 = vcmp.lt.s32.totalorder %v8155, 4
        %v8178 = vsel %vm8174, %v8158, %v8161
        %v8179 = vsel %vm8177, %v8167, 2102212464
        %v8180 = vsel %vm8176, %v8164, %v8179
        %v8181 = vsel %vm8175, %v8178, %v8180
        %v8182 = vsel %vm8174, %v8161, %v8164
        %v8183 = vsel %vm8177, %v8170, 920167782
        %v8184 = vsel %vm8176, %v8167, %v8183
        %v8185 = vsel %vm8175, %v8182, %v8184
        %v8186 = vsel %vm8174, %v8164, %v8167
        %v8187 = vsel %vm8177, %v8173, 1326507024
        %v8188 = vsel %vm8176, %v8170, %v8187
        %v8189 = vsel %vm8175, %v8186, %v8188
        %v8190 = vshll.u32 %v8150, 8
        %v8191 = vand.u32 %v8190, 65535
        %v8192 = vshrl.u32 %v8190, 16
        %v8193 = vand.u32 %v8189, 65535
        %v8194 = vshrl.u32 %v8189, 16
        %v8195 = vmul.u32 %v8191, %v8193
        %v8196 = vmul.u32 %v8191, %v8194
        %v8197 = vmul.u32 %v8192, %v8193
        %v8198 = vmul.u32 %v8192, %v8194
        %v8199 = vshll.u32 %v8196, 16
        %v8200 = vshrl.u32 %v8196, 16
        %v8201 = vshll.u32 %v8197, 16
        %v8202 = vshrl.u32 %v8197, 16
        %vm8203 = vc.u32 %v8195, %v8199
        %v8204 = vsel %vm8203, 1, 0
        %v8205 = vadd.s32 %v8195, %v8199
        %v8206 = vadd.s32 %v8198, %v8204
        %vm8207 = vc.u32 %v8205, %v8201
        %v8208 = vsel %vm8207, 1, 0
        %v8209 = vadd.s32 %v8205, %v8201
        %v8210 = vadd.s32 %v8206, %v8208
        %v8211 = vadd.s32 %v8210, %v8200
        %v8212 = vadd.s32 %v8211, %v8202
        %v8213 = vand.u32 %v8190, 65535
        %v8214 = vshrl.u32 %v8190, 16
        %v8215 = vand.u32 %v8185, 65535
        %v8216 = vshrl.u32 %v8185, 16
        %v8217 = vmul.u32 %v8213, %v8215
        %v8218 = vmul.u32 %v8213, %v8216
        %v8219 = vmul.u32 %v8214, %v8215
        %v8220 = vmul.u32 %v8214, %v8216
        %v8221 = vshll.u32 %v8218, 16
        %v8222 = vshrl.u32 %v8218, 16
        %v8223 = vshll.u32 %v8219, 16
        %v8224 = vshrl.u32 %v8219, 16
        %vm8225 = vc.u32 %v8217, %v8221
        %v8226 = vsel %vm8225, 1, 0
        %v8227 = vadd.s32 %v8217, %v8221
        %v8228 = vadd.s32 %v8220, %v8226
        %vm8229 = vc.u32 %v8227, %v8223
        %v8230 = vsel %vm8229, 1, 0
        %v8231 = vadd.s32 %v8227, %v8223
        %v8232 = vadd.s32 %v8228, %v8230
        %v8233 = vadd.s32 %v8232, %v8222
        %v8234 = vadd.s32 %v8233, %v8224
        %v8235 = vmul.u32 %v8190, %v8181
        %v8236 = vadd.s32 %v8212, %v8231
        %vm8237 = vc.u32 %v8212, %v8231
        %v8238 = vadd.s32 %v8234, 1
        %v8239 = vsel %vm8237, %v8238, %v8234
        %v8240 = vadd.s32 %v8235, %v8239
        %v8241 = vadd.s32 %v8240, 536870912
        %v8242 = vshrl.u32 %v8241, 30
        %v8243 = vshll.u32 %v8242, 30
        %v8244 = vsub.s32 %v8240, %v8243
        %vm8245 = vcmp.lt.s32.totalorder %v8244, 0
        %v8246 = vsub.s32 0, %v8244
        %v8247 = vsel %vm8245, %v8246, %v8244
        %v8248 = vclz %v8247
        %v8249 = vsub.s32 %v8248, 2
        %vm8250 = vcmp.gt.s32.totalorder 0, %v8249
        %v8251 = vsel %vm8250, 0, %v8249
        %v8252 = vsub.s32 32, %v8251
        %v8253 = vshll.u32 %v8244, %v8251
        %v8254 = vshrl.u32 %v8236, %v8252
        %v8255 = vor.u32 %v8253, %v8254
        %v8256 = vsub.s32 4294967266, %v8251
        %v8257 = vadd.s32 %v8256, 127
        %v8258 = vshll.u32 %v8257, 23
        %v8259 = vor.u32 4788187, %v8258
        %v8260 = vand.u32 2147483647, %v8259
        %v8262 = vcvt.s32.f32 %v8255
        %v8263 = vmul.f32 %v8262, %v8260
        %v8264 = vxor.u32 %v8263, 2147483648
        %v8265 = vsel %vm8144, %v8264, %v8263
        %v8266 = vsub.s32 4, %v8242
        %v8267 = vsel %vm8144, %v8266, %v8242
        %v8268 = vsel %vm8143, %v293, %v8265
        %v8269 = vsel %vm8143, 0, %v8267
        %v8270 = vmul.f32 %v8268, %v8268
        %v8271 = vmul.f32 %v8270, -0.001358992
        %v8272 = vadd.f32 %v8271, 0.041655596
        %v8273 = vmul.f32 %v8270, %v8272
        %v8274 = vadd.f32 %v8273, -0.4999988
        %v8275 = vmul.f32 %v8270, %v8274
        %v8276 = vadd.f32 1.0, %v8275
        %v8277 = vmul.f32 %v8268, %v8268
        %v8278 = vmul.f32 %v8277, -0.00019511016
        %v8279 = vadd.f32 %v8278, 0.008332121
        %v8280 = vmul.f32 %v8277, %v8279
        %v8281 = vadd.f32 %v8280, -0.16666654
        %v8282 = vmul.f32 %v8277, %v8281
        %v8283 = vadd.f32 %v8282, 1.0
        %v8284 = vmul.f32 %v8283, %v8268
        %vm8285 = vweird.f32 %v293
        %v8286 = vand.u32 %v8269, 3
        %vm8287 = vcmp.lt.s32.totalorder %v8286, 2
        %vm8288 = vcmp.eq.s32.totalorder %v8286, 0
        %v8289 = vxor.u32 %v8284, 2147483648
        %v8290 = vsel %vm8288, %v8276, %v8289
        %vm8291 = vcmp.eq.s32.totalorder %v8286, 2
        %v8292 = vxor.u32 %v8276, 2147483648
        %v8293 = vsel %vm8291, %v8292, %v8284
        %v8294 = vsel %vm8287, %v8290, %v8293
        %v8295 = vsel %vm8285, nan, %v8294
        %v8296 = vand.u32 2147483647, %v358
        %vm8297 = vcmp.le.f32.partialorder %v8296, 0.7853982
        %vm8298 = vcmp.lt.s32.totalorder %v358, 0
        %v8299 = vand.u32 %v358, 2139095040
        %v8300 = vshrl.u32 %v8299, 23
        %v8301 = vsub.s32 %v8300, 127
        %v8302 = vand.u32 2147483647, %v358
        %v8303 = vand.u32 %v8302, 8388607
        %v8304 = vor.u32 %v8303, 8388608
        %v8305 = vsub.s32 0, %v8304
        %v8306 = vadd.s32 %v8301, 1
        %vm8307 = vcmp.gt.s32.totalorder %v8306, 0
        %v8308 = vsel %vm8307, %v8306, 0
        %v8309 = vshrl.u32 %v8308, 5
        %v8310 = vand.u32 %v8308, 31
        %v8311 = vsub.s32 32, %v8310
        %v8312 = vshrl.u32 683565275, %v8311
        %v8313 = vshll.u32 683565275, %v8310
        %v8314 = vshrl.u32 2475754826, %v8311
        %v8315 = vor.u32 %v8313, %v8314
        %v8316 = vshll.u32 2475754826, %v8310
        %v8317 = vshrl.u32 2131351028, %v8311
        %v8318 = vor.u32 %v8316, %v8317
        %v8319 = vshll.u32 2131351028, %v8310
        %v8320 = vshrl.u32 2102212464, %v8311
        %v8321 = vor.u32 %v8319, %v8320
        %v8322 = vshll.u32 2102212464, %v8310
        %v8323 = vshrl.u32 920167782, %v8311
        %v8324 = vor.u32 %v8322, %v8323
        %v8325 = vshll.u32 920167782, %v8310
        %v8326 = vshrl.u32 1326507024, %v8311
        %v8327 = vor.u32 %v8325, %v8326
        %vm8328 = vcmp.lt.s32.totalorder %v8309, 1
        %vm8329 = vcmp.lt.s32.totalorder %v8309, 2
        %vm8330 = vcmp.lt.s32.totalorder %v8309, 3
        %vm8331 = vcmp.lt.s32.totalorder %v8309, 4
        %v8332 = vsel %vm8328, %v8312, %v8315
        %v8333 = vsel %vm8331, %v8321, 2102212464
        %v8334 = vsel %vm8330, %v8318, %v8333
        %v8335 = vsel %vm8329, %v8332, %v8334
        %v8336 = vsel %vm8328, %v8315, %v8318
        %v8337 = vsel %vm8331, %v8324, 920167782
        %v8338 = vsel %vm8330, %v8321, %v8337
        %v8339 = vsel %vm8329, %v8336, %v8338
        %v8340 = vsel %vm8328, %v8318, %v8321
        %v8341 = vsel %vm8331, %v8327, 1326507024
        %v8342 = vsel %vm8330, %v8324, %v8341
        %v8343 = vsel %vm8329, %v8340, %v8342
        %v8344 = vshll.u32 %v8304, 8
        %v8345 = vand.u32 %v8344, 65535
        %v8346 = vshrl.u32 %v8344, 16
        %v8347 = vand.u32 %v8343, 65535
        %v8348 = vshrl.u32 %v8343, 16
        %v8349 = vmul.u32 %v8345, %v8347
        %v8350 = vmul.u32 %v8345, %v8348
        %v8351 = vmul.u32 %v8346, %v8347
        %v8352 = vmul.u32 %v8346, %v8348
        %v8353 = vshll.u32 %v8350, 16
        %v8354 = vshrl.u32 %v8350, 16
        %v8355 = vshll.u32 %v8351, 16
        %v8356 = vshrl.u32 %v8351, 16
        %vm8357 = vc.u32 %v8349, %v8353
        %v8358 = vsel %vm8357, 1, 0
        %v8359 = vadd.s32 %v8349, %v8353
        %v8360 = vadd.s32 %v8352, %v8358
        %vm8361 = vc.u32 %v8359, %v8355
        %v8362 = vsel %vm8361, 1, 0
        %v8363 = vadd.s32 %v8359, %v8355
        %v8364 = vadd.s32 %v8360, %v8362
        %v8365 = vadd.s32 %v8364, %v8354
        %v8366 = vadd.s32 %v8365, %v8356
        %v8367 = vand.u32 %v8344, 65535
        %v8368 = vshrl.u32 %v8344, 16
        %v8369 = vand.u32 %v8339, 65535
        %v8370 = vshrl.u32 %v8339, 16
        %v8371 = vmul.u32 %v8367, %v8369
        %v8372 = vmul.u32 %v8367, %v8370
        %v8373 = vmul.u32 %v8368, %v8369
        %v8374 = vmul.u32 %v8368, %v8370
        %v8375 = vshll.u32 %v8372, 16
        %v8376 = vshrl.u32 %v8372, 16
        %v8377 = vshll.u32 %v8373, 16
        %v8378 = vshrl.u32 %v8373, 16
        %vm8379 = vc.u32 %v8371, %v8375
        %v8380 = vsel %vm8379, 1, 0
        %v8381 = vadd.s32 %v8371, %v8375
        %v8382 = vadd.s32 %v8374, %v8380
        %vm8383 = vc.u32 %v8381, %v8377
        %v8384 = vsel %vm8383, 1, 0
        %v8385 = vadd.s32 %v8381, %v8377
        %v8386 = vadd.s32 %v8382, %v8384
        %v8387 = vadd.s32 %v8386, %v8376
        %v8388 = vadd.s32 %v8387, %v8378
        %v8389 = vmul.u32 %v8344, %v8335
        %v8390 = vadd.s32 %v8366, %v8385
        %vm8391 = vc.u32 %v8366, %v8385
        %v8392 = vadd.s32 %v8388, 1
        %v8393 = vsel %vm8391, %v8392, %v8388
        %v8394 = vadd.s32 %v8389, %v8393
        %v8395 = vadd.s32 %v8394, 536870912
        %v8396 = vshrl.u32 %v8395, 30
        %v8397 = vshll.u32 %v8396, 30
        %v8398 = vsub.s32 %v8394, %v8397
        %vm8399 = vcmp.lt.s32.totalorder %v8398, 0
        %v8400 = vsub.s32 0, %v8398
        %v8401 = vsel %vm8399, %v8400, %v8398
        %v8402 = vclz %v8401
        %v8403 = vsub.s32 %v8402, 2
        %vm8404 = vcmp.gt.s32.totalorder 0, %v8403
        %v8405 = vsel %vm8404, 0, %v8403
        %v8406 = vsub.s32 32, %v8405
        %v8407 = vshll.u32 %v8398, %v8405
        %v8408 = vshrl.u32 %v8390, %v8406
        %v8409 = vor.u32 %v8407, %v8408
        %v8410 = vsub.s32 4294967266, %v8405
        %v8411 = vadd.s32 %v8410, 127
        %v8412 = vshll.u32 %v8411, 23
        %v8413 = vor.u32 4788187, %v8412
        %v8414 = vand.u32 2147483647, %v8413
        %v8416 = vcvt.s32.f32 %v8409
        %v8417 = vmul.f32 %v8416, %v8414
        %v8418 = vxor.u32 %v8417, 2147483648
        %v8419 = vsel %vm8298, %v8418, %v8417
        %v8420 = vsub.s32 4, %v8396
        %v8421 = vsel %vm8298, %v8420, %v8396
        %v8422 = vsel %vm8297, %v358, %v8419
        %v8423 = vsel %vm8297, 0, %v8421
        %v8424 = vmul.f32 %v8422, %v8422
        %v8425 = vmul.f32 %v8424, -0.001358992
        %v8426 = vadd.f32 %v8425, 0.041655596
        %v8427 = vmul.f32 %v8424, %v8426
        %v8428 = vadd.f32 %v8427, -0.4999988
        %v8429 = vmul.f32 %v8424, %v8428
        %v8430 = vadd.f32 1.0, %v8429
        %v8431 = vmul.f32 %v8422, %v8422
        %v8432 = vmul.f32 %v8431, -0.00019511016
        %v8433 = vadd.f32 %v8432, 0.008332121
        %v8434 = vmul.f32 %v8431, %v8433
        %v8435 = vadd.f32 %v8434, -0.16666654
        %v8436 = vmul.f32 %v8431, %v8435
        %v8437 = vadd.f32 %v8436, 1.0
        %v8438 = vmul.f32 %v8437, %v8422
        %vm8439 = vweird.f32 %v358
        %v8440 = vand.u32 %v8423, 3
        %vm8441 = vcmp.lt.s32.totalorder %v8440, 2
        %vm8442 = vcmp.eq.s32.totalorder %v8440, 0
        %v8443 = vxor.u32 %v8438, 2147483648
        %v8444 = vsel %vm8442, %v8430, %v8443
        %vm8445 = vcmp.eq.s32.totalorder %v8440, 2
        %v8446 = vxor.u32 %v8430, 2147483648
        %v8447 = vsel %vm8445, %v8446, %v8438
        %v8448 = vsel %vm8441, %v8444, %v8447
        %v8449 = vsel %vm8439, nan, %v8448
        %v8450 = vand.u32 2147483647, %v296
        %vm8451 = vcmp.le.f32.partialorder %v8450, 0.7853982
        %vm8452 = vcmp.lt.s32.totalorder %v296, 0
        %v8453 = vand.u32 %v296, 2139095040
        %v8454 = vshrl.u32 %v8453, 23
        %v8455 = vsub.s32 %v8454, 127
        %v8456 = vand.u32 2147483647, %v296
        %v8457 = vand.u32 %v8456, 8388607
        %v8458 = vor.u32 %v8457, 8388608
        %v8459 = vsub.s32 0, %v8458
        %v8460 = vadd.s32 %v8455, 1
        %vm8461 = vcmp.gt.s32.totalorder %v8460, 0
        %v8462 = vsel %vm8461, %v8460, 0
        %v8463 = vshrl.u32 %v8462, 5
        %v8464 = vand.u32 %v8462, 31
        %v8465 = vsub.s32 32, %v8464
        %v8466 = vshrl.u32 683565275, %v8465
        %v8467 = vshll.u32 683565275, %v8464
        %v8468 = vshrl.u32 2475754826, %v8465
        %v8469 = vor.u32 %v8467, %v8468
        %v8470 = vshll.u32 2475754826, %v8464
        %v8471 = vshrl.u32 2131351028, %v8465
        %v8472 = vor.u32 %v8470, %v8471
        %v8473 = vshll.u32 2131351028, %v8464
        %v8474 = vshrl.u32 2102212464, %v8465
        %v8475 = vor.u32 %v8473, %v8474
        %v8476 = vshll.u32 2102212464, %v8464
        %v8477 = vshrl.u32 920167782, %v8465
        %v8478 = vor.u32 %v8476, %v8477
        %v8479 = vshll.u32 920167782, %v8464
        %v8480 = vshrl.u32 1326507024, %v8465
        %v8481 = vor.u32 %v8479, %v8480
        %vm8482 = vcmp.lt.s32.totalorder %v8463, 1
        %vm8483 = vcmp.lt.s32.totalorder %v8463, 2
        %vm8484 = vcmp.lt.s32.totalorder %v8463, 3
        %vm8485 = vcmp.lt.s32.totalorder %v8463, 4
        %v8486 = vsel %vm8482, %v8466, %v8469
        %v8487 = vsel %vm8485, %v8475, 2102212464
        %v8488 = vsel %vm8484, %v8472, %v8487
        %v8489 = vsel %vm8483, %v8486, %v8488
        %v8490 = vsel %vm8482, %v8469, %v8472
        %v8491 = vsel %vm8485, %v8478, 920167782
        %v8492 = vsel %vm8484, %v8475, %v8491
        %v8493 = vsel %vm8483, %v8490, %v8492
        %v8494 = vsel %vm8482, %v8472, %v8475
        %v8495 = vsel %vm8485, %v8481, 1326507024
        %v8496 = vsel %vm8484, %v8478, %v8495
        %v8497 = vsel %vm8483, %v8494, %v8496
        %v8498 = vshll.u32 %v8458, 8
        %v8499 = vand.u32 %v8498, 65535
        %v8500 = vshrl.u32 %v8498, 16
        %v8501 = vand.u32 %v8497, 65535
        %v8502 = vshrl.u32 %v8497, 16
        %v8503 = vmul.u32 %v8499, %v8501
        %v8504 = vmul.u32 %v8499, %v8502
        %v8505 = vmul.u32 %v8500, %v8501
        %v8506 = vmul.u32 %v8500, %v8502
        %v8507 = vshll.u32 %v8504, 16
        %v8508 = vshrl.u32 %v8504, 16
        %v8509 = vshll.u32 %v8505, 16
        %v8510 = vshrl.u32 %v8505, 16
        %vm8511 = vc.u32 %v8503, %v8507
        %v8512 = vsel %vm8511, 1, 0
        %v8513 = vadd.s32 %v8503, %v8507
        %v8514 = vadd.s32 %v8506, %v8512
        %vm8515 = vc.u32 %v8513, %v8509
        %v8516 = vsel %vm8515, 1, 0
        %v8517 = vadd.s32 %v8513, %v8509
        %v8518 = vadd.s32 %v8514, %v8516
        %v8519 = vadd.s32 %v8518, %v8508
        %v8520 = vadd.s32 %v8519, %v8510
        %v8521 = vand.u32 %v8498, 65535
        %v8522 = vshrl.u32 %v8498, 16
        %v8523 = vand.u32 %v8493, 65535
        %v8524 = vshrl.u32 %v8493, 16
        %v8525 = vmul.u32 %v8521, %v8523
        %v8526 = vmul.u32 %v8521, %v8524
        %v8527 = vmul.u32 %v8522, %v8523
        %v8528 = vmul.u32 %v8522, %v8524
        %v8529 = vshll.u32 %v8526, 16
        %v8530 = vshrl.u32 %v8526, 16
        %v8531 = vshll.u32 %v8527, 16
        %v8532 = vshrl.u32 %v8527, 16
        %vm8533 = vc.u32 %v8525, %v8529
        %v8534 = vsel %vm8533, 1, 0
        %v8535 = vadd.s32 %v8525, %v8529
        %v8536 = vadd.s32 %v8528, %v8534
        %vm8537 = vc.u32 %v8535, %v8531
        %v8538 = vsel %vm8537, 1, 0
        %v8539 = vadd.s32 %v8535, %v8531
        %v8540 = vadd.s32 %v8536, %v8538
        %v8541 = vadd.s32 %v8540, %v8530
        %v8542 = vadd.s32 %v8541, %v8532
        %v8543 = vmul.u32 %v8498, %v8489
        %v8544 = vadd.s32 %v8520, %v8539
        %vm8545 = vc.u32 %v8520, %v8539
        %v8546 = vadd.s32 %v8542, 1
        %v8547 = vsel %vm8545, %v8546, %v8542
        %v8548 = vadd.s32 %v8543, %v8547
        %v8549 = vadd.s32 %v8548, 536870912
        %v8550 = vshrl.u32 %v8549, 30
        %v8551 = vshll.u32 %v8550, 30
        %v8552 = vsub.s32 %v8548, %v8551
        %vm8553 = vcmp.lt.s32.totalorder %v8552, 0
        %v8554 = vsub.s32 0, %v8552
        %v8555 = vsel %vm8553, %v8554, %v8552
        %v8556 = vclz %v8555
        %v8557 = vsub.s32 %v8556, 2
        %vm8558 = vcmp.gt.s32.totalorder 0, %v8557
        %v8559 = vsel %vm8558, 0, %v8557
        %v8560 = vsub.s32 32, %v8559
        %v8561 = vshll.u32 %v8552, %v8559
        %v8562 = vshrl.u32 %v8544, %v8560
        %v8563 = vor.u32 %v8561, %v8562
        %v8564 = vsub.s32 4294967266, %v8559
        %v8565 = vadd.s32 %v8564, 127
        %v8566 = vshll.u32 %v8565, 23
        %v8567 = vor.u32 4788187, %v8566
        %v8568 = vand.u32 2147483647, %v8567
        %v8570 = vcvt.s32.f32 %v8563
        %v8571 = vmul.f32 %v8570, %v8568
        %v8572 = vxor.u32 %v8571, 2147483648
        %v8573 = vsel %vm8452, %v8572, %v8571
        %v8574 = vsub.s32 4, %v8550
        %v8575 = vsel %vm8452, %v8574, %v8550
        %v8576 = vsel %vm8451, %v296, %v8573
        %v8577 = vsel %vm8451, 0, %v8575
        %v8578 = vmul.f32 %v8576, %v8576
        %v8579 = vmul.f32 %v8578, -0.001358992
        %v8580 = vadd.f32 %v8579, 0.041655596
        %v8581 = vmul.f32 %v8578, %v8580
        %v8582 = vadd.f32 %v8581, -0.4999988
        %v8583 = vmul.f32 %v8578, %v8582
        %v8584 = vadd.f32 1.0, %v8583
        %v8585 = vmul.f32 %v8576, %v8576
        %v8586 = vmul.f32 %v8585, -0.00019511016
        %v8587 = vadd.f32 %v8586, 0.008332121
        %v8588 = vmul.f32 %v8585, %v8587
        %v8589 = vadd.f32 %v8588, -0.16666654
        %v8590 = vmul.f32 %v8585, %v8589
        %v8591 = vadd.f32 %v8590, 1.0
        %v8592 = vmul.f32 %v8591, %v8576
        %vm8593 = vweird.f32 %v296
        %v8594 = vand.u32 %v8577, 3
        %vm8595 = vcmp.lt.s32.totalorder %v8594, 2
        %vm8596 = vcmp.eq.s32.totalorder %v8594, 0
        %v8597 = vxor.u32 %v8592, 2147483648
        %v8598 = vsel %vm8596, %v8584, %v8597
        %vm8599 = vcmp.eq.s32.totalorder %v8594, 2
        %v8600 = vxor.u32 %v8584, 2147483648
        %v8601 = vsel %vm8599, %v8600, %v8592
        %v8602 = vsel %vm8595, %v8598, %v8601
        %v8603 = vsel %vm8593, nan, %v8602
        %v8604 = vand.u32 2147483647, %v361
        %vm8605 = vcmp.le.f32.partialorder %v8604, 0.7853982
        %vm8606 = vcmp.lt.s32.totalorder %v361, 0
        %v8607 = vand.u32 %v361, 2139095040
        %v8608 = vshrl.u32 %v8607, 23
        %v8609 = vsub.s32 %v8608, 127
        %v8610 = vand.u32 2147483647, %v361
        %v8611 = vand.u32 %v8610, 8388607
        %v8612 = vor.u32 %v8611, 8388608
        %v8613 = vsub.s32 0, %v8612
        %v8614 = vadd.s32 %v8609, 1
        %vm8615 = vcmp.gt.s32.totalorder %v8614, 0
        %v8616 = vsel %vm8615, %v8614, 0
        %v8617 = vshrl.u32 %v8616, 5
        %v8618 = vand.u32 %v8616, 31
        %v8619 = vsub.s32 32, %v8618
        %v8620 = vshrl.u32 683565275, %v8619
        %v8621 = vshll.u32 683565275, %v8618
        %v8622 = vshrl.u32 2475754826, %v8619
        %v8623 = vor.u32 %v8621, %v8622
        %v8624 = vshll.u32 2475754826, %v8618
        %v8625 = vshrl.u32 2131351028, %v8619
        %v8626 = vor.u32 %v8624, %v8625
        %v8627 = vshll.u32 2131351028, %v8618
        %v8628 = vshrl.u32 2102212464, %v8619
        %v8629 = vor.u32 %v8627, %v8628
        %v8630 = vshll.u32 2102212464, %v8618
        %v8631 = vshrl.u32 920167782, %v8619
        %v8632 = vor.u32 %v8630, %v8631
        %v8633 = vshll.u32 920167782, %v8618
        %v8634 = vshrl.u32 1326507024, %v8619
        %v8635 = vor.u32 %v8633, %v8634
        %vm8636 = vcmp.lt.s32.totalorder %v8617, 1
        %vm8637 = vcmp.lt.s32.totalorder %v8617, 2
        %vm8638 = vcmp.lt.s32.totalorder %v8617, 3
        %vm8639 = vcmp.lt.s32.totalorder %v8617, 4
        %v8640 = vsel %vm8636, %v8620, %v8623
        %v8641 = vsel %vm8639, %v8629, 2102212464
        %v8642 = vsel %vm8638, %v8626, %v8641
        %v8643 = vsel %vm8637, %v8640, %v8642
        %v8644 = vsel %vm8636, %v8623, %v8626
        %v8645 = vsel %vm8639, %v8632, 920167782
        %v8646 = vsel %vm8638, %v8629, %v8645
        %v8647 = vsel %vm8637, %v8644, %v8646
        %v8648 = vsel %vm8636, %v8626, %v8629
        %v8649 = vsel %vm8639, %v8635, 1326507024
        %v8650 = vsel %vm8638, %v8632, %v8649
        %v8651 = vsel %vm8637, %v8648, %v8650
        %v8652 = vshll.u32 %v8612, 8
        %v8653 = vand.u32 %v8652, 65535
        %v8654 = vshrl.u32 %v8652, 16
        %v8655 = vand.u32 %v8651, 65535
        %v8656 = vshrl.u32 %v8651, 16
        %v8657 = vmul.u32 %v8653, %v8655
        %v8658 = vmul.u32 %v8653, %v8656
        %v8659 = vmul.u32 %v8654, %v8655
        %v8660 = vmul.u32 %v8654, %v8656
        %v8661 = vshll.u32 %v8658, 16
        %v8662 = vshrl.u32 %v8658, 16
        %v8663 = vshll.u32 %v8659, 16
        %v8664 = vshrl.u32 %v8659, 16
        %vm8665 = vc.u32 %v8657, %v8661
        %v8666 = vsel %vm8665, 1, 0
        %v8667 = vadd.s32 %v8657, %v8661
        %v8668 = vadd.s32 %v8660, %v8666
        %vm8669 = vc.u32 %v8667, %v8663
        %v8670 = vsel %vm8669, 1, 0
        %v8671 = vadd.s32 %v8667, %v8663
        %v8672 = vadd.s32 %v8668, %v8670
        %v8673 = vadd.s32 %v8672, %v8662
        %v8674 = vadd.s32 %v8673, %v8664
        %v8675 = vand.u32 %v8652, 65535
        %v8676 = vshrl.u32 %v8652, 16
        %v8677 = vand.u32 %v8647, 65535
        %v8678 = vshrl.u32 %v8647, 16
        %v8679 = vmul.u32 %v8675, %v8677
        %v8680 = vmul.u32 %v8675, %v8678
        %v8681 = vmul.u32 %v8676, %v8677
        %v8682 = vmul.u32 %v8676, %v8678
        %v8683 = vshll.u32 %v8680, 16
        %v8684 = vshrl.u32 %v8680, 16
        %v8685 = vshll.u32 %v8681, 16
        %v8686 = vshrl.u32 %v8681, 16
        %vm8687 = vc.u32 %v8679, %v8683
        %v8688 = vsel %vm8687, 1, 0
        %v8689 = vadd.s32 %v8679, %v8683
        %v8690 = vadd.s32 %v8682, %v8688
        %vm8691 = vc.u32 %v8689, %v8685
        %v8692 = vsel %vm8691, 1, 0
        %v8693 = vadd.s32 %v8689, %v8685
        %v8694 = vadd.s32 %v8690, %v8692
        %v8695 = vadd.s32 %v8694, %v8684
        %v8696 = vadd.s32 %v8695, %v8686
        %v8697 = vmul.u32 %v8652, %v8643
        %v8698 = vadd.s32 %v8674, %v8693
        %vm8699 = vc.u32 %v8674, %v8693
        %v8700 = vadd.s32 %v8696, 1
        %v8701 = vsel %vm8699, %v8700, %v8696
        %v8702 = vadd.s32 %v8697, %v8701
        %v8703 = vadd.s32 %v8702, 536870912
        %v8704 = vshrl.u32 %v8703, 30
        %v8705 = vshll.u32 %v8704, 30
        %v8706 = vsub.s32 %v8702, %v8705
        %vm8707 = vcmp.lt.s32.totalorder %v8706, 0
        %v8708 = vsub.s32 0, %v8706
        %v8709 = vsel %vm8707, %v8708, %v8706
        %v8710 = vclz %v8709
        %v8711 = vsub.s32 %v8710, 2
        %vm8712 = vcmp.gt.s32.totalorder 0, %v8711
        %v8713 = vsel %vm8712, 0, %v8711
        %v8714 = vsub.s32 32, %v8713
        %v8715 = vshll.u32 %v8706, %v8713
        %v8716 = vshrl.u32 %v8698, %v8714
        %v8717 = vor.u32 %v8715, %v8716
        %v8718 = vsub.s32 4294967266, %v8713
        %v8719 = vadd.s32 %v8718, 127
        %v8720 = vshll.u32 %v8719, 23
        %v8721 = vor.u32 4788187, %v8720
        %v8722 = vand.u32 2147483647, %v8721
        %v8724 = vcvt.s32.f32 %v8717
        %v8725 = vmul.f32 %v8724, %v8722
        %v8726 = vxor.u32 %v8725, 2147483648
        %v8727 = vsel %vm8606, %v8726, %v8725
        %v8728 = vsub.s32 4, %v8704
        %v8729 = vsel %vm8606, %v8728, %v8704
        %v8730 = vsel %vm8605, %v361, %v8727
        %v8731 = vsel %vm8605, 0, %v8729
        %v8732 = vmul.f32 %v8730, %v8730
        %v8733 = vmul.f32 %v8732, -0.001358992
        %v8734 = vadd.f32 %v8733, 0.041655596
        %v8735 = vmul.f32 %v8732, %v8734
        %v8736 = vadd.f32 %v8735, -0.4999988
        %v8737 = vmul.f32 %v8732, %v8736
        %v8738 = vadd.f32 1.0, %v8737
        %v8739 = vmul.f32 %v8730, %v8730
        %v8740 = vmul.f32 %v8739, -0.00019511016
        %v8741 = vadd.f32 %v8740, 0.008332121
        %v8742 = vmul.f32 %v8739, %v8741
        %v8743 = vadd.f32 %v8742, -0.16666654
        %v8744 = vmul.f32 %v8739, %v8743
        %v8745 = vadd.f32 %v8744, 1.0
        %v8746 = vmul.f32 %v8745, %v8730
        %vm8747 = vweird.f32 %v361
        %v8748 = vand.u32 %v8731, 3
        %vm8749 = vcmp.lt.s32.totalorder %v8748, 2
        %vm8750 = vcmp.eq.s32.totalorder %v8748, 0
        %v8751 = vxor.u32 %v8746, 2147483648
        %v8752 = vsel %vm8750, %v8738, %v8751
        %vm8753 = vcmp.eq.s32.totalorder %v8748, 2
        %v8754 = vxor.u32 %v8738, 2147483648
        %v8755 = vsel %vm8753, %v8754, %v8746
        %v8756 = vsel %vm8749, %v8752, %v8755
        %v8757 = vsel %vm8747, nan, %v8756
        %v8758 = vand.u32 2147483647, %v299
        %vm8759 = vcmp.le.f32.partialorder %v8758, 0.7853982
        %vm8760 = vcmp.lt.s32.totalorder %v299, 0
        %v8761 = vand.u32 %v299, 2139095040
        %v8762 = vshrl.u32 %v8761, 23
        %v8763 = vsub.s32 %v8762, 127
        %v8764 = vand.u32 2147483647, %v299
        %v8765 = vand.u32 %v8764, 8388607
        %v8766 = vor.u32 %v8765, 8388608
        %v8767 = vsub.s32 0, %v8766
        %v8768 = vadd.s32 %v8763, 1
        %vm8769 = vcmp.gt.s32.totalorder %v8768, 0
        %v8770 = vsel %vm8769, %v8768, 0
        %v8771 = vshrl.u32 %v8770, 5
        %v8772 = vand.u32 %v8770, 31
        %v8773 = vsub.s32 32, %v8772
        %v8774 = vshrl.u32 683565275, %v8773
        %v8775 = vshll.u32 683565275, %v8772
        %v8776 = vshrl.u32 2475754826, %v8773
        %v8777 = vor.u32 %v8775, %v8776
        %v8778 = vshll.u32 2475754826, %v8772
        %v8779 = vshrl.u32 2131351028, %v8773
        %v8780 = vor.u32 %v8778, %v8779
        %v8781 = vshll.u32 2131351028, %v8772
        %v8782 = vshrl.u32 2102212464, %v8773
        %v8783 = vor.u32 %v8781, %v8782
        %v8784 = vshll.u32 2102212464, %v8772
        %v8785 = vshrl.u32 920167782, %v8773
        %v8786 = vor.u32 %v8784, %v8785
        %v8787 = vshll.u32 920167782, %v8772
        %v8788 = vshrl.u32 1326507024, %v8773
        %v8789 = vor.u32 %v8787, %v8788
        %vm8790 = vcmp.lt.s32.totalorder %v8771, 1
        %vm8791 = vcmp.lt.s32.totalorder %v8771, 2
        %vm8792 = vcmp.lt.s32.totalorder %v8771, 3
        %vm8793 = vcmp.lt.s32.totalorder %v8771, 4
        %v8794 = vsel %vm8790, %v8774, %v8777
        %v8795 = vsel %vm8793, %v8783, 2102212464
        %v8796 = vsel %vm8792, %v8780, %v8795
        %v8797 = vsel %vm8791, %v8794, %v8796
        %v8798 = vsel %vm8790, %v8777, %v8780
        %v8799 = vsel %vm8793, %v8786, 920167782
        %v8800 = vsel %vm8792, %v8783, %v8799
        %v8801 = vsel %vm8791, %v8798, %v8800
        %v8802 = vsel %vm8790, %v8780, %v8783
        %v8803 = vsel %vm8793, %v8789, 1326507024
        %v8804 = vsel %vm8792, %v8786, %v8803
        %v8805 = vsel %vm8791, %v8802, %v8804
        %v8806 = vshll.u32 %v8766, 8
        %v8807 = vand.u32 %v8806, 65535
        %v8808 = vshrl.u32 %v8806, 16
        %v8809 = vand.u32 %v8805, 65535
        %v8810 = vshrl.u32 %v8805, 16
        %v8811 = vmul.u32 %v8807, %v8809
        %v8812 = vmul.u32 %v8807, %v8810
        %v8813 = vmul.u32 %v8808, %v8809
        %v8814 = vmul.u32 %v8808, %v8810
        %v8815 = vshll.u32 %v8812, 16
        %v8816 = vshrl.u32 %v8812, 16
        %v8817 = vshll.u32 %v8813, 16
        %v8818 = vshrl.u32 %v8813, 16
        %vm8819 = vc.u32 %v8811, %v8815
        %v8820 = vsel %vm8819, 1, 0
        %v8821 = vadd.s32 %v8811, %v8815
        %v8822 = vadd.s32 %v8814, %v8820
        %vm8823 = vc.u32 %v8821, %v8817
        %v8824 = vsel %vm8823, 1, 0
        %v8825 = vadd.s32 %v8821, %v8817
        %v8826 = vadd.s32 %v8822, %v8824
        %v8827 = vadd.s32 %v8826, %v8816
        %v8828 = vadd.s32 %v8827, %v8818
        %v8829 = vand.u32 %v8806, 65535
        %v8830 = vshrl.u32 %v8806, 16
        %v8831 = vand.u32 %v8801, 65535
        %v8832 = vshrl.u32 %v8801, 16
        %v8833 = vmul.u32 %v8829, %v8831
        %v8834 = vmul.u32 %v8829, %v8832
        %v8835 = vmul.u32 %v8830, %v8831
        %v8836 = vmul.u32 %v8830, %v8832
        %v8837 = vshll.u32 %v8834, 16
        %v8838 = vshrl.u32 %v8834, 16
        %v8839 = vshll.u32 %v8835, 16
        %v8840 = vshrl.u32 %v8835, 16
        %vm8841 = vc.u32 %v8833, %v8837
        %v8842 = vsel %vm8841, 1, 0
        %v8843 = vadd.s32 %v8833, %v8837
        %v8844 = vadd.s32 %v8836, %v8842
        %vm8845 = vc.u32 %v8843, %v8839
        %v8846 = vsel %vm8845, 1, 0
        %v8847 = vadd.s32 %v8843, %v8839
        %v8848 = vadd.s32 %v8844, %v8846
        %v8849 = vadd.s32 %v8848, %v8838
        %v8850 = vadd.s32 %v8849, %v8840
        %v8851 = vmul.u32 %v8806, %v8797
        %v8852 = vadd.s32 %v8828, %v8847
        %vm8853 = vc.u32 %v8828, %v8847
        %v8854 = vadd.s32 %v8850, 1
        %v8855 = vsel %vm8853, %v8854, %v8850
        %v8856 = vadd.s32 %v8851, %v8855
        %v8857 = vadd.s32 %v8856, 536870912
        %v8858 = vshrl.u32 %v8857, 30
        %v8859 = vshll.u32 %v8858, 30
        %v8860 = vsub.s32 %v8856, %v8859
        %vm8861 = vcmp.lt.s32.totalorder %v8860, 0
        %v8862 = vsub.s32 0, %v8860
        %v8863 = vsel %vm8861, %v8862, %v8860
        %v8864 = vclz %v8863
        %v8865 = vsub.s32 %v8864, 2
        %vm8866 = vcmp.gt.s32.totalorder 0, %v8865
        %v8867 = vsel %vm8866, 0, %v8865
        %v8868 = vsub.s32 32, %v8867
        %v8869 = vshll.u32 %v8860, %v8867
        %v8870 = vshrl.u32 %v8852, %v8868
        %v8871 = vor.u32 %v8869, %v8870
        %v8872 = vsub.s32 4294967266, %v8867
        %v8873 = vadd.s32 %v8872, 127
        %v8874 = vshll.u32 %v8873, 23
        %v8875 = vor.u32 4788187, %v8874
        %v8876 = vand.u32 2147483647, %v8875
        %v8878 = vcvt.s32.f32 %v8871
        %v8879 = vmul.f32 %v8878, %v8876
        %v8880 = vxor.u32 %v8879, 2147483648
        %v8881 = vsel %vm8760, %v8880, %v8879
        %v8882 = vsub.s32 4, %v8858
        %v8883 = vsel %vm8760, %v8882, %v8858
        %v8884 = vsel %vm8759, %v299, %v8881
        %v8885 = vsel %vm8759, 0, %v8883
        %v8886 = vmul.f32 %v8884, %v8884
        %v8887 = vmul.f32 %v8886, -0.001358992
        %v8888 = vadd.f32 %v8887, 0.041655596
        %v8889 = vmul.f32 %v8886, %v8888
        %v8890 = vadd.f32 %v8889, -0.4999988
        %v8891 = vmul.f32 %v8886, %v8890
        %v8892 = vadd.f32 1.0, %v8891
        %v8893 = vmul.f32 %v8884, %v8884
        %v8894 = vmul.f32 %v8893, -0.00019511016
        %v8895 = vadd.f32 %v8894, 0.008332121
        %v8896 = vmul.f32 %v8893, %v8895
        %v8897 = vadd.f32 %v8896, -0.16666654
        %v8898 = vmul.f32 %v8893, %v8897
        %v8899 = vadd.f32 %v8898, 1.0
        %v8900 = vmul.f32 %v8899, %v8884
        %vm8901 = vweird.f32 %v299
        %v8902 = vand.u32 %v8885, 3
        %vm8903 = vcmp.lt.s32.totalorder %v8902, 2
        %vm8904 = vcmp.eq.s32.totalorder %v8902, 0
        %v8905 = vxor.u32 %v8900, 2147483648
        %v8906 = vsel %vm8904, %v8892, %v8905
        %vm8907 = vcmp.eq.s32.totalorder %v8902, 2
        %v8908 = vxor.u32 %v8892, 2147483648
        %v8909 = vsel %vm8907, %v8908, %v8900
        %v8910 = vsel %vm8903, %v8906, %v8909
        %v8911 = vsel %vm8901, nan, %v8910
        %v8912 = vand.u32 2147483647, %v364
        %vm8913 = vcmp.le.f32.partialorder %v8912, 0.7853982
        %vm8914 = vcmp.lt.s32.totalorder %v364, 0
        %v8915 = vand.u32 %v364, 2139095040
        %v8916 = vshrl.u32 %v8915, 23
        %v8917 = vsub.s32 %v8916, 127
        %v8918 = vand.u32 2147483647, %v364
        %v8919 = vand.u32 %v8918, 8388607
        %v8920 = vor.u32 %v8919, 8388608
        %v8921 = vsub.s32 0, %v8920
        %v8922 = vadd.s32 %v8917, 1
        %vm8923 = vcmp.gt.s32.totalorder %v8922, 0
        %v8924 = vsel %vm8923, %v8922, 0
        %v8925 = vshrl.u32 %v8924, 5
        %v8926 = vand.u32 %v8924, 31
        %v8927 = vsub.s32 32, %v8926
        %v8928 = vshrl.u32 683565275, %v8927
        %v8929 = vshll.u32 683565275, %v8926
        %v8930 = vshrl.u32 2475754826, %v8927
        %v8931 = vor.u32 %v8929, %v8930
        %v8932 = vshll.u32 2475754826, %v8926
        %v8933 = vshrl.u32 2131351028, %v8927
        %v8934 = vor.u32 %v8932, %v8933
        %v8935 = vshll.u32 2131351028, %v8926
        %v8936 = vshrl.u32 2102212464, %v8927
        %v8937 = vor.u32 %v8935, %v8936
        %v8938 = vshll.u32 2102212464, %v8926
        %v8939 = vshrl.u32 920167782, %v8927
        %v8940 = vor.u32 %v8938, %v8939
        %v8941 = vshll.u32 920167782, %v8926
        %v8942 = vshrl.u32 1326507024, %v8927
        %v8943 = vor.u32 %v8941, %v8942
        %vm8944 = vcmp.lt.s32.totalorder %v8925, 1
        %vm8945 = vcmp.lt.s32.totalorder %v8925, 2
        %vm8946 = vcmp.lt.s32.totalorder %v8925, 3
        %vm8947 = vcmp.lt.s32.totalorder %v8925, 4
        %v8948 = vsel %vm8944, %v8928, %v8931
        %v8949 = vsel %vm8947, %v8937, 2102212464
        %v8950 = vsel %vm8946, %v8934, %v8949
        %v8951 = vsel %vm8945, %v8948, %v8950
        %v8952 = vsel %vm8944, %v8931, %v8934
        %v8953 = vsel %vm8947, %v8940, 920167782
        %v8954 = vsel %vm8946, %v8937, %v8953
        %v8955 = vsel %vm8945, %v8952, %v8954
        %v8956 = vsel %vm8944, %v8934, %v8937
        %v8957 = vsel %vm8947, %v8943, 1326507024
        %v8958 = vsel %vm8946, %v8940, %v8957
        %v8959 = vsel %vm8945, %v8956, %v8958
        %v8960 = vshll.u32 %v8920, 8
        %v8961 = vand.u32 %v8960, 65535
        %v8962 = vshrl.u32 %v8960, 16
        %v8963 = vand.u32 %v8959, 65535
        %v8964 = vshrl.u32 %v8959, 16
        %v8965 = vmul.u32 %v8961, %v8963
        %v8966 = vmul.u32 %v8961, %v8964
        %v8967 = vmul.u32 %v8962, %v8963
        %v8968 = vmul.u32 %v8962, %v8964
        %v8969 = vshll.u32 %v8966, 16
        %v8970 = vshrl.u32 %v8966, 16
        %v8971 = vshll.u32 %v8967, 16
        %v8972 = vshrl.u32 %v8967, 16
        %vm8973 = vc.u32 %v8965, %v8969
        %v8974 = vsel %vm8973, 1, 0
        %v8975 = vadd.s32 %v8965, %v8969
        %v8976 = vadd.s32 %v8968, %v8974
        %vm8977 = vc.u32 %v8975, %v8971
        %v8978 = vsel %vm8977, 1, 0
        %v8979 = vadd.s32 %v8975, %v8971
        %v8980 = vadd.s32 %v8976, %v8978
        %v8981 = vadd.s32 %v8980, %v8970
        %v8982 = vadd.s32 %v8981, %v8972
        %v8983 = vand.u32 %v8960, 65535
        %v8984 = vshrl.u32 %v8960, 16
        %v8985 = vand.u32 %v8955, 65535
        %v8986 = vshrl.u32 %v8955, 16
        %v8987 = vmul.u32 %v8983, %v8985
        %v8988 = vmul.u32 %v8983, %v8986
        %v8989 = vmul.u32 %v8984, %v8985
        %v8990 = vmul.u32 %v8984, %v8986
        %v8991 = vshll.u32 %v8988, 16
        %v8992 = vshrl.u32 %v8988, 16
        %v8993 = vshll.u32 %v8989, 16
        %v8994 = vshrl.u32 %v8989, 16
        %vm8995 = vc.u32 %v8987, %v8991
        %v8996 = vsel %vm8995, 1, 0
        %v8997 = vadd.s32 %v8987, %v8991
        %v8998 = vadd.s32 %v8990, %v8996
        %vm8999 = vc.u32 %v8997, %v8993
        %v9000 = vsel %vm8999, 1, 0
        %v9001 = vadd.s32 %v8997, %v8993
        %v9002 = vadd.s32 %v8998, %v9000
        %v9003 = vadd.s32 %v9002, %v8992
        %v9004 = vadd.s32 %v9003, %v8994
        %v9005 = vmul.u32 %v8960, %v8951
        %v9006 = vadd.s32 %v8982, %v9001
        %vm9007 = vc.u32 %v8982, %v9001
        %v9008 = vadd.s32 %v9004, 1
        %v9009 = vsel %vm9007, %v9008, %v9004
        %v9010 = vadd.s32 %v9005, %v9009
        %v9011 = vadd.s32 %v9010, 536870912
        %v9012 = vshrl.u32 %v9011, 30
        %v9013 = vshll.u32 %v9012, 30
        %v9014 = vsub.s32 %v9010, %v9013
        %vm9015 = vcmp.lt.s32.totalorder %v9014, 0
        %v9016 = vsub.s32 0, %v9014
        %v9017 = vsel %vm9015, %v9016, %v9014
        %v9018 = vclz %v9017
        %v9019 = vsub.s32 %v9018, 2
        %vm9020 = vcmp.gt.s32.totalorder 0, %v9019
        %v9021 = vsel %vm9020, 0, %v9019
        %v9022 = vsub.s32 32, %v9021
        %v9023 = vshll.u32 %v9014, %v9021
        %v9024 = vshrl.u32 %v9006, %v9022
        %v9025 = vor.u32 %v9023, %v9024
        %v9026 = vsub.s32 4294967266, %v9021
        %v9027 = vadd.s32 %v9026, 127
        %v9028 = vshll.u32 %v9027, 23
        %v9029 = vor.u32 4788187, %v9028
        %v9030 = vand.u32 2147483647, %v9029
        %v9032 = vcvt.s32.f32 %v9025
        %v9033 = vmul.f32 %v9032, %v9030
        %v9034 = vxor.u32 %v9033, 2147483648
        %v9035 = vsel %vm8914, %v9034, %v9033
        %v9036 = vsub.s32 4, %v9012
        %v9037 = vsel %vm8914, %v9036, %v9012
        %v9038 = vsel %vm8913, %v364, %v9035
        %v9039 = vsel %vm8913, 0, %v9037
        %v9040 = vmul.f32 %v9038, %v9038
        %v9041 = vmul.f32 %v9040, -0.001358992
        %v9042 = vadd.f32 %v9041, 0.041655596
        %v9043 = vmul.f32 %v9040, %v9042
        %v9044 = vadd.f32 %v9043, -0.4999988
        %v9045 = vmul.f32 %v9040, %v9044
        %v9046 = vadd.f32 1.0, %v9045
        %v9047 = vmul.f32 %v9038, %v9038
        %v9048 = vmul.f32 %v9047, -0.00019511016
        %v9049 = vadd.f32 %v9048, 0.008332121
        %v9050 = vmul.f32 %v9047, %v9049
        %v9051 = vadd.f32 %v9050, -0.16666654
        %v9052 = vmul.f32 %v9047, %v9051
        %v9053 = vadd.f32 %v9052, 1.0
        %v9054 = vmul.f32 %v9053, %v9038
        %vm9055 = vweird.f32 %v364
        %v9056 = vand.u32 %v9039, 3
        %vm9057 = vcmp.lt.s32.totalorder %v9056, 2
        %vm9058 = vcmp.eq.s32.totalorder %v9056, 0
        %v9059 = vxor.u32 %v9054, 2147483648
        %v9060 = vsel %vm9058, %v9046, %v9059
        %vm9061 = vcmp.eq.s32.totalorder %v9056, 2
        %v9062 = vxor.u32 %v9046, 2147483648
        %v9063 = vsel %vm9061, %v9062, %v9054
        %v9064 = vsel %vm9057, %v9060, %v9063
        %v9065 = vsel %vm9055, nan, %v9064
        %v9066 = vand.u32 2147483647, %v302
        %vm9067 = vcmp.le.f32.partialorder %v9066, 0.7853982
        %vm9068 = vcmp.lt.s32.totalorder %v302, 0
        %v9069 = vand.u32 %v302, 2139095040
        %v9070 = vshrl.u32 %v9069, 23
        %v9071 = vsub.s32 %v9070, 127
        %v9072 = vand.u32 2147483647, %v302
        %v9073 = vand.u32 %v9072, 8388607
        %v9074 = vor.u32 %v9073, 8388608
        %v9075 = vsub.s32 0, %v9074
        %v9076 = vadd.s32 %v9071, 1
        %vm9077 = vcmp.gt.s32.totalorder %v9076, 0
        %v9078 = vsel %vm9077, %v9076, 0
        %v9079 = vshrl.u32 %v9078, 5
        %v9080 = vand.u32 %v9078, 31
        %v9081 = vsub.s32 32, %v9080
        %v9082 = vshrl.u32 683565275, %v9081
        %v9083 = vshll.u32 683565275, %v9080
        %v9084 = vshrl.u32 2475754826, %v9081
        %v9085 = vor.u32 %v9083, %v9084
        %v9086 = vshll.u32 2475754826, %v9080
        %v9087 = vshrl.u32 2131351028, %v9081
        %v9088 = vor.u32 %v9086, %v9087
        %v9089 = vshll.u32 2131351028, %v9080
        %v9090 = vshrl.u32 2102212464, %v9081
        %v9091 = vor.u32 %v9089, %v9090
        %v9092 = vshll.u32 2102212464, %v9080
        %v9093 = vshrl.u32 920167782, %v9081
        %v9094 = vor.u32 %v9092, %v9093
        %v9095 = vshll.u32 920167782, %v9080
        %v9096 = vshrl.u32 1326507024, %v9081
        %v9097 = vor.u32 %v9095, %v9096
        %vm9098 = vcmp.lt.s32.totalorder %v9079, 1
        %vm9099 = vcmp.lt.s32.totalorder %v9079, 2
        %vm9100 = vcmp.lt.s32.totalorder %v9079, 3
        %vm9101 = vcmp.lt.s32.totalorder %v9079, 4
        %v9102 = vsel %vm9098, %v9082, %v9085
        %v9103 = vsel %vm9101, %v9091, 2102212464
        %v9104 = vsel %vm9100, %v9088, %v9103
        %v9105 = vsel %vm9099, %v9102, %v9104
        %v9106 = vsel %vm9098, %v9085, %v9088
        %v9107 = vsel %vm9101, %v9094, 920167782
        %v9108 = vsel %vm9100, %v9091, %v9107
        %v9109 = vsel %vm9099, %v9106, %v9108
        %v9110 = vsel %vm9098, %v9088, %v9091
        %v9111 = vsel %vm9101, %v9097, 1326507024
        %v9112 = vsel %vm9100, %v9094, %v9111
        %v9113 = vsel %vm9099, %v9110, %v9112
        %v9114 = vshll.u32 %v9074, 8
        %v9115 = vand.u32 %v9114, 65535
        %v9116 = vshrl.u32 %v9114, 16
        %v9117 = vand.u32 %v9113, 65535
        %v9118 = vshrl.u32 %v9113, 16
        %v9119 = vmul.u32 %v9115, %v9117
        %v9120 = vmul.u32 %v9115, %v9118
        %v9121 = vmul.u32 %v9116, %v9117
        %v9122 = vmul.u32 %v9116, %v9118
        %v9123 = vshll.u32 %v9120, 16
        %v9124 = vshrl.u32 %v9120, 16
        %v9125 = vshll.u32 %v9121, 16
        %v9126 = vshrl.u32 %v9121, 16
        %vm9127 = vc.u32 %v9119, %v9123
        %v9128 = vsel %vm9127, 1, 0
        %v9129 = vadd.s32 %v9119, %v9123
        %v9130 = vadd.s32 %v9122, %v9128
        %vm9131 = vc.u32 %v9129, %v9125
        %v9132 = vsel %vm9131, 1, 0
        %v9133 = vadd.s32 %v9129, %v9125
        %v9134 = vadd.s32 %v9130, %v9132
        %v9135 = vadd.s32 %v9134, %v9124
        %v9136 = vadd.s32 %v9135, %v9126
        %v9137 = vand.u32 %v9114, 65535
        %v9138 = vshrl.u32 %v9114, 16
        %v9139 = vand.u32 %v9109, 65535
        %v9140 = vshrl.u32 %v9109, 16
        %v9141 = vmul.u32 %v9137, %v9139
        %v9142 = vmul.u32 %v9137, %v9140
        %v9143 = vmul.u32 %v9138, %v9139
        %v9144 = vmul.u32 %v9138, %v9140
        %v9145 = vshll.u32 %v9142, 16
        %v9146 = vshrl.u32 %v9142, 16
        %v9147 = vshll.u32 %v9143, 16
        %v9148 = vshrl.u32 %v9143, 16
        %vm9149 = vc.u32 %v9141, %v9145
        %v9150 = vsel %vm9149, 1, 0
        %v9151 = vadd.s32 %v9141, %v9145
        %v9152 = vadd.s32 %v9144, %v9150
        %vm9153 = vc.u32 %v9151, %v9147
        %v9154 = vsel %vm9153, 1, 0
        %v9155 = vadd.s32 %v9151, %v9147
        %v9156 = vadd.s32 %v9152, %v9154
        %v9157 = vadd.s32 %v9156, %v9146
        %v9158 = vadd.s32 %v9157, %v9148
        %v9159 = vmul.u32 %v9114, %v9105
        %v9160 = vadd.s32 %v9136, %v9155
        %vm9161 = vc.u32 %v9136, %v9155
        %v9162 = vadd.s32 %v9158, 1
        %v9163 = vsel %vm9161, %v9162, %v9158
        %v9164 = vadd.s32 %v9159, %v9163
        %v9165 = vadd.s32 %v9164, 536870912
        %v9166 = vshrl.u32 %v9165, 30
        %v9167 = vshll.u32 %v9166, 30
        %v9168 = vsub.s32 %v9164, %v9167
        %vm9169 = vcmp.lt.s32.totalorder %v9168, 0
        %v9170 = vsub.s32 0, %v9168
        %v9171 = vsel %vm9169, %v9170, %v9168
        %v9172 = vclz %v9171
        %v9173 = vsub.s32 %v9172, 2
        %vm9174 = vcmp.gt.s32.totalorder 0, %v9173
        %v9175 = vsel %vm9174, 0, %v9173
        %v9176 = vsub.s32 32, %v9175
        %v9177 = vshll.u32 %v9168, %v9175
        %v9178 = vshrl.u32 %v9160, %v9176
        %v9179 = vor.u32 %v9177, %v9178
        %v9180 = vsub.s32 4294967266, %v9175
        %v9181 = vadd.s32 %v9180, 127
        %v9182 = vshll.u32 %v9181, 23
        %v9183 = vor.u32 4788187, %v9182
        %v9184 = vand.u32 2147483647, %v9183
        %v9186 = vcvt.s32.f32 %v9179
        %v9187 = vmul.f32 %v9186, %v9184
        %v9188 = vxor.u32 %v9187, 2147483648
        %v9189 = vsel %vm9068, %v9188, %v9187
        %v9190 = vsub.s32 4, %v9166
        %v9191 = vsel %vm9068, %v9190, %v9166
        %v9192 = vsel %vm9067, %v302, %v9189
        %v9193 = vsel %vm9067, 0, %v9191
        %v9194 = vmul.f32 %v9192, %v9192
        %v9195 = vmul.f32 %v9194, -0.001358992
        %v9196 = vadd.f32 %v9195, 0.041655596
        %v9197 = vmul.f32 %v9194, %v9196
        %v9198 = vadd.f32 %v9197, -0.4999988
        %v9199 = vmul.f32 %v9194, %v9198
        %v9200 = vadd.f32 1.0, %v9199
        %v9201 = vmul.f32 %v9192, %v9192
        %v9202 = vmul.f32 %v9201, -0.00019511016
        %v9203 = vadd.f32 %v9202, 0.008332121
        %v9204 = vmul.f32 %v9201, %v9203
        %v9205 = vadd.f32 %v9204, -0.16666654
        %v9206 = vmul.f32 %v9201, %v9205
        %v9207 = vadd.f32 %v9206, 1.0
        %v9208 = vmul.f32 %v9207, %v9192
        %vm9209 = vweird.f32 %v302
        %v9210 = vand.u32 %v9193, 3
        %vm9211 = vcmp.lt.s32.totalorder %v9210, 2
        %vm9212 = vcmp.eq.s32.totalorder %v9210, 0
        %v9213 = vxor.u32 %v9208, 2147483648
        %v9214 = vsel %vm9212, %v9200, %v9213
        %vm9215 = vcmp.eq.s32.totalorder %v9210, 2
        %v9216 = vxor.u32 %v9200, 2147483648
        %v9217 = vsel %vm9215, %v9216, %v9208
        %v9218 = vsel %vm9211, %v9214, %v9217
        %v9219 = vsel %vm9209, nan, %v9218
        %v9220 = vand.u32 2147483647, %v367
        %vm9221 = vcmp.le.f32.partialorder %v9220, 0.7853982
        %vm9222 = vcmp.lt.s32.totalorder %v367, 0
        %v9223 = vand.u32 %v367, 2139095040
        %v9224 = vshrl.u32 %v9223, 23
        %v9225 = vsub.s32 %v9224, 127
        %v9226 = vand.u32 2147483647, %v367
        %v9227 = vand.u32 %v9226, 8388607
        %v9228 = vor.u32 %v9227, 8388608
        %v9229 = vsub.s32 0, %v9228
        %v9230 = vadd.s32 %v9225, 1
        %vm9231 = vcmp.gt.s32.totalorder %v9230, 0
        %v9232 = vsel %vm9231, %v9230, 0
        %v9233 = vshrl.u32 %v9232, 5
        %v9234 = vand.u32 %v9232, 31
        %v9235 = vsub.s32 32, %v9234
        %v9236 = vshrl.u32 683565275, %v9235
        %v9237 = vshll.u32 683565275, %v9234
        %v9238 = vshrl.u32 2475754826, %v9235
        %v9239 = vor.u32 %v9237, %v9238
        %v9240 = vshll.u32 2475754826, %v9234
        %v9241 = vshrl.u32 2131351028, %v9235
        %v9242 = vor.u32 %v9240, %v9241
        %v9243 = vshll.u32 2131351028, %v9234
        %v9244 = vshrl.u32 2102212464, %v9235
        %v9245 = vor.u32 %v9243, %v9244
        %v9246 = vshll.u32 2102212464, %v9234
        %v9247 = vshrl.u32 920167782, %v9235
        %v9248 = vor.u32 %v9246, %v9247
        %v9249 = vshll.u32 920167782, %v9234
        %v9250 = vshrl.u32 1326507024, %v9235
        %v9251 = vor.u32 %v9249, %v9250
        %vm9252 = vcmp.lt.s32.totalorder %v9233, 1
        %vm9253 = vcmp.lt.s32.totalorder %v9233, 2
        %vm9254 = vcmp.lt.s32.totalorder %v9233, 3
        %vm9255 = vcmp.lt.s32.totalorder %v9233, 4
        %v9256 = vsel %vm9252, %v9236, %v9239
        %v9257 = vsel %vm9255, %v9245, 2102212464
        %v9258 = vsel %vm9254, %v9242, %v9257
        %v9259 = vsel %vm9253, %v9256, %v9258
        %v9260 = vsel %vm9252, %v9239, %v9242
        %v9261 = vsel %vm9255, %v9248, 920167782
        %v9262 = vsel %vm9254, %v9245, %v9261
        %v9263 = vsel %vm9253, %v9260, %v9262
        %v9264 = vsel %vm9252, %v9242, %v9245
        %v9265 = vsel %vm9255, %v9251, 1326507024
        %v9266 = vsel %vm9254, %v9248, %v9265
        %v9267 = vsel %vm9253, %v9264, %v9266
        %v9268 = vshll.u32 %v9228, 8
        %v9269 = vand.u32 %v9268, 65535
        %v9270 = vshrl.u32 %v9268, 16
        %v9271 = vand.u32 %v9267, 65535
        %v9272 = vshrl.u32 %v9267, 16
        %v9273 = vmul.u32 %v9269, %v9271
        %v9274 = vmul.u32 %v9269, %v9272
        %v9275 = vmul.u32 %v9270, %v9271
        %v9276 = vmul.u32 %v9270, %v9272
        %v9277 = vshll.u32 %v9274, 16
        %v9278 = vshrl.u32 %v9274, 16
        %v9279 = vshll.u32 %v9275, 16
        %v9280 = vshrl.u32 %v9275, 16
        %vm9281 = vc.u32 %v9273, %v9277
        %v9282 = vsel %vm9281, 1, 0
        %v9283 = vadd.s32 %v9273, %v9277
        %v9284 = vadd.s32 %v9276, %v9282
        %vm9285 = vc.u32 %v9283, %v9279
        %v9286 = vsel %vm9285, 1, 0
        %v9287 = vadd.s32 %v9283, %v9279
        %v9288 = vadd.s32 %v9284, %v9286
        %v9289 = vadd.s32 %v9288, %v9278
        %v9290 = vadd.s32 %v9289, %v9280
        %v9291 = vand.u32 %v9268, 65535
        %v9292 = vshrl.u32 %v9268, 16
        %v9293 = vand.u32 %v9263, 65535
        %v9294 = vshrl.u32 %v9263, 16
        %v9295 = vmul.u32 %v9291, %v9293
        %v9296 = vmul.u32 %v9291, %v9294
        %v9297 = vmul.u32 %v9292, %v9293
        %v9298 = vmul.u32 %v9292, %v9294
        %v9299 = vshll.u32 %v9296, 16
        %v9300 = vshrl.u32 %v9296, 16
        %v9301 = vshll.u32 %v9297, 16
        %v9302 = vshrl.u32 %v9297, 16
        %vm9303 = vc.u32 %v9295, %v9299
        %v9304 = vsel %vm9303, 1, 0
        %v9305 = vadd.s32 %v9295, %v9299
        %v9306 = vadd.s32 %v9298, %v9304
        %vm9307 = vc.u32 %v9305, %v9301
        %v9308 = vsel %vm9307, 1, 0
        %v9309 = vadd.s32 %v9305, %v9301
        %v9310 = vadd.s32 %v9306, %v9308
        %v9311 = vadd.s32 %v9310, %v9300
        %v9312 = vadd.s32 %v9311, %v9302
        %v9313 = vmul.u32 %v9268, %v9259
        %v9314 = vadd.s32 %v9290, %v9309
        %vm9315 = vc.u32 %v9290, %v9309
        %v9316 = vadd.s32 %v9312, 1
        %v9317 = vsel %vm9315, %v9316, %v9312
        %v9318 = vadd.s32 %v9313, %v9317
        %v9319 = vadd.s32 %v9318, 536870912
        %v9320 = vshrl.u32 %v9319, 30
        %v9321 = vshll.u32 %v9320, 30
        %v9322 = vsub.s32 %v9318, %v9321
        %vm9323 = vcmp.lt.s32.totalorder %v9322, 0
        %v9324 = vsub.s32 0, %v9322
        %v9325 = vsel %vm9323, %v9324, %v9322
        %v9326 = vclz %v9325
        %v9327 = vsub.s32 %v9326, 2
        %vm9328 = vcmp.gt.s32.totalorder 0, %v9327
        %v9329 = vsel %vm9328, 0, %v9327
        %v9330 = vsub.s32 32, %v9329
        %v9331 = vshll.u32 %v9322, %v9329
        %v9332 = vshrl.u32 %v9314, %v9330
        %v9333 = vor.u32 %v9331, %v9332
        %v9334 = vsub.s32 4294967266, %v9329
        %v9335 = vadd.s32 %v9334, 127
        %v9336 = vshll.u32 %v9335, 23
        %v9337 = vor.u32 4788187, %v9336
        %v9338 = vand.u32 2147483647, %v9337
        %v9340 = vcvt.s32.f32 %v9333
        %v9341 = vmul.f32 %v9340, %v9338
        %v9342 = vxor.u32 %v9341, 2147483648
        %v9343 = vsel %vm9222, %v9342, %v9341
        %v9344 = vsub.s32 4, %v9320
        %v9345 = vsel %vm9222, %v9344, %v9320
        %v9346 = vsel %vm9221, %v367, %v9343
        %v9347 = vsel %vm9221, 0, %v9345
        %v9348 = vmul.f32 %v9346, %v9346
        %v9349 = vmul.f32 %v9348, -0.001358992
        %v9350 = vadd.f32 %v9349, 0.041655596
        %v9351 = vmul.f32 %v9348, %v9350
        %v9352 = vadd.f32 %v9351, -0.4999988
        %v9353 = vmul.f32 %v9348, %v9352
        %v9354 = vadd.f32 1.0, %v9353
        %v9355 = vmul.f32 %v9346, %v9346
        %v9356 = vmul.f32 %v9355, -0.00019511016
        %v9357 = vadd.f32 %v9356, 0.008332121
        %v9358 = vmul.f32 %v9355, %v9357
        %v9359 = vadd.f32 %v9358, -0.16666654
        %v9360 = vmul.f32 %v9355, %v9359
        %v9361 = vadd.f32 %v9360, 1.0
        %v9362 = vmul.f32 %v9361, %v9346
        %vm9363 = vweird.f32 %v367
        %v9364 = vand.u32 %v9347, 3
        %vm9365 = vcmp.lt.s32.totalorder %v9364, 2
        %vm9366 = vcmp.eq.s32.totalorder %v9364, 0
        %v9367 = vxor.u32 %v9362, 2147483648
        %v9368 = vsel %vm9366, %v9354, %v9367
        %vm9369 = vcmp.eq.s32.totalorder %v9364, 2
        %v9370 = vxor.u32 %v9354, 2147483648
        %v9371 = vsel %vm9369, %v9370, %v9362
        %v9372 = vsel %vm9365, %v9368, %v9371
        %v9373 = vsel %vm9363, nan, %v9372
        %v9374 = vand.u32 2147483647, %v305
        %vm9375 = vcmp.le.f32.partialorder %v9374, 0.7853982
        %vm9376 = vcmp.lt.s32.totalorder %v305, 0
        %v9377 = vand.u32 %v305, 2139095040
        %v9378 = vshrl.u32 %v9377, 23
        %v9379 = vsub.s32 %v9378, 127
        %v9380 = vand.u32 2147483647, %v305
        %v9381 = vand.u32 %v9380, 8388607
        %v9382 = vor.u32 %v9381, 8388608
        %v9383 = vsub.s32 0, %v9382
        %v9384 = vadd.s32 %v9379, 1
        %vm9385 = vcmp.gt.s32.totalorder %v9384, 0
        %v9386 = vsel %vm9385, %v9384, 0
        %v9387 = vshrl.u32 %v9386, 5
        %v9388 = vand.u32 %v9386, 31
        %v9389 = vsub.s32 32, %v9388
        %v9390 = vshrl.u32 683565275, %v9389
        %v9391 = vshll.u32 683565275, %v9388
        %v9392 = vshrl.u32 2475754826, %v9389
        %v9393 = vor.u32 %v9391, %v9392
        %v9394 = vshll.u32 2475754826, %v9388
        %v9395 = vshrl.u32 2131351028, %v9389
        %v9396 = vor.u32 %v9394, %v9395
        %v9397 = vshll.u32 2131351028, %v9388
        %v9398 = vshrl.u32 2102212464, %v9389
        %v9399 = vor.u32 %v9397, %v9398
        %v9400 = vshll.u32 2102212464, %v9388
        %v9401 = vshrl.u32 920167782, %v9389
        %v9402 = vor.u32 %v9400, %v9401
        %v9403 = vshll.u32 920167782, %v9388
        %v9404 = vshrl.u32 1326507024, %v9389
        %v9405 = vor.u32 %v9403, %v9404
        %vm9406 = vcmp.lt.s32.totalorder %v9387, 1
        %vm9407 = vcmp.lt.s32.totalorder %v9387, 2
        %vm9408 = vcmp.lt.s32.totalorder %v9387, 3
        %vm9409 = vcmp.lt.s32.totalorder %v9387, 4
        %v9410 = vsel %vm9406, %v9390, %v9393
        %v9411 = vsel %vm9409, %v9399, 2102212464
        %v9412 = vsel %vm9408, %v9396, %v9411
        %v9413 = vsel %vm9407, %v9410, %v9412
        %v9414 = vsel %vm9406, %v9393, %v9396
        %v9415 = vsel %vm9409, %v9402, 920167782
        %v9416 = vsel %vm9408, %v9399, %v9415
        %v9417 = vsel %vm9407, %v9414, %v9416
        %v9418 = vsel %vm9406, %v9396, %v9399
        %v9419 = vsel %vm9409, %v9405, 1326507024
        %v9420 = vsel %vm9408, %v9402, %v9419
        %v9421 = vsel %vm9407, %v9418, %v9420
        %v9422 = vshll.u32 %v9382, 8
        %v9423 = vand.u32 %v9422, 65535
        %v9424 = vshrl.u32 %v9422, 16
        %v9425 = vand.u32 %v9421, 65535
        %v9426 = vshrl.u32 %v9421, 16
        %v9427 = vmul.u32 %v9423, %v9425
        %v9428 = vmul.u32 %v9423, %v9426
        %v9429 = vmul.u32 %v9424, %v9425
        %v9430 = vmul.u32 %v9424, %v9426
        %v9431 = vshll.u32 %v9428, 16
        %v9432 = vshrl.u32 %v9428, 16
        %v9433 = vshll.u32 %v9429, 16
        %v9434 = vshrl.u32 %v9429, 16
        %vm9435 = vc.u32 %v9427, %v9431
        %v9436 = vsel %vm9435, 1, 0
        %v9437 = vadd.s32 %v9427, %v9431
        %v9438 = vadd.s32 %v9430, %v9436
        %vm9439 = vc.u32 %v9437, %v9433
        %v9440 = vsel %vm9439, 1, 0
        %v9441 = vadd.s32 %v9437, %v9433
        %v9442 = vadd.s32 %v9438, %v9440
        %v9443 = vadd.s32 %v9442, %v9432
        %v9444 = vadd.s32 %v9443, %v9434
        %v9445 = vand.u32 %v9422, 65535
        %v9446 = vshrl.u32 %v9422, 16
        %v9447 = vand.u32 %v9417, 65535
        %v9448 = vshrl.u32 %v9417, 16
        %v9449 = vmul.u32 %v9445, %v9447
        %v9450 = vmul.u32 %v9445, %v9448
        %v9451 = vmul.u32 %v9446, %v9447
        %v9452 = vmul.u32 %v9446, %v9448
        %v9453 = vshll.u32 %v9450, 16
        %v9454 = vshrl.u32 %v9450, 16
        %v9455 = vshll.u32 %v9451, 16
        %v9456 = vshrl.u32 %v9451, 16
        %vm9457 = vc.u32 %v9449, %v9453
        %v9458 = vsel %vm9457, 1, 0
        %v9459 = vadd.s32 %v9449, %v9453
        %v9460 = vadd.s32 %v9452, %v9458
        %vm9461 = vc.u32 %v9459, %v9455
        %v9462 = vsel %vm9461, 1, 0
        %v9463 = vadd.s32 %v9459, %v9455
        %v9464 = vadd.s32 %v9460, %v9462
        %v9465 = vadd.s32 %v9464, %v9454
        %v9466 = vadd.s32 %v9465, %v9456
        %v9467 = vmul.u32 %v9422, %v9413
        %v9468 = vadd.s32 %v9444, %v9463
        %vm9469 = vc.u32 %v9444, %v9463
        %v9470 = vadd.s32 %v9466, 1
        %v9471 = vsel %vm9469, %v9470, %v9466
        %v9472 = vadd.s32 %v9467, %v9471
        %v9473 = vadd.s32 %v9472, 536870912
        %v9474 = vshrl.u32 %v9473, 30
        %v9475 = vshll.u32 %v9474, 30
        %v9476 = vsub.s32 %v9472, %v9475
        %vm9477 = vcmp.lt.s32.totalorder %v9476, 0
        %v9478 = vsub.s32 0, %v9476
        %v9479 = vsel %vm9477, %v9478, %v9476
        %v9480 = vclz %v9479
        %v9481 = vsub.s32 %v9480, 2
        %vm9482 = vcmp.gt.s32.totalorder 0, %v9481
        %v9483 = vsel %vm9482, 0, %v9481
        %v9484 = vsub.s32 32, %v9483
        %v9485 = vshll.u32 %v9476, %v9483
        %v9486 = vshrl.u32 %v9468, %v9484
        %v9487 = vor.u32 %v9485, %v9486
        %v9488 = vsub.s32 4294967266, %v9483
        %v9489 = vadd.s32 %v9488, 127
        %v9490 = vshll.u32 %v9489, 23
        %v9491 = vor.u32 4788187, %v9490
        %v9492 = vand.u32 2147483647, %v9491
        %v9494 = vcvt.s32.f32 %v9487
        %v9495 = vmul.f32 %v9494, %v9492
        %v9496 = vxor.u32 %v9495, 2147483648
        %v9497 = vsel %vm9376, %v9496, %v9495
        %v9498 = vsub.s32 4, %v9474
        %v9499 = vsel %vm9376, %v9498, %v9474
        %v9500 = vsel %vm9375, %v305, %v9497
        %v9501 = vsel %vm9375, 0, %v9499
        %v9502 = vmul.f32 %v9500, %v9500
        %v9503 = vmul.f32 %v9502, -0.001358992
        %v9504 = vadd.f32 %v9503, 0.041655596
        %v9505 = vmul.f32 %v9502, %v9504
        %v9506 = vadd.f32 %v9505, -0.4999988
        %v9507 = vmul.f32 %v9502, %v9506
        %v9508 = vadd.f32 1.0, %v9507
        %v9509 = vmul.f32 %v9500, %v9500
        %v9510 = vmul.f32 %v9509, -0.00019511016
        %v9511 = vadd.f32 %v9510, 0.008332121
        %v9512 = vmul.f32 %v9509, %v9511
        %v9513 = vadd.f32 %v9512, -0.16666654
        %v9514 = vmul.f32 %v9509, %v9513
        %v9515 = vadd.f32 %v9514, 1.0
        %v9516 = vmul.f32 %v9515, %v9500
        %vm9517 = vweird.f32 %v305
        %v9518 = vand.u32 %v9501, 3
        %vm9519 = vcmp.lt.s32.totalorder %v9518, 2
        %vm9520 = vcmp.eq.s32.totalorder %v9518, 0
        %v9521 = vxor.u32 %v9516, 2147483648
        %v9522 = vsel %vm9520, %v9508, %v9521
        %vm9523 = vcmp.eq.s32.totalorder %v9518, 2
        %v9524 = vxor.u32 %v9508, 2147483648
        %v9525 = vsel %vm9523, %v9524, %v9516
        %v9526 = vsel %vm9519, %v9522, %v9525
        %v9527 = vsel %vm9517, nan, %v9526
        %v9528 = vand.u32 2147483647, %v370
        %vm9529 = vcmp.le.f32.partialorder %v9528, 0.7853982
        %vm9530 = vcmp.lt.s32.totalorder %v370, 0
        %v9531 = vand.u32 %v370, 2139095040
        %v9532 = vshrl.u32 %v9531, 23
        %v9533 = vsub.s32 %v9532, 127
        %v9534 = vand.u32 2147483647, %v370
        %v9535 = vand.u32 %v9534, 8388607
        %v9536 = vor.u32 %v9535, 8388608
        %v9537 = vsub.s32 0, %v9536
        %v9538 = vadd.s32 %v9533, 1
        %vm9539 = vcmp.gt.s32.totalorder %v9538, 0
        %v9540 = vsel %vm9539, %v9538, 0
        %v9541 = vshrl.u32 %v9540, 5
        %v9542 = vand.u32 %v9540, 31
        %v9543 = vsub.s32 32, %v9542
        %v9544 = vshrl.u32 683565275, %v9543
        %v9545 = vshll.u32 683565275, %v9542
        %v9546 = vshrl.u32 2475754826, %v9543
        %v9547 = vor.u32 %v9545, %v9546
        %v9548 = vshll.u32 2475754826, %v9542
        %v9549 = vshrl.u32 2131351028, %v9543
        %v9550 = vor.u32 %v9548, %v9549
        %v9551 = vshll.u32 2131351028, %v9542
        %v9552 = vshrl.u32 2102212464, %v9543
        %v9553 = vor.u32 %v9551, %v9552
        %v9554 = vshll.u32 2102212464, %v9542
        %v9555 = vshrl.u32 920167782, %v9543
        %v9556 = vor.u32 %v9554, %v9555
        %v9557 = vshll.u32 920167782, %v9542
        %v9558 = vshrl.u32 1326507024, %v9543
        %v9559 = vor.u32 %v9557, %v9558
        %vm9560 = vcmp.lt.s32.totalorder %v9541, 1
        %vm9561 = vcmp.lt.s32.totalorder %v9541, 2
        %vm9562 = vcmp.lt.s32.totalorder %v9541, 3
        %vm9563 = vcmp.lt.s32.totalorder %v9541, 4
        %v9564 = vsel %vm9560, %v9544, %v9547
        %v9565 = vsel %vm9563, %v9553, 2102212464
        %v9566 = vsel %vm9562, %v9550, %v9565
        %v9567 = vsel %vm9561, %v9564, %v9566
        %v9568 = vsel %vm9560, %v9547, %v9550
        %v9569 = vsel %vm9563, %v9556, 920167782
        %v9570 = vsel %vm9562, %v9553, %v9569
        %v9571 = vsel %vm9561, %v9568, %v9570
        %v9572 = vsel %vm9560, %v9550, %v9553
        %v9573 = vsel %vm9563, %v9559, 1326507024
        %v9574 = vsel %vm9562, %v9556, %v9573
        %v9575 = vsel %vm9561, %v9572, %v9574
        %v9576 = vshll.u32 %v9536, 8
        %v9577 = vand.u32 %v9576, 65535
        %v9578 = vshrl.u32 %v9576, 16
        %v9579 = vand.u32 %v9575, 65535
        %v9580 = vshrl.u32 %v9575, 16
        %v9581 = vmul.u32 %v9577, %v9579
        %v9582 = vmul.u32 %v9577, %v9580
        %v9583 = vmul.u32 %v9578, %v9579
        %v9584 = vmul.u32 %v9578, %v9580
        %v9585 = vshll.u32 %v9582, 16
        %v9586 = vshrl.u32 %v9582, 16
        %v9587 = vshll.u32 %v9583, 16
        %v9588 = vshrl.u32 %v9583, 16
        %vm9589 = vc.u32 %v9581, %v9585
        %v9590 = vsel %vm9589, 1, 0
        %v9591 = vadd.s32 %v9581, %v9585
        %v9592 = vadd.s32 %v9584, %v9590
        %vm9593 = vc.u32 %v9591, %v9587
        %v9594 = vsel %vm9593, 1, 0
        %v9595 = vadd.s32 %v9591, %v9587
        %v9596 = vadd.s32 %v9592, %v9594
        %v9597 = vadd.s32 %v9596, %v9586
        %v9598 = vadd.s32 %v9597, %v9588
        %v9599 = vand.u32 %v9576, 65535
        %v9600 = vshrl.u32 %v9576, 16
        %v9601 = vand.u32 %v9571, 65535
        %v9602 = vshrl.u32 %v9571, 16
        %v9603 = vmul.u32 %v9599, %v9601
        %v9604 = vmul.u32 %v9599, %v9602
        %v9605 = vmul.u32 %v9600, %v9601
        %v9606 = vmul.u32 %v9600, %v9602
        %v9607 = vshll.u32 %v9604, 16
        %v9608 = vshrl.u32 %v9604, 16
        %v9609 = vshll.u32 %v9605, 16
        %v9610 = vshrl.u32 %v9605, 16
        %vm9611 = vc.u32 %v9603, %v9607
        %v9612 = vsel %vm9611, 1, 0
        %v9613 = vadd.s32 %v9603, %v9607
        %v9614 = vadd.s32 %v9606, %v9612
        %vm9615 = vc.u32 %v9613, %v9609
        %v9616 = vsel %vm9615, 1, 0
        %v9617 = vadd.s32 %v9613, %v9609
        %v9618 = vadd.s32 %v9614, %v9616
        %v9619 = vadd.s32 %v9618, %v9608
        %v9620 = vadd.s32 %v9619, %v9610
        %v9621 = vmul.u32 %v9576, %v9567
        %v9622 = vadd.s32 %v9598, %v9617
        %vm9623 = vc.u32 %v9598, %v9617
        %v9624 = vadd.s32 %v9620, 1
        %v9625 = vsel %vm9623, %v9624, %v9620
        %v9626 = vadd.s32 %v9621, %v9625
        %v9627 = vadd.s32 %v9626, 536870912
        %v9628 = vshrl.u32 %v9627, 30
        %v9629 = vshll.u32 %v9628, 30
        %v9630 = vsub.s32 %v9626, %v9629
        %vm9631 = vcmp.lt.s32.totalorder %v9630, 0
        %v9632 = vsub.s32 0, %v9630
        %v9633 = vsel %vm9631, %v9632, %v9630
        %v9634 = vclz %v9633
        %v9635 = vsub.s32 %v9634, 2
        %vm9636 = vcmp.gt.s32.totalorder 0, %v9635
        %v9637 = vsel %vm9636, 0, %v9635
        %v9638 = vsub.s32 32, %v9637
        %v9639 = vshll.u32 %v9630, %v9637
        %v9640 = vshrl.u32 %v9622, %v9638
        %v9641 = vor.u32 %v9639, %v9640
        %v9642 = vsub.s32 4294967266, %v9637
        %v9643 = vadd.s32 %v9642, 127
        %v9644 = vshll.u32 %v9643, 23
        %v9645 = vor.u32 4788187, %v9644
        %v9646 = vand.u32 2147483647, %v9645
        %v9648 = vcvt.s32.f32 %v9641
        %v9649 = vmul.f32 %v9648, %v9646
        %v9650 = vxor.u32 %v9649, 2147483648
        %v9651 = vsel %vm9530, %v9650, %v9649
        %v9652 = vsub.s32 4, %v9628
        %v9653 = vsel %vm9530, %v9652, %v9628
        %v9654 = vsel %vm9529, %v370, %v9651
        %v9655 = vsel %vm9529, 0, %v9653
        %v9656 = vmul.f32 %v9654, %v9654
        %v9657 = vmul.f32 %v9656, -0.001358992
        %v9658 = vadd.f32 %v9657, 0.041655596
        %v9659 = vmul.f32 %v9656, %v9658
        %v9660 = vadd.f32 %v9659, -0.4999988
        %v9661 = vmul.f32 %v9656, %v9660
        %v9662 = vadd.f32 1.0, %v9661
        %v9663 = vmul.f32 %v9654, %v9654
        %v9664 = vmul.f32 %v9663, -0.00019511016
        %v9665 = vadd.f32 %v9664, 0.008332121
        %v9666 = vmul.f32 %v9663, %v9665
        %v9667 = vadd.f32 %v9666, -0.16666654
        %v9668 = vmul.f32 %v9663, %v9667
        %v9669 = vadd.f32 %v9668, 1.0
        %v9670 = vmul.f32 %v9669, %v9654
        %vm9671 = vweird.f32 %v370
        %v9672 = vand.u32 %v9655, 3
        %vm9673 = vcmp.lt.s32.totalorder %v9672, 2
        %vm9674 = vcmp.eq.s32.totalorder %v9672, 0
        %v9675 = vxor.u32 %v9670, 2147483648
        %v9676 = vsel %vm9674, %v9662, %v9675
        %vm9677 = vcmp.eq.s32.totalorder %v9672, 2
        %v9678 = vxor.u32 %v9662, 2147483648
        %v9679 = vsel %vm9677, %v9678, %v9670
        %v9680 = vsel %vm9673, %v9676, %v9679
        %v9681 = vsel %vm9671, nan, %v9680
        %v9682 = vand.u32 2147483647, %v308
        %vm9683 = vcmp.le.f32.partialorder %v9682, 0.7853982
        %vm9684 = vcmp.lt.s32.totalorder %v308, 0
        %v9685 = vand.u32 %v308, 2139095040
        %v9686 = vshrl.u32 %v9685, 23
        %v9687 = vsub.s32 %v9686, 127
        %v9688 = vand.u32 2147483647, %v308
        %v9689 = vand.u32 %v9688, 8388607
        %v9690 = vor.u32 %v9689, 8388608
        %v9691 = vsub.s32 0, %v9690
        %v9692 = vadd.s32 %v9687, 1
        %vm9693 = vcmp.gt.s32.totalorder %v9692, 0
        %v9694 = vsel %vm9693, %v9692, 0
        %v9695 = vshrl.u32 %v9694, 5
        %v9696 = vand.u32 %v9694, 31
        %v9697 = vsub.s32 32, %v9696
        %v9698 = vshrl.u32 683565275, %v9697
        %v9699 = vshll.u32 683565275, %v9696
        %v9700 = vshrl.u32 2475754826, %v9697
        %v9701 = vor.u32 %v9699, %v9700
        %v9702 = vshll.u32 2475754826, %v9696
        %v9703 = vshrl.u32 2131351028, %v9697
        %v9704 = vor.u32 %v9702, %v9703
        %v9705 = vshll.u32 2131351028, %v9696
        %v9706 = vshrl.u32 2102212464, %v9697
        %v9707 = vor.u32 %v9705, %v9706
        %v9708 = vshll.u32 2102212464, %v9696
        %v9709 = vshrl.u32 920167782, %v9697
        %v9710 = vor.u32 %v9708, %v9709
        %v9711 = vshll.u32 920167782, %v9696
        %v9712 = vshrl.u32 1326507024, %v9697
        %v9713 = vor.u32 %v9711, %v9712
        %vm9714 = vcmp.lt.s32.totalorder %v9695, 1
        %vm9715 = vcmp.lt.s32.totalorder %v9695, 2
        %vm9716 = vcmp.lt.s32.totalorder %v9695, 3
        %vm9717 = vcmp.lt.s32.totalorder %v9695, 4
        %v9718 = vsel %vm9714, %v9698, %v9701
        %v9719 = vsel %vm9717, %v9707, 2102212464
        %v9720 = vsel %vm9716, %v9704, %v9719
        %v9721 = vsel %vm9715, %v9718, %v9720
        %v9722 = vsel %vm9714, %v9701, %v9704
        %v9723 = vsel %vm9717, %v9710, 920167782
        %v9724 = vsel %vm9716, %v9707, %v9723
        %v9725 = vsel %vm9715, %v9722, %v9724
        %v9726 = vsel %vm9714, %v9704, %v9707
        %v9727 = vsel %vm9717, %v9713, 1326507024
        %v9728 = vsel %vm9716, %v9710, %v9727
        %v9729 = vsel %vm9715, %v9726, %v9728
        %v9730 = vshll.u32 %v9690, 8
        %v9731 = vand.u32 %v9730, 65535
        %v9732 = vshrl.u32 %v9730, 16
        %v9733 = vand.u32 %v9729, 65535
        %v9734 = vshrl.u32 %v9729, 16
        %v9735 = vmul.u32 %v9731, %v9733
        %v9736 = vmul.u32 %v9731, %v9734
        %v9737 = vmul.u32 %v9732, %v9733
        %v9738 = vmul.u32 %v9732, %v9734
        %v9739 = vshll.u32 %v9736, 16
        %v9740 = vshrl.u32 %v9736, 16
        %v9741 = vshll.u32 %v9737, 16
        %v9742 = vshrl.u32 %v9737, 16
        %vm9743 = vc.u32 %v9735, %v9739
        %v9744 = vsel %vm9743, 1, 0
        %v9745 = vadd.s32 %v9735, %v9739
        %v9746 = vadd.s32 %v9738, %v9744
        %vm9747 = vc.u32 %v9745, %v9741
        %v9748 = vsel %vm9747, 1, 0
        %v9749 = vadd.s32 %v9745, %v9741
        %v9750 = vadd.s32 %v9746, %v9748
        %v9751 = vadd.s32 %v9750, %v9740
        %v9752 = vadd.s32 %v9751, %v9742
        %v9753 = vand.u32 %v9730, 65535
        %v9754 = vshrl.u32 %v9730, 16
        %v9755 = vand.u32 %v9725, 65535
        %v9756 = vshrl.u32 %v9725, 16
        %v9757 = vmul.u32 %v9753, %v9755
        %v9758 = vmul.u32 %v9753, %v9756
        %v9759 = vmul.u32 %v9754, %v9755
        %v9760 = vmul.u32 %v9754, %v9756
        %v9761 = vshll.u32 %v9758, 16
        %v9762 = vshrl.u32 %v9758, 16
        %v9763 = vshll.u32 %v9759, 16
        %v9764 = vshrl.u32 %v9759, 16
        %vm9765 = vc.u32 %v9757, %v9761
        %v9766 = vsel %vm9765, 1, 0
        %v9767 = vadd.s32 %v9757, %v9761
        %v9768 = vadd.s32 %v9760, %v9766
        %vm9769 = vc.u32 %v9767, %v9763
        %v9770 = vsel %vm9769, 1, 0
        %v9771 = vadd.s32 %v9767, %v9763
        %v9772 = vadd.s32 %v9768, %v9770
        %v9773 = vadd.s32 %v9772, %v9762
        %v9774 = vadd.s32 %v9773, %v9764
        %v9775 = vmul.u32 %v9730, %v9721
        %v9776 = vadd.s32 %v9752, %v9771
        %vm9777 = vc.u32 %v9752, %v9771
        %v9778 = vadd.s32 %v9774, 1
        %v9779 = vsel %vm9777, %v9778, %v9774
        %v9780 = vadd.s32 %v9775, %v9779
        %v9781 = vadd.s32 %v9780, 536870912
        %v9782 = vshrl.u32 %v9781, 30
        %v9783 = vshll.u32 %v9782, 30
        %v9784 = vsub.s32 %v9780, %v9783
        %vm9785 = vcmp.lt.s32.totalorder %v9784, 0
        %v9786 = vsub.s32 0, %v9784
        %v9787 = vsel %vm9785, %v9786, %v9784
        %v9788 = vclz %v9787
        %v9789 = vsub.s32 %v9788, 2
        %vm9790 = vcmp.gt.s32.totalorder 0, %v9789
        %v9791 = vsel %vm9790, 0, %v9789
        %v9792 = vsub.s32 32, %v9791
        %v9793 = vshll.u32 %v9784, %v9791
        %v9794 = vshrl.u32 %v9776, %v9792
        %v9795 = vor.u32 %v9793, %v9794
        %v9796 = vsub.s32 4294967266, %v9791
        %v9797 = vadd.s32 %v9796, 127
        %v9798 = vshll.u32 %v9797, 23
        %v9799 = vor.u32 4788187, %v9798
        %v9800 = vand.u32 2147483647, %v9799
        %v9802 = vcvt.s32.f32 %v9795
        %v9803 = vmul.f32 %v9802, %v9800
        %v9804 = vxor.u32 %v9803, 2147483648
        %v9805 = vsel %vm9684, %v9804, %v9803
        %v9806 = vsub.s32 4, %v9782
        %v9807 = vsel %vm9684, %v9806, %v9782
        %v9808 = vsel %vm9683, %v308, %v9805
        %v9809 = vsel %vm9683, 0, %v9807
        %v9810 = vmul.f32 %v9808, %v9808
        %v9811 = vmul.f32 %v9810, -0.001358992
        %v9812 = vadd.f32 %v9811, 0.041655596
        %v9813 = vmul.f32 %v9810, %v9812
        %v9814 = vadd.f32 %v9813, -0.4999988
        %v9815 = vmul.f32 %v9810, %v9814
        %v9816 = vadd.f32 1.0, %v9815
        %v9817 = vmul.f32 %v9808, %v9808
        %v9818 = vmul.f32 %v9817, -0.00019511016
        %v9819 = vadd.f32 %v9818, 0.008332121
        %v9820 = vmul.f32 %v9817, %v9819
        %v9821 = vadd.f32 %v9820, -0.16666654
        %v9822 = vmul.f32 %v9817, %v9821
        %v9823 = vadd.f32 %v9822, 1.0
        %v9824 = vmul.f32 %v9823, %v9808
        %vm9825 = vweird.f32 %v308
        %v9826 = vand.u32 %v9809, 3
        %vm9827 = vcmp.lt.s32.totalorder %v9826, 2
        %vm9828 = vcmp.eq.s32.totalorder %v9826, 0
        %v9829 = vxor.u32 %v9824, 2147483648
        %v9830 = vsel %vm9828, %v9816, %v9829
        %vm9831 = vcmp.eq.s32.totalorder %v9826, 2
        %v9832 = vxor.u32 %v9816, 2147483648
        %v9833 = vsel %vm9831, %v9832, %v9824
        %v9834 = vsel %vm9827, %v9830, %v9833
        %v9835 = vsel %vm9825, nan, %v9834
        %v9836 = vand.u32 2147483647, %v373
        %vm9837 = vcmp.le.f32.partialorder %v9836, 0.7853982
        %vm9838 = vcmp.lt.s32.totalorder %v373, 0
        %v9839 = vand.u32 %v373, 2139095040
        %v9840 = vshrl.u32 %v9839, 23
        %v9841 = vsub.s32 %v9840, 127
        %v9842 = vand.u32 2147483647, %v373
        %v9843 = vand.u32 %v9842, 8388607
        %v9844 = vor.u32 %v9843, 8388608
        %v9845 = vsub.s32 0, %v9844
        %v9846 = vadd.s32 %v9841, 1
        %vm9847 = vcmp.gt.s32.totalorder %v9846, 0
        %v9848 = vsel %vm9847, %v9846, 0
        %v9849 = vshrl.u32 %v9848, 5
        %v9850 = vand.u32 %v9848, 31
        %v9851 = vsub.s32 32, %v9850
        %v9852 = vshrl.u32 683565275, %v9851
        %v9853 = vshll.u32 683565275, %v9850
        %v9854 = vshrl.u32 2475754826, %v9851
        %v9855 = vor.u32 %v9853, %v9854
        %v9856 = vshll.u32 2475754826, %v9850
        %v9857 = vshrl.u32 2131351028, %v9851
        %v9858 = vor.u32 %v9856, %v9857
        %v9859 = vshll.u32 2131351028, %v9850
        %v9860 = vshrl.u32 2102212464, %v9851
        %v9861 = vor.u32 %v9859, %v9860
        %v9862 = vshll.u32 2102212464, %v9850
        %v9863 = vshrl.u32 920167782, %v9851
        %v9864 = vor.u32 %v9862, %v9863
        %v9865 = vshll.u32 920167782, %v9850
        %v9866 = vshrl.u32 1326507024, %v9851
        %v9867 = vor.u32 %v9865, %v9866
        %vm9868 = vcmp.lt.s32.totalorder %v9849, 1
        %vm9869 = vcmp.lt.s32.totalorder %v9849, 2
        %vm9870 = vcmp.lt.s32.totalorder %v9849, 3
        %vm9871 = vcmp.lt.s32.totalorder %v9849, 4
        %v9872 = vsel %vm9868, %v9852, %v9855
        %v9873 = vsel %vm9871, %v9861, 2102212464
        %v9874 = vsel %vm9870, %v9858, %v9873
        %v9875 = vsel %vm9869, %v9872, %v9874
        %v9876 = vsel %vm9868, %v9855, %v9858
        %v9877 = vsel %vm9871, %v9864, 920167782
        %v9878 = vsel %vm9870, %v9861, %v9877
        %v9879 = vsel %vm9869, %v9876, %v9878
        %v9880 = vsel %vm9868, %v9858, %v9861
        %v9881 = vsel %vm9871, %v9867, 1326507024
        %v9882 = vsel %vm9870, %v9864, %v9881
        %v9883 = vsel %vm9869, %v9880, %v9882
        %v9884 = vshll.u32 %v9844, 8
        %v9885 = vand.u32 %v9884, 65535
        %v9886 = vshrl.u32 %v9884, 16
        %v9887 = vand.u32 %v9883, 65535
        %v9888 = vshrl.u32 %v9883, 16
        %v9889 = vmul.u32 %v9885, %v9887
        %v9890 = vmul.u32 %v9885, %v9888
        %v9891 = vmul.u32 %v9886, %v9887
        %v9892 = vmul.u32 %v9886, %v9888
        %v9893 = vshll.u32 %v9890, 16
        %v9894 = vshrl.u32 %v9890, 16
        %v9895 = vshll.u32 %v9891, 16
        %v9896 = vshrl.u32 %v9891, 16
        %vm9897 = vc.u32 %v9889, %v9893
        %v9898 = vsel %vm9897, 1, 0
        %v9899 = vadd.s32 %v9889, %v9893
        %v9900 = vadd.s32 %v9892, %v9898
        %vm9901 = vc.u32 %v9899, %v9895
        %v9902 = vsel %vm9901, 1, 0
        %v9903 = vadd.s32 %v9899, %v9895
        %v9904 = vadd.s32 %v9900, %v9902
        %v9905 = vadd.s32 %v9904, %v9894
        %v9906 = vadd.s32 %v9905, %v9896
        %v9907 = vand.u32 %v9884, 65535
        %v9908 = vshrl.u32 %v9884, 16
        %v9909 = vand.u32 %v9879, 65535
        %v9910 = vshrl.u32 %v9879, 16
        %v9911 = vmul.u32 %v9907, %v9909
        %v9912 = vmul.u32 %v9907, %v9910
        %v9913 = vmul.u32 %v9908, %v9909
        %v9914 = vmul.u32 %v9908, %v9910
        %v9915 = vshll.u32 %v9912, 16
        %v9916 = vshrl.u32 %v9912, 16
        %v9917 = vshll.u32 %v9913, 16
        %v9918 = vshrl.u32 %v9913, 16
        %vm9919 = vc.u32 %v9911, %v9915
        %v9920 = vsel %vm9919, 1, 0
        %v9921 = vadd.s32 %v9911, %v9915
        %v9922 = vadd.s32 %v9914, %v9920
        %vm9923 = vc.u32 %v9921, %v9917
        %v9924 = vsel %vm9923, 1, 0
        %v9925 = vadd.s32 %v9921, %v9917
        %v9926 = vadd.s32 %v9922, %v9924
        %v9927 = vadd.s32 %v9926, %v9916
        %v9928 = vadd.s32 %v9927, %v9918
        %v9929 = vmul.u32 %v9884, %v9875
        %v9930 = vadd.s32 %v9906, %v9925
        %vm9931 = vc.u32 %v9906, %v9925
        %v9932 = vadd.s32 %v9928, 1
        %v9933 = vsel %vm9931, %v9932, %v9928
        %v9934 = vadd.s32 %v9929, %v9933
        %v9935 = vadd.s32 %v9934, 536870912
        %v9936 = vshrl.u32 %v9935, 30
        %v9937 = vshll.u32 %v9936, 30
        %v9938 = vsub.s32 %v9934, %v9937
        %vm9939 = vcmp.lt.s32.totalorder %v9938, 0
        %v9940 = vsub.s32 0, %v9938
        %v9941 = vsel %vm9939, %v9940, %v9938
        %v9942 = vclz %v9941
        %v9943 = vsub.s32 %v9942, 2
        %vm9944 = vcmp.gt.s32.totalorder 0, %v9943
        %v9945 = vsel %vm9944, 0, %v9943
        %v9946 = vsub.s32 32, %v9945
        %v9947 = vshll.u32 %v9938, %v9945
        %v9948 = vshrl.u32 %v9930, %v9946
        %v9949 = vor.u32 %v9947, %v9948
        %v9950 = vsub.s32 4294967266, %v9945
        %v9951 = vadd.s32 %v9950, 127
        %v9952 = vshll.u32 %v9951, 23
        %v9953 = vor.u32 4788187, %v9952
        %v9954 = vand.u32 2147483647, %v9953
        %v9956 = vcvt.s32.f32 %v9949
        %v9957 = vmul.f32 %v9956, %v9954
        %v9958 = vxor.u32 %v9957, 2147483648
        %v9959 = vsel %vm9838, %v9958, %v9957
        %v9960 = vsub.s32 4, %v9936
        %v9961 = vsel %vm9838, %v9960, %v9936
        %v9962 = vsel %vm9837, %v373, %v9959
        %v9963 = vsel %vm9837, 0, %v9961
        %v9964 = vmul.f32 %v9962, %v9962
        %v9965 = vmul.f32 %v9964, -0.001358992
        %v9966 = vadd.f32 %v9965, 0.041655596
        %v9967 = vmul.f32 %v9964, %v9966
        %v9968 = vadd.f32 %v9967, -0.4999988
        %v9969 = vmul.f32 %v9964, %v9968
        %v9970 = vadd.f32 1.0, %v9969
        %v9971 = vmul.f32 %v9962, %v9962
        %v9972 = vmul.f32 %v9971, -0.00019511016
        %v9973 = vadd.f32 %v9972, 0.008332121
        %v9974 = vmul.f32 %v9971, %v9973
        %v9975 = vadd.f32 %v9974, -0.16666654
        %v9976 = vmul.f32 %v9971, %v9975
        %v9977 = vadd.f32 %v9976, 1.0
        %v9978 = vmul.f32 %v9977, %v9962
        %vm9979 = vweird.f32 %v373
        %v9980 = vand.u32 %v9963, 3
        %vm9981 = vcmp.lt.s32.totalorder %v9980, 2
        %vm9982 = vcmp.eq.s32.totalorder %v9980, 0
        %v9983 = vxor.u32 %v9978, 2147483648
        %v9984 = vsel %vm9982, %v9970, %v9983
        %vm9985 = vcmp.eq.s32.totalorder %v9980, 2
        %v9986 = vxor.u32 %v9970, 2147483648
        %v9987 = vsel %vm9985, %v9986, %v9978
        %v9988 = vsel %vm9981, %v9984, %v9987
        %v9989 = vsel %vm9979, nan, %v9988
        %v9990 = vand.u32 2147483647, %v311
        %vm9991 = vcmp.le.f32.partialorder %v9990, 0.7853982
        %vm9992 = vcmp.lt.s32.totalorder %v311, 0
        %v9993 = vand.u32 %v311, 2139095040
        %v9994 = vshrl.u32 %v9993, 23
        %v9995 = vsub.s32 %v9994, 127
        %v9996 = vand.u32 2147483647, %v311
        %v9997 = vand.u32 %v9996, 8388607
        %v9998 = vor.u32 %v9997, 8388608
        %v9999 = vsub.s32 0, %v9998
        %v10000 = vadd.s32 %v9995, 1
        %vm10001 = vcmp.gt.s32.totalorder %v10000, 0
        %v10002 = vsel %vm10001, %v10000, 0
        %v10003 = vshrl.u32 %v10002, 5
        %v10004 = vand.u32 %v10002, 31
        %v10005 = vsub.s32 32, %v10004
        %v10006 = vshrl.u32 683565275, %v10005
        %v10007 = vshll.u32 683565275, %v10004
        %v10008 = vshrl.u32 2475754826, %v10005
        %v10009 = vor.u32 %v10007, %v10008
        %v10010 = vshll.u32 2475754826, %v10004
        %v10011 = vshrl.u32 2131351028, %v10005
        %v10012 = vor.u32 %v10010, %v10011
        %v10013 = vshll.u32 2131351028, %v10004
        %v10014 = vshrl.u32 2102212464, %v10005
        %v10015 = vor.u32 %v10013, %v10014
        %v10016 = vshll.u32 2102212464, %v10004
        %v10017 = vshrl.u32 920167782, %v10005
        %v10018 = vor.u32 %v10016, %v10017
        %v10019 = vshll.u32 920167782, %v10004
        %v10020 = vshrl.u32 1326507024, %v10005
        %v10021 = vor.u32 %v10019, %v10020
        %vm10022 = vcmp.lt.s32.totalorder %v10003, 1
        %vm10023 = vcmp.lt.s32.totalorder %v10003, 2
        %vm10024 = vcmp.lt.s32.totalorder %v10003, 3
        %vm10025 = vcmp.lt.s32.totalorder %v10003, 4
        %v10026 = vsel %vm10022, %v10006, %v10009
        %v10027 = vsel %vm10025, %v10015, 2102212464
        %v10028 = vsel %vm10024, %v10012, %v10027
        %v10029 = vsel %vm10023, %v10026, %v10028
        %v10030 = vsel %vm10022, %v10009, %v10012
        %v10031 = vsel %vm10025, %v10018, 920167782
        %v10032 = vsel %vm10024, %v10015, %v10031
        %v10033 = vsel %vm10023, %v10030, %v10032
        %v10034 = vsel %vm10022, %v10012, %v10015
        %v10035 = vsel %vm10025, %v10021, 1326507024
        %v10036 = vsel %vm10024, %v10018, %v10035
        %v10037 = vsel %vm10023, %v10034, %v10036
        %v10038 = vshll.u32 %v9998, 8
        %v10039 = vand.u32 %v10038, 65535
        %v10040 = vshrl.u32 %v10038, 16
        %v10041 = vand.u32 %v10037, 65535
        %v10042 = vshrl.u32 %v10037, 16
        %v10043 = vmul.u32 %v10039, %v10041
        %v10044 = vmul.u32 %v10039, %v10042
        %v10045 = vmul.u32 %v10040, %v10041
        %v10046 = vmul.u32 %v10040, %v10042
        %v10047 = vshll.u32 %v10044, 16
        %v10048 = vshrl.u32 %v10044, 16
        %v10049 = vshll.u32 %v10045, 16
        %v10050 = vshrl.u32 %v10045, 16
        %vm10051 = vc.u32 %v10043, %v10047
        %v10052 = vsel %vm10051, 1, 0
        %v10053 = vadd.s32 %v10043, %v10047
        %v10054 = vadd.s32 %v10046, %v10052
        %vm10055 = vc.u32 %v10053, %v10049
        %v10056 = vsel %vm10055, 1, 0
        %v10057 = vadd.s32 %v10053, %v10049
        %v10058 = vadd.s32 %v10054, %v10056
        %v10059 = vadd.s32 %v10058, %v10048
        %v10060 = vadd.s32 %v10059, %v10050
        %v10061 = vand.u32 %v10038, 65535
        %v10062 = vshrl.u32 %v10038, 16
        %v10063 = vand.u32 %v10033, 65535
        %v10064 = vshrl.u32 %v10033, 16
        %v10065 = vmul.u32 %v10061, %v10063
        %v10066 = vmul.u32 %v10061, %v10064
        %v10067 = vmul.u32 %v10062, %v10063
        %v10068 = vmul.u32 %v10062, %v10064
        %v10069 = vshll.u32 %v10066, 16
        %v10070 = vshrl.u32 %v10066, 16
        %v10071 = vshll.u32 %v10067, 16
        %v10072 = vshrl.u32 %v10067, 16
        %vm10073 = vc.u32 %v10065, %v10069
        %v10074 = vsel %vm10073, 1, 0
        %v10075 = vadd.s32 %v10065, %v10069
        %v10076 = vadd.s32 %v10068, %v10074
        %vm10077 = vc.u32 %v10075, %v10071
        %v10078 = vsel %vm10077, 1, 0
        %v10079 = vadd.s32 %v10075, %v10071
        %v10080 = vadd.s32 %v10076, %v10078
        %v10081 = vadd.s32 %v10080, %v10070
        %v10082 = vadd.s32 %v10081, %v10072
        %v10083 = vmul.u32 %v10038, %v10029
        %v10084 = vadd.s32 %v10060, %v10079
        %vm10085 = vc.u32 %v10060, %v10079
        %v10086 = vadd.s32 %v10082, 1
        %v10087 = vsel %vm10085, %v10086, %v10082
        %v10088 = vadd.s32 %v10083, %v10087
        %v10089 = vadd.s32 %v10088, 536870912
        %v10090 = vshrl.u32 %v10089, 30
        %v10091 = vshll.u32 %v10090, 30
        %v10092 = vsub.s32 %v10088, %v10091
        %vm10093 = vcmp.lt.s32.totalorder %v10092, 0
        %v10094 = vsub.s32 0, %v10092
        %v10095 = vsel %vm10093, %v10094, %v10092
        %v10096 = vclz %v10095
        %v10097 = vsub.s32 %v10096, 2
        %vm10098 = vcmp.gt.s32.totalorder 0, %v10097
        %v10099 = vsel %vm10098, 0, %v10097
        %v10100 = vsub.s32 32, %v10099
        %v10101 = vshll.u32 %v10092, %v10099
        %v10102 = vshrl.u32 %v10084, %v10100
        %v10103 = vor.u32 %v10101, %v10102
        %v10104 = vsub.s32 4294967266, %v10099
        %v10105 = vadd.s32 %v10104, 127
        %v10106 = vshll.u32 %v10105, 23
        %v10107 = vor.u32 4788187, %v10106
        %v10108 = vand.u32 2147483647, %v10107
        %v10110 = vcvt.s32.f32 %v10103
        %v10111 = vmul.f32 %v10110, %v10108
        %v10112 = vxor.u32 %v10111, 2147483648
        %v10113 = vsel %vm9992, %v10112, %v10111
        %v10114 = vsub.s32 4, %v10090
        %v10115 = vsel %vm9992, %v10114, %v10090
        %v10116 = vsel %vm9991, %v311, %v10113
        %v10117 = vsel %vm9991, 0, %v10115
        %v10118 = vmul.f32 %v10116, %v10116
        %v10119 = vmul.f32 %v10118, -0.001358992
        %v10120 = vadd.f32 %v10119, 0.041655596
        %v10121 = vmul.f32 %v10118, %v10120
        %v10122 = vadd.f32 %v10121, -0.4999988
        %v10123 = vmul.f32 %v10118, %v10122
        %v10124 = vadd.f32 1.0, %v10123
        %v10125 = vmul.f32 %v10116, %v10116
        %v10126 = vmul.f32 %v10125, -0.00019511016
        %v10127 = vadd.f32 %v10126, 0.008332121
        %v10128 = vmul.f32 %v10125, %v10127
        %v10129 = vadd.f32 %v10128, -0.16666654
        %v10130 = vmul.f32 %v10125, %v10129
        %v10131 = vadd.f32 %v10130, 1.0
        %v10132 = vmul.f32 %v10131, %v10116
        %vm10133 = vweird.f32 %v311
        %v10134 = vand.u32 %v10117, 3
        %vm10135 = vcmp.lt.s32.totalorder %v10134, 2
        %vm10136 = vcmp.eq.s32.totalorder %v10134, 0
        %v10137 = vxor.u32 %v10132, 2147483648
        %v10138 = vsel %vm10136, %v10124, %v10137
        %vm10139 = vcmp.eq.s32.totalorder %v10134, 2
        %v10140 = vxor.u32 %v10124, 2147483648
        %v10141 = vsel %vm10139, %v10140, %v10132
        %v10142 = vsel %vm10135, %v10138, %v10141
        %v10143 = vsel %vm10133, nan, %v10142
        %v10144 = vand.u32 2147483647, %v376
        %vm10145 = vcmp.le.f32.partialorder %v10144, 0.7853982
        %vm10146 = vcmp.lt.s32.totalorder %v376, 0
        %v10147 = vand.u32 %v376, 2139095040
        %v10148 = vshrl.u32 %v10147, 23
        %v10149 = vsub.s32 %v10148, 127
        %v10150 = vand.u32 2147483647, %v376
        %v10151 = vand.u32 %v10150, 8388607
        %v10152 = vor.u32 %v10151, 8388608
        %v10153 = vsub.s32 0, %v10152
        %v10154 = vadd.s32 %v10149, 1
        %vm10155 = vcmp.gt.s32.totalorder %v10154, 0
        %v10156 = vsel %vm10155, %v10154, 0
        %v10157 = vshrl.u32 %v10156, 5
        %v10158 = vand.u32 %v10156, 31
        %v10159 = vsub.s32 32, %v10158
        %v10160 = vshrl.u32 683565275, %v10159
        %v10161 = vshll.u32 683565275, %v10158
        %v10162 = vshrl.u32 2475754826, %v10159
        %v10163 = vor.u32 %v10161, %v10162
        %v10164 = vshll.u32 2475754826, %v10158
        %v10165 = vshrl.u32 2131351028, %v10159
        %v10166 = vor.u32 %v10164, %v10165
        %v10167 = vshll.u32 2131351028, %v10158
        %v10168 = vshrl.u32 2102212464, %v10159
        %v10169 = vor.u32 %v10167, %v10168
        %v10170 = vshll.u32 2102212464, %v10158
        %v10171 = vshrl.u32 920167782, %v10159
        %v10172 = vor.u32 %v10170, %v10171
        %v10173 = vshll.u32 920167782, %v10158
        %v10174 = vshrl.u32 1326507024, %v10159
        %v10175 = vor.u32 %v10173, %v10174
        %vm10176 = vcmp.lt.s32.totalorder %v10157, 1
        %vm10177 = vcmp.lt.s32.totalorder %v10157, 2
        %vm10178 = vcmp.lt.s32.totalorder %v10157, 3
        %vm10179 = vcmp.lt.s32.totalorder %v10157, 4
        %v10180 = vsel %vm10176, %v10160, %v10163
        %v10181 = vsel %vm10179, %v10169, 2102212464
        %v10182 = vsel %vm10178, %v10166, %v10181
        %v10183 = vsel %vm10177, %v10180, %v10182
        %v10184 = vsel %vm10176, %v10163, %v10166
        %v10185 = vsel %vm10179, %v10172, 920167782
        %v10186 = vsel %vm10178, %v10169, %v10185
        %v10187 = vsel %vm10177, %v10184, %v10186
        %v10188 = vsel %vm10176, %v10166, %v10169
        %v10189 = vsel %vm10179, %v10175, 1326507024
        %v10190 = vsel %vm10178, %v10172, %v10189
        %v10191 = vsel %vm10177, %v10188, %v10190
        %v10192 = vshll.u32 %v10152, 8
        %v10193 = vand.u32 %v10192, 65535
        %v10194 = vshrl.u32 %v10192, 16
        %v10195 = vand.u32 %v10191, 65535
        %v10196 = vshrl.u32 %v10191, 16
        %v10197 = vmul.u32 %v10193, %v10195
        %v10198 = vmul.u32 %v10193, %v10196
        %v10199 = vmul.u32 %v10194, %v10195
        %v10200 = vmul.u32 %v10194, %v10196
        %v10201 = vshll.u32 %v10198, 16
        %v10202 = vshrl.u32 %v10198, 16
        %v10203 = vshll.u32 %v10199, 16
        %v10204 = vshrl.u32 %v10199, 16
        %vm10205 = vc.u32 %v10197, %v10201
        %v10206 = vsel %vm10205, 1, 0
        %v10207 = vadd.s32 %v10197, %v10201
        %v10208 = vadd.s32 %v10200, %v10206
        %vm10209 = vc.u32 %v10207, %v10203
        %v10210 = vsel %vm10209, 1, 0
        %v10211 = vadd.s32 %v10207, %v10203
        %v10212 = vadd.s32 %v10208, %v10210
        %v10213 = vadd.s32 %v10212, %v10202
        %v10214 = vadd.s32 %v10213, %v10204
        %v10215 = vand.u32 %v10192, 65535
        %v10216 = vshrl.u32 %v10192, 16
        %v10217 = vand.u32 %v10187, 65535
        %v10218 = vshrl.u32 %v10187, 16
        %v10219 = vmul.u32 %v10215, %v10217
        %v10220 = vmul.u32 %v10215, %v10218
        %v10221 = vmul.u32 %v10216, %v10217
        %v10222 = vmul.u32 %v10216, %v10218
        %v10223 = vshll.u32 %v10220, 16
        %v10224 = vshrl.u32 %v10220, 16
        %v10225 = vshll.u32 %v10221, 16
        %v10226 = vshrl.u32 %v10221, 16
        %vm10227 = vc.u32 %v10219, %v10223
        %v10228 = vsel %vm10227, 1, 0
        %v10229 = vadd.s32 %v10219, %v10223
        %v10230 = vadd.s32 %v10222, %v10228
        %vm10231 = vc.u32 %v10229, %v10225
        %v10232 = vsel %vm10231, 1, 0
        %v10233 = vadd.s32 %v10229, %v10225
        %v10234 = vadd.s32 %v10230, %v10232
        %v10235 = vadd.s32 %v10234, %v10224
        %v10236 = vadd.s32 %v10235, %v10226
        %v10237 = vmul.u32 %v10192, %v10183
        %v10238 = vadd.s32 %v10214, %v10233
        %vm10239 = vc.u32 %v10214, %v10233
        %v10240 = vadd.s32 %v10236, 1
        %v10241 = vsel %vm10239, %v10240, %v10236
        %v10242 = vadd.s32 %v10237, %v10241
        %v10243 = vadd.s32 %v10242, 536870912
        %v10244 = vshrl.u32 %v10243, 30
        %v10245 = vshll.u32 %v10244, 30
        %v10246 = vsub.s32 %v10242, %v10245
        %vm10247 = vcmp.lt.s32.totalorder %v10246, 0
        %v10248 = vsub.s32 0, %v10246
        %v10249 = vsel %vm10247, %v10248, %v10246
        %v10250 = vclz %v10249
        %v10251 = vsub.s32 %v10250, 2
        %vm10252 = vcmp.gt.s32.totalorder 0, %v10251
        %v10253 = vsel %vm10252, 0, %v10251
        %v10254 = vsub.s32 32, %v10253
        %v10255 = vshll.u32 %v10246, %v10253
        %v10256 = vshrl.u32 %v10238, %v10254
        %v10257 = vor.u32 %v10255, %v10256
        %v10258 = vsub.s32 4294967266, %v10253
        %v10259 = vadd.s32 %v10258, 127
        %v10260 = vshll.u32 %v10259, 23
        %v10261 = vor.u32 4788187, %v10260
        %v10262 = vand.u32 2147483647, %v10261
        %v10264 = vcvt.s32.f32 %v10257
        %v10265 = vmul.f32 %v10264, %v10262
        %v10266 = vxor.u32 %v10265, 2147483648
        %v10267 = vsel %vm10146, %v10266, %v10265
        %v10268 = vsub.s32 4, %v10244
        %v10269 = vsel %vm10146, %v10268, %v10244
        %v10270 = vsel %vm10145, %v376, %v10267
        %v10271 = vsel %vm10145, 0, %v10269
        %v10272 = vmul.f32 %v10270, %v10270
        %v10273 = vmul.f32 %v10272, -0.001358992
        %v10274 = vadd.f32 %v10273, 0.041655596
        %v10275 = vmul.f32 %v10272, %v10274
        %v10276 = vadd.f32 %v10275, -0.4999988
        %v10277 = vmul.f32 %v10272, %v10276
        %v10278 = vadd.f32 1.0, %v10277
        %v10279 = vmul.f32 %v10270, %v10270
        %v10280 = vmul.f32 %v10279, -0.00019511016
        %v10281 = vadd.f32 %v10280, 0.008332121
        %v10282 = vmul.f32 %v10279, %v10281
        %v10283 = vadd.f32 %v10282, -0.16666654
        %v10284 = vmul.f32 %v10279, %v10283
        %v10285 = vadd.f32 %v10284, 1.0
        %v10286 = vmul.f32 %v10285, %v10270
        %vm10287 = vweird.f32 %v376
        %v10288 = vand.u32 %v10271, 3
        %vm10289 = vcmp.lt.s32.totalorder %v10288, 2
        %vm10290 = vcmp.eq.s32.totalorder %v10288, 0
        %v10291 = vxor.u32 %v10286, 2147483648
        %v10292 = vsel %vm10290, %v10278, %v10291
        %vm10293 = vcmp.eq.s32.totalorder %v10288, 2
        %v10294 = vxor.u32 %v10278, 2147483648
        %v10295 = vsel %vm10293, %v10294, %v10286
        %v10296 = vsel %vm10289, %v10292, %v10295
        %v10297 = vsel %vm10287, nan, %v10296
        %10298 = vst [vmem:[%s161 + $0x100] sm:$0xff] %v5523
        %10299 = vst [vmem:[%s161 + $0x108] sm:$0xff] %v5677
        %10300 = vst [vmem:[%s161 + $0x110] sm:$0xff] %v5831
        %10301 = vst [vmem:[%s161 + $0x118] sm:$0xff] %v5985
        %10302 = vst [vmem:[%s161 + $0x120] sm:$0xff] %v6139
        %10303 = vst [vmem:[%s161 + $0x128] sm:$0xff] %v6293
        %10304 = vst [vmem:[%s161 + $0x130] sm:$0xff] %v6447
        %10305 = vst [vmem:[%s161 + $0x138] sm:$0xff] %v6601
        %10306 = vst [vmem:[%s161 + $0x140] sm:$0xff] %v6755
        %10307 = vst [vmem:[%s161 + $0x148] sm:$0xff] %v6909
        %10308 = vst [vmem:[%s161 + $0x150] sm:$0xff] %v7063
        %10309 = vst [vmem:[%s161 + $0x158] sm:$0xff] %v7217
        %10310 = vst [vmem:[%s161 + $0x160] sm:$0xff] %v7371
        %10311 = vst [vmem:[%s161 + $0x168] sm:$0xff] %v7525
        %10312 = vst [vmem:[%s161 + $0x170] sm:$0xff] %v7679
        %10313 = vst [vmem:[%s161 + $0x178] sm:$0xff] %v7833
        %10314 = vst [vmem:[%s161 + $0x180] sm:$0xff] %v7987
        %10315 = vst [vmem:[%s161 + $0x188] sm:$0xff] %v8141
        %10316 = vst [vmem:[%s161 + $0x190] sm:$0xff] %v8295
        %10317 = vst [vmem:[%s161 + $0x198] sm:$0xff] %v8449
        %10318 = vst [vmem:[%s161 + $0x1a0] sm:$0xff] %v8603
        %10319 = vst [vmem:[%s161 + $0x1a8] sm:$0xff] %v8757
        %10320 = vst [vmem:[%s161 + $0x1b0] sm:$0xff] %v8911
        %10321 = vst [vmem:[%s161 + $0x1b8] sm:$0xff] %v9065
        %10322 = vst [vmem:[%s161 + $0x1c0] sm:$0xff] %v9219
        %10323 = vst [vmem:[%s161 + $0x1c8] sm:$0xff] %v9373
        %10324 = vst [vmem:[%s161 + $0x1d0] sm:$0xff] %v9527
        %10325 = vst [vmem:[%s161 + $0x1d8] sm:$0xff] %v9681
        %10326 = vst [vmem:[%s161 + $0x1e0] sm:$0xff] %v9835
        %10327 = vst [vmem:[%s161 + $0x1e8] sm:$0xff] %v9989
        %10328 = vst [vmem:[%s161 + $0x1f0] sm:$0xff] %v10143
        %10329 = vst [vmem:[%s161 + $0x1f8] sm:$0xff] %v10297
        %s10330 = sand.u32 %s87, 1
        %s10331 = scalar_lea.sflag [#allocation3], %s10330
        %s10332 = sand.u32 %s87, 1
        %s10333 = smul.addr %s10332, 512
        %s10334 = scalar_lea.vmem [#allocation2], %s10333
        // Predicated region
        $region29: #{tpu_custom_call.1} parent=27 // pred_check
          %p10335 = pneg %p97
        $region30: #{tpu_custom_call.1} parent=27 // pred_check_branch
          %10337 = sbr.rel (%p10335) target = $region32
        $region31: #{tpu_custom_call.1} parent=27 // pred_region
          %s10338 = smul.u32 2, %s21
          %10340 = vsyncadd %s10331, 0
          %s10341 = smul.addr %s20, 64
          %s10342 = sadd.s32 %s10338, %s10341
          %s10343 = smul.addr %s10342, 8
          %s10344 = scalar_lea.hbm %s2, %s10343
          %s10345 = sshll.u32 %s10334, 4
          %s10346 = int_to_ptr.vmem [resolvable:$true] %s10345
          %s10347 = sshll.u32 %s10344, 4
          %s10348 = int_to_ptr.hbm [resolvable:$true] %s10347
          %10353 = dma.vmem_to_hbm [thread:$0]  %s10346, 8192, %s10348, %s10331, 256, 256, 16
        $region32: #{tpu_custom_call.1} parent=27 // pred_fallthru
          _
      $region28: #{tpu_custom_call.1} parent=5 // pred_fallthru
        _
      %p10354 = scmp.le.s32.totalorder 2, %s11
      // Predicated region
      $region33: #{tpu_custom_call.1} parent=5 // pred_check
        %p10355 = pneg %p10354
      $region34: #{tpu_custom_call.1} parent=5 // pred_check_branch
        %10357 = sbr.rel (%p10355) target = $region36
      $region35: #{tpu_custom_call.1} parent=5 // pred_region
        %s10358 = ssub.s32 %s11, 2
        // Predicated region
        $region37: #{tpu_custom_call.1} parent=35 // pred_check
          %p10359 = pneg %p103
        $region38: #{tpu_custom_call.1} parent=35 // pred_check_branch
          %10361 = sbr.rel (%p10359) target = $region40
        $region39: #{tpu_custom_call.1} parent=35 // pred_region
          %s10362 = sand.u32 %s88, 1
          %s10363 = scalar_lea.sflag [#allocation3], %s10362
          %s10364 = sand.u32 %s88, 1
          %s10365 = smul.addr %s10364, 512
          %s10366 = scalar_lea.vmem [#allocation2], %s10365
          %10368 = dma.done %s10363, 8192
        $region40: #{tpu_custom_call.1} parent=35 // pred_fallthru
          _
      $region36: #{tpu_custom_call.1} parent=5 // pred_fallthru
        _
    $region6: #{tpu_custom_call.1} parent=1 // loop_footer
      %s15 = sadd.s32 1, %s11
    $region7: #{tpu_custom_call.1} parent=1 // loop_footer_branch
      %10 = sbr.rel target = $region3
    $region8: #{tpu_custom_call.1} parent=1 // loop_exit
      _
    %10369 = vsyncpa [#allocation3], 1
    %s10370 = scalar_lea.sflag [#allocation3], 1
    %10371 = vsyncpa %s10370, 1

</llo_original>
